<compile_context>
chip_gen: v6e
topology: v6e:2x2x1
jax: 0.10.0
libtpu: 0.0.40
codegen_flags: <defaults>
</compile_context>

<pallas_src>
import math
import functools

import jax
import jax.numpy as jnp
from jax.experimental import pallas as pl
from jax.experimental.pallas import tpu as pltpu


# ----------------------------------------------------------------------------
# Kernel: one (batch, seq-tile) block per grid step.
# ----------------------------------------------------------------------------
def _pe_relative_kernel(idx_ref, x_ref, div_ref, phase_ref, out_ref, *, scale):
    """
    idx_ref:   [1, ts, 1] float32 -- precomputed (already wrapped) table index
    x_ref:     [1, ts, D]
    div_ref:   [1, D]     float32 -- div_term expanded to all D channels (resident)
    phase_ref: [1, D]     float32 -- 0 on even channels, pi/2 on odd (resident)
    out_ref:   [1, ts, D]
    """
    # angle[s, d] = idx[s] * div_term[d // 2] + phase[d]
    # sin(a)        on even channels (phase 0)
    # sin(a + pi/2) = cos(a) on odd channels  -> single transcendental / element
    angle = idx_ref[0] * div_ref[...] + phase_ref[...]      # [ts, D]
    pe_rows = jnp.sin(angle)                                  # [ts, D]
    out_ref[0] = (x_ref[0].astype(jnp.float32)
                  + pe_rows * scale).astype(out_ref.dtype)
    # TODO(synk): nn.Dropout(p=0.1) is a train-time stochastic op; forward here
    # matches eval mode (identity).


# ----------------------------------------------------------------------------
# Wrapper
# ----------------------------------------------------------------------------
def _pick_seq_tile(S, cap):
    """Largest multiple-of-8 divisor of S that is <= cap; S as last resort."""
    cap = min(cap, S)
    best = None
    for cand in range(cap, 7, -1):
        if S % cand == 0 and cand % 8 == 0:
            best = cand
            break
    if best is None:
        # No legal tiled block exists (S not divisible by any multiple of 8);
        # the only valid BlockSpec along this axis is the full extent.
        best = S
    return best


def positional_encoding_relative(x, pos, *, resolution, max_len, embed_dim,
                                 peu_flg, center_idx=200, seq_tile=1024):
    B, S, D = x.shape
    assert D % 2 == 0, "d_model must be even (module's pe construction)"
    assert S > center_idx, "sequence must cover the hardcoded centre index"
    if max_len % 2 == 0:
        # Even max_len can produce idx == max_len, which the PyTorch module
        # itself cannot index; guard instead of silently mis-gathering.
        raise ValueError("max_len must be odd (module default 12001)")

    # --- index computation: tiny [B, S] int elementwise op, done in XLA ------
    # (avoids DMAing the lane-padded [B, S, K] pos tensor and removes the
    #  cross-tile dependence on the centre element)
    p = pos[:, :, -1]
    rel = (p - p[:, center_idx:center_idx + 1]).astype(jnp.float32) / resolution
    lo = float((-max_len) // 2)        # PyTorch: -max_len // 2 (floor divide)
    hi = float(max_len // 2)
    half = float(max_len // 2)
    rel = jnp.clip(rel, lo, hi) + half
    idx = rel.astype(jnp.int32)                         # trunc toward zero
    idx = jnp.where(idx < 0, idx + max_len, idx)        # pe[-1] -> last row
    idx_f = idx.astype(jnp.float32)[:, :, None]         # [B, S, 1]

    # --- analytic sinusoid constants (resident in VMEM, DMA'd once) ----------
    d = jnp.arange(D, dtype=jnp.int32)
    div_full = jnp.exp(((d // 2) * 2).astype(jnp.float32)
                       * (-math.log(20000.0) / D))[None, :]          # [1, D]
    phase = ((d % 2).astype(jnp.float32) * (math.pi / 2.0))[None, :]  # [1, D]

    scale = math.sqrt(embed_dim) if peu_flg else 1.0

    # --- sequence tiling ------------------------------------------------------
    ts = _pick_seq_tile(S, seq_tile)
    grid = (B, S // ts)

    kernel = functools.partial(_pe_relative_kernel, scale=scale)

    return pl.pallas_call(
        kernel,
        out_shape=jax.ShapeDtypeStruct((B, S, D), x.dtype),
        grid_spec=pltpu.PrefetchScalarGridSpec(
            num_scalar_prefetch=0,
            grid=grid,
            in_specs=[
                pl.BlockSpec((1, ts, 1), lambda b, s: (b, s, 0)),   # idx (f32)
                pl.BlockSpec((1, ts, D), lambda b, s: (b, s, 0)),   # x
                pl.BlockSpec((1, D), lambda b, s: (0, 0)),          # div (resident)
                pl.BlockSpec((1, D), lambda b, s: (0, 0)),          # phase (resident)
            ],
            out_specs=pl.BlockSpec((1, ts, D), lambda b, s: (b, s, 0)),
        ),
        compiler_params=pltpu.CompilerParams(
            dimension_semantics=("parallel", "parallel")),
    )(idx_f, x, div_full, phase)


# ----------------------------------------------------------------------------
# Pure-JAX reference: mirrors the PyTorch module (table gather) exactly.
# ----------------------------------------------------------------------------
def reference(x, pos, *, resolution, max_len, embed_dim, peu_flg, center_idx=200):
    D = x.shape[-1]
    position = jnp.arange(max_len, dtype=jnp.float32)[:, None]
    div_term = jnp.exp(jnp.arange(0, D, 2, dtype=jnp.float32)
                       * (-math.log(20000.0) / D))
    pe = jnp.zeros((max_len, D), jnp.float32)
    pe = pe.at[:, 0::2].set(jnp.sin(position * div_term))
    pe = pe.at[:, 1::2].set(jnp.cos(position * div_term))
    # (the module replicates pe across batch, but every copy is identical)

    p = pos[:, :, -1]
    rel = (p - p[:, center_idx:center_idx + 1]).astype(jnp.float32) / resolution
    rel = jnp.clip(rel, (-max_len) // 2, max_len // 2) + max_len // 2
    idx = rel.astype(jnp.int32)
    idx = jnp.where(idx < 0, idx + max_len, idx)        # torch negative indexing
    gathered = pe[idx]                                   # [B, S, D]
    scale = math.sqrt(embed_dim) if peu_flg else 1.0
    return x + gathered * scale


# ----------------------------------------------------------------------------
if __name__ == "__main__":
    B, S, D, K = 2, 512, 128, 3        # seq must exceed the hardcoded centre 200
    MAX_LEN = 257                      # odd, like the module default 12001
    RESOLUTION = 500
    PEU_FLG = True

    key = jax.random.PRNGKey(0)
    kx, kp1, kp2 = jax.random.split(key, 3)

    x = jax.random.normal(kx, (B, S, D), dtype=jnp.float32)
    # genomic coordinates spread so that clipping (and the -1 wrap) is exercised
    coord = jax.random.randint(kp1, (B, S), -100000, 100000, dtype=jnp.int32)
    other = jax.random.randint(kp2, (B, S, K - 1), 0, 1000, dtype=jnp.int32)
    pos = jnp.concatenate([other, coord[:, :, None]], axis=-1)      # [B, S, K]

    out = positional_encoding_relative(
        x, pos, resolution=RESOLUTION, max_len=MAX_LEN,
        embed_dim=D, peu_flg=PEU_FLG)
    out = jax.block_until_ready(out)

    ref = reference(x, pos, resolution=RESOLUTION, max_len=MAX_LEN,
                    embed_dim=D, peu_flg=PEU_FLG)
    assert out.shape == (B, S, D)
    # Tolerance covers (a) differing sin polynomial approximations between XLA
    # (reference table) and Mosaic (in-kernel) and (b) the +pi/2 phase-fold
    # rounding at angles up to ~max_len, all scaled by sqrt(d_model)~11.3; any
    # real index/scale/parity bug produces O(1)-O(10) errors and is still caught.
    max_err = float(jnp.max(jnp.abs(out - ref)))
    assert jnp.allclose(out, ref, rtol=0.0, atol=2e-3), f"mismatch: {max_err}"

    print("KERNEL_OK")
</pallas_src>

<mosaic_0001>
module attributes {stable_mosaic.version = 11 : i64} {
  func.func @_pe_relative_kernel(%arg0: i32, %arg1: i32, %arg2: memref<1x512x1xf32, #tpu.memory_space<vmem>>, %arg3: memref<1x512x128xf32, #tpu.memory_space<vmem>>, %arg4: memref<1x128xf32, #tpu.memory_space<vmem>>, %arg5: memref<1x128xf32, #tpu.memory_space<vmem>>, %arg6: memref<1x512x128xf32, #tpu.memory_space<vmem>>) attributes {dimension_semantics = [#tpu.dimension_semantics<parallel>, #tpu.dimension_semantics<parallel>], iteration_bounds = array<i64: 2, 1>, scalar_prefetch = 0 : i64, scratch_operands = 0 : i64, tpu.core_type = #tpu.core_type<tc>, window_params = [{transform_indices = @transform_0, window_bounds = array<i64: 1, 512, 1>}, {transform_indices = @transform_1, window_bounds = array<i64: 1, 512, 128>}, {pipeline_mode = #tpu.pipeline_mode<synchronous>, transform_indices = @transform_2, window_bounds = array<i64: 1, 128>}, {pipeline_mode = #tpu.pipeline_mode<synchronous>, transform_indices = @transform_3, window_bounds = array<i64: 1, 128>}, {transform_indices = @transform_4, window_bounds = array<i64: 1, 512, 128>}]} {
    %c0 = arith.constant 0 : index
    %c0_0 = arith.constant 0 : index
    %c0_1 = arith.constant 0 : index
    %0 = vector.load %arg2[%c0, %c0_0, %c0_1] : memref<1x512x1xf32, #tpu.memory_space<vmem>>, vector<1x512x1xf32>
    %1 = vector.shape_cast %0 : vector<1x512x1xf32> to vector<512x1xf32>
    %c0_2 = arith.constant 0 : index
    %c0_3 = arith.constant 0 : index
    %2 = vector.load %arg4[%c0_2, %c0_3] : memref<1x128xf32, #tpu.memory_space<vmem>>, vector<1x128xf32>
    %3 = vector.broadcast %1 : vector<512x1xf32> to vector<512x128xf32>
    %4 = vector.broadcast %2 : vector<1x128xf32> to vector<512x128xf32>
    %5 = arith.mulf %3, %4 : vector<512x128xf32>
    %c0_4 = arith.constant 0 : index
    %c0_5 = arith.constant 0 : index
    %6 = vector.load %arg5[%c0_4, %c0_5] : memref<1x128xf32, #tpu.memory_space<vmem>>, vector<1x128xf32>
    %7 = vector.broadcast %6 : vector<1x128xf32> to vector<512x128xf32>
    %8 = arith.addf %5, %7 : vector<512x128xf32>
    %9 = math.sin %8 : vector<512x128xf32>
    %c0_6 = arith.constant 0 : index
    %c0_7 = arith.constant 0 : index
    %c0_8 = arith.constant 0 : index
    %10 = vector.load %arg3[%c0_6, %c0_7, %c0_8] : memref<1x512x128xf32, #tpu.memory_space<vmem>>, vector<1x512x128xf32>
    %11 = vector.shape_cast %10 : vector<1x512x128xf32> to vector<512x128xf32>
    %cst = arith.constant 11.3137083 : f32
    %12 = vector.broadcast %cst : f32 to vector<512x128xf32>
    %13 = arith.mulf %9, %12 : vector<512x128xf32>
    %14 = arith.addf %11, %13 : vector<512x128xf32>
    %c0_9 = arith.constant 0 : index
    %c0_10 = arith.constant 0 : index
    %c0_11 = arith.constant 0 : index
    %15 = vector.load %arg6[%c0_9, %c0_10, %c0_11] : memref<1x512x128xf32, #tpu.memory_space<vmem>>, vector<1x512x128xf32>
    %16 = vector.shape_cast %15 : vector<1x512x128xf32> to vector<512x128xf32>
    %17 = vector.shape_cast %14 : vector<512x128xf32> to vector<1x512x128xf32>
    tpu.vector_store %arg6[%c0_9, %c0_10, %c0_11], %17 {strides = array<i32>} : memref<1x512x128xf32, #tpu.memory_space<vmem>>, vector<1x512x128xf32>,
    return
  }
  func.func @transform_0(%arg0: i32, %arg1: i32) -> (i32, i32, i32) {
    %c0_i32 = arith.constant 0 : i32
    %c0_i32_0 = arith.constant 0 : i32
    return %arg0, %arg1, %c0_i32 : i32, i32, i32
  }
  func.func @transform_1(%arg0: i32, %arg1: i32) -> (i32, i32, i32) {
    %c0_i32 = arith.constant 0 : i32
    %c0_i32_0 = arith.constant 0 : i32
    return %arg0, %arg1, %c0_i32 : i32, i32, i32
  }
  func.func @transform_2(%arg0: i32, %arg1: i32) -> (i32, i32) {
    %c0_i32 = arith.constant 0 : i32
    %c0_i32_0 = arith.constant 0 : i32
    %c0_i32_1 = arith.constant 0 : i32
    return %c0_i32, %c0_i32_0 : i32, i32
  }
  func.func @transform_3(%arg0: i32, %arg1: i32) -> (i32, i32) {
    %c0_i32 = arith.constant 0 : i32
    %c0_i32_0 = arith.constant 0 : i32
    %c0_i32_1 = arith.constant 0 : i32
    return %c0_i32, %c0_i32_0 : i32, i32
  }
  func.func @transform_4(%arg0: i32, %arg1: i32) -> (i32, i32, i32) {
    %c0_i32 = arith.constant 0 : i32
    %c0_i32_0 = arith.constant 0 : i32
    return %arg0, %arg1, %c0_i32 : i32, i32, i32
  }
}

</mosaic_0001>

<llo_original>
// kernel: tpu_custom_call.1
$region0: #{tpu_custom_call.1}
  #allocation0 [shape = 'u32[]', space=smem, size = 0x4, offset = 0x4, fixed_abs, tag = 'smem constant byte address 0x4 - core index']
  #allocation1 [shape = 'u32[144,128]{1,0:T(1,128)}', space=vmem, size = 0x12000, scoped, tag = 'internal scratch']
  %s0 = inlined_call_operand.vmem [shape: f32[2,512,1], index: 0, kind: input, shape index: {}]
  %s1 = inlined_call_operand.vmem [shape: f32[2,512,128], index: 1, kind: input, shape index: {}]
  %s2 = inlined_call_operand.vmem [shape: f32[1,128], index: 2, kind: input, shape index: {}]
  %s3 = inlined_call_operand.vmem [shape: f32[1,128], index: 3, kind: input, shape index: {}]
  %s4 = inlined_call_operand.hbm [shape: f32[2,512,128], index: 4, kind: output, shape index: {}]
  %s5 = sld [smem:[#allocation0]]
  $region49: #{tpu_custom_call.1} parent=0
    _
  %s7 = ssub.s32 1, %s5
  %s8 = scalar_select 0, %s7, %s5
  $region1: #{tpu_custom_call.1} parent=0
    #allocation2 [shape = 'u8[524288]{0}', space=vmem, size = 0x80000, scoped, tag = 'output window, operand 0']
    #allocation3 [shape = 's32[2]{0}', space=sflag, size = 0x8, scoped, tag = 'scoped memory for tpu_custom_call.1']
    %9 = vsyncpa [#allocation3], 0
    %s10 = scalar_lea.sflag [#allocation3], 1
    %11 = vsyncpa %s10, 0
    loop: start=0, step=1, limit=4
    $region2: #{tpu_custom_call.1} parent=1 // loop_pre_header
      _
    $region3: #{tpu_custom_call.1} parent=1 // loop_header
      %s13 = sphi 0, %s17
      %p14 = scmp.ge.s32.totalorder %s13, 4
      %s20 = sphi 0, %s32
      %s21 = sphi 0, %s28
      %s22 = sphi 0, %s20
      %s23 = sphi 0, %s21
      %s24 = sphi 0, %s22
      %s25 = sphi 0, %s23
      %s37 = sphi 0, %s39
      %s40 = sphi 0, %s37
      %s41 = sphi 0, %s40
      %s57 = sphi 0, %s41
      %s65 = sphi 0, %s67
      %s68 = sphi 0, %s65
      %s69 = sphi 0, %s68
      %s85 = sphi 0, %s69
      %s89 = sphi 0, %s89
      %s91 = sphi 0, %s89
      %s92 = sphi 0, %s91
      %s106 = sphi 0, %s92
      %s110 = sphi 0, %s110
      %s112 = sphi 0, %s110
      %s113 = sphi 0, %s112
      %s127 = sphi 0, %s113
      %s135 = sphi 0, %s137
      %s138 = sphi 0, %s135
      %s139 = sphi 0, %s138
      %s155 = sphi 0, %s139
    $region4: #{tpu_custom_call.1} parent=1 // loop_header_branch
      %16 = sbr.rel (%p14) target = $region8
    $region5: #{tpu_custom_call.1} parent=1 // loop_body
      %s18 = ssub.s32 %s13, 1
      %s19 = ssub.s32 %s13, 2
      %s26 = sadd.s32 1, %s21
      %p27 = scmp.ge.s32.totalorder %s26, 1
      %s28 = scalar_select %p27, 0, %s26
      %s29 = sadd.s32 1, %s20
      %s30 = scalar_select %p27, %s29, %s20
      %p31 = scmp.ge.s32.totalorder %s30, 2
      %s32 = scalar_select %p31, 0, %s30
      %s33 = ssub.s32 %s20, %s32
      %s34 = ssub.s32 %s21, %s28
      %s35 = sor.u32 %s33, %s34
      %p36 = scmp.eq.s32.totalorder %s35, 0
      %s38 = sadd.s32 %s37, 1
      %s39 = scalar_select %p36, %s37, %s38
      %p42 = pneg %p36
      %p43 = scmp.eq.s32.totalorder %s13, 1
      %p44 = por %p42, %p43
      %p45 = scmp.ne.s32.totalorder %s37, %s40
      %p46 = scmp.eq.s32.totalorder %s13, 0
      %p47 = por %p45, %p46
      %p48 = scmp.ne.s32.totalorder %s37, %s40
      %p49 = scmp.eq.s32.totalorder %s18, 1
      %p50 = por %p48, %p49
      %p51 = scmp.ne.s32.totalorder %s40, %s41
      %p52 = scmp.eq.s32.totalorder %s18, 0
      %p53 = por %p51, %p52
      %p54 = scmp.ne.s32.totalorder %s40, %s41
      %p55 = scmp.eq.s32.totalorder %s19, 1
      %p56 = por %p54, %p55
      %p58 = scmp.ne.s32.totalorder %s41, %s57
      %p59 = scmp.eq.s32.totalorder %s19, 0
      %p60 = por %p58, %p59
      %s61 = ssub.s32 %s20, %s32
      %s62 = ssub.s32 %s21, %s28
      %s63 = sor.u32 %s61, %s62
      %p64 = scmp.eq.s32.totalorder %s63, 0
      %s66 = sadd.s32 %s65, 1
      %s67 = scalar_select %p64, %s65, %s66
      %p70 = pneg %p64
      %p71 = scmp.eq.s32.totalorder %s13, 1
      %p72 = por %p70, %p71
      %p73 = scmp.ne.s32.totalorder %s65, %s68
      %p74 = scmp.eq.s32.totalorder %s13, 0
      %p75 = por %p73, %p74
      %p76 = scmp.ne.s32.totalorder %s65, %s68
      %p77 = scmp.eq.s32.totalorder %s18, 1
      %p78 = por %p76, %p77
      %p79 = scmp.ne.s32.totalorder %s68, %s69
      %p80 = scmp.eq.s32.totalorder %s18, 0
      %p81 = por %p79, %p80
      %p82 = scmp.ne.s32.totalorder %s68, %s69
      %p83 = scmp.eq.s32.totalorder %s19, 1
      %p84 = por %p82, %p83
      %p86 = scmp.ne.s32.totalorder %s69, %s85
      %p87 = scmp.eq.s32.totalorder %s19, 0
      %p88 = por %p86, %p87
      %s90 = sadd.s32 %s89, 1
      %p93 = scmp.eq.s32.totalorder %s13, 1
      %p94 = scmp.ne.s32.totalorder %s89, %s91
      %p95 = scmp.eq.s32.totalorder %s13, 0
      %p96 = por %p94, %p95
      %p97 = scmp.ne.s32.totalorder %s89, %s91
      %p98 = scmp.eq.s32.totalorder %s18, 1
      %p99 = por %p97, %p98
      %p100 = scmp.ne.s32.totalorder %s91, %s92
      %p101 = scmp.eq.s32.totalorder %s18, 0
      %p102 = por %p100, %p101
      %p103 = scmp.ne.s32.totalorder %s91, %s92
      %p104 = scmp.eq.s32.totalorder %s19, 1
      %p105 = por %p103, %p104
      %p107 = scmp.ne.s32.totalorder %s92, %s106
      %p108 = scmp.eq.s32.totalorder %s19, 0
      %p109 = por %p107, %p108
      %s111 = sadd.s32 %s110, 1
      %p114 = scmp.eq.s32.totalorder %s13, 1
      %p115 = scmp.ne.s32.totalorder %s110, %s112
      %p116 = scmp.eq.s32.totalorder %s13, 0
      %p117 = por %p115, %p116
      %p118 = scmp.ne.s32.totalorder %s110, %s112
      %p119 = scmp.eq.s32.totalorder %s18, 1
      %p120 = por %p118, %p119
      %p121 = scmp.ne.s32.totalorder %s112, %s113
      %p122 = scmp.eq.s32.totalorder %s18, 0
      %p123 = por %p121, %p122
      %p124 = scmp.ne.s32.totalorder %s112, %s113
      %p125 = scmp.eq.s32.totalorder %s19, 1
      %p126 = por %p124, %p125
      %p128 = scmp.ne.s32.totalorder %s113, %s127
      %p129 = scmp.eq.s32.totalorder %s19, 0
      %p130 = por %p128, %p129
      %s131 = ssub.s32 %s20, %s32
      %s132 = ssub.s32 %s21, %s28
      %s133 = sor.u32 %s131, %s132
      %p134 = scmp.eq.s32.totalorder %s133, 0
      %s136 = sadd.s32 %s135, 1
      %s137 = scalar_select %p134, %s135, %s136
      %p140 = pneg %p134
      %p141 = scmp.eq.s32.totalorder %s13, 1
      %p142 = por %p140, %p141
      %p143 = scmp.ne.s32.totalorder %s135, %s138
      %p144 = scmp.eq.s32.totalorder %s13, 0
      %p145 = por %p143, %p144
      %p146 = scmp.ne.s32.totalorder %s135, %s138
      %p147 = scmp.eq.s32.totalorder %s18, 1
      %p148 = por %p146, %p147
      %p149 = scmp.ne.s32.totalorder %s138, %s139
      %p150 = scmp.eq.s32.totalorder %s18, 0
      %p151 = por %p149, %p150
      %p152 = scmp.ne.s32.totalorder %s138, %s139
      %p153 = scmp.eq.s32.totalorder %s19, 1
      %p154 = por %p152, %p153
      %p156 = scmp.ne.s32.totalorder %s139, %s155
      %p157 = scmp.eq.s32.totalorder %s19, 0
      %p158 = por %p156, %p157
      %p159 = scmp.le.s32.totalorder 1, %s13
      %p160 = scmp.lt.s32.totalorder %s13, 3
      %p161 = pnand %p159, %p160
      %p162 = pneg %p161
      // Predicated region
      $region9: #{tpu_custom_call.1} parent=5 // pred_check
        _
      $region10: #{tpu_custom_call.1} parent=5 // pred_check_branch
        %164 = sbr.rel (%p161) target = $region12
      $region11: #{tpu_custom_call.1} parent=5 // pred_region
        %s165 = ssub.s32 %s13, 1
        // Predicated region
        $region13: #{tpu_custom_call.1} parent=11 // pred_check
          %p166 = pneg %p102
        $region14: #{tpu_custom_call.1} parent=11 // pred_check_branch
          %168 = sbr.rel (%p166) target = $region16
        $region15: #{tpu_custom_call.1} parent=11 // pred_region
          _
        $region16: #{tpu_custom_call.1} parent=11 // pred_fallthru
          _
        // Predicated region
        $region17: #{tpu_custom_call.1} parent=11 // pred_check
          %p169 = pneg %p123
        $region18: #{tpu_custom_call.1} parent=11 // pred_check_branch
          %171 = sbr.rel (%p169) target = $region20
        $region19: #{tpu_custom_call.1} parent=11 // pred_region
          _
        $region20: #{tpu_custom_call.1} parent=11 // pred_fallthru
          _
      $region12: #{tpu_custom_call.1} parent=5 // pred_fallthru
        _
      %p172 = scmp.lt.s32.totalorder %s13, 2
      // Predicated region
      $region21: #{tpu_custom_call.1} parent=5 // pred_check
        %p173 = pneg %p172
      $region22: #{tpu_custom_call.1} parent=5 // pred_check_branch
        %175 = sbr.rel (%p173) target = $region24
      $region23: #{tpu_custom_call.1} parent=5 // pred_region
        // Predicated region
        $region25: #{tpu_custom_call.1} parent=23 // pred_check
          %p176 = pneg %p47
        $region26: #{tpu_custom_call.1} parent=23 // pred_check_branch
          %178 = sbr.rel (%p176) target = $region28
        $region27: #{tpu_custom_call.1} parent=23 // pred_region
          %s179 = smul.u32 64, %s21
          %p180 = scmp.lt.s32.totalorder %s20, 1
          %s181 = scalar_select %p180, %s20, 1
          %p182 = scmp.lt.s32.totalorder %s179, 63
          %s183 = scalar_select %p182, %s179, 63
          %s184 = smul.addr %s181, 64
          %s185 = sadd.s32 %s183, %s184
          %s186 = smul.addr %s185, 8
          %s187 = scalar_lea.vmem %s0, %s186
          %s188 = smul.u32 64, %s21
        $region28: #{tpu_custom_call.1} parent=23 // pred_fallthru
          _
        // Predicated region
        $region29: #{tpu_custom_call.1} parent=23 // pred_check
          %p189 = pneg %p75
        $region30: #{tpu_custom_call.1} parent=23 // pred_check_branch
          %191 = sbr.rel (%p189) target = $region32
        $region31: #{tpu_custom_call.1} parent=23 // pred_region
          %s192 = smul.u32 64, %s21
          %p193 = scmp.lt.s32.totalorder %s20, 1
          %s194 = scalar_select %p193, %s20, 1
          %p195 = scmp.lt.s32.totalorder %s192, 63
          %s196 = scalar_select %p195, %s192, 63
          %s197 = smul.addr %s194, 64
          %s198 = sadd.s32 %s196, %s197
          %s199 = smul.addr %s198, 8
          %s200 = scalar_lea.vmem %s1, %s199
          %s201 = smul.u32 64, %s21
        $region32: #{tpu_custom_call.1} parent=23 // pred_fallthru
          _
      $region24: #{tpu_custom_call.1} parent=5 // pred_fallthru
        _
      %p202 = scmp.le.s32.totalorder 1, %s13
      %p203 = scmp.lt.s32.totalorder %s13, 3
      %p204 = pnand %p202, %p203
      %p205 = pneg %p204
      // Predicated region
      $region33: #{tpu_custom_call.1} parent=5 // pred_check
        _
      $region34: #{tpu_custom_call.1} parent=5 // pred_check_branch
        %207 = sbr.rel (%p204) target = $region36
      $region35: #{tpu_custom_call.1} parent=5 // pred_region
        %s208 = ssub.s32 %s13, 1
        %s209 = smul.u32 64, %s23
        %p210 = scmp.lt.s32.totalorder %s22, 1
        %s211 = scalar_select %p210, %s22, 1
        %p212 = scmp.lt.s32.totalorder %s209, 63
        %s213 = scalar_select %p212, %s209, 63
        %s214 = smul.addr %s211, 64
        %s215 = sadd.s32 %s213, %s214
        %s216 = smul.addr %s215, 8
        %s217 = scalar_lea.vmem %s0, %s216
        %p218 = pneg %p53
        %p219 = pneg %p50
        %s220 = smul.u32 64, %s23
        %p221 = scmp.lt.s32.totalorder %s22, 1
        %s222 = scalar_select %p221, %s22, 1
        %p223 = scmp.lt.s32.totalorder %s220, 63
        %s224 = scalar_select %p223, %s220, 63
        %s225 = smul.addr %s222, 64
        %s226 = sadd.s32 %s224, %s225
        %s227 = smul.addr %s226, 8
        %s228 = scalar_lea.vmem %s1, %s227
        %p229 = pneg %p81
        %p230 = pneg %p78
        %p231 = pneg %p102
        %p232 = pneg %p99
        %p233 = pneg %p123
        %p234 = pneg %p120
        %p235 = pneg %p151
        %p236 = pneg %p148
        %s237 = sand.u32 %s138, 1
        %s238 = scalar_lea.sflag [#allocation3], %s237
        %s239 = sand.u32 %s138, 1
        %s240 = smul.addr %s239, 512
        %s241 = scalar_lea.vmem [#allocation2], %s240
        %s242 = smul.u32 64, %s23
        %p243 = scmp.lt.s32.totalorder %s22, 1
        %s244 = scalar_select %p243, %s22, 1
        %p245 = scmp.lt.s32.totalorder %s242, 63
        %s246 = scalar_select %p245, %s242, 63
        %s247 = smul.addr %s244, 64
        %s248 = sadd.s32 %s246, %s247
        %s249 = smul.addr %s248, 8
        %s250 = scalar_lea.vmem %s0, %s249
        %s251 = smul.u32 64, %s23
        %s252 = smul.u32 64, %s23
        %p253 = scmp.lt.s32.totalorder %s22, 1
        %s254 = scalar_select %p253, %s22, 1
        %p255 = scmp.lt.s32.totalorder %s252, 63
        %s256 = scalar_select %p255, %s252, 63
        %s257 = smul.addr %s254, 64
        %s258 = sadd.s32 %s256, %s257
        %s259 = smul.addr %s258, 8
        %s260 = scalar_lea.vmem %s1, %s259
        %s261 = smul.u32 64, %s23
        %s262 = smul.u32 64, %s23
        %v263 = vld [vmem:[%s250] sm:$0xff]
        %v264 = vld [vmem:[%s250 + $0x8] sm:$0xff]
        %v265 = vld [vmem:[%s250 + $0x10] sm:$0xff]
        %v266 = vld [vmem:[%s250 + $0x18] sm:$0xff]
        %v267 = vld [vmem:[%s250 + $0x20] sm:$0xff]
        %v268 = vld [vmem:[%s250 + $0x28] sm:$0xff]
        %v269 = vld [vmem:[%s250 + $0x30] sm:$0xff]
        %v270 = vld [vmem:[%s250 + $0x38] sm:$0xff]
        %v271 = vld [vmem:[%s250 + $0x40] sm:$0xff]
        %v272 = vld [vmem:[%s250 + $0x48] sm:$0xff]
        %v273 = vld [vmem:[%s250 + $0x50] sm:$0xff]
        %v274 = vld [vmem:[%s250 + $0x58] sm:$0xff]
        %v275 = vld [vmem:[%s250 + $0x60] sm:$0xff]
        %v276 = vld [vmem:[%s250 + $0x68] sm:$0xff]
        %v277 = vld [vmem:[%s250 + $0x70] sm:$0xff]
        %v278 = vld [vmem:[%s250 + $0x78] sm:$0xff]
        %v279 = vld [vmem:[%s250 + $0x80] sm:$0xff]
        %v280 = vld [vmem:[%s250 + $0x88] sm:$0xff]
        %v281 = vld [vmem:[%s250 + $0x90] sm:$0xff]
        %v282 = vld [vmem:[%s250 + $0x98] sm:$0xff]
        %v283 = vld [vmem:[%s250 + $0xa0] sm:$0xff]
        %v284 = vld [vmem:[%s250 + $0xa8] sm:$0xff]
        %v285 = vld [vmem:[%s250 + $0xb0] sm:$0xff]
        %v286 = vld [vmem:[%s250 + $0xb8] sm:$0xff]
        %v287 = vld [vmem:[%s250 + $0xc0] sm:$0xff]
        %v288 = vld [vmem:[%s250 + $0xc8] sm:$0xff]
        %v289 = vld [vmem:[%s250 + $0xd0] sm:$0xff]
        %v290 = vld [vmem:[%s250 + $0xd8] sm:$0xff]
        %v291 = vld [vmem:[%s250 + $0xe0] sm:$0xff]
        %v292 = vld [vmem:[%s250 + $0xe8] sm:$0xff]
        %v293 = vld [vmem:[%s250 + $0xf0] sm:$0xff]
        %v294 = vld [vmem:[%s250 + $0xf8] sm:$0xff]
        %v295 = vld [vmem:[%s250 + $0x100] sm:$0xff]
        %v296 = vld [vmem:[%s250 + $0x108] sm:$0xff]
        %v297 = vld [vmem:[%s250 + $0x110] sm:$0xff]
        %v298 = vld [vmem:[%s250 + $0x118] sm:$0xff]
        %v299 = vld [vmem:[%s250 + $0x120] sm:$0xff]
        %v300 = vld [vmem:[%s250 + $0x128] sm:$0xff]
        %v301 = vld [vmem:[%s250 + $0x130] sm:$0xff]
        %v302 = vld [vmem:[%s250 + $0x138] sm:$0xff]
        %v303 = vld [vmem:[%s250 + $0x140] sm:$0xff]
        %v304 = vld [vmem:[%s250 + $0x148] sm:$0xff]
        %v305 = vld [vmem:[%s250 + $0x150] sm:$0xff]
        %v306 = vld [vmem:[%s250 + $0x158] sm:$0xff]
        %v307 = vld [vmem:[%s250 + $0x160] sm:$0xff]
        %v308 = vld [vmem:[%s250 + $0x168] sm:$0xff]
        %v309 = vld [vmem:[%s250 + $0x170] sm:$0xff]
        %v310 = vld [vmem:[%s250 + $0x178] sm:$0xff]
        %v311 = vld [vmem:[%s250 + $0x180] sm:$0xff]
        %v312 = vld [vmem:[%s250 + $0x188] sm:$0xff]
        %v313 = vld [vmem:[%s250 + $0x190] sm:$0xff]
        %v314 = vld [vmem:[%s250 + $0x198] sm:$0xff]
        %v315 = vld [vmem:[%s250 + $0x1a0] sm:$0xff]
        %v316 = vld [vmem:[%s250 + $0x1a8] sm:$0xff]
        %v317 = vld [vmem:[%s250 + $0x1b0] sm:$0xff]
        %v318 = vld [vmem:[%s250 + $0x1b8] sm:$0xff]
        %v319 = vld [vmem:[%s250 + $0x1c0] sm:$0xff]
        %v320 = vld [vmem:[%s250 + $0x1c8] sm:$0xff]
        %v321 = vld [vmem:[%s250 + $0x1d0] sm:$0xff]
        %v322 = vld [vmem:[%s250 + $0x1d8] sm:$0xff]
        %v323 = vld [vmem:[%s250 + $0x1e0] sm:$0xff]
        %v324 = vld [vmem:[%s250 + $0x1e8] sm:$0xff]
        %v325 = vld [vmem:[%s250 + $0x1f0] sm:$0xff]
        %v326 = vld [vmem:[%s250 + $0x1f8] sm:$0xff]
        %v327 = vld [vmem:[%s2] sm:$0x1]
        %329 = vset.pattern.permute.xlu0 0
        %330 = vperm.xlu0 %329, %v263
        %v331 = vpop.permute.xlu0 %330
        %334 = vset.pattern.permute.xlu0 0
        %335 = vperm.xlu0 %334, %v264
        %v336 = vpop.permute.xlu0 %335
        %339 = vset.pattern.permute.xlu0 0
        %340 = vperm.xlu0 %339, %v265
        %v341 = vpop.permute.xlu0 %340
        %344 = vset.pattern.permute.xlu0 0
        %345 = vperm.xlu0 %344, %v266
        %v346 = vpop.permute.xlu0 %345
        %349 = vset.pattern.permute.xlu0 0
        %350 = vperm.xlu0 %349, %v267
        %v351 = vpop.permute.xlu0 %350
        %354 = vset.pattern.permute.xlu0 0
        %355 = vperm.xlu0 %354, %v268
        %v356 = vpop.permute.xlu0 %355
        %359 = vset.pattern.permute.xlu0 0
        %360 = vperm.xlu0 %359, %v269
        %v361 = vpop.permute.xlu0 %360
        %364 = vset.pattern.permute.xlu0 0
        %365 = vperm.xlu0 %364, %v270
        %v366 = vpop.permute.xlu0 %365
        %369 = vset.pattern.permute.xlu0 0
        %370 = vperm.xlu0 %369, %v271
        %v371 = vpop.permute.xlu0 %370
        %374 = vset.pattern.permute.xlu0 0
        %375 = vperm.xlu0 %374, %v272
        %v376 = vpop.permute.xlu0 %375
        %379 = vset.pattern.permute.xlu0 0
        %380 = vperm.xlu0 %379, %v273
        %v381 = vpop.permute.xlu0 %380
        %384 = vset.pattern.permute.xlu0 0
        %385 = vperm.xlu0 %384, %v274
        %v386 = vpop.permute.xlu0 %385
        %389 = vset.pattern.permute.xlu0 0
        %390 = vperm.xlu0 %389, %v275
        %v391 = vpop.permute.xlu0 %390
        %394 = vset.pattern.permute.xlu0 0
        %395 = vperm.xlu0 %394, %v276
        %v396 = vpop.permute.xlu0 %395
        %399 = vset.pattern.permute.xlu0 0
        %400 = vperm.xlu0 %399, %v277
        %v401 = vpop.permute.xlu0 %400
        %404 = vset.pattern.permute.xlu0 0
        %405 = vperm.xlu0 %404, %v278
        %v406 = vpop.permute.xlu0 %405
        %409 = vset.pattern.permute.xlu0 0
        %410 = vperm.xlu0 %409, %v279
        %v411 = vpop.permute.xlu0 %410
        %414 = vset.pattern.permute.xlu0 0
        %415 = vperm.xlu0 %414, %v280
        %v416 = vpop.permute.xlu0 %415
        %419 = vset.pattern.permute.xlu0 0
        %420 = vperm.xlu0 %419, %v281
        %v421 = vpop.permute.xlu0 %420
        %424 = vset.pattern.permute.xlu0 0
        %425 = vperm.xlu0 %424, %v282
        %v426 = vpop.permute.xlu0 %425
        %429 = vset.pattern.permute.xlu0 0
        %430 = vperm.xlu0 %429, %v283
        %v431 = vpop.permute.xlu0 %430
        %434 = vset.pattern.permute.xlu0 0
        %435 = vperm.xlu0 %434, %v284
        %v436 = vpop.permute.xlu0 %435
        %439 = vset.pattern.permute.xlu0 0
        %440 = vperm.xlu0 %439, %v285
        %v441 = vpop.permute.xlu0 %440
        %444 = vset.pattern.permute.xlu0 0
        %445 = vperm.xlu0 %444, %v286
        %v446 = vpop.permute.xlu0 %445
        %449 = vset.pattern.permute.xlu0 0
        %450 = vperm.xlu0 %449, %v287
        %v451 = vpop.permute.xlu0 %450
        %454 = vset.pattern.permute.xlu0 0
        %455 = vperm.xlu0 %454, %v288
        %v456 = vpop.permute.xlu0 %455
        %459 = vset.pattern.permute.xlu0 0
        %460 = vperm.xlu0 %459, %v289
        %v461 = vpop.permute.xlu0 %460
        %464 = vset.pattern.permute.xlu0 0
        %465 = vperm.xlu0 %464, %v290
        %v466 = vpop.permute.xlu0 %465
        %469 = vset.pattern.permute.xlu0 0
        %470 = vperm.xlu0 %469, %v291
        %v471 = vpop.permute.xlu0 %470
        %474 = vset.pattern.permute.xlu0 0
        %475 = vperm.xlu0 %474, %v292
        %v476 = vpop.permute.xlu0 %475
        %479 = vset.pattern.permute.xlu0 0
        %480 = vperm.xlu0 %479, %v293
        %v481 = vpop.permute.xlu0 %480
        %484 = vset.pattern.permute.xlu0 0
        %485 = vperm.xlu0 %484, %v294
        %v486 = vpop.permute.xlu0 %485
        %489 = vset.pattern.permute.xlu0 0
        %490 = vperm.xlu0 %489, %v295
        %v491 = vpop.permute.xlu0 %490
        %494 = vset.pattern.permute.xlu0 0
        %495 = vperm.xlu0 %494, %v296
        %v496 = vpop.permute.xlu0 %495
        %499 = vset.pattern.permute.xlu0 0
        %500 = vperm.xlu0 %499, %v297
        %v501 = vpop.permute.xlu0 %500
        %504 = vset.pattern.permute.xlu0 0
        %505 = vperm.xlu0 %504, %v298
        %v506 = vpop.permute.xlu0 %505
        %509 = vset.pattern.permute.xlu0 0
        %510 = vperm.xlu0 %509, %v299
        %v511 = vpop.permute.xlu0 %510
        %514 = vset.pattern.permute.xlu0 0
        %515 = vperm.xlu0 %514, %v300
        %v516 = vpop.permute.xlu0 %515
        %519 = vset.pattern.permute.xlu0 0
        %520 = vperm.xlu0 %519, %v301
        %v521 = vpop.permute.xlu0 %520
        %524 = vset.pattern.permute.xlu0 0
        %525 = vperm.xlu0 %524, %v302
        %v526 = vpop.permute.xlu0 %525
        %529 = vset.pattern.permute.xlu0 0
        %530 = vperm.xlu0 %529, %v303
        %v531 = vpop.permute.xlu0 %530
        %534 = vset.pattern.permute.xlu0 0
        %535 = vperm.xlu0 %534, %v304
        %v536 = vpop.permute.xlu0 %535
        %539 = vset.pattern.permute.xlu0 0
        %540 = vperm.xlu0 %539, %v305
        %v541 = vpop.permute.xlu0 %540
        %544 = vset.pattern.permute.xlu0 0
        %545 = vperm.xlu0 %544, %v306
        %v546 = vpop.permute.xlu0 %545
        %549 = vset.pattern.permute.xlu0 0
        %550 = vperm.xlu0 %549, %v307
        %v551 = vpop.permute.xlu0 %550
        %554 = vset.pattern.permute.xlu0 0
        %555 = vperm.xlu0 %554, %v308
        %v556 = vpop.permute.xlu0 %555
        %559 = vset.pattern.permute.xlu0 0
        %560 = vperm.xlu0 %559, %v309
        %v561 = vpop.permute.xlu0 %560
        %564 = vset.pattern.permute.xlu0 0
        %565 = vperm.xlu0 %564, %v310
        %v566 = vpop.permute.xlu0 %565
        %569 = vset.pattern.permute.xlu0 0
        %570 = vperm.xlu0 %569, %v311
        %v571 = vpop.permute.xlu0 %570
        %574 = vset.pattern.permute.xlu0 0
        %575 = vperm.xlu0 %574, %v312
        %v576 = vpop.permute.xlu0 %575
        %579 = vset.pattern.permute.xlu0 0
        %580 = vperm.xlu0 %579, %v313
        %v581 = vpop.permute.xlu0 %580
        %584 = vset.pattern.permute.xlu0 0
        %585 = vperm.xlu0 %584, %v314
        %v586 = vpop.permute.xlu0 %585
        %589 = vset.pattern.permute.xlu0 0
        %590 = vperm.xlu0 %589, %v315
        %v591 = vpop.permute.xlu0 %590
        %594 = vset.pattern.permute.xlu0 0
        %595 = vperm.xlu0 %594, %v316
        %v596 = vpop.permute.xlu0 %595
        %599 = vset.pattern.permute.xlu0 0
        %600 = vperm.xlu0 %599, %v317
        %v601 = vpop.permute.xlu0 %600
        %604 = vset.pattern.permute.xlu0 0
        %605 = vperm.xlu0 %604, %v318
        %v606 = vpop.permute.xlu0 %605
        %609 = vset.pattern.permute.xlu0 0
        %610 = vperm.xlu0 %609, %v319
        %v611 = vpop.permute.xlu0 %610
        %614 = vset.pattern.permute.xlu0 0
        %615 = vperm.xlu0 %614, %v320
        %v616 = vpop.permute.xlu0 %615
        %619 = vset.pattern.permute.xlu0 0
        %620 = vperm.xlu0 %619, %v321
        %v621 = vpop.permute.xlu0 %620
        %624 = vset.pattern.permute.xlu0 0
        %625 = vperm.xlu0 %624, %v322
        %v626 = vpop.permute.xlu0 %625
        %629 = vset.pattern.permute.xlu0 0
        %630 = vperm.xlu0 %629, %v323
        %v631 = vpop.permute.xlu0 %630
        %634 = vset.pattern.permute.xlu0 0
        %635 = vperm.xlu0 %634, %v324
        %v636 = vpop.permute.xlu0 %635
        %639 = vset.pattern.permute.xlu0 0
        %640 = vperm.xlu0 %639, %v325
        %v641 = vpop.permute.xlu0 %640
        %644 = vset.pattern.permute.xlu0 0
        %645 = vperm.xlu0 %644, %v326
        %v646 = vpop.permute.xlu0 %645
        %v649 = vlaneseq
        %v650 = vshrl.u32 %v649, 7
        %v651 = vsub.s32 0, %v650
        %v652 = vrot.slane %v327, %v651
        %v654 = vmul.f32 %v331, %v652
        %v655 = vmul.f32 %v336, %v652
        %v656 = vmul.f32 %v341, %v652
        %v657 = vmul.f32 %v346, %v652
        %v658 = vmul.f32 %v351, %v652
        %v659 = vmul.f32 %v356, %v652
        %v660 = vmul.f32 %v361, %v652
        %v661 = vmul.f32 %v366, %v652
        %v662 = vmul.f32 %v371, %v652
        %v663 = vmul.f32 %v376, %v652
        %v664 = vmul.f32 %v381, %v652
        %v665 = vmul.f32 %v386, %v652
        %v666 = vmul.f32 %v391, %v652
        %v667 = vmul.f32 %v396, %v652
        %v668 = vmul.f32 %v401, %v652
        %v669 = vmul.f32 %v406, %v652
        %v670 = vmul.f32 %v411, %v652
        %v671 = vmul.f32 %v416, %v652
        %v672 = vmul.f32 %v421, %v652
        %v673 = vmul.f32 %v426, %v652
        %v674 = vmul.f32 %v431, %v652
        %v675 = vmul.f32 %v436, %v652
        %v676 = vmul.f32 %v441, %v652
        %v677 = vmul.f32 %v446, %v652
        %v678 = vmul.f32 %v451, %v652
        %v679 = vmul.f32 %v456, %v652
        %v680 = vmul.f32 %v461, %v652
        %v681 = vmul.f32 %v466, %v652
        %v682 = vmul.f32 %v471, %v652
        %v683 = vmul.f32 %v476, %v652
        %v684 = vmul.f32 %v481, %v652
        %v685 = vmul.f32 %v486, %v652
        %v686 = vmul.f32 %v491, %v652
        %v687 = vmul.f32 %v496, %v652
        %v688 = vmul.f32 %v501, %v652
        %v689 = vmul.f32 %v506, %v652
        %v690 = vmul.f32 %v511, %v652
        %v691 = vmul.f32 %v516, %v652
        %v692 = vmul.f32 %v521, %v652
        %v693 = vmul.f32 %v526, %v652
        %v694 = vmul.f32 %v531, %v652
        %v695 = vmul.f32 %v536, %v652
        %v696 = vmul.f32 %v541, %v652
        %v697 = vmul.f32 %v546, %v652
        %v698 = vmul.f32 %v551, %v652
        %v699 = vmul.f32 %v556, %v652
        %v700 = vmul.f32 %v561, %v652
        %v701 = vmul.f32 %v566, %v652
        %v702 = vmul.f32 %v571, %v652
        %v703 = vmul.f32 %v576, %v652
        %v704 = vmul.f32 %v581, %v652
        %v705 = vmul.f32 %v586, %v652
        %v706 = vmul.f32 %v591, %v652
        %v707 = vmul.f32 %v596, %v652
        %v708 = vmul.f32 %v601, %v652
        %v709 = vmul.f32 %v606, %v652
        %v710 = vmul.f32 %v611, %v652
        %v711 = vmul.f32 %v616, %v652
        %v712 = vmul.f32 %v621, %v652
        %v713 = vmul.f32 %v626, %v652
        %v714 = vmul.f32 %v631, %v652
        %v715 = vmul.f32 %v636, %v652
        %v716 = vmul.f32 %v641, %v652
        %v717 = vmul.f32 %v646, %v652
        %v718 = vld [vmem:[%s3] sm:$0x1]
        %v720 = vlaneseq
        %v721 = vshrl.u32 %v720, 7
        %v722 = vsub.s32 0, %v721
        %v723 = vrot.slane %v718, %v722
        %v725 = vadd.f32 %v654, %v723
        %v726 = vadd.f32 %v655, %v723
        %v727 = vadd.f32 %v656, %v723
        %v728 = vadd.f32 %v657, %v723
        %v729 = vadd.f32 %v658, %v723
        %v730 = vadd.f32 %v659, %v723
        %v731 = vadd.f32 %v660, %v723
        %v732 = vadd.f32 %v661, %v723
        %v733 = vadd.f32 %v662, %v723
        %v734 = vadd.f32 %v663, %v723
        %v735 = vadd.f32 %v664, %v723
        %v736 = vadd.f32 %v665, %v723
        %v737 = vadd.f32 %v666, %v723
        %v738 = vadd.f32 %v667, %v723
        %v739 = vadd.f32 %v668, %v723
        %v740 = vadd.f32 %v669, %v723
        %v741 = vadd.f32 %v670, %v723
        %v742 = vadd.f32 %v671, %v723
        %v743 = vadd.f32 %v672, %v723
        %v744 = vadd.f32 %v673, %v723
        %v745 = vadd.f32 %v674, %v723
        %v746 = vadd.f32 %v675, %v723
        %v747 = vadd.f32 %v676, %v723
        %v748 = vadd.f32 %v677, %v723
        %v749 = vadd.f32 %v678, %v723
        %v750 = vadd.f32 %v679, %v723
        %v751 = vadd.f32 %v680, %v723
        %v752 = vadd.f32 %v681, %v723
        %v753 = vadd.f32 %v682, %v723
        %v754 = vadd.f32 %v683, %v723
        %v755 = vadd.f32 %v684, %v723
        %v756 = vadd.f32 %v685, %v723
        %v757 = vadd.f32 %v686, %v723
        %v758 = vadd.f32 %v687, %v723
        %v759 = vadd.f32 %v688, %v723
        %v760 = vadd.f32 %v689, %v723
        %v761 = vadd.f32 %v690, %v723
        %v762 = vadd.f32 %v691, %v723
        %v763 = vadd.f32 %v692, %v723
        %v764 = vadd.f32 %v693, %v723
        %v765 = vadd.f32 %v694, %v723
        %v766 = vadd.f32 %v695, %v723
        %v767 = vadd.f32 %v696, %v723
        %v768 = vadd.f32 %v697, %v723
        %v769 = vadd.f32 %v698, %v723
        %v770 = vadd.f32 %v699, %v723
        %v771 = vadd.f32 %v700, %v723
        %v772 = vadd.f32 %v701, %v723
        %v773 = vadd.f32 %v702, %v723
        %v774 = vadd.f32 %v703, %v723
        %v775 = vadd.f32 %v704, %v723
        %v776 = vadd.f32 %v705, %v723
        %v777 = vadd.f32 %v706, %v723
        %v778 = vadd.f32 %v707, %v723
        %v779 = vadd.f32 %v708, %v723
        %v780 = vadd.f32 %v709, %v723
        %v781 = vadd.f32 %v710, %v723
        %v782 = vadd.f32 %v711, %v723
        %v783 = vadd.f32 %v712, %v723
        %v784 = vadd.f32 %v713, %v723
        %v785 = vadd.f32 %v714, %v723
        %v786 = vadd.f32 %v715, %v723
        %v787 = vadd.f32 %v716, %v723
        %v788 = vadd.f32 %v717, %v723
        %v789 = vand.u32 2147483647, %v725
        %vm790 = vcmp.le.f32.partialorder %v789, 0.7853982
        %vm791 = vcmp.lt.s32.totalorder %v725, 0
        %v792 = vand.u32 %v725, 2139095040
        %v793 = vshrl.u32 %v792, 23
        %v794 = vsub.s32 %v793, 127
        %v795 = vand.u32 2147483647, %v725
        %v796 = vand.u32 %v795, 8388607
        %v797 = vor.u32 %v796, 8388608
        %v798 = vsub.s32 0, %v797
        %v799 = vadd.s32 %v794, 1
        %vm800 = vcmp.gt.s32.totalorder %v799, 0
        %v801 = vsel %vm800, %v799, 0
        %v802 = vshrl.u32 %v801, 5
        %v803 = vand.u32 %v801, 31
        %v804 = vsub.s32 32, %v803
        %v805 = vshrl.u32 683565275, %v804
        %v806 = vshll.u32 683565275, %v803
        %v807 = vshrl.u32 2475754826, %v804
        %v808 = vor.u32 %v806, %v807
        %v809 = vshll.u32 2475754826, %v803
        %v810 = vshrl.u32 2131351028, %v804
        %v811 = vor.u32 %v809, %v810
        %v812 = vshll.u32 2131351028, %v803
        %v813 = vshrl.u32 2102212464, %v804
        %v814 = vor.u32 %v812, %v813
        %v815 = vshll.u32 2102212464, %v803
        %v816 = vshrl.u32 920167782, %v804
        %v817 = vor.u32 %v815, %v816
        %v818 = vshll.u32 920167782, %v803
        %v819 = vshrl.u32 1326507024, %v804
        %v820 = vor.u32 %v818, %v819
        %vm821 = vcmp.lt.s32.totalorder %v802, 1
        %vm822 = vcmp.lt.s32.totalorder %v802, 2
        %vm823 = vcmp.lt.s32.totalorder %v802, 3
        %vm824 = vcmp.lt.s32.totalorder %v802, 4
        %v825 = vsel %vm821, %v805, %v808
        %v826 = vsel %vm824, %v814, 2102212464
        %v827 = vsel %vm823, %v811, %v826
        %v828 = vsel %vm822, %v825, %v827
        %v829 = vsel %vm821, %v808, %v811
        %v830 = vsel %vm824, %v817, 920167782
        %v831 = vsel %vm823, %v814, %v830
        %v832 = vsel %vm822, %v829, %v831
        %v833 = vsel %vm821, %v811, %v814
        %v834 = vsel %vm824, %v820, 1326507024
        %v835 = vsel %vm823, %v817, %v834
        %v836 = vsel %vm822, %v833, %v835
        %v837 = vshll.u32 %v797, 8
        %v838 = vmul.u32.u64.compose %v837, %v836
        %v839 = vextract.low.u32 %v838
        %v840 = vextract.high.u32 %v838
        %v841 = vmul.u32.u64.compose %v837, %v832
        %v842 = vextract.low.u32 %v841
        %v843 = vextract.high.u32 %v841
        %v844 = vmul.u32 %v837, %v828
        %v845 = vadd.s32 %v840, %v842
        %vm846 = vc.u32 %v840, %v842
        %v847 = vadd.s32 %v843, 1
        %v848 = vsel %vm846, %v847, %v843
        %v849 = vadd.s32 %v844, %v848
        %v850 = vadd.s32 %v849, 536870912
        %v851 = vshrl.u32 %v850, 30
        %v852 = vshll.u32 %v851, 30
        %v853 = vsub.s32 %v849, %v852
        %vm854 = vcmp.lt.s32.totalorder %v853, 0
        %v855 = vsub.s32 0, %v853
        %v856 = vsel %vm854, %v855, %v853
        %v857 = vclz %v856
        %v858 = vsub.s32 %v857, 2
        %vm859 = vcmp.gt.s32.totalorder 0, %v858
        %v860 = vsel %vm859, 0, %v858
        %v861 = vsub.s32 32, %v860
        %v862 = vshll.u32 %v853, %v860
        %v863 = vshrl.u32 %v845, %v861
        %v864 = vor.u32 %v862, %v863
        %v865 = vsub.s32 4294967266, %v860
        %v866 = vadd.s32 %v865, 127
        %v867 = vshll.u32 %v866, 23
        %v868 = vor.u32 4788187, %v867
        %v869 = vand.u32 2147483647, %v868
        %v871 = vcvt.s32.f32 %v864
        %v872 = vmul.f32 %v871, %v869
        %v873 = vxor.u32 %v872, 2147483648
        %v874 = vsel %vm791, %v873, %v872
        %v875 = vsub.s32 4, %v851
        %v876 = vsel %vm791, %v875, %v851
        %v877 = vsel %vm790, %v725, %v874
        %v878 = vsel %vm790, 0, %v876
        %v879 = vcosq.f32.pop %v877
        %v880 = vsinq.f32.pop %v877
        %vm881 = vweird.f32 %v725
        %v882 = vadd.s32 %v878, 3
        %v883 = vand.u32 %v882, 3
        %vm884 = vcmp.lt.s32.totalorder %v883, 2
        %vm885 = vcmp.eq.s32.totalorder %v883, 0
        %v886 = vxor.u32 %v880, 2147483648
        %v887 = vsel %vm885, %v879, %v886
        %vm888 = vcmp.eq.s32.totalorder %v883, 2
        %v889 = vxor.u32 %v879, 2147483648
        %v890 = vsel %vm888, %v889, %v880
        %v891 = vsel %vm884, %v887, %v890
        %v892 = vsel %vm881, nan, %v891
        %v893 = vand.u32 2147483647, %v726
        %vm894 = vcmp.le.f32.partialorder %v893, 0.7853982
        %vm895 = vcmp.lt.s32.totalorder %v726, 0
        %v896 = vand.u32 %v726, 2139095040
        %v897 = vshrl.u32 %v896, 23
        %v898 = vsub.s32 %v897, 127
        %v899 = vand.u32 2147483647, %v726
        %v900 = vand.u32 %v899, 8388607
        %v901 = vor.u32 %v900, 8388608
        %v902 = vsub.s32 0, %v901
        %v903 = vadd.s32 %v898, 1
        %vm904 = vcmp.gt.s32.totalorder %v903, 0
        %v905 = vsel %vm904, %v903, 0
        %v906 = vshrl.u32 %v905, 5
        %v907 = vand.u32 %v905, 31
        %v908 = vsub.s32 32, %v907
        %v909 = vshrl.u32 683565275, %v908
        %v910 = vshll.u32 683565275, %v907
        %v911 = vshrl.u32 2475754826, %v908
        %v912 = vor.u32 %v910, %v911
        %v913 = vshll.u32 2475754826, %v907
        %v914 = vshrl.u32 2131351028, %v908
        %v915 = vor.u32 %v913, %v914
        %v916 = vshll.u32 2131351028, %v907
        %v917 = vshrl.u32 2102212464, %v908
        %v918 = vor.u32 %v916, %v917
        %v919 = vshll.u32 2102212464, %v907
        %v920 = vshrl.u32 920167782, %v908
        %v921 = vor.u32 %v919, %v920
        %v922 = vshll.u32 920167782, %v907
        %v923 = vshrl.u32 1326507024, %v908
        %v924 = vor.u32 %v922, %v923
        %vm925 = vcmp.lt.s32.totalorder %v906, 1
        %vm926 = vcmp.lt.s32.totalorder %v906, 2
        %vm927 = vcmp.lt.s32.totalorder %v906, 3
        %vm928 = vcmp.lt.s32.totalorder %v906, 4
        %v929 = vsel %vm925, %v909, %v912
        %v930 = vsel %vm928, %v918, 2102212464
        %v931 = vsel %vm927, %v915, %v930
        %v932 = vsel %vm926, %v929, %v931
        %v933 = vsel %vm925, %v912, %v915
        %v934 = vsel %vm928, %v921, 920167782
        %v935 = vsel %vm927, %v918, %v934
        %v936 = vsel %vm926, %v933, %v935
        %v937 = vsel %vm925, %v915, %v918
        %v938 = vsel %vm928, %v924, 1326507024
        %v939 = vsel %vm927, %v921, %v938
        %v940 = vsel %vm926, %v937, %v939
        %v941 = vshll.u32 %v901, 8
        %v942 = vmul.u32.u64.compose %v941, %v940
        %v943 = vextract.low.u32 %v942
        %v944 = vextract.high.u32 %v942
        %v945 = vmul.u32.u64.compose %v941, %v936
        %v946 = vextract.low.u32 %v945
        %v947 = vextract.high.u32 %v945
        %v948 = vmul.u32 %v941, %v932
        %v949 = vadd.s32 %v944, %v946
        %vm950 = vc.u32 %v944, %v946
        %v951 = vadd.s32 %v947, 1
        %v952 = vsel %vm950, %v951, %v947
        %v953 = vadd.s32 %v948, %v952
        %v954 = vadd.s32 %v953, 536870912
        %v955 = vshrl.u32 %v954, 30
        %v956 = vshll.u32 %v955, 30
        %v957 = vsub.s32 %v953, %v956
        %vm958 = vcmp.lt.s32.totalorder %v957, 0
        %v959 = vsub.s32 0, %v957
        %v960 = vsel %vm958, %v959, %v957
        %v961 = vclz %v960
        %v962 = vsub.s32 %v961, 2
        %vm963 = vcmp.gt.s32.totalorder 0, %v962
        %v964 = vsel %vm963, 0, %v962
        %v965 = vsub.s32 32, %v964
        %v966 = vshll.u32 %v957, %v964
        %v967 = vshrl.u32 %v949, %v965
        %v968 = vor.u32 %v966, %v967
        %v969 = vsub.s32 4294967266, %v964
        %v970 = vadd.s32 %v969, 127
        %v971 = vshll.u32 %v970, 23
        %v972 = vor.u32 4788187, %v971
        %v973 = vand.u32 2147483647, %v972
        %v975 = vcvt.s32.f32 %v968
        %v976 = vmul.f32 %v975, %v973
        %v977 = vxor.u32 %v976, 2147483648
        %v978 = vsel %vm895, %v977, %v976
        %v979 = vsub.s32 4, %v955
        %v980 = vsel %vm895, %v979, %v955
        %v981 = vsel %vm894, %v726, %v978
        %v982 = vsel %vm894, 0, %v980
        %v983 = vcosq.f32.pop %v981
        %v984 = vsinq.f32.pop %v981
        %vm985 = vweird.f32 %v726
        %v986 = vadd.s32 %v982, 3
        %v987 = vand.u32 %v986, 3
        %vm988 = vcmp.lt.s32.totalorder %v987, 2
        %vm989 = vcmp.eq.s32.totalorder %v987, 0
        %v990 = vxor.u32 %v984, 2147483648
        %v991 = vsel %vm989, %v983, %v990
        %vm992 = vcmp.eq.s32.totalorder %v987, 2
        %v993 = vxor.u32 %v983, 2147483648
        %v994 = vsel %vm992, %v993, %v984
        %v995 = vsel %vm988, %v991, %v994
        %v996 = vsel %vm985, nan, %v995
        %v997 = vand.u32 2147483647, %v727
        %vm998 = vcmp.le.f32.partialorder %v997, 0.7853982
        %vm999 = vcmp.lt.s32.totalorder %v727, 0
        %v1000 = vand.u32 %v727, 2139095040
        %v1001 = vshrl.u32 %v1000, 23
        %v1002 = vsub.s32 %v1001, 127
        %v1003 = vand.u32 2147483647, %v727
        %v1004 = vand.u32 %v1003, 8388607
        %v1005 = vor.u32 %v1004, 8388608
        %v1006 = vsub.s32 0, %v1005
        %v1007 = vadd.s32 %v1002, 1
        %vm1008 = vcmp.gt.s32.totalorder %v1007, 0
        %v1009 = vsel %vm1008, %v1007, 0
        %v1010 = vshrl.u32 %v1009, 5
        %v1011 = vand.u32 %v1009, 31
        %v1012 = vsub.s32 32, %v1011
        %v1013 = vshrl.u32 683565275, %v1012
        %v1014 = vshll.u32 683565275, %v1011
        %v1015 = vshrl.u32 2475754826, %v1012
        %v1016 = vor.u32 %v1014, %v1015
        %v1017 = vshll.u32 2475754826, %v1011
        %v1018 = vshrl.u32 2131351028, %v1012
        %v1019 = vor.u32 %v1017, %v1018
        %v1020 = vshll.u32 2131351028, %v1011
        %v1021 = vshrl.u32 2102212464, %v1012
        %v1022 = vor.u32 %v1020, %v1021
        %v1023 = vshll.u32 2102212464, %v1011
        %v1024 = vshrl.u32 920167782, %v1012
        %v1025 = vor.u32 %v1023, %v1024
        %v1026 = vshll.u32 920167782, %v1011
        %v1027 = vshrl.u32 1326507024, %v1012
        %v1028 = vor.u32 %v1026, %v1027
        %vm1029 = vcmp.lt.s32.totalorder %v1010, 1
        %vm1030 = vcmp.lt.s32.totalorder %v1010, 2
        %vm1031 = vcmp.lt.s32.totalorder %v1010, 3
        %vm1032 = vcmp.lt.s32.totalorder %v1010, 4
        %v1033 = vsel %vm1029, %v1013, %v1016
        %v1034 = vsel %vm1032, %v1022, 2102212464
        %v1035 = vsel %vm1031, %v1019, %v1034
        %v1036 = vsel %vm1030, %v1033, %v1035
        %v1037 = vsel %vm1029, %v1016, %v1019
        %v1038 = vsel %vm1032, %v1025, 920167782
        %v1039 = vsel %vm1031, %v1022, %v1038
        %v1040 = vsel %vm1030, %v1037, %v1039
        %v1041 = vsel %vm1029, %v1019, %v1022
        %v1042 = vsel %vm1032, %v1028, 1326507024
        %v1043 = vsel %vm1031, %v1025, %v1042
        %v1044 = vsel %vm1030, %v1041, %v1043
        %v1045 = vshll.u32 %v1005, 8
        %v1046 = vmul.u32.u64.compose %v1045, %v1044
        %v1047 = vextract.low.u32 %v1046
        %v1048 = vextract.high.u32 %v1046
        %v1049 = vmul.u32.u64.compose %v1045, %v1040
        %v1050 = vextract.low.u32 %v1049
        %v1051 = vextract.high.u32 %v1049
        %v1052 = vmul.u32 %v1045, %v1036
        %v1053 = vadd.s32 %v1048, %v1050
        %vm1054 = vc.u32 %v1048, %v1050
        %v1055 = vadd.s32 %v1051, 1
        %v1056 = vsel %vm1054, %v1055, %v1051
        %v1057 = vadd.s32 %v1052, %v1056
        %v1058 = vadd.s32 %v1057, 536870912
        %v1059 = vshrl.u32 %v1058, 30
        %v1060 = vshll.u32 %v1059, 30
        %v1061 = vsub.s32 %v1057, %v1060
        %vm1062 = vcmp.lt.s32.totalorder %v1061, 0
        %v1063 = vsub.s32 0, %v1061
        %v1064 = vsel %vm1062, %v1063, %v1061
        %v1065 = vclz %v1064
        %v1066 = vsub.s32 %v1065, 2
        %vm1067 = vcmp.gt.s32.totalorder 0, %v1066
        %v1068 = vsel %vm1067, 0, %v1066
        %v1069 = vsub.s32 32, %v1068
        %v1070 = vshll.u32 %v1061, %v1068
        %v1071 = vshrl.u32 %v1053, %v1069
        %v1072 = vor.u32 %v1070, %v1071
        %v1073 = vsub.s32 4294967266, %v1068
        %v1074 = vadd.s32 %v1073, 127
        %v1075 = vshll.u32 %v1074, 23
        %v1076 = vor.u32 4788187, %v1075
        %v1077 = vand.u32 2147483647, %v1076
        %v1079 = vcvt.s32.f32 %v1072
        %v1080 = vmul.f32 %v1079, %v1077
        %v1081 = vxor.u32 %v1080, 2147483648
        %v1082 = vsel %vm999, %v1081, %v1080
        %v1083 = vsub.s32 4, %v1059
        %v1084 = vsel %vm999, %v1083, %v1059
        %v1085 = vsel %vm998, %v727, %v1082
        %v1086 = vsel %vm998, 0, %v1084
        %v1087 = vcosq.f32.pop %v1085
        %v1088 = vsinq.f32.pop %v1085
        %vm1089 = vweird.f32 %v727
        %v1090 = vadd.s32 %v1086, 3
        %v1091 = vand.u32 %v1090, 3
        %vm1092 = vcmp.lt.s32.totalorder %v1091, 2
        %vm1093 = vcmp.eq.s32.totalorder %v1091, 0
        %v1094 = vxor.u32 %v1088, 2147483648
        %v1095 = vsel %vm1093, %v1087, %v1094
        %vm1096 = vcmp.eq.s32.totalorder %v1091, 2
        %v1097 = vxor.u32 %v1087, 2147483648
        %v1098 = vsel %vm1096, %v1097, %v1088
        %v1099 = vsel %vm1092, %v1095, %v1098
        %v1100 = vsel %vm1089, nan, %v1099
        %v1101 = vand.u32 2147483647, %v728
        %vm1102 = vcmp.le.f32.partialorder %v1101, 0.7853982
        %vm1103 = vcmp.lt.s32.totalorder %v728, 0
        %v1104 = vand.u32 %v728, 2139095040
        %v1105 = vshrl.u32 %v1104, 23
        %v1106 = vsub.s32 %v1105, 127
        %v1107 = vand.u32 2147483647, %v728
        %v1108 = vand.u32 %v1107, 8388607
        %v1109 = vor.u32 %v1108, 8388608
        %v1110 = vsub.s32 0, %v1109
        %v1111 = vadd.s32 %v1106, 1
        %vm1112 = vcmp.gt.s32.totalorder %v1111, 0
        %v1113 = vsel %vm1112, %v1111, 0
        %v1114 = vshrl.u32 %v1113, 5
        %v1115 = vand.u32 %v1113, 31
        %v1116 = vsub.s32 32, %v1115
        %v1117 = vshrl.u32 683565275, %v1116
        %v1118 = vshll.u32 683565275, %v1115
        %v1119 = vshrl.u32 2475754826, %v1116
        %v1120 = vor.u32 %v1118, %v1119
        %v1121 = vshll.u32 2475754826, %v1115
        %v1122 = vshrl.u32 2131351028, %v1116
        %v1123 = vor.u32 %v1121, %v1122
        %v1124 = vshll.u32 2131351028, %v1115
        %v1125 = vshrl.u32 2102212464, %v1116
        %v1126 = vor.u32 %v1124, %v1125
        %v1127 = vshll.u32 2102212464, %v1115
        %v1128 = vshrl.u32 920167782, %v1116
        %v1129 = vor.u32 %v1127, %v1128
        %v1130 = vshll.u32 920167782, %v1115
        %v1131 = vshrl.u32 1326507024, %v1116
        %v1132 = vor.u32 %v1130, %v1131
        %vm1133 = vcmp.lt.s32.totalorder %v1114, 1
        %vm1134 = vcmp.lt.s32.totalorder %v1114, 2
        %vm1135 = vcmp.lt.s32.totalorder %v1114, 3
        %vm1136 = vcmp.lt.s32.totalorder %v1114, 4
        %v1137 = vsel %vm1133, %v1117, %v1120
        %v1138 = vsel %vm1136, %v1126, 2102212464
        %v1139 = vsel %vm1135, %v1123, %v1138
        %v1140 = vsel %vm1134, %v1137, %v1139
        %v1141 = vsel %vm1133, %v1120, %v1123
        %v1142 = vsel %vm1136, %v1129, 920167782
        %v1143 = vsel %vm1135, %v1126, %v1142
        %v1144 = vsel %vm1134, %v1141, %v1143
        %v1145 = vsel %vm1133, %v1123, %v1126
        %v1146 = vsel %vm1136, %v1132, 1326507024
        %v1147 = vsel %vm1135, %v1129, %v1146
        %v1148 = vsel %vm1134, %v1145, %v1147
        %v1149 = vshll.u32 %v1109, 8
        %v1150 = vmul.u32.u64.compose %v1149, %v1148
        %v1151 = vextract.low.u32 %v1150
        %v1152 = vextract.high.u32 %v1150
        %v1153 = vmul.u32.u64.compose %v1149, %v1144
        %v1154 = vextract.low.u32 %v1153
        %v1155 = vextract.high.u32 %v1153
        %v1156 = vmul.u32 %v1149, %v1140
        %v1157 = vadd.s32 %v1152, %v1154
        %vm1158 = vc.u32 %v1152, %v1154
        %v1159 = vadd.s32 %v1155, 1
        %v1160 = vsel %vm1158, %v1159, %v1155
        %v1161 = vadd.s32 %v1156, %v1160
        %v1162 = vadd.s32 %v1161, 536870912
        %v1163 = vshrl.u32 %v1162, 30
        %v1164 = vshll.u32 %v1163, 30
        %v1165 = vsub.s32 %v1161, %v1164
        %vm1166 = vcmp.lt.s32.totalorder %v1165, 0
        %v1167 = vsub.s32 0, %v1165
        %v1168 = vsel %vm1166, %v1167, %v1165
        %v1169 = vclz %v1168
        %v1170 = vsub.s32 %v1169, 2
        %vm1171 = vcmp.gt.s32.totalorder 0, %v1170
        %v1172 = vsel %vm1171, 0, %v1170
        %v1173 = vsub.s32 32, %v1172
        %v1174 = vshll.u32 %v1165, %v1172
        %v1175 = vshrl.u32 %v1157, %v1173
        %v1176 = vor.u32 %v1174, %v1175
        %v1177 = vsub.s32 4294967266, %v1172
        %v1178 = vadd.s32 %v1177, 127
        %v1179 = vshll.u32 %v1178, 23
        %v1180 = vor.u32 4788187, %v1179
        %v1181 = vand.u32 2147483647, %v1180
        %v1183 = vcvt.s32.f32 %v1176
        %v1184 = vmul.f32 %v1183, %v1181
        %v1185 = vxor.u32 %v1184, 2147483648
        %v1186 = vsel %vm1103, %v1185, %v1184
        %v1187 = vsub.s32 4, %v1163
        %v1188 = vsel %vm1103, %v1187, %v1163
        %v1189 = vsel %vm1102, %v728, %v1186
        %v1190 = vsel %vm1102, 0, %v1188
        %v1191 = vcosq.f32.pop %v1189
        %v1192 = vsinq.f32.pop %v1189
        %vm1193 = vweird.f32 %v728
        %v1194 = vadd.s32 %v1190, 3
        %v1195 = vand.u32 %v1194, 3
        %vm1196 = vcmp.lt.s32.totalorder %v1195, 2
        %vm1197 = vcmp.eq.s32.totalorder %v1195, 0
        %v1198 = vxor.u32 %v1192, 2147483648
        %v1199 = vsel %vm1197, %v1191, %v1198
        %vm1200 = vcmp.eq.s32.totalorder %v1195, 2
        %v1201 = vxor.u32 %v1191, 2147483648
        %v1202 = vsel %vm1200, %v1201, %v1192
        %v1203 = vsel %vm1196, %v1199, %v1202
        %v1204 = vsel %vm1193, nan, %v1203
        %v1205 = vand.u32 2147483647, %v729
        %vm1206 = vcmp.le.f32.partialorder %v1205, 0.7853982
        %vm1207 = vcmp.lt.s32.totalorder %v729, 0
        %v1208 = vand.u32 %v729, 2139095040
        %v1209 = vshrl.u32 %v1208, 23
        %v1210 = vsub.s32 %v1209, 127
        %v1211 = vand.u32 2147483647, %v729
        %v1212 = vand.u32 %v1211, 8388607
        %v1213 = vor.u32 %v1212, 8388608
        %v1214 = vsub.s32 0, %v1213
        %v1215 = vadd.s32 %v1210, 1
        %vm1216 = vcmp.gt.s32.totalorder %v1215, 0
        %v1217 = vsel %vm1216, %v1215, 0
        %v1218 = vshrl.u32 %v1217, 5
        %v1219 = vand.u32 %v1217, 31
        %v1220 = vsub.s32 32, %v1219
        %v1221 = vshrl.u32 683565275, %v1220
        %v1222 = vshll.u32 683565275, %v1219
        %v1223 = vshrl.u32 2475754826, %v1220
        %v1224 = vor.u32 %v1222, %v1223
        %v1225 = vshll.u32 2475754826, %v1219
        %v1226 = vshrl.u32 2131351028, %v1220
        %v1227 = vor.u32 %v1225, %v1226
        %v1228 = vshll.u32 2131351028, %v1219
        %v1229 = vshrl.u32 2102212464, %v1220
        %v1230 = vor.u32 %v1228, %v1229
        %v1231 = vshll.u32 2102212464, %v1219
        %v1232 = vshrl.u32 920167782, %v1220
        %v1233 = vor.u32 %v1231, %v1232
        %v1234 = vshll.u32 920167782, %v1219
        %v1235 = vshrl.u32 1326507024, %v1220
        %v1236 = vor.u32 %v1234, %v1235
        %vm1237 = vcmp.lt.s32.totalorder %v1218, 1
        %vm1238 = vcmp.lt.s32.totalorder %v1218, 2
        %vm1239 = vcmp.lt.s32.totalorder %v1218, 3
        %vm1240 = vcmp.lt.s32.totalorder %v1218, 4
        %v1241 = vsel %vm1237, %v1221, %v1224
        %v1242 = vsel %vm1240, %v1230, 2102212464
        %v1243 = vsel %vm1239, %v1227, %v1242
        %v1244 = vsel %vm1238, %v1241, %v1243
        %v1245 = vsel %vm1237, %v1224, %v1227
        %v1246 = vsel %vm1240, %v1233, 920167782
        %v1247 = vsel %vm1239, %v1230, %v1246
        %v1248 = vsel %vm1238, %v1245, %v1247
        %v1249 = vsel %vm1237, %v1227, %v1230
        %v1250 = vsel %vm1240, %v1236, 1326507024
        %v1251 = vsel %vm1239, %v1233, %v1250
        %v1252 = vsel %vm1238, %v1249, %v1251
        %v1253 = vshll.u32 %v1213, 8
        %v1254 = vmul.u32.u64.compose %v1253, %v1252
        %v1255 = vextract.low.u32 %v1254
        %v1256 = vextract.high.u32 %v1254
        %v1257 = vmul.u32.u64.compose %v1253, %v1248
        %v1258 = vextract.low.u32 %v1257
        %v1259 = vextract.high.u32 %v1257
        %v1260 = vmul.u32 %v1253, %v1244
        %v1261 = vadd.s32 %v1256, %v1258
        %vm1262 = vc.u32 %v1256, %v1258
        %v1263 = vadd.s32 %v1259, 1
        %v1264 = vsel %vm1262, %v1263, %v1259
        %v1265 = vadd.s32 %v1260, %v1264
        %v1266 = vadd.s32 %v1265, 536870912
        %v1267 = vshrl.u32 %v1266, 30
        %v1268 = vshll.u32 %v1267, 30
        %v1269 = vsub.s32 %v1265, %v1268
        %vm1270 = vcmp.lt.s32.totalorder %v1269, 0
        %v1271 = vsub.s32 0, %v1269
        %v1272 = vsel %vm1270, %v1271, %v1269
        %v1273 = vclz %v1272
        %v1274 = vsub.s32 %v1273, 2
        %vm1275 = vcmp.gt.s32.totalorder 0, %v1274
        %v1276 = vsel %vm1275, 0, %v1274
        %v1277 = vsub.s32 32, %v1276
        %v1278 = vshll.u32 %v1269, %v1276
        %v1279 = vshrl.u32 %v1261, %v1277
        %v1280 = vor.u32 %v1278, %v1279
        %v1281 = vsub.s32 4294967266, %v1276
        %v1282 = vadd.s32 %v1281, 127
        %v1283 = vshll.u32 %v1282, 23
        %v1284 = vor.u32 4788187, %v1283
        %v1285 = vand.u32 2147483647, %v1284
        %v1287 = vcvt.s32.f32 %v1280
        %v1288 = vmul.f32 %v1287, %v1285
        %v1289 = vxor.u32 %v1288, 2147483648
        %v1290 = vsel %vm1207, %v1289, %v1288
        %v1291 = vsub.s32 4, %v1267
        %v1292 = vsel %vm1207, %v1291, %v1267
        %v1293 = vsel %vm1206, %v729, %v1290
        %v1294 = vsel %vm1206, 0, %v1292
        %v1295 = vcosq.f32.pop %v1293
        %v1296 = vsinq.f32.pop %v1293
        %vm1297 = vweird.f32 %v729
        %v1298 = vadd.s32 %v1294, 3
        %v1299 = vand.u32 %v1298, 3
        %vm1300 = vcmp.lt.s32.totalorder %v1299, 2
        %vm1301 = vcmp.eq.s32.totalorder %v1299, 0
        %v1302 = vxor.u32 %v1296, 2147483648
        %v1303 = vsel %vm1301, %v1295, %v1302
        %vm1304 = vcmp.eq.s32.totalorder %v1299, 2
        %v1305 = vxor.u32 %v1295, 2147483648
        %v1306 = vsel %vm1304, %v1305, %v1296
        %v1307 = vsel %vm1300, %v1303, %v1306
        %v1308 = vsel %vm1297, nan, %v1307
        %v1309 = vand.u32 2147483647, %v730
        %vm1310 = vcmp.le.f32.partialorder %v1309, 0.7853982
        %vm1311 = vcmp.lt.s32.totalorder %v730, 0
        %v1312 = vand.u32 %v730, 2139095040
        %v1313 = vshrl.u32 %v1312, 23
        %v1314 = vsub.s32 %v1313, 127
        %v1315 = vand.u32 2147483647, %v730
        %v1316 = vand.u32 %v1315, 8388607
        %v1317 = vor.u32 %v1316, 8388608
        %v1318 = vsub.s32 0, %v1317
        %v1319 = vadd.s32 %v1314, 1
        %vm1320 = vcmp.gt.s32.totalorder %v1319, 0
        %v1321 = vsel %vm1320, %v1319, 0
        %v1322 = vshrl.u32 %v1321, 5
        %v1323 = vand.u32 %v1321, 31
        %v1324 = vsub.s32 32, %v1323
        %v1325 = vshrl.u32 683565275, %v1324
        %v1326 = vshll.u32 683565275, %v1323
        %v1327 = vshrl.u32 2475754826, %v1324
        %v1328 = vor.u32 %v1326, %v1327
        %v1329 = vshll.u32 2475754826, %v1323
        %v1330 = vshrl.u32 2131351028, %v1324
        %v1331 = vor.u32 %v1329, %v1330
        %v1332 = vshll.u32 2131351028, %v1323
        %v1333 = vshrl.u32 2102212464, %v1324
        %v1334 = vor.u32 %v1332, %v1333
        %v1335 = vshll.u32 2102212464, %v1323
        %v1336 = vshrl.u32 920167782, %v1324
        %v1337 = vor.u32 %v1335, %v1336
        %v1338 = vshll.u32 920167782, %v1323
        %v1339 = vshrl.u32 1326507024, %v1324
        %v1340 = vor.u32 %v1338, %v1339
        %vm1341 = vcmp.lt.s32.totalorder %v1322, 1
        %vm1342 = vcmp.lt.s32.totalorder %v1322, 2
        %vm1343 = vcmp.lt.s32.totalorder %v1322, 3
        %vm1344 = vcmp.lt.s32.totalorder %v1322, 4
        %v1345 = vsel %vm1341, %v1325, %v1328
        %v1346 = vsel %vm1344, %v1334, 2102212464
        %v1347 = vsel %vm1343, %v1331, %v1346
        %v1348 = vsel %vm1342, %v1345, %v1347
        %v1349 = vsel %vm1341, %v1328, %v1331
        %v1350 = vsel %vm1344, %v1337, 920167782
        %v1351 = vsel %vm1343, %v1334, %v1350
        %v1352 = vsel %vm1342, %v1349, %v1351
        %v1353 = vsel %vm1341, %v1331, %v1334
        %v1354 = vsel %vm1344, %v1340, 1326507024
        %v1355 = vsel %vm1343, %v1337, %v1354
        %v1356 = vsel %vm1342, %v1353, %v1355
        %v1357 = vshll.u32 %v1317, 8
        %v1358 = vmul.u32.u64.compose %v1357, %v1356
        %v1359 = vextract.low.u32 %v1358
        %v1360 = vextract.high.u32 %v1358
        %v1361 = vmul.u32.u64.compose %v1357, %v1352
        %v1362 = vextract.low.u32 %v1361
        %v1363 = vextract.high.u32 %v1361
        %v1364 = vmul.u32 %v1357, %v1348
        %v1365 = vadd.s32 %v1360, %v1362
        %vm1366 = vc.u32 %v1360, %v1362
        %v1367 = vadd.s32 %v1363, 1
        %v1368 = vsel %vm1366, %v1367, %v1363
        %v1369 = vadd.s32 %v1364, %v1368
        %v1370 = vadd.s32 %v1369, 536870912
        %v1371 = vshrl.u32 %v1370, 30
        %v1372 = vshll.u32 %v1371, 30
        %v1373 = vsub.s32 %v1369, %v1372
        %vm1374 = vcmp.lt.s32.totalorder %v1373, 0
        %v1375 = vsub.s32 0, %v1373
        %v1376 = vsel %vm1374, %v1375, %v1373
        %v1377 = vclz %v1376
        %v1378 = vsub.s32 %v1377, 2
        %vm1379 = vcmp.gt.s32.totalorder 0, %v1378
        %v1380 = vsel %vm1379, 0, %v1378
        %v1381 = vsub.s32 32, %v1380
        %v1382 = vshll.u32 %v1373, %v1380
        %v1383 = vshrl.u32 %v1365, %v1381
        %v1384 = vor.u32 %v1382, %v1383
        %v1385 = vsub.s32 4294967266, %v1380
        %v1386 = vadd.s32 %v1385, 127
        %v1387 = vshll.u32 %v1386, 23
        %v1388 = vor.u32 4788187, %v1387
        %v1389 = vand.u32 2147483647, %v1388
        %v1391 = vcvt.s32.f32 %v1384
        %v1392 = vmul.f32 %v1391, %v1389
        %v1393 = vxor.u32 %v1392, 2147483648
        %v1394 = vsel %vm1311, %v1393, %v1392
        %v1395 = vsub.s32 4, %v1371
        %v1396 = vsel %vm1311, %v1395, %v1371
        %v1397 = vsel %vm1310, %v730, %v1394
        %v1398 = vsel %vm1310, 0, %v1396
        %v1399 = vcosq.f32.pop %v1397
        %v1400 = vsinq.f32.pop %v1397
        %vm1401 = vweird.f32 %v730
        %v1402 = vadd.s32 %v1398, 3
        %v1403 = vand.u32 %v1402, 3
        %vm1404 = vcmp.lt.s32.totalorder %v1403, 2
        %vm1405 = vcmp.eq.s32.totalorder %v1403, 0
        %v1406 = vxor.u32 %v1400, 2147483648
        %v1407 = vsel %vm1405, %v1399, %v1406
        %vm1408 = vcmp.eq.s32.totalorder %v1403, 2
        %v1409 = vxor.u32 %v1399, 2147483648
        %v1410 = vsel %vm1408, %v1409, %v1400
        %v1411 = vsel %vm1404, %v1407, %v1410
        %v1412 = vsel %vm1401, nan, %v1411
        %v1413 = vand.u32 2147483647, %v731
        %vm1414 = vcmp.le.f32.partialorder %v1413, 0.7853982
        %vm1415 = vcmp.lt.s32.totalorder %v731, 0
        %v1416 = vand.u32 %v731, 2139095040
        %v1417 = vshrl.u32 %v1416, 23
        %v1418 = vsub.s32 %v1417, 127
        %v1419 = vand.u32 2147483647, %v731
        %v1420 = vand.u32 %v1419, 8388607
        %v1421 = vor.u32 %v1420, 8388608
        %v1422 = vsub.s32 0, %v1421
        %v1423 = vadd.s32 %v1418, 1
        %vm1424 = vcmp.gt.s32.totalorder %v1423, 0
        %v1425 = vsel %vm1424, %v1423, 0
        %v1426 = vshrl.u32 %v1425, 5
        %v1427 = vand.u32 %v1425, 31
        %v1428 = vsub.s32 32, %v1427
        %v1429 = vshrl.u32 683565275, %v1428
        %v1430 = vshll.u32 683565275, %v1427
        %v1431 = vshrl.u32 2475754826, %v1428
        %v1432 = vor.u32 %v1430, %v1431
        %v1433 = vshll.u32 2475754826, %v1427
        %v1434 = vshrl.u32 2131351028, %v1428
        %v1435 = vor.u32 %v1433, %v1434
        %v1436 = vshll.u32 2131351028, %v1427
        %v1437 = vshrl.u32 2102212464, %v1428
        %v1438 = vor.u32 %v1436, %v1437
        %v1439 = vshll.u32 2102212464, %v1427
        %v1440 = vshrl.u32 920167782, %v1428
        %v1441 = vor.u32 %v1439, %v1440
        %v1442 = vshll.u32 920167782, %v1427
        %v1443 = vshrl.u32 1326507024, %v1428
        %v1444 = vor.u32 %v1442, %v1443
        %vm1445 = vcmp.lt.s32.totalorder %v1426, 1
        %vm1446 = vcmp.lt.s32.totalorder %v1426, 2
        %vm1447 = vcmp.lt.s32.totalorder %v1426, 3
        %vm1448 = vcmp.lt.s32.totalorder %v1426, 4
        %v1449 = vsel %vm1445, %v1429, %v1432
        %v1450 = vsel %vm1448, %v1438, 2102212464
        %v1451 = vsel %vm1447, %v1435, %v1450
        %v1452 = vsel %vm1446, %v1449, %v1451
        %v1453 = vsel %vm1445, %v1432, %v1435
        %v1454 = vsel %vm1448, %v1441, 920167782
        %v1455 = vsel %vm1447, %v1438, %v1454
        %v1456 = vsel %vm1446, %v1453, %v1455
        %v1457 = vsel %vm1445, %v1435, %v1438
        %v1458 = vsel %vm1448, %v1444, 1326507024
        %v1459 = vsel %vm1447, %v1441, %v1458
        %v1460 = vsel %vm1446, %v1457, %v1459
        %v1461 = vshll.u32 %v1421, 8
        %v1462 = vmul.u32.u64.compose %v1461, %v1460
        %v1463 = vextract.low.u32 %v1462
        %v1464 = vextract.high.u32 %v1462
        %v1465 = vmul.u32.u64.compose %v1461, %v1456
        %v1466 = vextract.low.u32 %v1465
        %v1467 = vextract.high.u32 %v1465
        %v1468 = vmul.u32 %v1461, %v1452
        %v1469 = vadd.s32 %v1464, %v1466
        %vm1470 = vc.u32 %v1464, %v1466
        %v1471 = vadd.s32 %v1467, 1
        %v1472 = vsel %vm1470, %v1471, %v1467
        %v1473 = vadd.s32 %v1468, %v1472
        %v1474 = vadd.s32 %v1473, 536870912
        %v1475 = vshrl.u32 %v1474, 30
        %v1476 = vshll.u32 %v1475, 30
        %v1477 = vsub.s32 %v1473, %v1476
        %vm1478 = vcmp.lt.s32.totalorder %v1477, 0
        %v1479 = vsub.s32 0, %v1477
        %v1480 = vsel %vm1478, %v1479, %v1477
        %v1481 = vclz %v1480
        %v1482 = vsub.s32 %v1481, 2
        %vm1483 = vcmp.gt.s32.totalorder 0, %v1482
        %v1484 = vsel %vm1483, 0, %v1482
        %v1485 = vsub.s32 32, %v1484
        %v1486 = vshll.u32 %v1477, %v1484
        %v1487 = vshrl.u32 %v1469, %v1485
        %v1488 = vor.u32 %v1486, %v1487
        %v1489 = vsub.s32 4294967266, %v1484
        %v1490 = vadd.s32 %v1489, 127
        %v1491 = vshll.u32 %v1490, 23
        %v1492 = vor.u32 4788187, %v1491
        %v1493 = vand.u32 2147483647, %v1492
        %v1495 = vcvt.s32.f32 %v1488
        %v1496 = vmul.f32 %v1495, %v1493
        %v1497 = vxor.u32 %v1496, 2147483648
        %v1498 = vsel %vm1415, %v1497, %v1496
        %v1499 = vsub.s32 4, %v1475
        %v1500 = vsel %vm1415, %v1499, %v1475
        %v1501 = vsel %vm1414, %v731, %v1498
        %v1502 = vsel %vm1414, 0, %v1500
        %v1503 = vcosq.f32.pop %v1501
        %v1504 = vsinq.f32.pop %v1501
        %vm1505 = vweird.f32 %v731
        %v1506 = vadd.s32 %v1502, 3
        %v1507 = vand.u32 %v1506, 3
        %vm1508 = vcmp.lt.s32.totalorder %v1507, 2
        %vm1509 = vcmp.eq.s32.totalorder %v1507, 0
        %v1510 = vxor.u32 %v1504, 2147483648
        %v1511 = vsel %vm1509, %v1503, %v1510
        %vm1512 = vcmp.eq.s32.totalorder %v1507, 2
        %v1513 = vxor.u32 %v1503, 2147483648
        %v1514 = vsel %vm1512, %v1513, %v1504
        %v1515 = vsel %vm1508, %v1511, %v1514
        %v1516 = vsel %vm1505, nan, %v1515
        %v1517 = vand.u32 2147483647, %v732
        %vm1518 = vcmp.le.f32.partialorder %v1517, 0.7853982
        %vm1519 = vcmp.lt.s32.totalorder %v732, 0
        %v1520 = vand.u32 %v732, 2139095040
        %v1521 = vshrl.u32 %v1520, 23
        %v1522 = vsub.s32 %v1521, 127
        %v1523 = vand.u32 2147483647, %v732
        %v1524 = vand.u32 %v1523, 8388607
        %v1525 = vor.u32 %v1524, 8388608
        %v1526 = vsub.s32 0, %v1525
        %v1527 = vadd.s32 %v1522, 1
        %vm1528 = vcmp.gt.s32.totalorder %v1527, 0
        %v1529 = vsel %vm1528, %v1527, 0
        %v1530 = vshrl.u32 %v1529, 5
        %v1531 = vand.u32 %v1529, 31
        %v1532 = vsub.s32 32, %v1531
        %v1533 = vshrl.u32 683565275, %v1532
        %v1534 = vshll.u32 683565275, %v1531
        %v1535 = vshrl.u32 2475754826, %v1532
        %v1536 = vor.u32 %v1534, %v1535
        %v1537 = vshll.u32 2475754826, %v1531
        %v1538 = vshrl.u32 2131351028, %v1532
        %v1539 = vor.u32 %v1537, %v1538
        %v1540 = vshll.u32 2131351028, %v1531
        %v1541 = vshrl.u32 2102212464, %v1532
        %v1542 = vor.u32 %v1540, %v1541
        %v1543 = vshll.u32 2102212464, %v1531
        %v1544 = vshrl.u32 920167782, %v1532
        %v1545 = vor.u32 %v1543, %v1544
        %v1546 = vshll.u32 920167782, %v1531
        %v1547 = vshrl.u32 1326507024, %v1532
        %v1548 = vor.u32 %v1546, %v1547
        %vm1549 = vcmp.lt.s32.totalorder %v1530, 1
        %vm1550 = vcmp.lt.s32.totalorder %v1530, 2
        %vm1551 = vcmp.lt.s32.totalorder %v1530, 3
        %vm1552 = vcmp.lt.s32.totalorder %v1530, 4
        %v1553 = vsel %vm1549, %v1533, %v1536
        %v1554 = vsel %vm1552, %v1542, 2102212464
        %v1555 = vsel %vm1551, %v1539, %v1554
        %v1556 = vsel %vm1550, %v1553, %v1555
        %v1557 = vsel %vm1549, %v1536, %v1539
        %v1558 = vsel %vm1552, %v1545, 920167782
        %v1559 = vsel %vm1551, %v1542, %v1558
        %v1560 = vsel %vm1550, %v1557, %v1559
        %v1561 = vsel %vm1549, %v1539, %v1542
        %v1562 = vsel %vm1552, %v1548, 1326507024
        %v1563 = vsel %vm1551, %v1545, %v1562
        %v1564 = vsel %vm1550, %v1561, %v1563
        %v1565 = vshll.u32 %v1525, 8
        %v1566 = vmul.u32.u64.compose %v1565, %v1564
        %v1567 = vextract.low.u32 %v1566
        %v1568 = vextract.high.u32 %v1566
        %v1569 = vmul.u32.u64.compose %v1565, %v1560
        %v1570 = vextract.low.u32 %v1569
        %v1571 = vextract.high.u32 %v1569
        %v1572 = vmul.u32 %v1565, %v1556
        %v1573 = vadd.s32 %v1568, %v1570
        %vm1574 = vc.u32 %v1568, %v1570
        %v1575 = vadd.s32 %v1571, 1
        %v1576 = vsel %vm1574, %v1575, %v1571
        %v1577 = vadd.s32 %v1572, %v1576
        %v1578 = vadd.s32 %v1577, 536870912
        %v1579 = vshrl.u32 %v1578, 30
        %v1580 = vshll.u32 %v1579, 30
        %v1581 = vsub.s32 %v1577, %v1580
        %vm1582 = vcmp.lt.s32.totalorder %v1581, 0
        %v1583 = vsub.s32 0, %v1581
        %v1584 = vsel %vm1582, %v1583, %v1581
        %v1585 = vclz %v1584
        %v1586 = vsub.s32 %v1585, 2
        %vm1587 = vcmp.gt.s32.totalorder 0, %v1586
        %v1588 = vsel %vm1587, 0, %v1586
        %v1589 = vsub.s32 32, %v1588
        %v1590 = vshll.u32 %v1581, %v1588
        %v1591 = vshrl.u32 %v1573, %v1589
        %v1592 = vor.u32 %v1590, %v1591
        %v1593 = vsub.s32 4294967266, %v1588
        %v1594 = vadd.s32 %v1593, 127
        %v1595 = vshll.u32 %v1594, 23
        %v1596 = vor.u32 4788187, %v1595
        %v1597 = vand.u32 2147483647, %v1596
        %v1599 = vcvt.s32.f32 %v1592
        %v1600 = vmul.f32 %v1599, %v1597
        %v1601 = vxor.u32 %v1600, 2147483648
        %v1602 = vsel %vm1519, %v1601, %v1600
        %v1603 = vsub.s32 4, %v1579
        %v1604 = vsel %vm1519, %v1603, %v1579
        %v1605 = vsel %vm1518, %v732, %v1602
        %v1606 = vsel %vm1518, 0, %v1604
        %v1607 = vcosq.f32.pop %v1605
        %v1608 = vsinq.f32.pop %v1605
        %vm1609 = vweird.f32 %v732
        %v1610 = vadd.s32 %v1606, 3
        %v1611 = vand.u32 %v1610, 3
        %vm1612 = vcmp.lt.s32.totalorder %v1611, 2
        %vm1613 = vcmp.eq.s32.totalorder %v1611, 0
        %v1614 = vxor.u32 %v1608, 2147483648
        %v1615 = vsel %vm1613, %v1607, %v1614
        %vm1616 = vcmp.eq.s32.totalorder %v1611, 2
        %v1617 = vxor.u32 %v1607, 2147483648
        %v1618 = vsel %vm1616, %v1617, %v1608
        %v1619 = vsel %vm1612, %v1615, %v1618
        %v1620 = vsel %vm1609, nan, %v1619
        %v1621 = vand.u32 2147483647, %v733
        %vm1622 = vcmp.le.f32.partialorder %v1621, 0.7853982
        %vm1623 = vcmp.lt.s32.totalorder %v733, 0
        %v1624 = vand.u32 %v733, 2139095040
        %v1625 = vshrl.u32 %v1624, 23
        %v1626 = vsub.s32 %v1625, 127
        %v1627 = vand.u32 2147483647, %v733
        %v1628 = vand.u32 %v1627, 8388607
        %v1629 = vor.u32 %v1628, 8388608
        %v1630 = vsub.s32 0, %v1629
        %v1631 = vadd.s32 %v1626, 1
        %vm1632 = vcmp.gt.s32.totalorder %v1631, 0
        %v1633 = vsel %vm1632, %v1631, 0
        %v1634 = vshrl.u32 %v1633, 5
        %v1635 = vand.u32 %v1633, 31
        %v1636 = vsub.s32 32, %v1635
        %v1637 = vshrl.u32 683565275, %v1636
        %v1638 = vshll.u32 683565275, %v1635
        %v1639 = vshrl.u32 2475754826, %v1636
        %v1640 = vor.u32 %v1638, %v1639
        %v1641 = vshll.u32 2475754826, %v1635
        %v1642 = vshrl.u32 2131351028, %v1636
        %v1643 = vor.u32 %v1641, %v1642
        %v1644 = vshll.u32 2131351028, %v1635
        %v1645 = vshrl.u32 2102212464, %v1636
        %v1646 = vor.u32 %v1644, %v1645
        %v1647 = vshll.u32 2102212464, %v1635
        %v1648 = vshrl.u32 920167782, %v1636
        %v1649 = vor.u32 %v1647, %v1648
        %v1650 = vshll.u32 920167782, %v1635
        %v1651 = vshrl.u32 1326507024, %v1636
        %v1652 = vor.u32 %v1650, %v1651
        %vm1653 = vcmp.lt.s32.totalorder %v1634, 1
        %vm1654 = vcmp.lt.s32.totalorder %v1634, 2
        %vm1655 = vcmp.lt.s32.totalorder %v1634, 3
        %vm1656 = vcmp.lt.s32.totalorder %v1634, 4
        %v1657 = vsel %vm1653, %v1637, %v1640
        %v1658 = vsel %vm1656, %v1646, 2102212464
        %v1659 = vsel %vm1655, %v1643, %v1658
        %v1660 = vsel %vm1654, %v1657, %v1659
        %v1661 = vsel %vm1653, %v1640, %v1643
        %v1662 = vsel %vm1656, %v1649, 920167782
        %v1663 = vsel %vm1655, %v1646, %v1662
        %v1664 = vsel %vm1654, %v1661, %v1663
        %v1665 = vsel %vm1653, %v1643, %v1646
        %v1666 = vsel %vm1656, %v1652, 1326507024
        %v1667 = vsel %vm1655, %v1649, %v1666
        %v1668 = vsel %vm1654, %v1665, %v1667
        %v1669 = vshll.u32 %v1629, 8
        %v1670 = vmul.u32.u64.compose %v1669, %v1668
        %v1671 = vextract.low.u32 %v1670
        %v1672 = vextract.high.u32 %v1670
        %v1673 = vmul.u32.u64.compose %v1669, %v1664
        %v1674 = vextract.low.u32 %v1673
        %v1675 = vextract.high.u32 %v1673
        %v1676 = vmul.u32 %v1669, %v1660
        %v1677 = vadd.s32 %v1672, %v1674
        %vm1678 = vc.u32 %v1672, %v1674
        %v1679 = vadd.s32 %v1675, 1
        %v1680 = vsel %vm1678, %v1679, %v1675
        %v1681 = vadd.s32 %v1676, %v1680
        %v1682 = vadd.s32 %v1681, 536870912
        %v1683 = vshrl.u32 %v1682, 30
        %v1684 = vshll.u32 %v1683, 30
        %v1685 = vsub.s32 %v1681, %v1684
        %vm1686 = vcmp.lt.s32.totalorder %v1685, 0
        %v1687 = vsub.s32 0, %v1685
        %v1688 = vsel %vm1686, %v1687, %v1685
        %v1689 = vclz %v1688
        %v1690 = vsub.s32 %v1689, 2
        %vm1691 = vcmp.gt.s32.totalorder 0, %v1690
        %v1692 = vsel %vm1691, 0, %v1690
        %v1693 = vsub.s32 32, %v1692
        %v1694 = vshll.u32 %v1685, %v1692
        %v1695 = vshrl.u32 %v1677, %v1693
        %v1696 = vor.u32 %v1694, %v1695
        %v1697 = vsub.s32 4294967266, %v1692
        %v1698 = vadd.s32 %v1697, 127
        %v1699 = vshll.u32 %v1698, 23
        %v1700 = vor.u32 4788187, %v1699
        %v1701 = vand.u32 2147483647, %v1700
        %v1703 = vcvt.s32.f32 %v1696
        %v1704 = vmul.f32 %v1703, %v1701
        %v1705 = vxor.u32 %v1704, 2147483648
        %v1706 = vsel %vm1623, %v1705, %v1704
        %v1707 = vsub.s32 4, %v1683
        %v1708 = vsel %vm1623, %v1707, %v1683
        %v1709 = vsel %vm1622, %v733, %v1706
        %v1710 = vsel %vm1622, 0, %v1708
        %v1711 = vcosq.f32.pop %v1709
        %v1712 = vsinq.f32.pop %v1709
        %vm1713 = vweird.f32 %v733
        %v1714 = vadd.s32 %v1710, 3
        %v1715 = vand.u32 %v1714, 3
        %vm1716 = vcmp.lt.s32.totalorder %v1715, 2
        %vm1717 = vcmp.eq.s32.totalorder %v1715, 0
        %v1718 = vxor.u32 %v1712, 2147483648
        %v1719 = vsel %vm1717, %v1711, %v1718
        %vm1720 = vcmp.eq.s32.totalorder %v1715, 2
        %v1721 = vxor.u32 %v1711, 2147483648
        %v1722 = vsel %vm1720, %v1721, %v1712
        %v1723 = vsel %vm1716, %v1719, %v1722
        %v1724 = vsel %vm1713, nan, %v1723
        %v1725 = vand.u32 2147483647, %v734
        %vm1726 = vcmp.le.f32.partialorder %v1725, 0.7853982
        %vm1727 = vcmp.lt.s32.totalorder %v734, 0
        %v1728 = vand.u32 %v734, 2139095040
        %v1729 = vshrl.u32 %v1728, 23
        %v1730 = vsub.s32 %v1729, 127
        %v1731 = vand.u32 2147483647, %v734
        %v1732 = vand.u32 %v1731, 8388607
        %v1733 = vor.u32 %v1732, 8388608
        %v1734 = vsub.s32 0, %v1733
        %v1735 = vadd.s32 %v1730, 1
        %vm1736 = vcmp.gt.s32.totalorder %v1735, 0
        %v1737 = vsel %vm1736, %v1735, 0
        %v1738 = vshrl.u32 %v1737, 5
        %v1739 = vand.u32 %v1737, 31
        %v1740 = vsub.s32 32, %v1739
        %v1741 = vshrl.u32 683565275, %v1740
        %v1742 = vshll.u32 683565275, %v1739
        %v1743 = vshrl.u32 2475754826, %v1740
        %v1744 = vor.u32 %v1742, %v1743
        %v1745 = vshll.u32 2475754826, %v1739
        %v1746 = vshrl.u32 2131351028, %v1740
        %v1747 = vor.u32 %v1745, %v1746
        %v1748 = vshll.u32 2131351028, %v1739
        %v1749 = vshrl.u32 2102212464, %v1740
        %v1750 = vor.u32 %v1748, %v1749
        %v1751 = vshll.u32 2102212464, %v1739
        %v1752 = vshrl.u32 920167782, %v1740
        %v1753 = vor.u32 %v1751, %v1752
        %v1754 = vshll.u32 920167782, %v1739
        %v1755 = vshrl.u32 1326507024, %v1740
        %v1756 = vor.u32 %v1754, %v1755
        %vm1757 = vcmp.lt.s32.totalorder %v1738, 1
        %vm1758 = vcmp.lt.s32.totalorder %v1738, 2
        %vm1759 = vcmp.lt.s32.totalorder %v1738, 3
        %vm1760 = vcmp.lt.s32.totalorder %v1738, 4
        %v1761 = vsel %vm1757, %v1741, %v1744
        %v1762 = vsel %vm1760, %v1750, 2102212464
        %v1763 = vsel %vm1759, %v1747, %v1762
        %v1764 = vsel %vm1758, %v1761, %v1763
        %v1765 = vsel %vm1757, %v1744, %v1747
        %v1766 = vsel %vm1760, %v1753, 920167782
        %v1767 = vsel %vm1759, %v1750, %v1766
        %v1768 = vsel %vm1758, %v1765, %v1767
        %v1769 = vsel %vm1757, %v1747, %v1750
        %v1770 = vsel %vm1760, %v1756, 1326507024
        %v1771 = vsel %vm1759, %v1753, %v1770
        %v1772 = vsel %vm1758, %v1769, %v1771
        %v1773 = vshll.u32 %v1733, 8
        %v1774 = vmul.u32.u64.compose %v1773, %v1772
        %v1775 = vextract.low.u32 %v1774
        %v1776 = vextract.high.u32 %v1774
        %v1777 = vmul.u32.u64.compose %v1773, %v1768
        %v1778 = vextract.low.u32 %v1777
        %v1779 = vextract.high.u32 %v1777
        %v1780 = vmul.u32 %v1773, %v1764
        %v1781 = vadd.s32 %v1776, %v1778
        %vm1782 = vc.u32 %v1776, %v1778
        %v1783 = vadd.s32 %v1779, 1
        %v1784 = vsel %vm1782, %v1783, %v1779
        %v1785 = vadd.s32 %v1780, %v1784
        %v1786 = vadd.s32 %v1785, 536870912
        %v1787 = vshrl.u32 %v1786, 30
        %v1788 = vshll.u32 %v1787, 30
        %v1789 = vsub.s32 %v1785, %v1788
        %vm1790 = vcmp.lt.s32.totalorder %v1789, 0
        %v1791 = vsub.s32 0, %v1789
        %v1792 = vsel %vm1790, %v1791, %v1789
        %v1793 = vclz %v1792
        %v1794 = vsub.s32 %v1793, 2
        %vm1795 = vcmp.gt.s32.totalorder 0, %v1794
        %v1796 = vsel %vm1795, 0, %v1794
        %v1797 = vsub.s32 32, %v1796
        %v1798 = vshll.u32 %v1789, %v1796
        %v1799 = vshrl.u32 %v1781, %v1797
        %v1800 = vor.u32 %v1798, %v1799
        %v1801 = vsub.s32 4294967266, %v1796
        %v1802 = vadd.s32 %v1801, 127
        %v1803 = vshll.u32 %v1802, 23
        %v1804 = vor.u32 4788187, %v1803
        %v1805 = vand.u32 2147483647, %v1804
        %v1807 = vcvt.s32.f32 %v1800
        %v1808 = vmul.f32 %v1807, %v1805
        %v1809 = vxor.u32 %v1808, 2147483648
        %v1810 = vsel %vm1727, %v1809, %v1808
        %v1811 = vsub.s32 4, %v1787
        %v1812 = vsel %vm1727, %v1811, %v1787
        %v1813 = vsel %vm1726, %v734, %v1810
        %v1814 = vsel %vm1726, 0, %v1812
        %v1815 = vcosq.f32.pop %v1813
        %v1816 = vsinq.f32.pop %v1813
        %vm1817 = vweird.f32 %v734
        %v1818 = vadd.s32 %v1814, 3
        %v1819 = vand.u32 %v1818, 3
        %vm1820 = vcmp.lt.s32.totalorder %v1819, 2
        %vm1821 = vcmp.eq.s32.totalorder %v1819, 0
        %v1822 = vxor.u32 %v1816, 2147483648
        %v1823 = vsel %vm1821, %v1815, %v1822
        %vm1824 = vcmp.eq.s32.totalorder %v1819, 2
        %v1825 = vxor.u32 %v1815, 2147483648
        %v1826 = vsel %vm1824, %v1825, %v1816
        %v1827 = vsel %vm1820, %v1823, %v1826
        %v1828 = vsel %vm1817, nan, %v1827
        %v1829 = vand.u32 2147483647, %v735
        %vm1830 = vcmp.le.f32.partialorder %v1829, 0.7853982
        %vm1831 = vcmp.lt.s32.totalorder %v735, 0
        %v1832 = vand.u32 %v735, 2139095040
        %v1833 = vshrl.u32 %v1832, 23
        %v1834 = vsub.s32 %v1833, 127
        %v1835 = vand.u32 2147483647, %v735
        %v1836 = vand.u32 %v1835, 8388607
        %v1837 = vor.u32 %v1836, 8388608
        %v1838 = vsub.s32 0, %v1837
        %v1839 = vadd.s32 %v1834, 1
        %vm1840 = vcmp.gt.s32.totalorder %v1839, 0
        %v1841 = vsel %vm1840, %v1839, 0
        %v1842 = vshrl.u32 %v1841, 5
        %v1843 = vand.u32 %v1841, 31
        %v1844 = vsub.s32 32, %v1843
        %v1845 = vshrl.u32 683565275, %v1844
        %v1846 = vshll.u32 683565275, %v1843
        %v1847 = vshrl.u32 2475754826, %v1844
        %v1848 = vor.u32 %v1846, %v1847
        %v1849 = vshll.u32 2475754826, %v1843
        %v1850 = vshrl.u32 2131351028, %v1844
        %v1851 = vor.u32 %v1849, %v1850
        %v1852 = vshll.u32 2131351028, %v1843
        %v1853 = vshrl.u32 2102212464, %v1844
        %v1854 = vor.u32 %v1852, %v1853
        %v1855 = vshll.u32 2102212464, %v1843
        %v1856 = vshrl.u32 920167782, %v1844
        %v1857 = vor.u32 %v1855, %v1856
        %v1858 = vshll.u32 920167782, %v1843
        %v1859 = vshrl.u32 1326507024, %v1844
        %v1860 = vor.u32 %v1858, %v1859
        %vm1861 = vcmp.lt.s32.totalorder %v1842, 1
        %vm1862 = vcmp.lt.s32.totalorder %v1842, 2
        %vm1863 = vcmp.lt.s32.totalorder %v1842, 3
        %vm1864 = vcmp.lt.s32.totalorder %v1842, 4
        %v1865 = vsel %vm1861, %v1845, %v1848
        %v1866 = vsel %vm1864, %v1854, 2102212464
        %v1867 = vsel %vm1863, %v1851, %v1866
        %v1868 = vsel %vm1862, %v1865, %v1867
        %v1869 = vsel %vm1861, %v1848, %v1851
        %v1870 = vsel %vm1864, %v1857, 920167782
        %v1871 = vsel %vm1863, %v1854, %v1870
        %v1872 = vsel %vm1862, %v1869, %v1871
        %v1873 = vsel %vm1861, %v1851, %v1854
        %v1874 = vsel %vm1864, %v1860, 1326507024
        %v1875 = vsel %vm1863, %v1857, %v1874
        %v1876 = vsel %vm1862, %v1873, %v1875
        %v1877 = vshll.u32 %v1837, 8
        %v1878 = vmul.u32.u64.compose %v1877, %v1876
        %v1879 = vextract.low.u32 %v1878
        %v1880 = vextract.high.u32 %v1878
        %v1881 = vmul.u32.u64.compose %v1877, %v1872
        %v1882 = vextract.low.u32 %v1881
        %v1883 = vextract.high.u32 %v1881
        %v1884 = vmul.u32 %v1877, %v1868
        %v1885 = vadd.s32 %v1880, %v1882
        %vm1886 = vc.u32 %v1880, %v1882
        %v1887 = vadd.s32 %v1883, 1
        %v1888 = vsel %vm1886, %v1887, %v1883
        %v1889 = vadd.s32 %v1884, %v1888
        %v1890 = vadd.s32 %v1889, 536870912
        %v1891 = vshrl.u32 %v1890, 30
        %v1892 = vshll.u32 %v1891, 30
        %v1893 = vsub.s32 %v1889, %v1892
        %vm1894 = vcmp.lt.s32.totalorder %v1893, 0
        %v1895 = vsub.s32 0, %v1893
        %v1896 = vsel %vm1894, %v1895, %v1893
        %v1897 = vclz %v1896
        %v1898 = vsub.s32 %v1897, 2
        %vm1899 = vcmp.gt.s32.totalorder 0, %v1898
        %v1900 = vsel %vm1899, 0, %v1898
        %v1901 = vsub.s32 32, %v1900
        %v1902 = vshll.u32 %v1893, %v1900
        %v1903 = vshrl.u32 %v1885, %v1901
        %v1904 = vor.u32 %v1902, %v1903
        %v1905 = vsub.s32 4294967266, %v1900
        %v1906 = vadd.s32 %v1905, 127
        %v1907 = vshll.u32 %v1906, 23
        %v1908 = vor.u32 4788187, %v1907
        %v1909 = vand.u32 2147483647, %v1908
        %v1911 = vcvt.s32.f32 %v1904
        %v1912 = vmul.f32 %v1911, %v1909
        %v1913 = vxor.u32 %v1912, 2147483648
        %v1914 = vsel %vm1831, %v1913, %v1912
        %v1915 = vsub.s32 4, %v1891
        %v1916 = vsel %vm1831, %v1915, %v1891
        %v1917 = vsel %vm1830, %v735, %v1914
        %v1918 = vsel %vm1830, 0, %v1916
        %v1919 = vcosq.f32.pop %v1917
        %v1920 = vsinq.f32.pop %v1917
        %vm1921 = vweird.f32 %v735
        %v1922 = vadd.s32 %v1918, 3
        %v1923 = vand.u32 %v1922, 3
        %vm1924 = vcmp.lt.s32.totalorder %v1923, 2
        %vm1925 = vcmp.eq.s32.totalorder %v1923, 0
        %v1926 = vxor.u32 %v1920, 2147483648
        %v1927 = vsel %vm1925, %v1919, %v1926
        %vm1928 = vcmp.eq.s32.totalorder %v1923, 2
        %v1929 = vxor.u32 %v1919, 2147483648
        %v1930 = vsel %vm1928, %v1929, %v1920
        %v1931 = vsel %vm1924, %v1927, %v1930
        %v1932 = vsel %vm1921, nan, %v1931
        %v1933 = vand.u32 2147483647, %v736
        %vm1934 = vcmp.le.f32.partialorder %v1933, 0.7853982
        %vm1935 = vcmp.lt.s32.totalorder %v736, 0
        %v1936 = vand.u32 %v736, 2139095040
        %v1937 = vshrl.u32 %v1936, 23
        %v1938 = vsub.s32 %v1937, 127
        %v1939 = vand.u32 2147483647, %v736
        %v1940 = vand.u32 %v1939, 8388607
        %v1941 = vor.u32 %v1940, 8388608
        %v1942 = vsub.s32 0, %v1941
        %v1943 = vadd.s32 %v1938, 1
        %vm1944 = vcmp.gt.s32.totalorder %v1943, 0
        %v1945 = vsel %vm1944, %v1943, 0
        %v1946 = vshrl.u32 %v1945, 5
        %v1947 = vand.u32 %v1945, 31
        %v1948 = vsub.s32 32, %v1947
        %v1949 = vshrl.u32 683565275, %v1948
        %v1950 = vshll.u32 683565275, %v1947
        %v1951 = vshrl.u32 2475754826, %v1948
        %v1952 = vor.u32 %v1950, %v1951
        %v1953 = vshll.u32 2475754826, %v1947
        %v1954 = vshrl.u32 2131351028, %v1948
        %v1955 = vor.u32 %v1953, %v1954
        %v1956 = vshll.u32 2131351028, %v1947
        %v1957 = vshrl.u32 2102212464, %v1948
        %v1958 = vor.u32 %v1956, %v1957
        %v1959 = vshll.u32 2102212464, %v1947
        %v1960 = vshrl.u32 920167782, %v1948
        %v1961 = vor.u32 %v1959, %v1960
        %v1962 = vshll.u32 920167782, %v1947
        %v1963 = vshrl.u32 1326507024, %v1948
        %v1964 = vor.u32 %v1962, %v1963
        %vm1965 = vcmp.lt.s32.totalorder %v1946, 1
        %vm1966 = vcmp.lt.s32.totalorder %v1946, 2
        %vm1967 = vcmp.lt.s32.totalorder %v1946, 3
        %vm1968 = vcmp.lt.s32.totalorder %v1946, 4
        %v1969 = vsel %vm1965, %v1949, %v1952
        %v1970 = vsel %vm1968, %v1958, 2102212464
        %v1971 = vsel %vm1967, %v1955, %v1970
        %v1972 = vsel %vm1966, %v1969, %v1971
        %v1973 = vsel %vm1965, %v1952, %v1955
        %v1974 = vsel %vm1968, %v1961, 920167782
        %v1975 = vsel %vm1967, %v1958, %v1974
        %v1976 = vsel %vm1966, %v1973, %v1975
        %v1977 = vsel %vm1965, %v1955, %v1958
        %v1978 = vsel %vm1968, %v1964, 1326507024
        %v1979 = vsel %vm1967, %v1961, %v1978
        %v1980 = vsel %vm1966, %v1977, %v1979
        %v1981 = vshll.u32 %v1941, 8
        %v1982 = vmul.u32.u64.compose %v1981, %v1980
        %v1983 = vextract.low.u32 %v1982
        %v1984 = vextract.high.u32 %v1982
        %v1985 = vmul.u32.u64.compose %v1981, %v1976
        %v1986 = vextract.low.u32 %v1985
        %v1987 = vextract.high.u32 %v1985
        %v1988 = vmul.u32 %v1981, %v1972
        %v1989 = vadd.s32 %v1984, %v1986
        %vm1990 = vc.u32 %v1984, %v1986
        %v1991 = vadd.s32 %v1987, 1
        %v1992 = vsel %vm1990, %v1991, %v1987
        %v1993 = vadd.s32 %v1988, %v1992
        %v1994 = vadd.s32 %v1993, 536870912
        %v1995 = vshrl.u32 %v1994, 30
        %v1996 = vshll.u32 %v1995, 30
        %v1997 = vsub.s32 %v1993, %v1996
        %vm1998 = vcmp.lt.s32.totalorder %v1997, 0
        %v1999 = vsub.s32 0, %v1997
        %v2000 = vsel %vm1998, %v1999, %v1997
        %v2001 = vclz %v2000
        %v2002 = vsub.s32 %v2001, 2
        %vm2003 = vcmp.gt.s32.totalorder 0, %v2002
        %v2004 = vsel %vm2003, 0, %v2002
        %v2005 = vsub.s32 32, %v2004
        %v2006 = vshll.u32 %v1997, %v2004
        %v2007 = vshrl.u32 %v1989, %v2005
        %v2008 = vor.u32 %v2006, %v2007
        %v2009 = vsub.s32 4294967266, %v2004
        %v2010 = vadd.s32 %v2009, 127
        %v2011 = vshll.u32 %v2010, 23
        %v2012 = vor.u32 4788187, %v2011
        %v2013 = vand.u32 2147483647, %v2012
        %v2015 = vcvt.s32.f32 %v2008
        %v2016 = vmul.f32 %v2015, %v2013
        %v2017 = vxor.u32 %v2016, 2147483648
        %v2018 = vsel %vm1935, %v2017, %v2016
        %v2019 = vsub.s32 4, %v1995
        %v2020 = vsel %vm1935, %v2019, %v1995
        %v2021 = vsel %vm1934, %v736, %v2018
        %v2022 = vsel %vm1934, 0, %v2020
        %v2023 = vcosq.f32.pop %v2021
        %v2024 = vsinq.f32.pop %v2021
        %vm2025 = vweird.f32 %v736
        %v2026 = vadd.s32 %v2022, 3
        %v2027 = vand.u32 %v2026, 3
        %vm2028 = vcmp.lt.s32.totalorder %v2027, 2
        %vm2029 = vcmp.eq.s32.totalorder %v2027, 0
        %v2030 = vxor.u32 %v2024, 2147483648
        %v2031 = vsel %vm2029, %v2023, %v2030
        %vm2032 = vcmp.eq.s32.totalorder %v2027, 2
        %v2033 = vxor.u32 %v2023, 2147483648
        %v2034 = vsel %vm2032, %v2033, %v2024
        %v2035 = vsel %vm2028, %v2031, %v2034
        %v2036 = vsel %vm2025, nan, %v2035
        %v2037 = vand.u32 2147483647, %v737
        %vm2038 = vcmp.le.f32.partialorder %v2037, 0.7853982
        %vm2039 = vcmp.lt.s32.totalorder %v737, 0
        %v2040 = vand.u32 %v737, 2139095040
        %v2041 = vshrl.u32 %v2040, 23
        %v2042 = vsub.s32 %v2041, 127
        %v2043 = vand.u32 2147483647, %v737
        %v2044 = vand.u32 %v2043, 8388607
        %v2045 = vor.u32 %v2044, 8388608
        %v2046 = vsub.s32 0, %v2045
        %v2047 = vadd.s32 %v2042, 1
        %vm2048 = vcmp.gt.s32.totalorder %v2047, 0
        %v2049 = vsel %vm2048, %v2047, 0
        %v2050 = vshrl.u32 %v2049, 5
        %v2051 = vand.u32 %v2049, 31
        %v2052 = vsub.s32 32, %v2051
        %v2053 = vshrl.u32 683565275, %v2052
        %v2054 = vshll.u32 683565275, %v2051
        %v2055 = vshrl.u32 2475754826, %v2052
        %v2056 = vor.u32 %v2054, %v2055
        %v2057 = vshll.u32 2475754826, %v2051
        %v2058 = vshrl.u32 2131351028, %v2052
        %v2059 = vor.u32 %v2057, %v2058
        %v2060 = vshll.u32 2131351028, %v2051
        %v2061 = vshrl.u32 2102212464, %v2052
        %v2062 = vor.u32 %v2060, %v2061
        %v2063 = vshll.u32 2102212464, %v2051
        %v2064 = vshrl.u32 920167782, %v2052
        %v2065 = vor.u32 %v2063, %v2064
        %v2066 = vshll.u32 920167782, %v2051
        %v2067 = vshrl.u32 1326507024, %v2052
        %v2068 = vor.u32 %v2066, %v2067
        %vm2069 = vcmp.lt.s32.totalorder %v2050, 1
        %vm2070 = vcmp.lt.s32.totalorder %v2050, 2
        %vm2071 = vcmp.lt.s32.totalorder %v2050, 3
        %vm2072 = vcmp.lt.s32.totalorder %v2050, 4
        %v2073 = vsel %vm2069, %v2053, %v2056
        %v2074 = vsel %vm2072, %v2062, 2102212464
        %v2075 = vsel %vm2071, %v2059, %v2074
        %v2076 = vsel %vm2070, %v2073, %v2075
        %v2077 = vsel %vm2069, %v2056, %v2059
        %v2078 = vsel %vm2072, %v2065, 920167782
        %v2079 = vsel %vm2071, %v2062, %v2078
        %v2080 = vsel %vm2070, %v2077, %v2079
        %v2081 = vsel %vm2069, %v2059, %v2062
        %v2082 = vsel %vm2072, %v2068, 1326507024
        %v2083 = vsel %vm2071, %v2065, %v2082
        %v2084 = vsel %vm2070, %v2081, %v2083
        %v2085 = vshll.u32 %v2045, 8
        %v2086 = vmul.u32.u64.compose %v2085, %v2084
        %v2087 = vextract.low.u32 %v2086
        %v2088 = vextract.high.u32 %v2086
        %v2089 = vmul.u32.u64.compose %v2085, %v2080
        %v2090 = vextract.low.u32 %v2089
        %v2091 = vextract.high.u32 %v2089
        %v2092 = vmul.u32 %v2085, %v2076
        %v2093 = vadd.s32 %v2088, %v2090
        %vm2094 = vc.u32 %v2088, %v2090
        %v2095 = vadd.s32 %v2091, 1
        %v2096 = vsel %vm2094, %v2095, %v2091
        %v2097 = vadd.s32 %v2092, %v2096
        %v2098 = vadd.s32 %v2097, 536870912
        %v2099 = vshrl.u32 %v2098, 30
        %v2100 = vshll.u32 %v2099, 30
        %v2101 = vsub.s32 %v2097, %v2100
        %vm2102 = vcmp.lt.s32.totalorder %v2101, 0
        %v2103 = vsub.s32 0, %v2101
        %v2104 = vsel %vm2102, %v2103, %v2101
        %v2105 = vclz %v2104
        %v2106 = vsub.s32 %v2105, 2
        %vm2107 = vcmp.gt.s32.totalorder 0, %v2106
        %v2108 = vsel %vm2107, 0, %v2106
        %v2109 = vsub.s32 32, %v2108
        %v2110 = vshll.u32 %v2101, %v2108
        %v2111 = vshrl.u32 %v2093, %v2109
        %v2112 = vor.u32 %v2110, %v2111
        %v2113 = vsub.s32 4294967266, %v2108
        %v2114 = vadd.s32 %v2113, 127
        %v2115 = vshll.u32 %v2114, 23
        %v2116 = vor.u32 4788187, %v2115
        %v2117 = vand.u32 2147483647, %v2116
        %v2119 = vcvt.s32.f32 %v2112
        %v2120 = vmul.f32 %v2119, %v2117
        %v2121 = vxor.u32 %v2120, 2147483648
        %v2122 = vsel %vm2039, %v2121, %v2120
        %v2123 = vsub.s32 4, %v2099
        %v2124 = vsel %vm2039, %v2123, %v2099
        %v2125 = vsel %vm2038, %v737, %v2122
        %v2126 = vsel %vm2038, 0, %v2124
        %v2127 = vcosq.f32.pop %v2125
        %v2128 = vsinq.f32.pop %v2125
        %vm2129 = vweird.f32 %v737
        %v2130 = vadd.s32 %v2126, 3
        %v2131 = vand.u32 %v2130, 3
        %vm2132 = vcmp.lt.s32.totalorder %v2131, 2
        %vm2133 = vcmp.eq.s32.totalorder %v2131, 0
        %v2134 = vxor.u32 %v2128, 2147483648
        %v2135 = vsel %vm2133, %v2127, %v2134
        %vm2136 = vcmp.eq.s32.totalorder %v2131, 2
        %v2137 = vxor.u32 %v2127, 2147483648
        %v2138 = vsel %vm2136, %v2137, %v2128
        %v2139 = vsel %vm2132, %v2135, %v2138
        %v2140 = vsel %vm2129, nan, %v2139
        %v2141 = vand.u32 2147483647, %v738
        %vm2142 = vcmp.le.f32.partialorder %v2141, 0.7853982
        %vm2143 = vcmp.lt.s32.totalorder %v738, 0
        %v2144 = vand.u32 %v738, 2139095040
        %v2145 = vshrl.u32 %v2144, 23
        %v2146 = vsub.s32 %v2145, 127
        %v2147 = vand.u32 2147483647, %v738
        %v2148 = vand.u32 %v2147, 8388607
        %v2149 = vor.u32 %v2148, 8388608
        %v2150 = vsub.s32 0, %v2149
        %v2151 = vadd.s32 %v2146, 1
        %vm2152 = vcmp.gt.s32.totalorder %v2151, 0
        %v2153 = vsel %vm2152, %v2151, 0
        %v2154 = vshrl.u32 %v2153, 5
        %v2155 = vand.u32 %v2153, 31
        %v2156 = vsub.s32 32, %v2155
        %v2157 = vshrl.u32 683565275, %v2156
        %v2158 = vshll.u32 683565275, %v2155
        %v2159 = vshrl.u32 2475754826, %v2156
        %v2160 = vor.u32 %v2158, %v2159
        %v2161 = vshll.u32 2475754826, %v2155
        %v2162 = vshrl.u32 2131351028, %v2156
        %v2163 = vor.u32 %v2161, %v2162
        %v2164 = vshll.u32 2131351028, %v2155
        %v2165 = vshrl.u32 2102212464, %v2156
        %v2166 = vor.u32 %v2164, %v2165
        %v2167 = vshll.u32 2102212464, %v2155
        %v2168 = vshrl.u32 920167782, %v2156
        %v2169 = vor.u32 %v2167, %v2168
        %v2170 = vshll.u32 920167782, %v2155
        %v2171 = vshrl.u32 1326507024, %v2156
        %v2172 = vor.u32 %v2170, %v2171
        %vm2173 = vcmp.lt.s32.totalorder %v2154, 1
        %vm2174 = vcmp.lt.s32.totalorder %v2154, 2
        %vm2175 = vcmp.lt.s32.totalorder %v2154, 3
        %vm2176 = vcmp.lt.s32.totalorder %v2154, 4
        %v2177 = vsel %vm2173, %v2157, %v2160
        %v2178 = vsel %vm2176, %v2166, 2102212464
        %v2179 = vsel %vm2175, %v2163, %v2178
        %v2180 = vsel %vm2174, %v2177, %v2179
        %v2181 = vsel %vm2173, %v2160, %v2163
        %v2182 = vsel %vm2176, %v2169, 920167782
        %v2183 = vsel %vm2175, %v2166, %v2182
        %v2184 = vsel %vm2174, %v2181, %v2183
        %v2185 = vsel %vm2173, %v2163, %v2166
        %v2186 = vsel %vm2176, %v2172, 1326507024
        %v2187 = vsel %vm2175, %v2169, %v2186
        %v2188 = vsel %vm2174, %v2185, %v2187
        %v2189 = vshll.u32 %v2149, 8
        %v2190 = vmul.u32.u64.compose %v2189, %v2188
        %v2191 = vextract.low.u32 %v2190
        %v2192 = vextract.high.u32 %v2190
        %v2193 = vmul.u32.u64.compose %v2189, %v2184
        %v2194 = vextract.low.u32 %v2193
        %v2195 = vextract.high.u32 %v2193
        %v2196 = vmul.u32 %v2189, %v2180
        %v2197 = vadd.s32 %v2192, %v2194
        %vm2198 = vc.u32 %v2192, %v2194
        %v2199 = vadd.s32 %v2195, 1
        %v2200 = vsel %vm2198, %v2199, %v2195
        %v2201 = vadd.s32 %v2196, %v2200
        %v2202 = vadd.s32 %v2201, 536870912
        %v2203 = vshrl.u32 %v2202, 30
        %v2204 = vshll.u32 %v2203, 30
        %v2205 = vsub.s32 %v2201, %v2204
        %vm2206 = vcmp.lt.s32.totalorder %v2205, 0
        %v2207 = vsub.s32 0, %v2205
        %v2208 = vsel %vm2206, %v2207, %v2205
        %v2209 = vclz %v2208
        %v2210 = vsub.s32 %v2209, 2
        %vm2211 = vcmp.gt.s32.totalorder 0, %v2210
        %v2212 = vsel %vm2211, 0, %v2210
        %v2213 = vsub.s32 32, %v2212
        %v2214 = vshll.u32 %v2205, %v2212
        %v2215 = vshrl.u32 %v2197, %v2213
        %v2216 = vor.u32 %v2214, %v2215
        %v2217 = vsub.s32 4294967266, %v2212
        %v2218 = vadd.s32 %v2217, 127
        %v2219 = vshll.u32 %v2218, 23
        %v2220 = vor.u32 4788187, %v2219
        %v2221 = vand.u32 2147483647, %v2220
        %v2223 = vcvt.s32.f32 %v2216
        %v2224 = vmul.f32 %v2223, %v2221
        %v2225 = vxor.u32 %v2224, 2147483648
        %v2226 = vsel %vm2143, %v2225, %v2224
        %v2227 = vsub.s32 4, %v2203
        %v2228 = vsel %vm2143, %v2227, %v2203
        %v2229 = vsel %vm2142, %v738, %v2226
        %v2230 = vsel %vm2142, 0, %v2228
        %v2231 = vcosq.f32.pop %v2229
        %v2232 = vsinq.f32.pop %v2229
        %vm2233 = vweird.f32 %v738
        %v2234 = vadd.s32 %v2230, 3
        %v2235 = vand.u32 %v2234, 3
        %vm2236 = vcmp.lt.s32.totalorder %v2235, 2
        %vm2237 = vcmp.eq.s32.totalorder %v2235, 0
        %v2238 = vxor.u32 %v2232, 2147483648
        %v2239 = vsel %vm2237, %v2231, %v2238
        %vm2240 = vcmp.eq.s32.totalorder %v2235, 2
        %v2241 = vxor.u32 %v2231, 2147483648
        %v2242 = vsel %vm2240, %v2241, %v2232
        %v2243 = vsel %vm2236, %v2239, %v2242
        %v2244 = vsel %vm2233, nan, %v2243
        %v2245 = vand.u32 2147483647, %v739
        %vm2246 = vcmp.le.f32.partialorder %v2245, 0.7853982
        %vm2247 = vcmp.lt.s32.totalorder %v739, 0
        %v2248 = vand.u32 %v739, 2139095040
        %v2249 = vshrl.u32 %v2248, 23
        %v2250 = vsub.s32 %v2249, 127
        %v2251 = vand.u32 2147483647, %v739
        %v2252 = vand.u32 %v2251, 8388607
        %v2253 = vor.u32 %v2252, 8388608
        %v2254 = vsub.s32 0, %v2253
        %v2255 = vadd.s32 %v2250, 1
        %vm2256 = vcmp.gt.s32.totalorder %v2255, 0
        %v2257 = vsel %vm2256, %v2255, 0
        %v2258 = vshrl.u32 %v2257, 5
        %v2259 = vand.u32 %v2257, 31
        %v2260 = vsub.s32 32, %v2259
        %v2261 = vshrl.u32 683565275, %v2260
        %v2262 = vshll.u32 683565275, %v2259
        %v2263 = vshrl.u32 2475754826, %v2260
        %v2264 = vor.u32 %v2262, %v2263
        %v2265 = vshll.u32 2475754826, %v2259
        %v2266 = vshrl.u32 2131351028, %v2260
        %v2267 = vor.u32 %v2265, %v2266
        %v2268 = vshll.u32 2131351028, %v2259
        %v2269 = vshrl.u32 2102212464, %v2260
        %v2270 = vor.u32 %v2268, %v2269
        %v2271 = vshll.u32 2102212464, %v2259
        %v2272 = vshrl.u32 920167782, %v2260
        %v2273 = vor.u32 %v2271, %v2272
        %v2274 = vshll.u32 920167782, %v2259
        %v2275 = vshrl.u32 1326507024, %v2260
        %v2276 = vor.u32 %v2274, %v2275
        %vm2277 = vcmp.lt.s32.totalorder %v2258, 1
        %vm2278 = vcmp.lt.s32.totalorder %v2258, 2
        %vm2279 = vcmp.lt.s32.totalorder %v2258, 3
        %vm2280 = vcmp.lt.s32.totalorder %v2258, 4
        %v2281 = vsel %vm2277, %v2261, %v2264
        %v2282 = vsel %vm2280, %v2270, 2102212464
        %v2283 = vsel %vm2279, %v2267, %v2282
        %v2284 = vsel %vm2278, %v2281, %v2283
        %v2285 = vsel %vm2277, %v2264, %v2267
        %v2286 = vsel %vm2280, %v2273, 920167782
        %v2287 = vsel %vm2279, %v2270, %v2286
        %v2288 = vsel %vm2278, %v2285, %v2287
        %v2289 = vsel %vm2277, %v2267, %v2270
        %v2290 = vsel %vm2280, %v2276, 1326507024
        %v2291 = vsel %vm2279, %v2273, %v2290
        %v2292 = vsel %vm2278, %v2289, %v2291
        %v2293 = vshll.u32 %v2253, 8
        %v2294 = vmul.u32.u64.compose %v2293, %v2292
        %v2295 = vextract.low.u32 %v2294
        %v2296 = vextract.high.u32 %v2294
        %v2297 = vmul.u32.u64.compose %v2293, %v2288
        %v2298 = vextract.low.u32 %v2297
        %v2299 = vextract.high.u32 %v2297
        %v2300 = vmul.u32 %v2293, %v2284
        %v2301 = vadd.s32 %v2296, %v2298
        %vm2302 = vc.u32 %v2296, %v2298
        %v2303 = vadd.s32 %v2299, 1
        %v2304 = vsel %vm2302, %v2303, %v2299
        %v2305 = vadd.s32 %v2300, %v2304
        %v2306 = vadd.s32 %v2305, 536870912
        %v2307 = vshrl.u32 %v2306, 30
        %v2308 = vshll.u32 %v2307, 30
        %v2309 = vsub.s32 %v2305, %v2308
        %vm2310 = vcmp.lt.s32.totalorder %v2309, 0
        %v2311 = vsub.s32 0, %v2309
        %v2312 = vsel %vm2310, %v2311, %v2309
        %v2313 = vclz %v2312
        %v2314 = vsub.s32 %v2313, 2
        %vm2315 = vcmp.gt.s32.totalorder 0, %v2314
        %v2316 = vsel %vm2315, 0, %v2314
        %v2317 = vsub.s32 32, %v2316
        %v2318 = vshll.u32 %v2309, %v2316
        %v2319 = vshrl.u32 %v2301, %v2317
        %v2320 = vor.u32 %v2318, %v2319
        %v2321 = vsub.s32 4294967266, %v2316
        %v2322 = vadd.s32 %v2321, 127
        %v2323 = vshll.u32 %v2322, 23
        %v2324 = vor.u32 4788187, %v2323
        %v2325 = vand.u32 2147483647, %v2324
        %v2327 = vcvt.s32.f32 %v2320
        %v2328 = vmul.f32 %v2327, %v2325
        %v2329 = vxor.u32 %v2328, 2147483648
        %v2330 = vsel %vm2247, %v2329, %v2328
        %v2331 = vsub.s32 4, %v2307
        %v2332 = vsel %vm2247, %v2331, %v2307
        %v2333 = vsel %vm2246, %v739, %v2330
        %v2334 = vsel %vm2246, 0, %v2332
        %v2335 = vcosq.f32.pop %v2333
        %v2336 = vsinq.f32.pop %v2333
        %vm2337 = vweird.f32 %v739
        %v2338 = vadd.s32 %v2334, 3
        %v2339 = vand.u32 %v2338, 3
        %vm2340 = vcmp.lt.s32.totalorder %v2339, 2
        %vm2341 = vcmp.eq.s32.totalorder %v2339, 0
        %v2342 = vxor.u32 %v2336, 2147483648
        %v2343 = vsel %vm2341, %v2335, %v2342
        %vm2344 = vcmp.eq.s32.totalorder %v2339, 2
        %v2345 = vxor.u32 %v2335, 2147483648
        %v2346 = vsel %vm2344, %v2345, %v2336
        %v2347 = vsel %vm2340, %v2343, %v2346
        %v2348 = vsel %vm2337, nan, %v2347
        %v2349 = vand.u32 2147483647, %v740
        %vm2350 = vcmp.le.f32.partialorder %v2349, 0.7853982
        %vm2351 = vcmp.lt.s32.totalorder %v740, 0
        %v2352 = vand.u32 %v740, 2139095040
        %v2353 = vshrl.u32 %v2352, 23
        %v2354 = vsub.s32 %v2353, 127
        %v2355 = vand.u32 2147483647, %v740
        %v2356 = vand.u32 %v2355, 8388607
        %v2357 = vor.u32 %v2356, 8388608
        %v2358 = vsub.s32 0, %v2357
        %v2359 = vadd.s32 %v2354, 1
        %vm2360 = vcmp.gt.s32.totalorder %v2359, 0
        %v2361 = vsel %vm2360, %v2359, 0
        %v2362 = vshrl.u32 %v2361, 5
        %v2363 = vand.u32 %v2361, 31
        %v2364 = vsub.s32 32, %v2363
        %v2365 = vshrl.u32 683565275, %v2364
        %v2366 = vshll.u32 683565275, %v2363
        %v2367 = vshrl.u32 2475754826, %v2364
        %v2368 = vor.u32 %v2366, %v2367
        %v2369 = vshll.u32 2475754826, %v2363
        %v2370 = vshrl.u32 2131351028, %v2364
        %v2371 = vor.u32 %v2369, %v2370
        %v2372 = vshll.u32 2131351028, %v2363
        %v2373 = vshrl.u32 2102212464, %v2364
        %v2374 = vor.u32 %v2372, %v2373
        %v2375 = vshll.u32 2102212464, %v2363
        %v2376 = vshrl.u32 920167782, %v2364
        %v2377 = vor.u32 %v2375, %v2376
        %v2378 = vshll.u32 920167782, %v2363
        %v2379 = vshrl.u32 1326507024, %v2364
        %v2380 = vor.u32 %v2378, %v2379
        %vm2381 = vcmp.lt.s32.totalorder %v2362, 1
        %vm2382 = vcmp.lt.s32.totalorder %v2362, 2
        %vm2383 = vcmp.lt.s32.totalorder %v2362, 3
        %vm2384 = vcmp.lt.s32.totalorder %v2362, 4
        %v2385 = vsel %vm2381, %v2365, %v2368
        %v2386 = vsel %vm2384, %v2374, 2102212464
        %v2387 = vsel %vm2383, %v2371, %v2386
        %v2388 = vsel %vm2382, %v2385, %v2387
        %v2389 = vsel %vm2381, %v2368, %v2371
        %v2390 = vsel %vm2384, %v2377, 920167782
        %v2391 = vsel %vm2383, %v2374, %v2390
        %v2392 = vsel %vm2382, %v2389, %v2391
        %v2393 = vsel %vm2381, %v2371, %v2374
        %v2394 = vsel %vm2384, %v2380, 1326507024
        %v2395 = vsel %vm2383, %v2377, %v2394
        %v2396 = vsel %vm2382, %v2393, %v2395
        %v2397 = vshll.u32 %v2357, 8
        %v2398 = vmul.u32.u64.compose %v2397, %v2396
        %v2399 = vextract.low.u32 %v2398
        %v2400 = vextract.high.u32 %v2398
        %v2401 = vmul.u32.u64.compose %v2397, %v2392
        %v2402 = vextract.low.u32 %v2401
        %v2403 = vextract.high.u32 %v2401
        %v2404 = vmul.u32 %v2397, %v2388
        %v2405 = vadd.s32 %v2400, %v2402
        %vm2406 = vc.u32 %v2400, %v2402
        %v2407 = vadd.s32 %v2403, 1
        %v2408 = vsel %vm2406, %v2407, %v2403
        %v2409 = vadd.s32 %v2404, %v2408
        %v2410 = vadd.s32 %v2409, 536870912
        %v2411 = vshrl.u32 %v2410, 30
        %v2412 = vshll.u32 %v2411, 30
        %v2413 = vsub.s32 %v2409, %v2412
        %vm2414 = vcmp.lt.s32.totalorder %v2413, 0
        %v2415 = vsub.s32 0, %v2413
        %v2416 = vsel %vm2414, %v2415, %v2413
        %v2417 = vclz %v2416
        %v2418 = vsub.s32 %v2417, 2
        %vm2419 = vcmp.gt.s32.totalorder 0, %v2418
        %v2420 = vsel %vm2419, 0, %v2418
        %v2421 = vsub.s32 32, %v2420
        %v2422 = vshll.u32 %v2413, %v2420
        %v2423 = vshrl.u32 %v2405, %v2421
        %v2424 = vor.u32 %v2422, %v2423
        %v2425 = vsub.s32 4294967266, %v2420
        %v2426 = vadd.s32 %v2425, 127
        %v2427 = vshll.u32 %v2426, 23
        %v2428 = vor.u32 4788187, %v2427
        %v2429 = vand.u32 2147483647, %v2428
        %v2431 = vcvt.s32.f32 %v2424
        %v2432 = vmul.f32 %v2431, %v2429
        %v2433 = vxor.u32 %v2432, 2147483648
        %v2434 = vsel %vm2351, %v2433, %v2432
        %v2435 = vsub.s32 4, %v2411
        %v2436 = vsel %vm2351, %v2435, %v2411
        %v2437 = vsel %vm2350, %v740, %v2434
        %v2438 = vsel %vm2350, 0, %v2436
        %v2439 = vcosq.f32.pop %v2437
        %v2440 = vsinq.f32.pop %v2437
        %vm2441 = vweird.f32 %v740
        %v2442 = vadd.s32 %v2438, 3
        %v2443 = vand.u32 %v2442, 3
        %vm2444 = vcmp.lt.s32.totalorder %v2443, 2
        %vm2445 = vcmp.eq.s32.totalorder %v2443, 0
        %v2446 = vxor.u32 %v2440, 2147483648
        %v2447 = vsel %vm2445, %v2439, %v2446
        %vm2448 = vcmp.eq.s32.totalorder %v2443, 2
        %v2449 = vxor.u32 %v2439, 2147483648
        %v2450 = vsel %vm2448, %v2449, %v2440
        %v2451 = vsel %vm2444, %v2447, %v2450
        %v2452 = vsel %vm2441, nan, %v2451
        %v2453 = vand.u32 2147483647, %v741
        %vm2454 = vcmp.le.f32.partialorder %v2453, 0.7853982
        %vm2455 = vcmp.lt.s32.totalorder %v741, 0
        %v2456 = vand.u32 %v741, 2139095040
        %v2457 = vshrl.u32 %v2456, 23
        %v2458 = vsub.s32 %v2457, 127
        %v2459 = vand.u32 2147483647, %v741
        %v2460 = vand.u32 %v2459, 8388607
        %v2461 = vor.u32 %v2460, 8388608
        %v2462 = vsub.s32 0, %v2461
        %v2463 = vadd.s32 %v2458, 1
        %vm2464 = vcmp.gt.s32.totalorder %v2463, 0
        %v2465 = vsel %vm2464, %v2463, 0
        %v2466 = vshrl.u32 %v2465, 5
        %v2467 = vand.u32 %v2465, 31
        %v2468 = vsub.s32 32, %v2467
        %v2469 = vshrl.u32 683565275, %v2468
        %v2470 = vshll.u32 683565275, %v2467
        %v2471 = vshrl.u32 2475754826, %v2468
        %v2472 = vor.u32 %v2470, %v2471
        %v2473 = vshll.u32 2475754826, %v2467
        %v2474 = vshrl.u32 2131351028, %v2468
        %v2475 = vor.u32 %v2473, %v2474
        %v2476 = vshll.u32 2131351028, %v2467
        %v2477 = vshrl.u32 2102212464, %v2468
        %v2478 = vor.u32 %v2476, %v2477
        %v2479 = vshll.u32 2102212464, %v2467
        %v2480 = vshrl.u32 920167782, %v2468
        %v2481 = vor.u32 %v2479, %v2480
        %v2482 = vshll.u32 920167782, %v2467
        %v2483 = vshrl.u32 1326507024, %v2468
        %v2484 = vor.u32 %v2482, %v2483
        %vm2485 = vcmp.lt.s32.totalorder %v2466, 1
        %vm2486 = vcmp.lt.s32.totalorder %v2466, 2
        %vm2487 = vcmp.lt.s32.totalorder %v2466, 3
        %vm2488 = vcmp.lt.s32.totalorder %v2466, 4
        %v2489 = vsel %vm2485, %v2469, %v2472
        %v2490 = vsel %vm2488, %v2478, 2102212464
        %v2491 = vsel %vm2487, %v2475, %v2490
        %v2492 = vsel %vm2486, %v2489, %v2491
        %v2493 = vsel %vm2485, %v2472, %v2475
        %v2494 = vsel %vm2488, %v2481, 920167782
        %v2495 = vsel %vm2487, %v2478, %v2494
        %v2496 = vsel %vm2486, %v2493, %v2495
        %v2497 = vsel %vm2485, %v2475, %v2478
        %v2498 = vsel %vm2488, %v2484, 1326507024
        %v2499 = vsel %vm2487, %v2481, %v2498
        %v2500 = vsel %vm2486, %v2497, %v2499
        %v2501 = vshll.u32 %v2461, 8
        %v2502 = vmul.u32.u64.compose %v2501, %v2500
        %v2503 = vextract.low.u32 %v2502
        %v2504 = vextract.high.u32 %v2502
        %v2505 = vmul.u32.u64.compose %v2501, %v2496
        %v2506 = vextract.low.u32 %v2505
        %v2507 = vextract.high.u32 %v2505
        %v2508 = vmul.u32 %v2501, %v2492
        %v2509 = vadd.s32 %v2504, %v2506
        %vm2510 = vc.u32 %v2504, %v2506
        %v2511 = vadd.s32 %v2507, 1
        %v2512 = vsel %vm2510, %v2511, %v2507
        %v2513 = vadd.s32 %v2508, %v2512
        %v2514 = vadd.s32 %v2513, 536870912
        %v2515 = vshrl.u32 %v2514, 30
        %v2516 = vshll.u32 %v2515, 30
        %v2517 = vsub.s32 %v2513, %v2516
        %vm2518 = vcmp.lt.s32.totalorder %v2517, 0
        %v2519 = vsub.s32 0, %v2517
        %v2520 = vsel %vm2518, %v2519, %v2517
        %v2521 = vclz %v2520
        %v2522 = vsub.s32 %v2521, 2
        %vm2523 = vcmp.gt.s32.totalorder 0, %v2522
        %v2524 = vsel %vm2523, 0, %v2522
        %v2525 = vsub.s32 32, %v2524
        %v2526 = vshll.u32 %v2517, %v2524
        %v2527 = vshrl.u32 %v2509, %v2525
        %v2528 = vor.u32 %v2526, %v2527
        %v2529 = vsub.s32 4294967266, %v2524
        %v2530 = vadd.s32 %v2529, 127
        %v2531 = vshll.u32 %v2530, 23
        %v2532 = vor.u32 4788187, %v2531
        %v2533 = vand.u32 2147483647, %v2532
        %v2535 = vcvt.s32.f32 %v2528
        %v2536 = vmul.f32 %v2535, %v2533
        %v2537 = vxor.u32 %v2536, 2147483648
        %v2538 = vsel %vm2455, %v2537, %v2536
        %v2539 = vsub.s32 4, %v2515
        %v2540 = vsel %vm2455, %v2539, %v2515
        %v2541 = vsel %vm2454, %v741, %v2538
        %v2542 = vsel %vm2454, 0, %v2540
        %v2543 = vcosq.f32.pop %v2541
        %v2544 = vsinq.f32.pop %v2541
        %vm2545 = vweird.f32 %v741
        %v2546 = vadd.s32 %v2542, 3
        %v2547 = vand.u32 %v2546, 3
        %vm2548 = vcmp.lt.s32.totalorder %v2547, 2
        %vm2549 = vcmp.eq.s32.totalorder %v2547, 0
        %v2550 = vxor.u32 %v2544, 2147483648
        %v2551 = vsel %vm2549, %v2543, %v2550
        %vm2552 = vcmp.eq.s32.totalorder %v2547, 2
        %v2553 = vxor.u32 %v2543, 2147483648
        %v2554 = vsel %vm2552, %v2553, %v2544
        %v2555 = vsel %vm2548, %v2551, %v2554
        %v2556 = vsel %vm2545, nan, %v2555
        %v2557 = vand.u32 2147483647, %v742
        %vm2558 = vcmp.le.f32.partialorder %v2557, 0.7853982
        %vm2559 = vcmp.lt.s32.totalorder %v742, 0
        %v2560 = vand.u32 %v742, 2139095040
        %v2561 = vshrl.u32 %v2560, 23
        %v2562 = vsub.s32 %v2561, 127
        %v2563 = vand.u32 2147483647, %v742
        %v2564 = vand.u32 %v2563, 8388607
        %v2565 = vor.u32 %v2564, 8388608
        %v2566 = vsub.s32 0, %v2565
        %v2567 = vadd.s32 %v2562, 1
        %vm2568 = vcmp.gt.s32.totalorder %v2567, 0
        %v2569 = vsel %vm2568, %v2567, 0
        %v2570 = vshrl.u32 %v2569, 5
        %v2571 = vand.u32 %v2569, 31
        %v2572 = vsub.s32 32, %v2571
        %v2573 = vshrl.u32 683565275, %v2572
        %v2574 = vshll.u32 683565275, %v2571
        %v2575 = vshrl.u32 2475754826, %v2572
        %v2576 = vor.u32 %v2574, %v2575
        %v2577 = vshll.u32 2475754826, %v2571
        %v2578 = vshrl.u32 2131351028, %v2572
        %v2579 = vor.u32 %v2577, %v2578
        %v2580 = vshll.u32 2131351028, %v2571
        %v2581 = vshrl.u32 2102212464, %v2572
        %v2582 = vor.u32 %v2580, %v2581
        %v2583 = vshll.u32 2102212464, %v2571
        %v2584 = vshrl.u32 920167782, %v2572
        %v2585 = vor.u32 %v2583, %v2584
        %v2586 = vshll.u32 920167782, %v2571
        %v2587 = vshrl.u32 1326507024, %v2572
        %v2588 = vor.u32 %v2586, %v2587
        %vm2589 = vcmp.lt.s32.totalorder %v2570, 1
        %vm2590 = vcmp.lt.s32.totalorder %v2570, 2
        %vm2591 = vcmp.lt.s32.totalorder %v2570, 3
        %vm2592 = vcmp.lt.s32.totalorder %v2570, 4
        %v2593 = vsel %vm2589, %v2573, %v2576
        %v2594 = vsel %vm2592, %v2582, 2102212464
        %v2595 = vsel %vm2591, %v2579, %v2594
        %v2596 = vsel %vm2590, %v2593, %v2595
        %v2597 = vsel %vm2589, %v2576, %v2579
        %v2598 = vsel %vm2592, %v2585, 920167782
        %v2599 = vsel %vm2591, %v2582, %v2598
        %v2600 = vsel %vm2590, %v2597, %v2599
        %v2601 = vsel %vm2589, %v2579, %v2582
        %v2602 = vsel %vm2592, %v2588, 1326507024
        %v2603 = vsel %vm2591, %v2585, %v2602
        %v2604 = vsel %vm2590, %v2601, %v2603
        %v2605 = vshll.u32 %v2565, 8
        %v2606 = vmul.u32.u64.compose %v2605, %v2604
        %v2607 = vextract.low.u32 %v2606
        %v2608 = vextract.high.u32 %v2606
        %v2609 = vmul.u32.u64.compose %v2605, %v2600
        %v2610 = vextract.low.u32 %v2609
        %v2611 = vextract.high.u32 %v2609
        %v2612 = vmul.u32 %v2605, %v2596
        %v2613 = vadd.s32 %v2608, %v2610
        %vm2614 = vc.u32 %v2608, %v2610
        %v2615 = vadd.s32 %v2611, 1
        %v2616 = vsel %vm2614, %v2615, %v2611
        %v2617 = vadd.s32 %v2612, %v2616
        %v2618 = vadd.s32 %v2617, 536870912
        %v2619 = vshrl.u32 %v2618, 30
        %v2620 = vshll.u32 %v2619, 30
        %v2621 = vsub.s32 %v2617, %v2620
        %vm2622 = vcmp.lt.s32.totalorder %v2621, 0
        %v2623 = vsub.s32 0, %v2621
        %v2624 = vsel %vm2622, %v2623, %v2621
        %v2625 = vclz %v2624
        %v2626 = vsub.s32 %v2625, 2
        %vm2627 = vcmp.gt.s32.totalorder 0, %v2626
        %v2628 = vsel %vm2627, 0, %v2626
        %v2629 = vsub.s32 32, %v2628
        %v2630 = vshll.u32 %v2621, %v2628
        %v2631 = vshrl.u32 %v2613, %v2629
        %v2632 = vor.u32 %v2630, %v2631
        %v2633 = vsub.s32 4294967266, %v2628
        %v2634 = vadd.s32 %v2633, 127
        %v2635 = vshll.u32 %v2634, 23
        %v2636 = vor.u32 4788187, %v2635
        %v2637 = vand.u32 2147483647, %v2636
        %v2639 = vcvt.s32.f32 %v2632
        %v2640 = vmul.f32 %v2639, %v2637
        %v2641 = vxor.u32 %v2640, 2147483648
        %v2642 = vsel %vm2559, %v2641, %v2640
        %v2643 = vsub.s32 4, %v2619
        %v2644 = vsel %vm2559, %v2643, %v2619
        %v2645 = vsel %vm2558, %v742, %v2642
        %v2646 = vsel %vm2558, 0, %v2644
        %v2647 = vcosq.f32.pop %v2645
        %v2648 = vsinq.f32.pop %v2645
        %vm2649 = vweird.f32 %v742
        %v2650 = vadd.s32 %v2646, 3
        %v2651 = vand.u32 %v2650, 3
        %vm2652 = vcmp.lt.s32.totalorder %v2651, 2
        %vm2653 = vcmp.eq.s32.totalorder %v2651, 0
        %v2654 = vxor.u32 %v2648, 2147483648
        %v2655 = vsel %vm2653, %v2647, %v2654
        %vm2656 = vcmp.eq.s32.totalorder %v2651, 2
        %v2657 = vxor.u32 %v2647, 2147483648
        %v2658 = vsel %vm2656, %v2657, %v2648
        %v2659 = vsel %vm2652, %v2655, %v2658
        %v2660 = vsel %vm2649, nan, %v2659
        %v2661 = vand.u32 2147483647, %v743
        %vm2662 = vcmp.le.f32.partialorder %v2661, 0.7853982
        %vm2663 = vcmp.lt.s32.totalorder %v743, 0
        %v2664 = vand.u32 %v743, 2139095040
        %v2665 = vshrl.u32 %v2664, 23
        %v2666 = vsub.s32 %v2665, 127
        %v2667 = vand.u32 2147483647, %v743
        %v2668 = vand.u32 %v2667, 8388607
        %v2669 = vor.u32 %v2668, 8388608
        %v2670 = vsub.s32 0, %v2669
        %v2671 = vadd.s32 %v2666, 1
        %vm2672 = vcmp.gt.s32.totalorder %v2671, 0
        %v2673 = vsel %vm2672, %v2671, 0
        %v2674 = vshrl.u32 %v2673, 5
        %v2675 = vand.u32 %v2673, 31
        %v2676 = vsub.s32 32, %v2675
        %v2677 = vshrl.u32 683565275, %v2676
        %v2678 = vshll.u32 683565275, %v2675
        %v2679 = vshrl.u32 2475754826, %v2676
        %v2680 = vor.u32 %v2678, %v2679
        %v2681 = vshll.u32 2475754826, %v2675
        %v2682 = vshrl.u32 2131351028, %v2676
        %v2683 = vor.u32 %v2681, %v2682
        %v2684 = vshll.u32 2131351028, %v2675
        %v2685 = vshrl.u32 2102212464, %v2676
        %v2686 = vor.u32 %v2684, %v2685
        %v2687 = vshll.u32 2102212464, %v2675
        %v2688 = vshrl.u32 920167782, %v2676
        %v2689 = vor.u32 %v2687, %v2688
        %v2690 = vshll.u32 920167782, %v2675
        %v2691 = vshrl.u32 1326507024, %v2676
        %v2692 = vor.u32 %v2690, %v2691
        %vm2693 = vcmp.lt.s32.totalorder %v2674, 1
        %vm2694 = vcmp.lt.s32.totalorder %v2674, 2
        %vm2695 = vcmp.lt.s32.totalorder %v2674, 3
        %vm2696 = vcmp.lt.s32.totalorder %v2674, 4
        %v2697 = vsel %vm2693, %v2677, %v2680
        %v2698 = vsel %vm2696, %v2686, 2102212464
        %v2699 = vsel %vm2695, %v2683, %v2698
        %v2700 = vsel %vm2694, %v2697, %v2699
        %v2701 = vsel %vm2693, %v2680, %v2683
        %v2702 = vsel %vm2696, %v2689, 920167782
        %v2703 = vsel %vm2695, %v2686, %v2702
        %v2704 = vsel %vm2694, %v2701, %v2703
        %v2705 = vsel %vm2693, %v2683, %v2686
        %v2706 = vsel %vm2696, %v2692, 1326507024
        %v2707 = vsel %vm2695, %v2689, %v2706
        %v2708 = vsel %vm2694, %v2705, %v2707
        %v2709 = vshll.u32 %v2669, 8
        %v2710 = vmul.u32.u64.compose %v2709, %v2708
        %v2711 = vextract.low.u32 %v2710
        %v2712 = vextract.high.u32 %v2710
        %v2713 = vmul.u32.u64.compose %v2709, %v2704
        %v2714 = vextract.low.u32 %v2713
        %v2715 = vextract.high.u32 %v2713
        %v2716 = vmul.u32 %v2709, %v2700
        %v2717 = vadd.s32 %v2712, %v2714
        %vm2718 = vc.u32 %v2712, %v2714
        %v2719 = vadd.s32 %v2715, 1
        %v2720 = vsel %vm2718, %v2719, %v2715
        %v2721 = vadd.s32 %v2716, %v2720
        %v2722 = vadd.s32 %v2721, 536870912
        %v2723 = vshrl.u32 %v2722, 30
        %v2724 = vshll.u32 %v2723, 30
        %v2725 = vsub.s32 %v2721, %v2724
        %vm2726 = vcmp.lt.s32.totalorder %v2725, 0
        %v2727 = vsub.s32 0, %v2725
        %v2728 = vsel %vm2726, %v2727, %v2725
        %v2729 = vclz %v2728
        %v2730 = vsub.s32 %v2729, 2
        %vm2731 = vcmp.gt.s32.totalorder 0, %v2730
        %v2732 = vsel %vm2731, 0, %v2730
        %v2733 = vsub.s32 32, %v2732
        %v2734 = vshll.u32 %v2725, %v2732
        %v2735 = vshrl.u32 %v2717, %v2733
        %v2736 = vor.u32 %v2734, %v2735
        %v2737 = vsub.s32 4294967266, %v2732
        %v2738 = vadd.s32 %v2737, 127
        %v2739 = vshll.u32 %v2738, 23
        %v2740 = vor.u32 4788187, %v2739
        %v2741 = vand.u32 2147483647, %v2740
        %v2743 = vcvt.s32.f32 %v2736
        %v2744 = vmul.f32 %v2743, %v2741
        %v2745 = vxor.u32 %v2744, 2147483648
        %v2746 = vsel %vm2663, %v2745, %v2744
        %v2747 = vsub.s32 4, %v2723
        %v2748 = vsel %vm2663, %v2747, %v2723
        %v2749 = vsel %vm2662, %v743, %v2746
        %v2750 = vsel %vm2662, 0, %v2748
        %v2751 = vcosq.f32.pop %v2749
        %v2752 = vsinq.f32.pop %v2749
        %vm2753 = vweird.f32 %v743
        %v2754 = vadd.s32 %v2750, 3
        %v2755 = vand.u32 %v2754, 3
        %vm2756 = vcmp.lt.s32.totalorder %v2755, 2
        %vm2757 = vcmp.eq.s32.totalorder %v2755, 0
        %v2758 = vxor.u32 %v2752, 2147483648
        %v2759 = vsel %vm2757, %v2751, %v2758
        %vm2760 = vcmp.eq.s32.totalorder %v2755, 2
        %v2761 = vxor.u32 %v2751, 2147483648
        %v2762 = vsel %vm2760, %v2761, %v2752
        %v2763 = vsel %vm2756, %v2759, %v2762
        %v2764 = vsel %vm2753, nan, %v2763
        %v2765 = vand.u32 2147483647, %v744
        %vm2766 = vcmp.le.f32.partialorder %v2765, 0.7853982
        %vm2767 = vcmp.lt.s32.totalorder %v744, 0
        %v2768 = vand.u32 %v744, 2139095040
        %v2769 = vshrl.u32 %v2768, 23
        %v2770 = vsub.s32 %v2769, 127
        %v2771 = vand.u32 2147483647, %v744
        %v2772 = vand.u32 %v2771, 8388607
        %v2773 = vor.u32 %v2772, 8388608
        %v2774 = vsub.s32 0, %v2773
        %v2775 = vadd.s32 %v2770, 1
        %vm2776 = vcmp.gt.s32.totalorder %v2775, 0
        %v2777 = vsel %vm2776, %v2775, 0
        %v2778 = vshrl.u32 %v2777, 5
        %v2779 = vand.u32 %v2777, 31
        %v2780 = vsub.s32 32, %v2779
        %v2781 = vshrl.u32 683565275, %v2780
        %v2782 = vshll.u32 683565275, %v2779
        %v2783 = vshrl.u32 2475754826, %v2780
        %v2784 = vor.u32 %v2782, %v2783
        %v2785 = vshll.u32 2475754826, %v2779
        %v2786 = vshrl.u32 2131351028, %v2780
        %v2787 = vor.u32 %v2785, %v2786
        %v2788 = vshll.u32 2131351028, %v2779
        %v2789 = vshrl.u32 2102212464, %v2780
        %v2790 = vor.u32 %v2788, %v2789
        %v2791 = vshll.u32 2102212464, %v2779
        %v2792 = vshrl.u32 920167782, %v2780
        %v2793 = vor.u32 %v2791, %v2792
        %v2794 = vshll.u32 920167782, %v2779
        %v2795 = vshrl.u32 1326507024, %v2780
        %v2796 = vor.u32 %v2794, %v2795
        %vm2797 = vcmp.lt.s32.totalorder %v2778, 1
        %vm2798 = vcmp.lt.s32.totalorder %v2778, 2
        %vm2799 = vcmp.lt.s32.totalorder %v2778, 3
        %vm2800 = vcmp.lt.s32.totalorder %v2778, 4
        %v2801 = vsel %vm2797, %v2781, %v2784
        %v2802 = vsel %vm2800, %v2790, 2102212464
        %v2803 = vsel %vm2799, %v2787, %v2802
        %v2804 = vsel %vm2798, %v2801, %v2803
        %v2805 = vsel %vm2797, %v2784, %v2787
        %v2806 = vsel %vm2800, %v2793, 920167782
        %v2807 = vsel %vm2799, %v2790, %v2806
        %v2808 = vsel %vm2798, %v2805, %v2807
        %v2809 = vsel %vm2797, %v2787, %v2790
        %v2810 = vsel %vm2800, %v2796, 1326507024
        %v2811 = vsel %vm2799, %v2793, %v2810
        %v2812 = vsel %vm2798, %v2809, %v2811
        %v2813 = vshll.u32 %v2773, 8
        %v2814 = vmul.u32.u64.compose %v2813, %v2812
        %v2815 = vextract.low.u32 %v2814
        %v2816 = vextract.high.u32 %v2814
        %v2817 = vmul.u32.u64.compose %v2813, %v2808
        %v2818 = vextract.low.u32 %v2817
        %v2819 = vextract.high.u32 %v2817
        %v2820 = vmul.u32 %v2813, %v2804
        %v2821 = vadd.s32 %v2816, %v2818
        %vm2822 = vc.u32 %v2816, %v2818
        %v2823 = vadd.s32 %v2819, 1
        %v2824 = vsel %vm2822, %v2823, %v2819
        %v2825 = vadd.s32 %v2820, %v2824
        %v2826 = vadd.s32 %v2825, 536870912
        %v2827 = vshrl.u32 %v2826, 30
        %v2828 = vshll.u32 %v2827, 30
        %v2829 = vsub.s32 %v2825, %v2828
        %vm2830 = vcmp.lt.s32.totalorder %v2829, 0
        %v2831 = vsub.s32 0, %v2829
        %v2832 = vsel %vm2830, %v2831, %v2829
        %v2833 = vclz %v2832
        %v2834 = vsub.s32 %v2833, 2
        %vm2835 = vcmp.gt.s32.totalorder 0, %v2834
        %v2836 = vsel %vm2835, 0, %v2834
        %v2837 = vsub.s32 32, %v2836
        %v2838 = vshll.u32 %v2829, %v2836
        %v2839 = vshrl.u32 %v2821, %v2837
        %v2840 = vor.u32 %v2838, %v2839
        %v2841 = vsub.s32 4294967266, %v2836
        %v2842 = vadd.s32 %v2841, 127
        %v2843 = vshll.u32 %v2842, 23
        %v2844 = vor.u32 4788187, %v2843
        %v2845 = vand.u32 2147483647, %v2844
        %v2847 = vcvt.s32.f32 %v2840
        %v2848 = vmul.f32 %v2847, %v2845
        %v2849 = vxor.u32 %v2848, 2147483648
        %v2850 = vsel %vm2767, %v2849, %v2848
        %v2851 = vsub.s32 4, %v2827
        %v2852 = vsel %vm2767, %v2851, %v2827
        %v2853 = vsel %vm2766, %v744, %v2850
        %v2854 = vsel %vm2766, 0, %v2852
        %v2855 = vcosq.f32.pop %v2853
        %v2856 = vsinq.f32.pop %v2853
        %vm2857 = vweird.f32 %v744
        %v2858 = vadd.s32 %v2854, 3
        %v2859 = vand.u32 %v2858, 3
        %vm2860 = vcmp.lt.s32.totalorder %v2859, 2
        %vm2861 = vcmp.eq.s32.totalorder %v2859, 0
        %v2862 = vxor.u32 %v2856, 2147483648
        %v2863 = vsel %vm2861, %v2855, %v2862
        %vm2864 = vcmp.eq.s32.totalorder %v2859, 2
        %v2865 = vxor.u32 %v2855, 2147483648
        %v2866 = vsel %vm2864, %v2865, %v2856
        %v2867 = vsel %vm2860, %v2863, %v2866
        %v2868 = vsel %vm2857, nan, %v2867
        %v2869 = vand.u32 2147483647, %v745
        %vm2870 = vcmp.le.f32.partialorder %v2869, 0.7853982
        %vm2871 = vcmp.lt.s32.totalorder %v745, 0
        %v2872 = vand.u32 %v745, 2139095040
        %v2873 = vshrl.u32 %v2872, 23
        %v2874 = vsub.s32 %v2873, 127
        %v2875 = vand.u32 2147483647, %v745
        %v2876 = vand.u32 %v2875, 8388607
        %v2877 = vor.u32 %v2876, 8388608
        %v2878 = vsub.s32 0, %v2877
        %v2879 = vadd.s32 %v2874, 1
        %vm2880 = vcmp.gt.s32.totalorder %v2879, 0
        %v2881 = vsel %vm2880, %v2879, 0
        %v2882 = vshrl.u32 %v2881, 5
        %v2883 = vand.u32 %v2881, 31
        %v2884 = vsub.s32 32, %v2883
        %v2885 = vshrl.u32 683565275, %v2884
        %v2886 = vshll.u32 683565275, %v2883
        %v2887 = vshrl.u32 2475754826, %v2884
        %v2888 = vor.u32 %v2886, %v2887
        %v2889 = vshll.u32 2475754826, %v2883
        %v2890 = vshrl.u32 2131351028, %v2884
        %v2891 = vor.u32 %v2889, %v2890
        %v2892 = vshll.u32 2131351028, %v2883
        %v2893 = vshrl.u32 2102212464, %v2884
        %v2894 = vor.u32 %v2892, %v2893
        %v2895 = vshll.u32 2102212464, %v2883
        %v2896 = vshrl.u32 920167782, %v2884
        %v2897 = vor.u32 %v2895, %v2896
        %v2898 = vshll.u32 920167782, %v2883
        %v2899 = vshrl.u32 1326507024, %v2884
        %v2900 = vor.u32 %v2898, %v2899
        %vm2901 = vcmp.lt.s32.totalorder %v2882, 1
        %vm2902 = vcmp.lt.s32.totalorder %v2882, 2
        %vm2903 = vcmp.lt.s32.totalorder %v2882, 3
        %vm2904 = vcmp.lt.s32.totalorder %v2882, 4
        %v2905 = vsel %vm2901, %v2885, %v2888
        %v2906 = vsel %vm2904, %v2894, 2102212464
        %v2907 = vsel %vm2903, %v2891, %v2906
        %v2908 = vsel %vm2902, %v2905, %v2907
        %v2909 = vsel %vm2901, %v2888, %v2891
        %v2910 = vsel %vm2904, %v2897, 920167782
        %v2911 = vsel %vm2903, %v2894, %v2910
        %v2912 = vsel %vm2902, %v2909, %v2911
        %v2913 = vsel %vm2901, %v2891, %v2894
        %v2914 = vsel %vm2904, %v2900, 1326507024
        %v2915 = vsel %vm2903, %v2897, %v2914
        %v2916 = vsel %vm2902, %v2913, %v2915
        %v2917 = vshll.u32 %v2877, 8
        %v2918 = vmul.u32.u64.compose %v2917, %v2916
        %v2919 = vextract.low.u32 %v2918
        %v2920 = vextract.high.u32 %v2918
        %v2921 = vmul.u32.u64.compose %v2917, %v2912
        %v2922 = vextract.low.u32 %v2921
        %v2923 = vextract.high.u32 %v2921
        %v2924 = vmul.u32 %v2917, %v2908
        %v2925 = vadd.s32 %v2920, %v2922
        %vm2926 = vc.u32 %v2920, %v2922
        %v2927 = vadd.s32 %v2923, 1
        %v2928 = vsel %vm2926, %v2927, %v2923
        %v2929 = vadd.s32 %v2924, %v2928
        %v2930 = vadd.s32 %v2929, 536870912
        %v2931 = vshrl.u32 %v2930, 30
        %v2932 = vshll.u32 %v2931, 30
        %v2933 = vsub.s32 %v2929, %v2932
        %vm2934 = vcmp.lt.s32.totalorder %v2933, 0
        %v2935 = vsub.s32 0, %v2933
        %v2936 = vsel %vm2934, %v2935, %v2933
        %v2937 = vclz %v2936
        %v2938 = vsub.s32 %v2937, 2
        %vm2939 = vcmp.gt.s32.totalorder 0, %v2938
        %v2940 = vsel %vm2939, 0, %v2938
        %v2941 = vsub.s32 32, %v2940
        %v2942 = vshll.u32 %v2933, %v2940
        %v2943 = vshrl.u32 %v2925, %v2941
        %v2944 = vor.u32 %v2942, %v2943
        %v2945 = vsub.s32 4294967266, %v2940
        %v2946 = vadd.s32 %v2945, 127
        %v2947 = vshll.u32 %v2946, 23
        %v2948 = vor.u32 4788187, %v2947
        %v2949 = vand.u32 2147483647, %v2948
        %v2951 = vcvt.s32.f32 %v2944
        %v2952 = vmul.f32 %v2951, %v2949
        %v2953 = vxor.u32 %v2952, 2147483648
        %v2954 = vsel %vm2871, %v2953, %v2952
        %v2955 = vsub.s32 4, %v2931
        %v2956 = vsel %vm2871, %v2955, %v2931
        %v2957 = vsel %vm2870, %v745, %v2954
        %v2958 = vsel %vm2870, 0, %v2956
        %v2959 = vcosq.f32.pop %v2957
        %v2960 = vsinq.f32.pop %v2957
        %vm2961 = vweird.f32 %v745
        %v2962 = vadd.s32 %v2958, 3
        %v2963 = vand.u32 %v2962, 3
        %vm2964 = vcmp.lt.s32.totalorder %v2963, 2
        %vm2965 = vcmp.eq.s32.totalorder %v2963, 0
        %v2966 = vxor.u32 %v2960, 2147483648
        %v2967 = vsel %vm2965, %v2959, %v2966
        %vm2968 = vcmp.eq.s32.totalorder %v2963, 2
        %v2969 = vxor.u32 %v2959, 2147483648
        %v2970 = vsel %vm2968, %v2969, %v2960
        %v2971 = vsel %vm2964, %v2967, %v2970
        %v2972 = vsel %vm2961, nan, %v2971
        %v2973 = vand.u32 2147483647, %v746
        %vm2974 = vcmp.le.f32.partialorder %v2973, 0.7853982
        %vm2975 = vcmp.lt.s32.totalorder %v746, 0
        %v2976 = vand.u32 %v746, 2139095040
        %v2977 = vshrl.u32 %v2976, 23
        %v2978 = vsub.s32 %v2977, 127
        %v2979 = vand.u32 2147483647, %v746
        %v2980 = vand.u32 %v2979, 8388607
        %v2981 = vor.u32 %v2980, 8388608
        %v2982 = vsub.s32 0, %v2981
        %v2983 = vadd.s32 %v2978, 1
        %vm2984 = vcmp.gt.s32.totalorder %v2983, 0
        %v2985 = vsel %vm2984, %v2983, 0
        %v2986 = vshrl.u32 %v2985, 5
        %v2987 = vand.u32 %v2985, 31
        %v2988 = vsub.s32 32, %v2987
        %v2989 = vshrl.u32 683565275, %v2988
        %v2990 = vshll.u32 683565275, %v2987
        %v2991 = vshrl.u32 2475754826, %v2988
        %v2992 = vor.u32 %v2990, %v2991
        %v2993 = vshll.u32 2475754826, %v2987
        %v2994 = vshrl.u32 2131351028, %v2988
        %v2995 = vor.u32 %v2993, %v2994
        %v2996 = vshll.u32 2131351028, %v2987
        %v2997 = vshrl.u32 2102212464, %v2988
        %v2998 = vor.u32 %v2996, %v2997
        %v2999 = vshll.u32 2102212464, %v2987
        %v3000 = vshrl.u32 920167782, %v2988
        %v3001 = vor.u32 %v2999, %v3000
        %v3002 = vshll.u32 920167782, %v2987
        %v3003 = vshrl.u32 1326507024, %v2988
        %v3004 = vor.u32 %v3002, %v3003
        %vm3005 = vcmp.lt.s32.totalorder %v2986, 1
        %vm3006 = vcmp.lt.s32.totalorder %v2986, 2
        %vm3007 = vcmp.lt.s32.totalorder %v2986, 3
        %vm3008 = vcmp.lt.s32.totalorder %v2986, 4
        %v3009 = vsel %vm3005, %v2989, %v2992
        %v3010 = vsel %vm3008, %v2998, 2102212464
        %v3011 = vsel %vm3007, %v2995, %v3010
        %v3012 = vsel %vm3006, %v3009, %v3011
        %v3013 = vsel %vm3005, %v2992, %v2995
        %v3014 = vsel %vm3008, %v3001, 920167782
        %v3015 = vsel %vm3007, %v2998, %v3014
        %v3016 = vsel %vm3006, %v3013, %v3015
        %v3017 = vsel %vm3005, %v2995, %v2998
        %v3018 = vsel %vm3008, %v3004, 1326507024
        %v3019 = vsel %vm3007, %v3001, %v3018
        %v3020 = vsel %vm3006, %v3017, %v3019
        %v3021 = vshll.u32 %v2981, 8
        %v3022 = vmul.u32.u64.compose %v3021, %v3020
        %v3023 = vextract.low.u32 %v3022
        %v3024 = vextract.high.u32 %v3022
        %v3025 = vmul.u32.u64.compose %v3021, %v3016
        %v3026 = vextract.low.u32 %v3025
        %v3027 = vextract.high.u32 %v3025
        %v3028 = vmul.u32 %v3021, %v3012
        %v3029 = vadd.s32 %v3024, %v3026
        %vm3030 = vc.u32 %v3024, %v3026
        %v3031 = vadd.s32 %v3027, 1
        %v3032 = vsel %vm3030, %v3031, %v3027
        %v3033 = vadd.s32 %v3028, %v3032
        %v3034 = vadd.s32 %v3033, 536870912
        %v3035 = vshrl.u32 %v3034, 30
        %v3036 = vshll.u32 %v3035, 30
        %v3037 = vsub.s32 %v3033, %v3036
        %vm3038 = vcmp.lt.s32.totalorder %v3037, 0
        %v3039 = vsub.s32 0, %v3037
        %v3040 = vsel %vm3038, %v3039, %v3037
        %v3041 = vclz %v3040
        %v3042 = vsub.s32 %v3041, 2
        %vm3043 = vcmp.gt.s32.totalorder 0, %v3042
        %v3044 = vsel %vm3043, 0, %v3042
        %v3045 = vsub.s32 32, %v3044
        %v3046 = vshll.u32 %v3037, %v3044
        %v3047 = vshrl.u32 %v3029, %v3045
        %v3048 = vor.u32 %v3046, %v3047
        %v3049 = vsub.s32 4294967266, %v3044
        %v3050 = vadd.s32 %v3049, 127
        %v3051 = vshll.u32 %v3050, 23
        %v3052 = vor.u32 4788187, %v3051
        %v3053 = vand.u32 2147483647, %v3052
        %v3055 = vcvt.s32.f32 %v3048
        %v3056 = vmul.f32 %v3055, %v3053
        %v3057 = vxor.u32 %v3056, 2147483648
        %v3058 = vsel %vm2975, %v3057, %v3056
        %v3059 = vsub.s32 4, %v3035
        %v3060 = vsel %vm2975, %v3059, %v3035
        %v3061 = vsel %vm2974, %v746, %v3058
        %v3062 = vsel %vm2974, 0, %v3060
        %v3063 = vcosq.f32.pop %v3061
        %v3064 = vsinq.f32.pop %v3061
        %vm3065 = vweird.f32 %v746
        %v3066 = vadd.s32 %v3062, 3
        %v3067 = vand.u32 %v3066, 3
        %vm3068 = vcmp.lt.s32.totalorder %v3067, 2
        %vm3069 = vcmp.eq.s32.totalorder %v3067, 0
        %v3070 = vxor.u32 %v3064, 2147483648
        %v3071 = vsel %vm3069, %v3063, %v3070
        %vm3072 = vcmp.eq.s32.totalorder %v3067, 2
        %v3073 = vxor.u32 %v3063, 2147483648
        %v3074 = vsel %vm3072, %v3073, %v3064
        %v3075 = vsel %vm3068, %v3071, %v3074
        %v3076 = vsel %vm3065, nan, %v3075
        %v3077 = vand.u32 2147483647, %v747
        %vm3078 = vcmp.le.f32.partialorder %v3077, 0.7853982
        %vm3079 = vcmp.lt.s32.totalorder %v747, 0
        %v3080 = vand.u32 %v747, 2139095040
        %v3081 = vshrl.u32 %v3080, 23
        %v3082 = vsub.s32 %v3081, 127
        %v3083 = vand.u32 2147483647, %v747
        %v3084 = vand.u32 %v3083, 8388607
        %v3085 = vor.u32 %v3084, 8388608
        %v3086 = vsub.s32 0, %v3085
        %v3087 = vadd.s32 %v3082, 1
        %vm3088 = vcmp.gt.s32.totalorder %v3087, 0
        %v3089 = vsel %vm3088, %v3087, 0
        %v3090 = vshrl.u32 %v3089, 5
        %v3091 = vand.u32 %v3089, 31
        %v3092 = vsub.s32 32, %v3091
        %v3093 = vshrl.u32 683565275, %v3092
        %v3094 = vshll.u32 683565275, %v3091
        %v3095 = vshrl.u32 2475754826, %v3092
        %v3096 = vor.u32 %v3094, %v3095
        %v3097 = vshll.u32 2475754826, %v3091
        %v3098 = vshrl.u32 2131351028, %v3092
        %v3099 = vor.u32 %v3097, %v3098
        %v3100 = vshll.u32 2131351028, %v3091
        %v3101 = vshrl.u32 2102212464, %v3092
        %v3102 = vor.u32 %v3100, %v3101
        %v3103 = vshll.u32 2102212464, %v3091
        %v3104 = vshrl.u32 920167782, %v3092
        %v3105 = vor.u32 %v3103, %v3104
        %v3106 = vshll.u32 920167782, %v3091
        %v3107 = vshrl.u32 1326507024, %v3092
        %v3108 = vor.u32 %v3106, %v3107
        %vm3109 = vcmp.lt.s32.totalorder %v3090, 1
        %vm3110 = vcmp.lt.s32.totalorder %v3090, 2
        %vm3111 = vcmp.lt.s32.totalorder %v3090, 3
        %vm3112 = vcmp.lt.s32.totalorder %v3090, 4
        %v3113 = vsel %vm3109, %v3093, %v3096
        %v3114 = vsel %vm3112, %v3102, 2102212464
        %v3115 = vsel %vm3111, %v3099, %v3114
        %v3116 = vsel %vm3110, %v3113, %v3115
        %v3117 = vsel %vm3109, %v3096, %v3099
        %v3118 = vsel %vm3112, %v3105, 920167782
        %v3119 = vsel %vm3111, %v3102, %v3118
        %v3120 = vsel %vm3110, %v3117, %v3119
        %v3121 = vsel %vm3109, %v3099, %v3102
        %v3122 = vsel %vm3112, %v3108, 1326507024
        %v3123 = vsel %vm3111, %v3105, %v3122
        %v3124 = vsel %vm3110, %v3121, %v3123
        %v3125 = vshll.u32 %v3085, 8
        %v3126 = vmul.u32.u64.compose %v3125, %v3124
        %v3127 = vextract.low.u32 %v3126
        %v3128 = vextract.high.u32 %v3126
        %v3129 = vmul.u32.u64.compose %v3125, %v3120
        %v3130 = vextract.low.u32 %v3129
        %v3131 = vextract.high.u32 %v3129
        %v3132 = vmul.u32 %v3125, %v3116
        %v3133 = vadd.s32 %v3128, %v3130
        %vm3134 = vc.u32 %v3128, %v3130
        %v3135 = vadd.s32 %v3131, 1
        %v3136 = vsel %vm3134, %v3135, %v3131
        %v3137 = vadd.s32 %v3132, %v3136
        %v3138 = vadd.s32 %v3137, 536870912
        %v3139 = vshrl.u32 %v3138, 30
        %v3140 = vshll.u32 %v3139, 30
        %v3141 = vsub.s32 %v3137, %v3140
        %vm3142 = vcmp.lt.s32.totalorder %v3141, 0
        %v3143 = vsub.s32 0, %v3141
        %v3144 = vsel %vm3142, %v3143, %v3141
        %v3145 = vclz %v3144
        %v3146 = vsub.s32 %v3145, 2
        %vm3147 = vcmp.gt.s32.totalorder 0, %v3146
        %v3148 = vsel %vm3147, 0, %v3146
        %v3149 = vsub.s32 32, %v3148
        %v3150 = vshll.u32 %v3141, %v3148
        %v3151 = vshrl.u32 %v3133, %v3149
        %v3152 = vor.u32 %v3150, %v3151
        %v3153 = vsub.s32 4294967266, %v3148
        %v3154 = vadd.s32 %v3153, 127
        %v3155 = vshll.u32 %v3154, 23
        %v3156 = vor.u32 4788187, %v3155
        %v3157 = vand.u32 2147483647, %v3156
        %v3159 = vcvt.s32.f32 %v3152
        %v3160 = vmul.f32 %v3159, %v3157
        %v3161 = vxor.u32 %v3160, 2147483648
        %v3162 = vsel %vm3079, %v3161, %v3160
        %v3163 = vsub.s32 4, %v3139
        %v3164 = vsel %vm3079, %v3163, %v3139
        %v3165 = vsel %vm3078, %v747, %v3162
        %v3166 = vsel %vm3078, 0, %v3164
        %v3167 = vcosq.f32.pop %v3165
        %v3168 = vsinq.f32.pop %v3165
        %vm3169 = vweird.f32 %v747
        %v3170 = vadd.s32 %v3166, 3
        %v3171 = vand.u32 %v3170, 3
        %vm3172 = vcmp.lt.s32.totalorder %v3171, 2
        %vm3173 = vcmp.eq.s32.totalorder %v3171, 0
        %v3174 = vxor.u32 %v3168, 2147483648
        %v3175 = vsel %vm3173, %v3167, %v3174
        %vm3176 = vcmp.eq.s32.totalorder %v3171, 2
        %v3177 = vxor.u32 %v3167, 2147483648
        %v3178 = vsel %vm3176, %v3177, %v3168
        %v3179 = vsel %vm3172, %v3175, %v3178
        %v3180 = vsel %vm3169, nan, %v3179
        %v3181 = vand.u32 2147483647, %v748
        %vm3182 = vcmp.le.f32.partialorder %v3181, 0.7853982
        %vm3183 = vcmp.lt.s32.totalorder %v748, 0
        %v3184 = vand.u32 %v748, 2139095040
        %v3185 = vshrl.u32 %v3184, 23
        %v3186 = vsub.s32 %v3185, 127
        %v3187 = vand.u32 2147483647, %v748
        %v3188 = vand.u32 %v3187, 8388607
        %v3189 = vor.u32 %v3188, 8388608
        %v3190 = vsub.s32 0, %v3189
        %v3191 = vadd.s32 %v3186, 1
        %vm3192 = vcmp.gt.s32.totalorder %v3191, 0
        %v3193 = vsel %vm3192, %v3191, 0
        %v3194 = vshrl.u32 %v3193, 5
        %v3195 = vand.u32 %v3193, 31
        %v3196 = vsub.s32 32, %v3195
        %v3197 = vshrl.u32 683565275, %v3196
        %v3198 = vshll.u32 683565275, %v3195
        %v3199 = vshrl.u32 2475754826, %v3196
        %v3200 = vor.u32 %v3198, %v3199
        %v3201 = vshll.u32 2475754826, %v3195
        %v3202 = vshrl.u32 2131351028, %v3196
        %v3203 = vor.u32 %v3201, %v3202
        %v3204 = vshll.u32 2131351028, %v3195
        %v3205 = vshrl.u32 2102212464, %v3196
        %v3206 = vor.u32 %v3204, %v3205
        %v3207 = vshll.u32 2102212464, %v3195
        %v3208 = vshrl.u32 920167782, %v3196
        %v3209 = vor.u32 %v3207, %v3208
        %v3210 = vshll.u32 920167782, %v3195
        %v3211 = vshrl.u32 1326507024, %v3196
        %v3212 = vor.u32 %v3210, %v3211
        %vm3213 = vcmp.lt.s32.totalorder %v3194, 1
        %vm3214 = vcmp.lt.s32.totalorder %v3194, 2
        %vm3215 = vcmp.lt.s32.totalorder %v3194, 3
        %vm3216 = vcmp.lt.s32.totalorder %v3194, 4
        %v3217 = vsel %vm3213, %v3197, %v3200
        %v3218 = vsel %vm3216, %v3206, 2102212464
        %v3219 = vsel %vm3215, %v3203, %v3218
        %v3220 = vsel %vm3214, %v3217, %v3219
        %v3221 = vsel %vm3213, %v3200, %v3203
        %v3222 = vsel %vm3216, %v3209, 920167782
        %v3223 = vsel %vm3215, %v3206, %v3222
        %v3224 = vsel %vm3214, %v3221, %v3223
        %v3225 = vsel %vm3213, %v3203, %v3206
        %v3226 = vsel %vm3216, %v3212, 1326507024
        %v3227 = vsel %vm3215, %v3209, %v3226
        %v3228 = vsel %vm3214, %v3225, %v3227
        %v3229 = vshll.u32 %v3189, 8
        %v3230 = vmul.u32.u64.compose %v3229, %v3228
        %v3231 = vextract.low.u32 %v3230
        %v3232 = vextract.high.u32 %v3230
        %v3233 = vmul.u32.u64.compose %v3229, %v3224
        %v3234 = vextract.low.u32 %v3233
        %v3235 = vextract.high.u32 %v3233
        %v3236 = vmul.u32 %v3229, %v3220
        %v3237 = vadd.s32 %v3232, %v3234
        %vm3238 = vc.u32 %v3232, %v3234
        %v3239 = vadd.s32 %v3235, 1
        %v3240 = vsel %vm3238, %v3239, %v3235
        %v3241 = vadd.s32 %v3236, %v3240
        %v3242 = vadd.s32 %v3241, 536870912
        %v3243 = vshrl.u32 %v3242, 30
        %v3244 = vshll.u32 %v3243, 30
        %v3245 = vsub.s32 %v3241, %v3244
        %vm3246 = vcmp.lt.s32.totalorder %v3245, 0
        %v3247 = vsub.s32 0, %v3245
        %v3248 = vsel %vm3246, %v3247, %v3245
        %v3249 = vclz %v3248
        %v3250 = vsub.s32 %v3249, 2
        %vm3251 = vcmp.gt.s32.totalorder 0, %v3250
        %v3252 = vsel %vm3251, 0, %v3250
        %v3253 = vsub.s32 32, %v3252
        %v3254 = vshll.u32 %v3245, %v3252
        %v3255 = vshrl.u32 %v3237, %v3253
        %v3256 = vor.u32 %v3254, %v3255
        %v3257 = vsub.s32 4294967266, %v3252
        %v3258 = vadd.s32 %v3257, 127
        %v3259 = vshll.u32 %v3258, 23
        %v3260 = vor.u32 4788187, %v3259
        %v3261 = vand.u32 2147483647, %v3260
        %v3263 = vcvt.s32.f32 %v3256
        %v3264 = vmul.f32 %v3263, %v3261
        %v3265 = vxor.u32 %v3264, 2147483648
        %v3266 = vsel %vm3183, %v3265, %v3264
        %v3267 = vsub.s32 4, %v3243
        %v3268 = vsel %vm3183, %v3267, %v3243
        %v3269 = vsel %vm3182, %v748, %v3266
        %v3270 = vsel %vm3182, 0, %v3268
        %v3271 = vcosq.f32.pop %v3269
        %v3272 = vsinq.f32.pop %v3269
        %vm3273 = vweird.f32 %v748
        %v3274 = vadd.s32 %v3270, 3
        %v3275 = vand.u32 %v3274, 3
        %vm3276 = vcmp.lt.s32.totalorder %v3275, 2
        %vm3277 = vcmp.eq.s32.totalorder %v3275, 0
        %v3278 = vxor.u32 %v3272, 2147483648
        %v3279 = vsel %vm3277, %v3271, %v3278
        %vm3280 = vcmp.eq.s32.totalorder %v3275, 2
        %v3281 = vxor.u32 %v3271, 2147483648
        %v3282 = vsel %vm3280, %v3281, %v3272
        %v3283 = vsel %vm3276, %v3279, %v3282
        %v3284 = vsel %vm3273, nan, %v3283
        %v3285 = vand.u32 2147483647, %v749
        %vm3286 = vcmp.le.f32.partialorder %v3285, 0.7853982
        %vm3287 = vcmp.lt.s32.totalorder %v749, 0
        %v3288 = vand.u32 %v749, 2139095040
        %v3289 = vshrl.u32 %v3288, 23
        %v3290 = vsub.s32 %v3289, 127
        %v3291 = vand.u32 2147483647, %v749
        %v3292 = vand.u32 %v3291, 8388607
        %v3293 = vor.u32 %v3292, 8388608
        %v3294 = vsub.s32 0, %v3293
        %v3295 = vadd.s32 %v3290, 1
        %vm3296 = vcmp.gt.s32.totalorder %v3295, 0
        %v3297 = vsel %vm3296, %v3295, 0
        %v3298 = vshrl.u32 %v3297, 5
        %v3299 = vand.u32 %v3297, 31
        %v3300 = vsub.s32 32, %v3299
        %v3301 = vshrl.u32 683565275, %v3300
        %v3302 = vshll.u32 683565275, %v3299
        %v3303 = vshrl.u32 2475754826, %v3300
        %v3304 = vor.u32 %v3302, %v3303
        %v3305 = vshll.u32 2475754826, %v3299
        %v3306 = vshrl.u32 2131351028, %v3300
        %v3307 = vor.u32 %v3305, %v3306
        %v3308 = vshll.u32 2131351028, %v3299
        %v3309 = vshrl.u32 2102212464, %v3300
        %v3310 = vor.u32 %v3308, %v3309
        %v3311 = vshll.u32 2102212464, %v3299
        %v3312 = vshrl.u32 920167782, %v3300
        %v3313 = vor.u32 %v3311, %v3312
        %v3314 = vshll.u32 920167782, %v3299
        %v3315 = vshrl.u32 1326507024, %v3300
        %v3316 = vor.u32 %v3314, %v3315
        %vm3317 = vcmp.lt.s32.totalorder %v3298, 1
        %vm3318 = vcmp.lt.s32.totalorder %v3298, 2
        %vm3319 = vcmp.lt.s32.totalorder %v3298, 3
        %vm3320 = vcmp.lt.s32.totalorder %v3298, 4
        %v3321 = vsel %vm3317, %v3301, %v3304
        %v3322 = vsel %vm3320, %v3310, 2102212464
        %v3323 = vsel %vm3319, %v3307, %v3322
        %v3324 = vsel %vm3318, %v3321, %v3323
        %v3325 = vsel %vm3317, %v3304, %v3307
        %v3326 = vsel %vm3320, %v3313, 920167782
        %v3327 = vsel %vm3319, %v3310, %v3326
        %v3328 = vsel %vm3318, %v3325, %v3327
        %v3329 = vsel %vm3317, %v3307, %v3310
        %v3330 = vsel %vm3320, %v3316, 1326507024
        %v3331 = vsel %vm3319, %v3313, %v3330
        %v3332 = vsel %vm3318, %v3329, %v3331
        %v3333 = vshll.u32 %v3293, 8
        %v3334 = vmul.u32.u64.compose %v3333, %v3332
        %v3335 = vextract.low.u32 %v3334
        %v3336 = vextract.high.u32 %v3334
        %v3337 = vmul.u32.u64.compose %v3333, %v3328
        %v3338 = vextract.low.u32 %v3337
        %v3339 = vextract.high.u32 %v3337
        %v3340 = vmul.u32 %v3333, %v3324
        %v3341 = vadd.s32 %v3336, %v3338
        %vm3342 = vc.u32 %v3336, %v3338
        %v3343 = vadd.s32 %v3339, 1
        %v3344 = vsel %vm3342, %v3343, %v3339
        %v3345 = vadd.s32 %v3340, %v3344
        %v3346 = vadd.s32 %v3345, 536870912
        %v3347 = vshrl.u32 %v3346, 30
        %v3348 = vshll.u32 %v3347, 30
        %v3349 = vsub.s32 %v3345, %v3348
        %vm3350 = vcmp.lt.s32.totalorder %v3349, 0
        %v3351 = vsub.s32 0, %v3349
        %v3352 = vsel %vm3350, %v3351, %v3349
        %v3353 = vclz %v3352
        %v3354 = vsub.s32 %v3353, 2
        %vm3355 = vcmp.gt.s32.totalorder 0, %v3354
        %v3356 = vsel %vm3355, 0, %v3354
        %v3357 = vsub.s32 32, %v3356
        %v3358 = vshll.u32 %v3349, %v3356
        %v3359 = vshrl.u32 %v3341, %v3357
        %v3360 = vor.u32 %v3358, %v3359
        %v3361 = vsub.s32 4294967266, %v3356
        %v3362 = vadd.s32 %v3361, 127
        %v3363 = vshll.u32 %v3362, 23
        %v3364 = vor.u32 4788187, %v3363
        %v3365 = vand.u32 2147483647, %v3364
        %v3367 = vcvt.s32.f32 %v3360
        %v3368 = vmul.f32 %v3367, %v3365
        %v3369 = vxor.u32 %v3368, 2147483648
        %v3370 = vsel %vm3287, %v3369, %v3368
        %v3371 = vsub.s32 4, %v3347
        %v3372 = vsel %vm3287, %v3371, %v3347
        %v3373 = vsel %vm3286, %v749, %v3370
        %v3374 = vsel %vm3286, 0, %v3372
        %v3375 = vcosq.f32.pop %v3373
        %v3376 = vsinq.f32.pop %v3373
        %vm3377 = vweird.f32 %v749
        %v3378 = vadd.s32 %v3374, 3
        %v3379 = vand.u32 %v3378, 3
        %vm3380 = vcmp.lt.s32.totalorder %v3379, 2
        %vm3381 = vcmp.eq.s32.totalorder %v3379, 0
        %v3382 = vxor.u32 %v3376, 2147483648
        %v3383 = vsel %vm3381, %v3375, %v3382
        %vm3384 = vcmp.eq.s32.totalorder %v3379, 2
        %v3385 = vxor.u32 %v3375, 2147483648
        %v3386 = vsel %vm3384, %v3385, %v3376
        %v3387 = vsel %vm3380, %v3383, %v3386
        %v3388 = vsel %vm3377, nan, %v3387
        %v3389 = vand.u32 2147483647, %v750
        %vm3390 = vcmp.le.f32.partialorder %v3389, 0.7853982
        %vm3391 = vcmp.lt.s32.totalorder %v750, 0
        %v3392 = vand.u32 %v750, 2139095040
        %v3393 = vshrl.u32 %v3392, 23
        %v3394 = vsub.s32 %v3393, 127
        %v3395 = vand.u32 2147483647, %v750
        %v3396 = vand.u32 %v3395, 8388607
        %v3397 = vor.u32 %v3396, 8388608
        %v3398 = vsub.s32 0, %v3397
        %v3399 = vadd.s32 %v3394, 1
        %vm3400 = vcmp.gt.s32.totalorder %v3399, 0
        %v3401 = vsel %vm3400, %v3399, 0
        %v3402 = vshrl.u32 %v3401, 5
        %v3403 = vand.u32 %v3401, 31
        %v3404 = vsub.s32 32, %v3403
        %v3405 = vshrl.u32 683565275, %v3404
        %v3406 = vshll.u32 683565275, %v3403
        %v3407 = vshrl.u32 2475754826, %v3404
        %v3408 = vor.u32 %v3406, %v3407
        %v3409 = vshll.u32 2475754826, %v3403
        %v3410 = vshrl.u32 2131351028, %v3404
        %v3411 = vor.u32 %v3409, %v3410
        %v3412 = vshll.u32 2131351028, %v3403
        %v3413 = vshrl.u32 2102212464, %v3404
        %v3414 = vor.u32 %v3412, %v3413
        %v3415 = vshll.u32 2102212464, %v3403
        %v3416 = vshrl.u32 920167782, %v3404
        %v3417 = vor.u32 %v3415, %v3416
        %v3418 = vshll.u32 920167782, %v3403
        %v3419 = vshrl.u32 1326507024, %v3404
        %v3420 = vor.u32 %v3418, %v3419
        %vm3421 = vcmp.lt.s32.totalorder %v3402, 1
        %vm3422 = vcmp.lt.s32.totalorder %v3402, 2
        %vm3423 = vcmp.lt.s32.totalorder %v3402, 3
        %vm3424 = vcmp.lt.s32.totalorder %v3402, 4
        %v3425 = vsel %vm3421, %v3405, %v3408
        %v3426 = vsel %vm3424, %v3414, 2102212464
        %v3427 = vsel %vm3423, %v3411, %v3426
        %v3428 = vsel %vm3422, %v3425, %v3427
        %v3429 = vsel %vm3421, %v3408, %v3411
        %v3430 = vsel %vm3424, %v3417, 920167782
        %v3431 = vsel %vm3423, %v3414, %v3430
        %v3432 = vsel %vm3422, %v3429, %v3431
        %v3433 = vsel %vm3421, %v3411, %v3414
        %v3434 = vsel %vm3424, %v3420, 1326507024
        %v3435 = vsel %vm3423, %v3417, %v3434
        %v3436 = vsel %vm3422, %v3433, %v3435
        %v3437 = vshll.u32 %v3397, 8
        %v3438 = vmul.u32.u64.compose %v3437, %v3436
        %v3439 = vextract.low.u32 %v3438
        %v3440 = vextract.high.u32 %v3438
        %v3441 = vmul.u32.u64.compose %v3437, %v3432
        %v3442 = vextract.low.u32 %v3441
        %v3443 = vextract.high.u32 %v3441
        %v3444 = vmul.u32 %v3437, %v3428
        %v3445 = vadd.s32 %v3440, %v3442
        %vm3446 = vc.u32 %v3440, %v3442
        %v3447 = vadd.s32 %v3443, 1
        %v3448 = vsel %vm3446, %v3447, %v3443
        %v3449 = vadd.s32 %v3444, %v3448
        %v3450 = vadd.s32 %v3449, 536870912
        %v3451 = vshrl.u32 %v3450, 30
        %v3452 = vshll.u32 %v3451, 30
        %v3453 = vsub.s32 %v3449, %v3452
        %vm3454 = vcmp.lt.s32.totalorder %v3453, 0
        %v3455 = vsub.s32 0, %v3453
        %v3456 = vsel %vm3454, %v3455, %v3453
        %v3457 = vclz %v3456
        %v3458 = vsub.s32 %v3457, 2
        %vm3459 = vcmp.gt.s32.totalorder 0, %v3458
        %v3460 = vsel %vm3459, 0, %v3458
        %v3461 = vsub.s32 32, %v3460
        %v3462 = vshll.u32 %v3453, %v3460
        %v3463 = vshrl.u32 %v3445, %v3461
        %v3464 = vor.u32 %v3462, %v3463
        %v3465 = vsub.s32 4294967266, %v3460
        %v3466 = vadd.s32 %v3465, 127
        %v3467 = vshll.u32 %v3466, 23
        %v3468 = vor.u32 4788187, %v3467
        %v3469 = vand.u32 2147483647, %v3468
        %v3471 = vcvt.s32.f32 %v3464
        %v3472 = vmul.f32 %v3471, %v3469
        %v3473 = vxor.u32 %v3472, 2147483648
        %v3474 = vsel %vm3391, %v3473, %v3472
        %v3475 = vsub.s32 4, %v3451
        %v3476 = vsel %vm3391, %v3475, %v3451
        %v3477 = vsel %vm3390, %v750, %v3474
        %v3478 = vsel %vm3390, 0, %v3476
        %v3479 = vcosq.f32.pop %v3477
        %v3480 = vsinq.f32.pop %v3477
        %vm3481 = vweird.f32 %v750
        %v3482 = vadd.s32 %v3478, 3
        %v3483 = vand.u32 %v3482, 3
        %vm3484 = vcmp.lt.s32.totalorder %v3483, 2
        %vm3485 = vcmp.eq.s32.totalorder %v3483, 0
        %v3486 = vxor.u32 %v3480, 2147483648
        %v3487 = vsel %vm3485, %v3479, %v3486
        %vm3488 = vcmp.eq.s32.totalorder %v3483, 2
        %v3489 = vxor.u32 %v3479, 2147483648
        %v3490 = vsel %vm3488, %v3489, %v3480
        %v3491 = vsel %vm3484, %v3487, %v3490
        %v3492 = vsel %vm3481, nan, %v3491
        %v3493 = vand.u32 2147483647, %v751
        %vm3494 = vcmp.le.f32.partialorder %v3493, 0.7853982
        %vm3495 = vcmp.lt.s32.totalorder %v751, 0
        %v3496 = vand.u32 %v751, 2139095040
        %v3497 = vshrl.u32 %v3496, 23
        %v3498 = vsub.s32 %v3497, 127
        %v3499 = vand.u32 2147483647, %v751
        %v3500 = vand.u32 %v3499, 8388607
        %v3501 = vor.u32 %v3500, 8388608
        %v3502 = vsub.s32 0, %v3501
        %v3503 = vadd.s32 %v3498, 1
        %vm3504 = vcmp.gt.s32.totalorder %v3503, 0
        %v3505 = vsel %vm3504, %v3503, 0
        %v3506 = vshrl.u32 %v3505, 5
        %v3507 = vand.u32 %v3505, 31
        %v3508 = vsub.s32 32, %v3507
        %v3509 = vshrl.u32 683565275, %v3508
        %v3510 = vshll.u32 683565275, %v3507
        %v3511 = vshrl.u32 2475754826, %v3508
        %v3512 = vor.u32 %v3510, %v3511
        %v3513 = vshll.u32 2475754826, %v3507
        %v3514 = vshrl.u32 2131351028, %v3508
        %v3515 = vor.u32 %v3513, %v3514
        %v3516 = vshll.u32 2131351028, %v3507
        %v3517 = vshrl.u32 2102212464, %v3508
        %v3518 = vor.u32 %v3516, %v3517
        %v3519 = vshll.u32 2102212464, %v3507
        %v3520 = vshrl.u32 920167782, %v3508
        %v3521 = vor.u32 %v3519, %v3520
        %v3522 = vshll.u32 920167782, %v3507
        %v3523 = vshrl.u32 1326507024, %v3508
        %v3524 = vor.u32 %v3522, %v3523
        %vm3525 = vcmp.lt.s32.totalorder %v3506, 1
        %vm3526 = vcmp.lt.s32.totalorder %v3506, 2
        %vm3527 = vcmp.lt.s32.totalorder %v3506, 3
        %vm3528 = vcmp.lt.s32.totalorder %v3506, 4
        %v3529 = vsel %vm3525, %v3509, %v3512
        %v3530 = vsel %vm3528, %v3518, 2102212464
        %v3531 = vsel %vm3527, %v3515, %v3530
        %v3532 = vsel %vm3526, %v3529, %v3531
        %v3533 = vsel %vm3525, %v3512, %v3515
        %v3534 = vsel %vm3528, %v3521, 920167782
        %v3535 = vsel %vm3527, %v3518, %v3534
        %v3536 = vsel %vm3526, %v3533, %v3535
        %v3537 = vsel %vm3525, %v3515, %v3518
        %v3538 = vsel %vm3528, %v3524, 1326507024
        %v3539 = vsel %vm3527, %v3521, %v3538
        %v3540 = vsel %vm3526, %v3537, %v3539
        %v3541 = vshll.u32 %v3501, 8
        %v3542 = vmul.u32.u64.compose %v3541, %v3540
        %v3543 = vextract.low.u32 %v3542
        %v3544 = vextract.high.u32 %v3542
        %v3545 = vmul.u32.u64.compose %v3541, %v3536
        %v3546 = vextract.low.u32 %v3545
        %v3547 = vextract.high.u32 %v3545
        %v3548 = vmul.u32 %v3541, %v3532
        %v3549 = vadd.s32 %v3544, %v3546
        %vm3550 = vc.u32 %v3544, %v3546
        %v3551 = vadd.s32 %v3547, 1
        %v3552 = vsel %vm3550, %v3551, %v3547
        %v3553 = vadd.s32 %v3548, %v3552
        %v3554 = vadd.s32 %v3553, 536870912
        %v3555 = vshrl.u32 %v3554, 30
        %v3556 = vshll.u32 %v3555, 30
        %v3557 = vsub.s32 %v3553, %v3556
        %vm3558 = vcmp.lt.s32.totalorder %v3557, 0
        %v3559 = vsub.s32 0, %v3557
        %v3560 = vsel %vm3558, %v3559, %v3557
        %v3561 = vclz %v3560
        %v3562 = vsub.s32 %v3561, 2
        %vm3563 = vcmp.gt.s32.totalorder 0, %v3562
        %v3564 = vsel %vm3563, 0, %v3562
        %v3565 = vsub.s32 32, %v3564
        %v3566 = vshll.u32 %v3557, %v3564
        %v3567 = vshrl.u32 %v3549, %v3565
        %v3568 = vor.u32 %v3566, %v3567
        %v3569 = vsub.s32 4294967266, %v3564
        %v3570 = vadd.s32 %v3569, 127
        %v3571 = vshll.u32 %v3570, 23
        %v3572 = vor.u32 4788187, %v3571
        %v3573 = vand.u32 2147483647, %v3572
        %v3575 = vcvt.s32.f32 %v3568
        %v3576 = vmul.f32 %v3575, %v3573
        %v3577 = vxor.u32 %v3576, 2147483648
        %v3578 = vsel %vm3495, %v3577, %v3576
        %v3579 = vsub.s32 4, %v3555
        %v3580 = vsel %vm3495, %v3579, %v3555
        %v3581 = vsel %vm3494, %v751, %v3578
        %v3582 = vsel %vm3494, 0, %v3580
        %v3583 = vcosq.f32.pop %v3581
        %v3584 = vsinq.f32.pop %v3581
        %vm3585 = vweird.f32 %v751
        %v3586 = vadd.s32 %v3582, 3
        %v3587 = vand.u32 %v3586, 3
        %vm3588 = vcmp.lt.s32.totalorder %v3587, 2
        %vm3589 = vcmp.eq.s32.totalorder %v3587, 0
        %v3590 = vxor.u32 %v3584, 2147483648
        %v3591 = vsel %vm3589, %v3583, %v3590
        %vm3592 = vcmp.eq.s32.totalorder %v3587, 2
        %v3593 = vxor.u32 %v3583, 2147483648
        %v3594 = vsel %vm3592, %v3593, %v3584
        %v3595 = vsel %vm3588, %v3591, %v3594
        %v3596 = vsel %vm3585, nan, %v3595
        %v3597 = vand.u32 2147483647, %v752
        %vm3598 = vcmp.le.f32.partialorder %v3597, 0.7853982
        %vm3599 = vcmp.lt.s32.totalorder %v752, 0
        %v3600 = vand.u32 %v752, 2139095040
        %v3601 = vshrl.u32 %v3600, 23
        %v3602 = vsub.s32 %v3601, 127
        %v3603 = vand.u32 2147483647, %v752
        %v3604 = vand.u32 %v3603, 8388607
        %v3605 = vor.u32 %v3604, 8388608
        %v3606 = vsub.s32 0, %v3605
        %v3607 = vadd.s32 %v3602, 1
        %vm3608 = vcmp.gt.s32.totalorder %v3607, 0
        %v3609 = vsel %vm3608, %v3607, 0
        %v3610 = vshrl.u32 %v3609, 5
        %v3611 = vand.u32 %v3609, 31
        %v3612 = vsub.s32 32, %v3611
        %v3613 = vshrl.u32 683565275, %v3612
        %v3614 = vshll.u32 683565275, %v3611
        %v3615 = vshrl.u32 2475754826, %v3612
        %v3616 = vor.u32 %v3614, %v3615
        %v3617 = vshll.u32 2475754826, %v3611
        %v3618 = vshrl.u32 2131351028, %v3612
        %v3619 = vor.u32 %v3617, %v3618
        %v3620 = vshll.u32 2131351028, %v3611
        %v3621 = vshrl.u32 2102212464, %v3612
        %v3622 = vor.u32 %v3620, %v3621
        %v3623 = vshll.u32 2102212464, %v3611
        %v3624 = vshrl.u32 920167782, %v3612
        %v3625 = vor.u32 %v3623, %v3624
        %v3626 = vshll.u32 920167782, %v3611
        %v3627 = vshrl.u32 1326507024, %v3612
        %v3628 = vor.u32 %v3626, %v3627
        %vm3629 = vcmp.lt.s32.totalorder %v3610, 1
        %vm3630 = vcmp.lt.s32.totalorder %v3610, 2
        %vm3631 = vcmp.lt.s32.totalorder %v3610, 3
        %vm3632 = vcmp.lt.s32.totalorder %v3610, 4
        %v3633 = vsel %vm3629, %v3613, %v3616
        %v3634 = vsel %vm3632, %v3622, 2102212464
        %v3635 = vsel %vm3631, %v3619, %v3634
        %v3636 = vsel %vm3630, %v3633, %v3635
        %v3637 = vsel %vm3629, %v3616, %v3619
        %v3638 = vsel %vm3632, %v3625, 920167782
        %v3639 = vsel %vm3631, %v3622, %v3638
        %v3640 = vsel %vm3630, %v3637, %v3639
        %v3641 = vsel %vm3629, %v3619, %v3622
        %v3642 = vsel %vm3632, %v3628, 1326507024
        %v3643 = vsel %vm3631, %v3625, %v3642
        %v3644 = vsel %vm3630, %v3641, %v3643
        %v3645 = vshll.u32 %v3605, 8
        %v3646 = vmul.u32.u64.compose %v3645, %v3644
        %v3647 = vextract.low.u32 %v3646
        %v3648 = vextract.high.u32 %v3646
        %v3649 = vmul.u32.u64.compose %v3645, %v3640
        %v3650 = vextract.low.u32 %v3649
        %v3651 = vextract.high.u32 %v3649
        %v3652 = vmul.u32 %v3645, %v3636
        %v3653 = vadd.s32 %v3648, %v3650
        %vm3654 = vc.u32 %v3648, %v3650
        %v3655 = vadd.s32 %v3651, 1
        %v3656 = vsel %vm3654, %v3655, %v3651
        %v3657 = vadd.s32 %v3652, %v3656
        %v3658 = vadd.s32 %v3657, 536870912
        %v3659 = vshrl.u32 %v3658, 30
        %v3660 = vshll.u32 %v3659, 30
        %v3661 = vsub.s32 %v3657, %v3660
        %vm3662 = vcmp.lt.s32.totalorder %v3661, 0
        %v3663 = vsub.s32 0, %v3661
        %v3664 = vsel %vm3662, %v3663, %v3661
        %v3665 = vclz %v3664
        %v3666 = vsub.s32 %v3665, 2
        %vm3667 = vcmp.gt.s32.totalorder 0, %v3666
        %v3668 = vsel %vm3667, 0, %v3666
        %v3669 = vsub.s32 32, %v3668
        %v3670 = vshll.u32 %v3661, %v3668
        %v3671 = vshrl.u32 %v3653, %v3669
        %v3672 = vor.u32 %v3670, %v3671
        %v3673 = vsub.s32 4294967266, %v3668
        %v3674 = vadd.s32 %v3673, 127
        %v3675 = vshll.u32 %v3674, 23
        %v3676 = vor.u32 4788187, %v3675
        %v3677 = vand.u32 2147483647, %v3676
        %v3679 = vcvt.s32.f32 %v3672
        %v3680 = vmul.f32 %v3679, %v3677
        %v3681 = vxor.u32 %v3680, 2147483648
        %v3682 = vsel %vm3599, %v3681, %v3680
        %v3683 = vsub.s32 4, %v3659
        %v3684 = vsel %vm3599, %v3683, %v3659
        %v3685 = vsel %vm3598, %v752, %v3682
        %v3686 = vsel %vm3598, 0, %v3684
        %v3687 = vcosq.f32.pop %v3685
        %v3688 = vsinq.f32.pop %v3685
        %vm3689 = vweird.f32 %v752
        %v3690 = vadd.s32 %v3686, 3
        %v3691 = vand.u32 %v3690, 3
        %vm3692 = vcmp.lt.s32.totalorder %v3691, 2
        %vm3693 = vcmp.eq.s32.totalorder %v3691, 0
        %v3694 = vxor.u32 %v3688, 2147483648
        %v3695 = vsel %vm3693, %v3687, %v3694
        %vm3696 = vcmp.eq.s32.totalorder %v3691, 2
        %v3697 = vxor.u32 %v3687, 2147483648
        %v3698 = vsel %vm3696, %v3697, %v3688
        %v3699 = vsel %vm3692, %v3695, %v3698
        %v3700 = vsel %vm3689, nan, %v3699
        %v3701 = vand.u32 2147483647, %v753
        %vm3702 = vcmp.le.f32.partialorder %v3701, 0.7853982
        %vm3703 = vcmp.lt.s32.totalorder %v753, 0
        %v3704 = vand.u32 %v753, 2139095040
        %v3705 = vshrl.u32 %v3704, 23
        %v3706 = vsub.s32 %v3705, 127
        %v3707 = vand.u32 2147483647, %v753
        %v3708 = vand.u32 %v3707, 8388607
        %v3709 = vor.u32 %v3708, 8388608
        %v3710 = vsub.s32 0, %v3709
        %v3711 = vadd.s32 %v3706, 1
        %vm3712 = vcmp.gt.s32.totalorder %v3711, 0
        %v3713 = vsel %vm3712, %v3711, 0
        %v3714 = vshrl.u32 %v3713, 5
        %v3715 = vand.u32 %v3713, 31
        %v3716 = vsub.s32 32, %v3715
        %v3717 = vshrl.u32 683565275, %v3716
        %v3718 = vshll.u32 683565275, %v3715
        %v3719 = vshrl.u32 2475754826, %v3716
        %v3720 = vor.u32 %v3718, %v3719
        %v3721 = vshll.u32 2475754826, %v3715
        %v3722 = vshrl.u32 2131351028, %v3716
        %v3723 = vor.u32 %v3721, %v3722
        %v3724 = vshll.u32 2131351028, %v3715
        %v3725 = vshrl.u32 2102212464, %v3716
        %v3726 = vor.u32 %v3724, %v3725
        %v3727 = vshll.u32 2102212464, %v3715
        %v3728 = vshrl.u32 920167782, %v3716
        %v3729 = vor.u32 %v3727, %v3728
        %v3730 = vshll.u32 920167782, %v3715
        %v3731 = vshrl.u32 1326507024, %v3716
        %v3732 = vor.u32 %v3730, %v3731
        %vm3733 = vcmp.lt.s32.totalorder %v3714, 1
        %vm3734 = vcmp.lt.s32.totalorder %v3714, 2
        %vm3735 = vcmp.lt.s32.totalorder %v3714, 3
        %vm3736 = vcmp.lt.s32.totalorder %v3714, 4
        %v3737 = vsel %vm3733, %v3717, %v3720
        %v3738 = vsel %vm3736, %v3726, 2102212464
        %v3739 = vsel %vm3735, %v3723, %v3738
        %v3740 = vsel %vm3734, %v3737, %v3739
        %v3741 = vsel %vm3733, %v3720, %v3723
        %v3742 = vsel %vm3736, %v3729, 920167782
        %v3743 = vsel %vm3735, %v3726, %v3742
        %v3744 = vsel %vm3734, %v3741, %v3743
        %v3745 = vsel %vm3733, %v3723, %v3726
        %v3746 = vsel %vm3736, %v3732, 1326507024
        %v3747 = vsel %vm3735, %v3729, %v3746
        %v3748 = vsel %vm3734, %v3745, %v3747
        %v3749 = vshll.u32 %v3709, 8
        %v3750 = vmul.u32.u64.compose %v3749, %v3748
        %v3751 = vextract.low.u32 %v3750
        %v3752 = vextract.high.u32 %v3750
        %v3753 = vmul.u32.u64.compose %v3749, %v3744
        %v3754 = vextract.low.u32 %v3753
        %v3755 = vextract.high.u32 %v3753
        %v3756 = vmul.u32 %v3749, %v3740
        %v3757 = vadd.s32 %v3752, %v3754
        %vm3758 = vc.u32 %v3752, %v3754
        %v3759 = vadd.s32 %v3755, 1
        %v3760 = vsel %vm3758, %v3759, %v3755
        %v3761 = vadd.s32 %v3756, %v3760
        %v3762 = vadd.s32 %v3761, 536870912
        %v3763 = vshrl.u32 %v3762, 30
        %v3764 = vshll.u32 %v3763, 30
        %v3765 = vsub.s32 %v3761, %v3764
        %vm3766 = vcmp.lt.s32.totalorder %v3765, 0
        %v3767 = vsub.s32 0, %v3765
        %v3768 = vsel %vm3766, %v3767, %v3765
        %v3769 = vclz %v3768
        %v3770 = vsub.s32 %v3769, 2
        %vm3771 = vcmp.gt.s32.totalorder 0, %v3770
        %v3772 = vsel %vm3771, 0, %v3770
        %v3773 = vsub.s32 32, %v3772
        %v3774 = vshll.u32 %v3765, %v3772
        %v3775 = vshrl.u32 %v3757, %v3773
        %v3776 = vor.u32 %v3774, %v3775
        %v3777 = vsub.s32 4294967266, %v3772
        %v3778 = vadd.s32 %v3777, 127
        %v3779 = vshll.u32 %v3778, 23
        %v3780 = vor.u32 4788187, %v3779
        %v3781 = vand.u32 2147483647, %v3780
        %v3783 = vcvt.s32.f32 %v3776
        %v3784 = vmul.f32 %v3783, %v3781
        %v3785 = vxor.u32 %v3784, 2147483648
        %v3786 = vsel %vm3703, %v3785, %v3784
        %v3787 = vsub.s32 4, %v3763
        %v3788 = vsel %vm3703, %v3787, %v3763
        %v3789 = vsel %vm3702, %v753, %v3786
        %v3790 = vsel %vm3702, 0, %v3788
        %v3791 = vcosq.f32.pop %v3789
        %v3792 = vsinq.f32.pop %v3789
        %vm3793 = vweird.f32 %v753
        %v3794 = vadd.s32 %v3790, 3
        %v3795 = vand.u32 %v3794, 3
        %vm3796 = vcmp.lt.s32.totalorder %v3795, 2
        %vm3797 = vcmp.eq.s32.totalorder %v3795, 0
        %v3798 = vxor.u32 %v3792, 2147483648
        %v3799 = vsel %vm3797, %v3791, %v3798
        %vm3800 = vcmp.eq.s32.totalorder %v3795, 2
        %v3801 = vxor.u32 %v3791, 2147483648
        %v3802 = vsel %vm3800, %v3801, %v3792
        %v3803 = vsel %vm3796, %v3799, %v3802
        %v3804 = vsel %vm3793, nan, %v3803
        %v3805 = vand.u32 2147483647, %v754
        %vm3806 = vcmp.le.f32.partialorder %v3805, 0.7853982
        %vm3807 = vcmp.lt.s32.totalorder %v754, 0
        %v3808 = vand.u32 %v754, 2139095040
        %v3809 = vshrl.u32 %v3808, 23
        %v3810 = vsub.s32 %v3809, 127
        %v3811 = vand.u32 2147483647, %v754
        %v3812 = vand.u32 %v3811, 8388607
        %v3813 = vor.u32 %v3812, 8388608
        %v3814 = vsub.s32 0, %v3813
        %v3815 = vadd.s32 %v3810, 1
        %vm3816 = vcmp.gt.s32.totalorder %v3815, 0
        %v3817 = vsel %vm3816, %v3815, 0
        %v3818 = vshrl.u32 %v3817, 5
        %v3819 = vand.u32 %v3817, 31
        %v3820 = vsub.s32 32, %v3819
        %v3821 = vshrl.u32 683565275, %v3820
        %v3822 = vshll.u32 683565275, %v3819
        %v3823 = vshrl.u32 2475754826, %v3820
        %v3824 = vor.u32 %v3822, %v3823
        %v3825 = vshll.u32 2475754826, %v3819
        %v3826 = vshrl.u32 2131351028, %v3820
        %v3827 = vor.u32 %v3825, %v3826
        %v3828 = vshll.u32 2131351028, %v3819
        %v3829 = vshrl.u32 2102212464, %v3820
        %v3830 = vor.u32 %v3828, %v3829
        %v3831 = vshll.u32 2102212464, %v3819
        %v3832 = vshrl.u32 920167782, %v3820
        %v3833 = vor.u32 %v3831, %v3832
        %v3834 = vshll.u32 920167782, %v3819
        %v3835 = vshrl.u32 1326507024, %v3820
        %v3836 = vor.u32 %v3834, %v3835
        %vm3837 = vcmp.lt.s32.totalorder %v3818, 1
        %vm3838 = vcmp.lt.s32.totalorder %v3818, 2
        %vm3839 = vcmp.lt.s32.totalorder %v3818, 3
        %vm3840 = vcmp.lt.s32.totalorder %v3818, 4
        %v3841 = vsel %vm3837, %v3821, %v3824
        %v3842 = vsel %vm3840, %v3830, 2102212464
        %v3843 = vsel %vm3839, %v3827, %v3842
        %v3844 = vsel %vm3838, %v3841, %v3843
        %v3845 = vsel %vm3837, %v3824, %v3827
        %v3846 = vsel %vm3840, %v3833, 920167782
        %v3847 = vsel %vm3839, %v3830, %v3846
        %v3848 = vsel %vm3838, %v3845, %v3847
        %v3849 = vsel %vm3837, %v3827, %v3830
        %v3850 = vsel %vm3840, %v3836, 1326507024
        %v3851 = vsel %vm3839, %v3833, %v3850
        %v3852 = vsel %vm3838, %v3849, %v3851
        %v3853 = vshll.u32 %v3813, 8
        %v3854 = vmul.u32.u64.compose %v3853, %v3852
        %v3855 = vextract.low.u32 %v3854
        %v3856 = vextract.high.u32 %v3854
        %v3857 = vmul.u32.u64.compose %v3853, %v3848
        %v3858 = vextract.low.u32 %v3857
        %v3859 = vextract.high.u32 %v3857
        %v3860 = vmul.u32 %v3853, %v3844
        %v3861 = vadd.s32 %v3856, %v3858
        %vm3862 = vc.u32 %v3856, %v3858
        %v3863 = vadd.s32 %v3859, 1
        %v3864 = vsel %vm3862, %v3863, %v3859
        %v3865 = vadd.s32 %v3860, %v3864
        %v3866 = vadd.s32 %v3865, 536870912
        %v3867 = vshrl.u32 %v3866, 30
        %v3868 = vshll.u32 %v3867, 30
        %v3869 = vsub.s32 %v3865, %v3868
        %vm3870 = vcmp.lt.s32.totalorder %v3869, 0
        %v3871 = vsub.s32 0, %v3869
        %v3872 = vsel %vm3870, %v3871, %v3869
        %v3873 = vclz %v3872
        %v3874 = vsub.s32 %v3873, 2
        %vm3875 = vcmp.gt.s32.totalorder 0, %v3874
        %v3876 = vsel %vm3875, 0, %v3874
        %v3877 = vsub.s32 32, %v3876
        %v3878 = vshll.u32 %v3869, %v3876
        %v3879 = vshrl.u32 %v3861, %v3877
        %v3880 = vor.u32 %v3878, %v3879
        %v3881 = vsub.s32 4294967266, %v3876
        %v3882 = vadd.s32 %v3881, 127
        %v3883 = vshll.u32 %v3882, 23
        %v3884 = vor.u32 4788187, %v3883
        %v3885 = vand.u32 2147483647, %v3884
        %v3887 = vcvt.s32.f32 %v3880
        %v3888 = vmul.f32 %v3887, %v3885
        %v3889 = vxor.u32 %v3888, 2147483648
        %v3890 = vsel %vm3807, %v3889, %v3888
        %v3891 = vsub.s32 4, %v3867
        %v3892 = vsel %vm3807, %v3891, %v3867
        %v3893 = vsel %vm3806, %v754, %v3890
        %v3894 = vsel %vm3806, 0, %v3892
        %v3895 = vcosq.f32.pop %v3893
        %v3896 = vsinq.f32.pop %v3893
        %vm3897 = vweird.f32 %v754
        %v3898 = vadd.s32 %v3894, 3
        %v3899 = vand.u32 %v3898, 3
        %vm3900 = vcmp.lt.s32.totalorder %v3899, 2
        %vm3901 = vcmp.eq.s32.totalorder %v3899, 0
        %v3902 = vxor.u32 %v3896, 2147483648
        %v3903 = vsel %vm3901, %v3895, %v3902
        %vm3904 = vcmp.eq.s32.totalorder %v3899, 2
        %v3905 = vxor.u32 %v3895, 2147483648
        %v3906 = vsel %vm3904, %v3905, %v3896
        %v3907 = vsel %vm3900, %v3903, %v3906
        %v3908 = vsel %vm3897, nan, %v3907
        %v3909 = vand.u32 2147483647, %v755
        %vm3910 = vcmp.le.f32.partialorder %v3909, 0.7853982
        %vm3911 = vcmp.lt.s32.totalorder %v755, 0
        %v3912 = vand.u32 %v755, 2139095040
        %v3913 = vshrl.u32 %v3912, 23
        %v3914 = vsub.s32 %v3913, 127
        %v3915 = vand.u32 2147483647, %v755
        %v3916 = vand.u32 %v3915, 8388607
        %v3917 = vor.u32 %v3916, 8388608
        %v3918 = vsub.s32 0, %v3917
        %v3919 = vadd.s32 %v3914, 1
        %vm3920 = vcmp.gt.s32.totalorder %v3919, 0
        %v3921 = vsel %vm3920, %v3919, 0
        %v3922 = vshrl.u32 %v3921, 5
        %v3923 = vand.u32 %v3921, 31
        %v3924 = vsub.s32 32, %v3923
        %v3925 = vshrl.u32 683565275, %v3924
        %v3926 = vshll.u32 683565275, %v3923
        %v3927 = vshrl.u32 2475754826, %v3924
        %v3928 = vor.u32 %v3926, %v3927
        %v3929 = vshll.u32 2475754826, %v3923
        %v3930 = vshrl.u32 2131351028, %v3924
        %v3931 = vor.u32 %v3929, %v3930
        %v3932 = vshll.u32 2131351028, %v3923
        %v3933 = vshrl.u32 2102212464, %v3924
        %v3934 = vor.u32 %v3932, %v3933
        %v3935 = vshll.u32 2102212464, %v3923
        %v3936 = vshrl.u32 920167782, %v3924
        %v3937 = vor.u32 %v3935, %v3936
        %v3938 = vshll.u32 920167782, %v3923
        %v3939 = vshrl.u32 1326507024, %v3924
        %v3940 = vor.u32 %v3938, %v3939
        %vm3941 = vcmp.lt.s32.totalorder %v3922, 1
        %vm3942 = vcmp.lt.s32.totalorder %v3922, 2
        %vm3943 = vcmp.lt.s32.totalorder %v3922, 3
        %vm3944 = vcmp.lt.s32.totalorder %v3922, 4
        %v3945 = vsel %vm3941, %v3925, %v3928
        %v3946 = vsel %vm3944, %v3934, 2102212464
        %v3947 = vsel %vm3943, %v3931, %v3946
        %v3948 = vsel %vm3942, %v3945, %v3947
        %v3949 = vsel %vm3941, %v3928, %v3931
        %v3950 = vsel %vm3944, %v3937, 920167782
        %v3951 = vsel %vm3943, %v3934, %v3950
        %v3952 = vsel %vm3942, %v3949, %v3951
        %v3953 = vsel %vm3941, %v3931, %v3934
        %v3954 = vsel %vm3944, %v3940, 1326507024
        %v3955 = vsel %vm3943, %v3937, %v3954
        %v3956 = vsel %vm3942, %v3953, %v3955
        %v3957 = vshll.u32 %v3917, 8
        %v3958 = vmul.u32.u64.compose %v3957, %v3956
        %v3959 = vextract.low.u32 %v3958
        %v3960 = vextract.high.u32 %v3958
        %v3961 = vmul.u32.u64.compose %v3957, %v3952
        %v3962 = vextract.low.u32 %v3961
        %v3963 = vextract.high.u32 %v3961
        %v3964 = vmul.u32 %v3957, %v3948
        %v3965 = vadd.s32 %v3960, %v3962
        %vm3966 = vc.u32 %v3960, %v3962
        %v3967 = vadd.s32 %v3963, 1
        %v3968 = vsel %vm3966, %v3967, %v3963
        %v3969 = vadd.s32 %v3964, %v3968
        %v3970 = vadd.s32 %v3969, 536870912
        %v3971 = vshrl.u32 %v3970, 30
        %v3972 = vshll.u32 %v3971, 30
        %v3973 = vsub.s32 %v3969, %v3972
        %vm3974 = vcmp.lt.s32.totalorder %v3973, 0
        %v3975 = vsub.s32 0, %v3973
        %v3976 = vsel %vm3974, %v3975, %v3973
        %v3977 = vclz %v3976
        %v3978 = vsub.s32 %v3977, 2
        %vm3979 = vcmp.gt.s32.totalorder 0, %v3978
        %v3980 = vsel %vm3979, 0, %v3978
        %v3981 = vsub.s32 32, %v3980
        %v3982 = vshll.u32 %v3973, %v3980
        %v3983 = vshrl.u32 %v3965, %v3981
        %v3984 = vor.u32 %v3982, %v3983
        %v3985 = vsub.s32 4294967266, %v3980
        %v3986 = vadd.s32 %v3985, 127
        %v3987 = vshll.u32 %v3986, 23
        %v3988 = vor.u32 4788187, %v3987
        %v3989 = vand.u32 2147483647, %v3988
        %v3991 = vcvt.s32.f32 %v3984
        %v3992 = vmul.f32 %v3991, %v3989
        %v3993 = vxor.u32 %v3992, 2147483648
        %v3994 = vsel %vm3911, %v3993, %v3992
        %v3995 = vsub.s32 4, %v3971
        %v3996 = vsel %vm3911, %v3995, %v3971
        %v3997 = vsel %vm3910, %v755, %v3994
        %v3998 = vsel %vm3910, 0, %v3996
        %v3999 = vcosq.f32.pop %v3997
        %v4000 = vsinq.f32.pop %v3997
        %vm4001 = vweird.f32 %v755
        %v4002 = vadd.s32 %v3998, 3
        %v4003 = vand.u32 %v4002, 3
        %vm4004 = vcmp.lt.s32.totalorder %v4003, 2
        %vm4005 = vcmp.eq.s32.totalorder %v4003, 0
        %v4006 = vxor.u32 %v4000, 2147483648
        %v4007 = vsel %vm4005, %v3999, %v4006
        %vm4008 = vcmp.eq.s32.totalorder %v4003, 2
        %v4009 = vxor.u32 %v3999, 2147483648
        %v4010 = vsel %vm4008, %v4009, %v4000
        %v4011 = vsel %vm4004, %v4007, %v4010
        %v4012 = vsel %vm4001, nan, %v4011
        %v4013 = vand.u32 2147483647, %v756
        %vm4014 = vcmp.le.f32.partialorder %v4013, 0.7853982
        %vm4015 = vcmp.lt.s32.totalorder %v756, 0
        %v4016 = vand.u32 %v756, 2139095040
        %v4017 = vshrl.u32 %v4016, 23
        %v4018 = vsub.s32 %v4017, 127
        %v4019 = vand.u32 2147483647, %v756
        %v4020 = vand.u32 %v4019, 8388607
        %v4021 = vor.u32 %v4020, 8388608
        %v4022 = vsub.s32 0, %v4021
        %v4023 = vadd.s32 %v4018, 1
        %vm4024 = vcmp.gt.s32.totalorder %v4023, 0
        %v4025 = vsel %vm4024, %v4023, 0
        %v4026 = vshrl.u32 %v4025, 5
        %v4027 = vand.u32 %v4025, 31
        %v4028 = vsub.s32 32, %v4027
        %v4029 = vshrl.u32 683565275, %v4028
        %v4030 = vshll.u32 683565275, %v4027
        %v4031 = vshrl.u32 2475754826, %v4028
        %v4032 = vor.u32 %v4030, %v4031
        %v4033 = vshll.u32 2475754826, %v4027
        %v4034 = vshrl.u32 2131351028, %v4028
        %v4035 = vor.u32 %v4033, %v4034
        %v4036 = vshll.u32 2131351028, %v4027
        %v4037 = vshrl.u32 2102212464, %v4028
        %v4038 = vor.u32 %v4036, %v4037
        %v4039 = vshll.u32 2102212464, %v4027
        %v4040 = vshrl.u32 920167782, %v4028
        %v4041 = vor.u32 %v4039, %v4040
        %v4042 = vshll.u32 920167782, %v4027
        %v4043 = vshrl.u32 1326507024, %v4028
        %v4044 = vor.u32 %v4042, %v4043
        %vm4045 = vcmp.lt.s32.totalorder %v4026, 1
        %vm4046 = vcmp.lt.s32.totalorder %v4026, 2
        %vm4047 = vcmp.lt.s32.totalorder %v4026, 3
        %vm4048 = vcmp.lt.s32.totalorder %v4026, 4
        %v4049 = vsel %vm4045, %v4029, %v4032
        %v4050 = vsel %vm4048, %v4038, 2102212464
        %v4051 = vsel %vm4047, %v4035, %v4050
        %v4052 = vsel %vm4046, %v4049, %v4051
        %v4053 = vsel %vm4045, %v4032, %v4035
        %v4054 = vsel %vm4048, %v4041, 920167782
        %v4055 = vsel %vm4047, %v4038, %v4054
        %v4056 = vsel %vm4046, %v4053, %v4055
        %v4057 = vsel %vm4045, %v4035, %v4038
        %v4058 = vsel %vm4048, %v4044, 1326507024
        %v4059 = vsel %vm4047, %v4041, %v4058
        %v4060 = vsel %vm4046, %v4057, %v4059
        %v4061 = vshll.u32 %v4021, 8
        %v4062 = vmul.u32.u64.compose %v4061, %v4060
        %v4063 = vextract.low.u32 %v4062
        %v4064 = vextract.high.u32 %v4062
        %v4065 = vmul.u32.u64.compose %v4061, %v4056
        %v4066 = vextract.low.u32 %v4065
        %v4067 = vextract.high.u32 %v4065
        %v4068 = vmul.u32 %v4061, %v4052
        %v4069 = vadd.s32 %v4064, %v4066
        %vm4070 = vc.u32 %v4064, %v4066
        %v4071 = vadd.s32 %v4067, 1
        %v4072 = vsel %vm4070, %v4071, %v4067
        %v4073 = vadd.s32 %v4068, %v4072
        %v4074 = vadd.s32 %v4073, 536870912
        %v4075 = vshrl.u32 %v4074, 30
        %v4076 = vshll.u32 %v4075, 30
        %v4077 = vsub.s32 %v4073, %v4076
        %vm4078 = vcmp.lt.s32.totalorder %v4077, 0
        %v4079 = vsub.s32 0, %v4077
        %v4080 = vsel %vm4078, %v4079, %v4077
        %v4081 = vclz %v4080
        %v4082 = vsub.s32 %v4081, 2
        %vm4083 = vcmp.gt.s32.totalorder 0, %v4082
        %v4084 = vsel %vm4083, 0, %v4082
        %v4085 = vsub.s32 32, %v4084
        %v4086 = vshll.u32 %v4077, %v4084
        %v4087 = vshrl.u32 %v4069, %v4085
        %v4088 = vor.u32 %v4086, %v4087
        %v4089 = vsub.s32 4294967266, %v4084
        %v4090 = vadd.s32 %v4089, 127
        %v4091 = vshll.u32 %v4090, 23
        %v4092 = vor.u32 4788187, %v4091
        %v4093 = vand.u32 2147483647, %v4092
        %v4095 = vcvt.s32.f32 %v4088
        %v4096 = vmul.f32 %v4095, %v4093
        %v4097 = vxor.u32 %v4096, 2147483648
        %v4098 = vsel %vm4015, %v4097, %v4096
        %v4099 = vsub.s32 4, %v4075
        %v4100 = vsel %vm4015, %v4099, %v4075
        %v4101 = vsel %vm4014, %v756, %v4098
        %v4102 = vsel %vm4014, 0, %v4100
        %v4103 = vcosq.f32.pop %v4101
        %v4104 = vsinq.f32.pop %v4101
        %vm4105 = vweird.f32 %v756
        %v4106 = vadd.s32 %v4102, 3
        %v4107 = vand.u32 %v4106, 3
        %vm4108 = vcmp.lt.s32.totalorder %v4107, 2
        %vm4109 = vcmp.eq.s32.totalorder %v4107, 0
        %v4110 = vxor.u32 %v4104, 2147483648
        %v4111 = vsel %vm4109, %v4103, %v4110
        %vm4112 = vcmp.eq.s32.totalorder %v4107, 2
        %v4113 = vxor.u32 %v4103, 2147483648
        %v4114 = vsel %vm4112, %v4113, %v4104
        %v4115 = vsel %vm4108, %v4111, %v4114
        %v4116 = vsel %vm4105, nan, %v4115
        %v4117 = vand.u32 2147483647, %v757
        %vm4118 = vcmp.le.f32.partialorder %v4117, 0.7853982
        %vm4119 = vcmp.lt.s32.totalorder %v757, 0
        %v4120 = vand.u32 %v757, 2139095040
        %v4121 = vshrl.u32 %v4120, 23
        %v4122 = vsub.s32 %v4121, 127
        %v4123 = vand.u32 2147483647, %v757
        %v4124 = vand.u32 %v4123, 8388607
        %v4125 = vor.u32 %v4124, 8388608
        %v4126 = vsub.s32 0, %v4125
        %v4127 = vadd.s32 %v4122, 1
        %vm4128 = vcmp.gt.s32.totalorder %v4127, 0
        %v4129 = vsel %vm4128, %v4127, 0
        %v4130 = vshrl.u32 %v4129, 5
        %v4131 = vand.u32 %v4129, 31
        %v4132 = vsub.s32 32, %v4131
        %v4133 = vshrl.u32 683565275, %v4132
        %v4134 = vshll.u32 683565275, %v4131
        %v4135 = vshrl.u32 2475754826, %v4132
        %v4136 = vor.u32 %v4134, %v4135
        %v4137 = vshll.u32 2475754826, %v4131
        %v4138 = vshrl.u32 2131351028, %v4132
        %v4139 = vor.u32 %v4137, %v4138
        %v4140 = vshll.u32 2131351028, %v4131
        %v4141 = vshrl.u32 2102212464, %v4132
        %v4142 = vor.u32 %v4140, %v4141
        %v4143 = vshll.u32 2102212464, %v4131
        %v4144 = vshrl.u32 920167782, %v4132
        %v4145 = vor.u32 %v4143, %v4144
        %v4146 = vshll.u32 920167782, %v4131
        %v4147 = vshrl.u32 1326507024, %v4132
        %v4148 = vor.u32 %v4146, %v4147
        %vm4149 = vcmp.lt.s32.totalorder %v4130, 1
        %vm4150 = vcmp.lt.s32.totalorder %v4130, 2
        %vm4151 = vcmp.lt.s32.totalorder %v4130, 3
        %vm4152 = vcmp.lt.s32.totalorder %v4130, 4
        %v4153 = vsel %vm4149, %v4133, %v4136
        %v4154 = vsel %vm4152, %v4142, 2102212464
        %v4155 = vsel %vm4151, %v4139, %v4154
        %v4156 = vsel %vm4150, %v4153, %v4155
        %v4157 = vsel %vm4149, %v4136, %v4139
        %v4158 = vsel %vm4152, %v4145, 920167782
        %v4159 = vsel %vm4151, %v4142, %v4158
        %v4160 = vsel %vm4150, %v4157, %v4159
        %v4161 = vsel %vm4149, %v4139, %v4142
        %v4162 = vsel %vm4152, %v4148, 1326507024
        %v4163 = vsel %vm4151, %v4145, %v4162
        %v4164 = vsel %vm4150, %v4161, %v4163
        %v4165 = vshll.u32 %v4125, 8
        %v4166 = vmul.u32.u64.compose %v4165, %v4164
        %v4167 = vextract.low.u32 %v4166
        %v4168 = vextract.high.u32 %v4166
        %v4169 = vmul.u32.u64.compose %v4165, %v4160
        %v4170 = vextract.low.u32 %v4169
        %v4171 = vextract.high.u32 %v4169
        %v4172 = vmul.u32 %v4165, %v4156
        %v4173 = vadd.s32 %v4168, %v4170
        %vm4174 = vc.u32 %v4168, %v4170
        %v4175 = vadd.s32 %v4171, 1
        %v4176 = vsel %vm4174, %v4175, %v4171
        %v4177 = vadd.s32 %v4172, %v4176
        %v4178 = vadd.s32 %v4177, 536870912
        %v4179 = vshrl.u32 %v4178, 30
        %v4180 = vshll.u32 %v4179, 30
        %v4181 = vsub.s32 %v4177, %v4180
        %vm4182 = vcmp.lt.s32.totalorder %v4181, 0
        %v4183 = vsub.s32 0, %v4181
        %v4184 = vsel %vm4182, %v4183, %v4181
        %v4185 = vclz %v4184
        %v4186 = vsub.s32 %v4185, 2
        %vm4187 = vcmp.gt.s32.totalorder 0, %v4186
        %v4188 = vsel %vm4187, 0, %v4186
        %v4189 = vsub.s32 32, %v4188
        %v4190 = vshll.u32 %v4181, %v4188
        %v4191 = vshrl.u32 %v4173, %v4189
        %v4192 = vor.u32 %v4190, %v4191
        %v4193 = vsub.s32 4294967266, %v4188
        %v4194 = vadd.s32 %v4193, 127
        %v4195 = vshll.u32 %v4194, 23
        %v4196 = vor.u32 4788187, %v4195
        %v4197 = vand.u32 2147483647, %v4196
        %v4199 = vcvt.s32.f32 %v4192
        %v4200 = vmul.f32 %v4199, %v4197
        %v4201 = vxor.u32 %v4200, 2147483648
        %v4202 = vsel %vm4119, %v4201, %v4200
        %v4203 = vsub.s32 4, %v4179
        %v4204 = vsel %vm4119, %v4203, %v4179
        %v4205 = vsel %vm4118, %v757, %v4202
        %v4206 = vsel %vm4118, 0, %v4204
        %v4207 = vcosq.f32.pop %v4205
        %v4208 = vsinq.f32.pop %v4205
        %vm4209 = vweird.f32 %v757
        %v4210 = vadd.s32 %v4206, 3
        %v4211 = vand.u32 %v4210, 3
        %vm4212 = vcmp.lt.s32.totalorder %v4211, 2
        %vm4213 = vcmp.eq.s32.totalorder %v4211, 0
        %v4214 = vxor.u32 %v4208, 2147483648
        %v4215 = vsel %vm4213, %v4207, %v4214
        %vm4216 = vcmp.eq.s32.totalorder %v4211, 2
        %v4217 = vxor.u32 %v4207, 2147483648
        %v4218 = vsel %vm4216, %v4217, %v4208
        %v4219 = vsel %vm4212, %v4215, %v4218
        %v4220 = vsel %vm4209, nan, %v4219
        %v4221 = vand.u32 2147483647, %v758
        %vm4222 = vcmp.le.f32.partialorder %v4221, 0.7853982
        %vm4223 = vcmp.lt.s32.totalorder %v758, 0
        %v4224 = vand.u32 %v758, 2139095040
        %v4225 = vshrl.u32 %v4224, 23
        %v4226 = vsub.s32 %v4225, 127
        %v4227 = vand.u32 2147483647, %v758
        %v4228 = vand.u32 %v4227, 8388607
        %v4229 = vor.u32 %v4228, 8388608
        %v4230 = vsub.s32 0, %v4229
        %v4231 = vadd.s32 %v4226, 1
        %vm4232 = vcmp.gt.s32.totalorder %v4231, 0
        %v4233 = vsel %vm4232, %v4231, 0
        %v4234 = vshrl.u32 %v4233, 5
        %v4235 = vand.u32 %v4233, 31
        %v4236 = vsub.s32 32, %v4235
        %v4237 = vshrl.u32 683565275, %v4236
        %v4238 = vshll.u32 683565275, %v4235
        %v4239 = vshrl.u32 2475754826, %v4236
        %v4240 = vor.u32 %v4238, %v4239
        %v4241 = vshll.u32 2475754826, %v4235
        %v4242 = vshrl.u32 2131351028, %v4236
        %v4243 = vor.u32 %v4241, %v4242
        %v4244 = vshll.u32 2131351028, %v4235
        %v4245 = vshrl.u32 2102212464, %v4236
        %v4246 = vor.u32 %v4244, %v4245
        %v4247 = vshll.u32 2102212464, %v4235
        %v4248 = vshrl.u32 920167782, %v4236
        %v4249 = vor.u32 %v4247, %v4248
        %v4250 = vshll.u32 920167782, %v4235
        %v4251 = vshrl.u32 1326507024, %v4236
        %v4252 = vor.u32 %v4250, %v4251
        %vm4253 = vcmp.lt.s32.totalorder %v4234, 1
        %vm4254 = vcmp.lt.s32.totalorder %v4234, 2
        %vm4255 = vcmp.lt.s32.totalorder %v4234, 3
        %vm4256 = vcmp.lt.s32.totalorder %v4234, 4
        %v4257 = vsel %vm4253, %v4237, %v4240
        %v4258 = vsel %vm4256, %v4246, 2102212464
        %v4259 = vsel %vm4255, %v4243, %v4258
        %v4260 = vsel %vm4254, %v4257, %v4259
        %v4261 = vsel %vm4253, %v4240, %v4243
        %v4262 = vsel %vm4256, %v4249, 920167782
        %v4263 = vsel %vm4255, %v4246, %v4262
        %v4264 = vsel %vm4254, %v4261, %v4263
        %v4265 = vsel %vm4253, %v4243, %v4246
        %v4266 = vsel %vm4256, %v4252, 1326507024
        %v4267 = vsel %vm4255, %v4249, %v4266
        %v4268 = vsel %vm4254, %v4265, %v4267
        %v4269 = vshll.u32 %v4229, 8
        %v4270 = vmul.u32.u64.compose %v4269, %v4268
        %v4271 = vextract.low.u32 %v4270
        %v4272 = vextract.high.u32 %v4270
        %v4273 = vmul.u32.u64.compose %v4269, %v4264
        %v4274 = vextract.low.u32 %v4273
        %v4275 = vextract.high.u32 %v4273
        %v4276 = vmul.u32 %v4269, %v4260
        %v4277 = vadd.s32 %v4272, %v4274
        %vm4278 = vc.u32 %v4272, %v4274
        %v4279 = vadd.s32 %v4275, 1
        %v4280 = vsel %vm4278, %v4279, %v4275
        %v4281 = vadd.s32 %v4276, %v4280
        %v4282 = vadd.s32 %v4281, 536870912
        %v4283 = vshrl.u32 %v4282, 30
        %v4284 = vshll.u32 %v4283, 30
        %v4285 = vsub.s32 %v4281, %v4284
        %vm4286 = vcmp.lt.s32.totalorder %v4285, 0
        %v4287 = vsub.s32 0, %v4285
        %v4288 = vsel %vm4286, %v4287, %v4285
        %v4289 = vclz %v4288
        %v4290 = vsub.s32 %v4289, 2
        %vm4291 = vcmp.gt.s32.totalorder 0, %v4290
        %v4292 = vsel %vm4291, 0, %v4290
        %v4293 = vsub.s32 32, %v4292
        %v4294 = vshll.u32 %v4285, %v4292
        %v4295 = vshrl.u32 %v4277, %v4293
        %v4296 = vor.u32 %v4294, %v4295
        %v4297 = vsub.s32 4294967266, %v4292
        %v4298 = vadd.s32 %v4297, 127
        %v4299 = vshll.u32 %v4298, 23
        %v4300 = vor.u32 4788187, %v4299
        %v4301 = vand.u32 2147483647, %v4300
        %v4303 = vcvt.s32.f32 %v4296
        %v4304 = vmul.f32 %v4303, %v4301
        %v4305 = vxor.u32 %v4304, 2147483648
        %v4306 = vsel %vm4223, %v4305, %v4304
        %v4307 = vsub.s32 4, %v4283
        %v4308 = vsel %vm4223, %v4307, %v4283
        %v4309 = vsel %vm4222, %v758, %v4306
        %v4310 = vsel %vm4222, 0, %v4308
        %v4311 = vcosq.f32.pop %v4309
        %v4312 = vsinq.f32.pop %v4309
        %vm4313 = vweird.f32 %v758
        %v4314 = vadd.s32 %v4310, 3
        %v4315 = vand.u32 %v4314, 3
        %vm4316 = vcmp.lt.s32.totalorder %v4315, 2
        %vm4317 = vcmp.eq.s32.totalorder %v4315, 0
        %v4318 = vxor.u32 %v4312, 2147483648
        %v4319 = vsel %vm4317, %v4311, %v4318
        %vm4320 = vcmp.eq.s32.totalorder %v4315, 2
        %v4321 = vxor.u32 %v4311, 2147483648
        %v4322 = vsel %vm4320, %v4321, %v4312
        %v4323 = vsel %vm4316, %v4319, %v4322
        %v4324 = vsel %vm4313, nan, %v4323
        %v4325 = vand.u32 2147483647, %v759
        %vm4326 = vcmp.le.f32.partialorder %v4325, 0.7853982
        %vm4327 = vcmp.lt.s32.totalorder %v759, 0
        %v4328 = vand.u32 %v759, 2139095040
        %v4329 = vshrl.u32 %v4328, 23
        %v4330 = vsub.s32 %v4329, 127
        %v4331 = vand.u32 2147483647, %v759
        %v4332 = vand.u32 %v4331, 8388607
        %v4333 = vor.u32 %v4332, 8388608
        %v4334 = vsub.s32 0, %v4333
        %v4335 = vadd.s32 %v4330, 1
        %vm4336 = vcmp.gt.s32.totalorder %v4335, 0
        %v4337 = vsel %vm4336, %v4335, 0
        %v4338 = vshrl.u32 %v4337, 5
        %v4339 = vand.u32 %v4337, 31
        %v4340 = vsub.s32 32, %v4339
        %v4341 = vshrl.u32 683565275, %v4340
        %v4342 = vshll.u32 683565275, %v4339
        %v4343 = vshrl.u32 2475754826, %v4340
        %v4344 = vor.u32 %v4342, %v4343
        %v4345 = vshll.u32 2475754826, %v4339
        %v4346 = vshrl.u32 2131351028, %v4340
        %v4347 = vor.u32 %v4345, %v4346
        %v4348 = vshll.u32 2131351028, %v4339
        %v4349 = vshrl.u32 2102212464, %v4340
        %v4350 = vor.u32 %v4348, %v4349
        %v4351 = vshll.u32 2102212464, %v4339
        %v4352 = vshrl.u32 920167782, %v4340
        %v4353 = vor.u32 %v4351, %v4352
        %v4354 = vshll.u32 920167782, %v4339
        %v4355 = vshrl.u32 1326507024, %v4340
        %v4356 = vor.u32 %v4354, %v4355
        %vm4357 = vcmp.lt.s32.totalorder %v4338, 1
        %vm4358 = vcmp.lt.s32.totalorder %v4338, 2
        %vm4359 = vcmp.lt.s32.totalorder %v4338, 3
        %vm4360 = vcmp.lt.s32.totalorder %v4338, 4
        %v4361 = vsel %vm4357, %v4341, %v4344
        %v4362 = vsel %vm4360, %v4350, 2102212464
        %v4363 = vsel %vm4359, %v4347, %v4362
        %v4364 = vsel %vm4358, %v4361, %v4363
        %v4365 = vsel %vm4357, %v4344, %v4347
        %v4366 = vsel %vm4360, %v4353, 920167782
        %v4367 = vsel %vm4359, %v4350, %v4366
        %v4368 = vsel %vm4358, %v4365, %v4367
        %v4369 = vsel %vm4357, %v4347, %v4350
        %v4370 = vsel %vm4360, %v4356, 1326507024
        %v4371 = vsel %vm4359, %v4353, %v4370
        %v4372 = vsel %vm4358, %v4369, %v4371
        %v4373 = vshll.u32 %v4333, 8
        %v4374 = vmul.u32.u64.compose %v4373, %v4372
        %v4375 = vextract.low.u32 %v4374
        %v4376 = vextract.high.u32 %v4374
        %v4377 = vmul.u32.u64.compose %v4373, %v4368
        %v4378 = vextract.low.u32 %v4377
        %v4379 = vextract.high.u32 %v4377
        %v4380 = vmul.u32 %v4373, %v4364
        %v4381 = vadd.s32 %v4376, %v4378
        %vm4382 = vc.u32 %v4376, %v4378
        %v4383 = vadd.s32 %v4379, 1
        %v4384 = vsel %vm4382, %v4383, %v4379
        %v4385 = vadd.s32 %v4380, %v4384
        %v4386 = vadd.s32 %v4385, 536870912
        %v4387 = vshrl.u32 %v4386, 30
        %v4388 = vshll.u32 %v4387, 30
        %v4389 = vsub.s32 %v4385, %v4388
        %vm4390 = vcmp.lt.s32.totalorder %v4389, 0
        %v4391 = vsub.s32 0, %v4389
        %v4392 = vsel %vm4390, %v4391, %v4389
        %v4393 = vclz %v4392
        %v4394 = vsub.s32 %v4393, 2
        %vm4395 = vcmp.gt.s32.totalorder 0, %v4394
        %v4396 = vsel %vm4395, 0, %v4394
        %v4397 = vsub.s32 32, %v4396
        %v4398 = vshll.u32 %v4389, %v4396
        %v4399 = vshrl.u32 %v4381, %v4397
        %v4400 = vor.u32 %v4398, %v4399
        %v4401 = vsub.s32 4294967266, %v4396
        %v4402 = vadd.s32 %v4401, 127
        %v4403 = vshll.u32 %v4402, 23
        %v4404 = vor.u32 4788187, %v4403
        %v4405 = vand.u32 2147483647, %v4404
        %v4407 = vcvt.s32.f32 %v4400
        %v4408 = vmul.f32 %v4407, %v4405
        %v4409 = vxor.u32 %v4408, 2147483648
        %v4410 = vsel %vm4327, %v4409, %v4408
        %v4411 = vsub.s32 4, %v4387
        %v4412 = vsel %vm4327, %v4411, %v4387
        %v4413 = vsel %vm4326, %v759, %v4410
        %v4414 = vsel %vm4326, 0, %v4412
        %v4415 = vcosq.f32.pop %v4413
        %v4416 = vsinq.f32.pop %v4413
        %vm4417 = vweird.f32 %v759
        %v4418 = vadd.s32 %v4414, 3
        %v4419 = vand.u32 %v4418, 3
        %vm4420 = vcmp.lt.s32.totalorder %v4419, 2
        %vm4421 = vcmp.eq.s32.totalorder %v4419, 0
        %v4422 = vxor.u32 %v4416, 2147483648
        %v4423 = vsel %vm4421, %v4415, %v4422
        %vm4424 = vcmp.eq.s32.totalorder %v4419, 2
        %v4425 = vxor.u32 %v4415, 2147483648
        %v4426 = vsel %vm4424, %v4425, %v4416
        %v4427 = vsel %vm4420, %v4423, %v4426
        %v4428 = vsel %vm4417, nan, %v4427
        %v4429 = vand.u32 2147483647, %v760
        %vm4430 = vcmp.le.f32.partialorder %v4429, 0.7853982
        %vm4431 = vcmp.lt.s32.totalorder %v760, 0
        %v4432 = vand.u32 %v760, 2139095040
        %v4433 = vshrl.u32 %v4432, 23
        %v4434 = vsub.s32 %v4433, 127
        %v4435 = vand.u32 2147483647, %v760
        %v4436 = vand.u32 %v4435, 8388607
        %v4437 = vor.u32 %v4436, 8388608
        %v4438 = vsub.s32 0, %v4437
        %v4439 = vadd.s32 %v4434, 1
        %vm4440 = vcmp.gt.s32.totalorder %v4439, 0
        %v4441 = vsel %vm4440, %v4439, 0
        %v4442 = vshrl.u32 %v4441, 5
        %v4443 = vand.u32 %v4441, 31
        %v4444 = vsub.s32 32, %v4443
        %v4445 = vshrl.u32 683565275, %v4444
        %v4446 = vshll.u32 683565275, %v4443
        %v4447 = vshrl.u32 2475754826, %v4444
        %v4448 = vor.u32 %v4446, %v4447
        %v4449 = vshll.u32 2475754826, %v4443
        %v4450 = vshrl.u32 2131351028, %v4444
        %v4451 = vor.u32 %v4449, %v4450
        %v4452 = vshll.u32 2131351028, %v4443
        %v4453 = vshrl.u32 2102212464, %v4444
        %v4454 = vor.u32 %v4452, %v4453
        %v4455 = vshll.u32 2102212464, %v4443
        %v4456 = vshrl.u32 920167782, %v4444
        %v4457 = vor.u32 %v4455, %v4456
        %v4458 = vshll.u32 920167782, %v4443
        %v4459 = vshrl.u32 1326507024, %v4444
        %v4460 = vor.u32 %v4458, %v4459
        %vm4461 = vcmp.lt.s32.totalorder %v4442, 1
        %vm4462 = vcmp.lt.s32.totalorder %v4442, 2
        %vm4463 = vcmp.lt.s32.totalorder %v4442, 3
        %vm4464 = vcmp.lt.s32.totalorder %v4442, 4
        %v4465 = vsel %vm4461, %v4445, %v4448
        %v4466 = vsel %vm4464, %v4454, 2102212464
        %v4467 = vsel %vm4463, %v4451, %v4466
        %v4468 = vsel %vm4462, %v4465, %v4467
        %v4469 = vsel %vm4461, %v4448, %v4451
        %v4470 = vsel %vm4464, %v4457, 920167782
        %v4471 = vsel %vm4463, %v4454, %v4470
        %v4472 = vsel %vm4462, %v4469, %v4471
        %v4473 = vsel %vm4461, %v4451, %v4454
        %v4474 = vsel %vm4464, %v4460, 1326507024
        %v4475 = vsel %vm4463, %v4457, %v4474
        %v4476 = vsel %vm4462, %v4473, %v4475
        %v4477 = vshll.u32 %v4437, 8
        %v4478 = vmul.u32.u64.compose %v4477, %v4476
        %v4479 = vextract.low.u32 %v4478
        %v4480 = vextract.high.u32 %v4478
        %v4481 = vmul.u32.u64.compose %v4477, %v4472
        %v4482 = vextract.low.u32 %v4481
        %v4483 = vextract.high.u32 %v4481
        %v4484 = vmul.u32 %v4477, %v4468
        %v4485 = vadd.s32 %v4480, %v4482
        %vm4486 = vc.u32 %v4480, %v4482
        %v4487 = vadd.s32 %v4483, 1
        %v4488 = vsel %vm4486, %v4487, %v4483
        %v4489 = vadd.s32 %v4484, %v4488
        %v4490 = vadd.s32 %v4489, 536870912
        %v4491 = vshrl.u32 %v4490, 30
        %v4492 = vshll.u32 %v4491, 30
        %v4493 = vsub.s32 %v4489, %v4492
        %vm4494 = vcmp.lt.s32.totalorder %v4493, 0
        %v4495 = vsub.s32 0, %v4493
        %v4496 = vsel %vm4494, %v4495, %v4493
        %v4497 = vclz %v4496
        %v4498 = vsub.s32 %v4497, 2
        %vm4499 = vcmp.gt.s32.totalorder 0, %v4498
        %v4500 = vsel %vm4499, 0, %v4498
        %v4501 = vsub.s32 32, %v4500
        %v4502 = vshll.u32 %v4493, %v4500
        %v4503 = vshrl.u32 %v4485, %v4501
        %v4504 = vor.u32 %v4502, %v4503
        %v4505 = vsub.s32 4294967266, %v4500
        %v4506 = vadd.s32 %v4505, 127
        %v4507 = vshll.u32 %v4506, 23
        %v4508 = vor.u32 4788187, %v4507
        %v4509 = vand.u32 2147483647, %v4508
        %v4511 = vcvt.s32.f32 %v4504
        %v4512 = vmul.f32 %v4511, %v4509
        %v4513 = vxor.u32 %v4512, 2147483648
        %v4514 = vsel %vm4431, %v4513, %v4512
        %v4515 = vsub.s32 4, %v4491
        %v4516 = vsel %vm4431, %v4515, %v4491
        %v4517 = vsel %vm4430, %v760, %v4514
        %v4518 = vsel %vm4430, 0, %v4516
        %v4519 = vcosq.f32.pop %v4517
        %v4520 = vsinq.f32.pop %v4517
        %vm4521 = vweird.f32 %v760
        %v4522 = vadd.s32 %v4518, 3
        %v4523 = vand.u32 %v4522, 3
        %vm4524 = vcmp.lt.s32.totalorder %v4523, 2
        %vm4525 = vcmp.eq.s32.totalorder %v4523, 0
        %v4526 = vxor.u32 %v4520, 2147483648
        %v4527 = vsel %vm4525, %v4519, %v4526
        %vm4528 = vcmp.eq.s32.totalorder %v4523, 2
        %v4529 = vxor.u32 %v4519, 2147483648
        %v4530 = vsel %vm4528, %v4529, %v4520
        %v4531 = vsel %vm4524, %v4527, %v4530
        %v4532 = vsel %vm4521, nan, %v4531
        %v4533 = vand.u32 2147483647, %v761
        %vm4534 = vcmp.le.f32.partialorder %v4533, 0.7853982
        %vm4535 = vcmp.lt.s32.totalorder %v761, 0
        %v4536 = vand.u32 %v761, 2139095040
        %v4537 = vshrl.u32 %v4536, 23
        %v4538 = vsub.s32 %v4537, 127
        %v4539 = vand.u32 2147483647, %v761
        %v4540 = vand.u32 %v4539, 8388607
        %v4541 = vor.u32 %v4540, 8388608
        %v4542 = vsub.s32 0, %v4541
        %v4543 = vadd.s32 %v4538, 1
        %vm4544 = vcmp.gt.s32.totalorder %v4543, 0
        %v4545 = vsel %vm4544, %v4543, 0
        %v4546 = vshrl.u32 %v4545, 5
        %v4547 = vand.u32 %v4545, 31
        %v4548 = vsub.s32 32, %v4547
        %v4549 = vshrl.u32 683565275, %v4548
        %v4550 = vshll.u32 683565275, %v4547
        %v4551 = vshrl.u32 2475754826, %v4548
        %v4552 = vor.u32 %v4550, %v4551
        %v4553 = vshll.u32 2475754826, %v4547
        %v4554 = vshrl.u32 2131351028, %v4548
        %v4555 = vor.u32 %v4553, %v4554
        %v4556 = vshll.u32 2131351028, %v4547
        %v4557 = vshrl.u32 2102212464, %v4548
        %v4558 = vor.u32 %v4556, %v4557
        %v4559 = vshll.u32 2102212464, %v4547
        %v4560 = vshrl.u32 920167782, %v4548
        %v4561 = vor.u32 %v4559, %v4560
        %v4562 = vshll.u32 920167782, %v4547
        %v4563 = vshrl.u32 1326507024, %v4548
        %v4564 = vor.u32 %v4562, %v4563
        %vm4565 = vcmp.lt.s32.totalorder %v4546, 1
        %vm4566 = vcmp.lt.s32.totalorder %v4546, 2
        %vm4567 = vcmp.lt.s32.totalorder %v4546, 3
        %vm4568 = vcmp.lt.s32.totalorder %v4546, 4
        %v4569 = vsel %vm4565, %v4549, %v4552
        %v4570 = vsel %vm4568, %v4558, 2102212464
        %v4571 = vsel %vm4567, %v4555, %v4570
        %v4572 = vsel %vm4566, %v4569, %v4571
        %v4573 = vsel %vm4565, %v4552, %v4555
        %v4574 = vsel %vm4568, %v4561, 920167782
        %v4575 = vsel %vm4567, %v4558, %v4574
        %v4576 = vsel %vm4566, %v4573, %v4575
        %v4577 = vsel %vm4565, %v4555, %v4558
        %v4578 = vsel %vm4568, %v4564, 1326507024
        %v4579 = vsel %vm4567, %v4561, %v4578
        %v4580 = vsel %vm4566, %v4577, %v4579
        %v4581 = vshll.u32 %v4541, 8
        %v4582 = vmul.u32.u64.compose %v4581, %v4580
        %v4583 = vextract.low.u32 %v4582
        %v4584 = vextract.high.u32 %v4582
        %v4585 = vmul.u32.u64.compose %v4581, %v4576
        %v4586 = vextract.low.u32 %v4585
        %v4587 = vextract.high.u32 %v4585
        %v4588 = vmul.u32 %v4581, %v4572
        %v4589 = vadd.s32 %v4584, %v4586
        %vm4590 = vc.u32 %v4584, %v4586
        %v4591 = vadd.s32 %v4587, 1
        %v4592 = vsel %vm4590, %v4591, %v4587
        %v4593 = vadd.s32 %v4588, %v4592
        %v4594 = vadd.s32 %v4593, 536870912
        %v4595 = vshrl.u32 %v4594, 30
        %v4596 = vshll.u32 %v4595, 30
        %v4597 = vsub.s32 %v4593, %v4596
        %vm4598 = vcmp.lt.s32.totalorder %v4597, 0
        %v4599 = vsub.s32 0, %v4597
        %v4600 = vsel %vm4598, %v4599, %v4597
        %v4601 = vclz %v4600
        %v4602 = vsub.s32 %v4601, 2
        %vm4603 = vcmp.gt.s32.totalorder 0, %v4602
        %v4604 = vsel %vm4603, 0, %v4602
        %v4605 = vsub.s32 32, %v4604
        %v4606 = vshll.u32 %v4597, %v4604
        %v4607 = vshrl.u32 %v4589, %v4605
        %v4608 = vor.u32 %v4606, %v4607
        %v4609 = vsub.s32 4294967266, %v4604
        %v4610 = vadd.s32 %v4609, 127
        %v4611 = vshll.u32 %v4610, 23
        %v4612 = vor.u32 4788187, %v4611
        %v4613 = vand.u32 2147483647, %v4612
        %v4615 = vcvt.s32.f32 %v4608
        %v4616 = vmul.f32 %v4615, %v4613
        %v4617 = vxor.u32 %v4616, 2147483648
        %v4618 = vsel %vm4535, %v4617, %v4616
        %v4619 = vsub.s32 4, %v4595
        %v4620 = vsel %vm4535, %v4619, %v4595
        %v4621 = vsel %vm4534, %v761, %v4618
        %v4622 = vsel %vm4534, 0, %v4620
        %v4623 = vcosq.f32.pop %v4621
        %v4624 = vsinq.f32.pop %v4621
        %vm4625 = vweird.f32 %v761
        %v4626 = vadd.s32 %v4622, 3
        %v4627 = vand.u32 %v4626, 3
        %vm4628 = vcmp.lt.s32.totalorder %v4627, 2
        %vm4629 = vcmp.eq.s32.totalorder %v4627, 0
        %v4630 = vxor.u32 %v4624, 2147483648
        %v4631 = vsel %vm4629, %v4623, %v4630
        %vm4632 = vcmp.eq.s32.totalorder %v4627, 2
        %v4633 = vxor.u32 %v4623, 2147483648
        %v4634 = vsel %vm4632, %v4633, %v4624
        %v4635 = vsel %vm4628, %v4631, %v4634
        %v4636 = vsel %vm4625, nan, %v4635
        %v4637 = vand.u32 2147483647, %v762
        %vm4638 = vcmp.le.f32.partialorder %v4637, 0.7853982
        %vm4639 = vcmp.lt.s32.totalorder %v762, 0
        %v4640 = vand.u32 %v762, 2139095040
        %v4641 = vshrl.u32 %v4640, 23
        %v4642 = vsub.s32 %v4641, 127
        %v4643 = vand.u32 2147483647, %v762
        %v4644 = vand.u32 %v4643, 8388607
        %v4645 = vor.u32 %v4644, 8388608
        %v4646 = vsub.s32 0, %v4645
        %v4647 = vadd.s32 %v4642, 1
        %vm4648 = vcmp.gt.s32.totalorder %v4647, 0
        %v4649 = vsel %vm4648, %v4647, 0
        %v4650 = vshrl.u32 %v4649, 5
        %v4651 = vand.u32 %v4649, 31
        %v4652 = vsub.s32 32, %v4651
        %v4653 = vshrl.u32 683565275, %v4652
        %v4654 = vshll.u32 683565275, %v4651
        %v4655 = vshrl.u32 2475754826, %v4652
        %v4656 = vor.u32 %v4654, %v4655
        %v4657 = vshll.u32 2475754826, %v4651
        %v4658 = vshrl.u32 2131351028, %v4652
        %v4659 = vor.u32 %v4657, %v4658
        %v4660 = vshll.u32 2131351028, %v4651
        %v4661 = vshrl.u32 2102212464, %v4652
        %v4662 = vor.u32 %v4660, %v4661
        %v4663 = vshll.u32 2102212464, %v4651
        %v4664 = vshrl.u32 920167782, %v4652
        %v4665 = vor.u32 %v4663, %v4664
        %v4666 = vshll.u32 920167782, %v4651
        %v4667 = vshrl.u32 1326507024, %v4652
        %v4668 = vor.u32 %v4666, %v4667
        %vm4669 = vcmp.lt.s32.totalorder %v4650, 1
        %vm4670 = vcmp.lt.s32.totalorder %v4650, 2
        %vm4671 = vcmp.lt.s32.totalorder %v4650, 3
        %vm4672 = vcmp.lt.s32.totalorder %v4650, 4
        %v4673 = vsel %vm4669, %v4653, %v4656
        %v4674 = vsel %vm4672, %v4662, 2102212464
        %v4675 = vsel %vm4671, %v4659, %v4674
        %v4676 = vsel %vm4670, %v4673, %v4675
        %v4677 = vsel %vm4669, %v4656, %v4659
        %v4678 = vsel %vm4672, %v4665, 920167782
        %v4679 = vsel %vm4671, %v4662, %v4678
        %v4680 = vsel %vm4670, %v4677, %v4679
        %v4681 = vsel %vm4669, %v4659, %v4662
        %v4682 = vsel %vm4672, %v4668, 1326507024
        %v4683 = vsel %vm4671, %v4665, %v4682
        %v4684 = vsel %vm4670, %v4681, %v4683
        %v4685 = vshll.u32 %v4645, 8
        %v4686 = vmul.u32.u64.compose %v4685, %v4684
        %v4687 = vextract.low.u32 %v4686
        %v4688 = vextract.high.u32 %v4686
        %v4689 = vmul.u32.u64.compose %v4685, %v4680
        %v4690 = vextract.low.u32 %v4689
        %v4691 = vextract.high.u32 %v4689
        %v4692 = vmul.u32 %v4685, %v4676
        %v4693 = vadd.s32 %v4688, %v4690
        %vm4694 = vc.u32 %v4688, %v4690
        %v4695 = vadd.s32 %v4691, 1
        %v4696 = vsel %vm4694, %v4695, %v4691
        %v4697 = vadd.s32 %v4692, %v4696
        %v4698 = vadd.s32 %v4697, 536870912
        %v4699 = vshrl.u32 %v4698, 30
        %v4700 = vshll.u32 %v4699, 30
        %v4701 = vsub.s32 %v4697, %v4700
        %vm4702 = vcmp.lt.s32.totalorder %v4701, 0
        %v4703 = vsub.s32 0, %v4701
        %v4704 = vsel %vm4702, %v4703, %v4701
        %v4705 = vclz %v4704
        %v4706 = vsub.s32 %v4705, 2
        %vm4707 = vcmp.gt.s32.totalorder 0, %v4706
        %v4708 = vsel %vm4707, 0, %v4706
        %v4709 = vsub.s32 32, %v4708
        %v4710 = vshll.u32 %v4701, %v4708
        %v4711 = vshrl.u32 %v4693, %v4709
        %v4712 = vor.u32 %v4710, %v4711
        %v4713 = vsub.s32 4294967266, %v4708
        %v4714 = vadd.s32 %v4713, 127
        %v4715 = vshll.u32 %v4714, 23
        %v4716 = vor.u32 4788187, %v4715
        %v4717 = vand.u32 2147483647, %v4716
        %v4719 = vcvt.s32.f32 %v4712
        %v4720 = vmul.f32 %v4719, %v4717
        %v4721 = vxor.u32 %v4720, 2147483648
        %v4722 = vsel %vm4639, %v4721, %v4720
        %v4723 = vsub.s32 4, %v4699
        %v4724 = vsel %vm4639, %v4723, %v4699
        %v4725 = vsel %vm4638, %v762, %v4722
        %v4726 = vsel %vm4638, 0, %v4724
        %v4727 = vcosq.f32.pop %v4725
        %v4728 = vsinq.f32.pop %v4725
        %vm4729 = vweird.f32 %v762
        %v4730 = vadd.s32 %v4726, 3
        %v4731 = vand.u32 %v4730, 3
        %vm4732 = vcmp.lt.s32.totalorder %v4731, 2
        %vm4733 = vcmp.eq.s32.totalorder %v4731, 0
        %v4734 = vxor.u32 %v4728, 2147483648
        %v4735 = vsel %vm4733, %v4727, %v4734
        %vm4736 = vcmp.eq.s32.totalorder %v4731, 2
        %v4737 = vxor.u32 %v4727, 2147483648
        %v4738 = vsel %vm4736, %v4737, %v4728
        %v4739 = vsel %vm4732, %v4735, %v4738
        %v4740 = vsel %vm4729, nan, %v4739
        %v4741 = vand.u32 2147483647, %v763
        %vm4742 = vcmp.le.f32.partialorder %v4741, 0.7853982
        %vm4743 = vcmp.lt.s32.totalorder %v763, 0
        %v4744 = vand.u32 %v763, 2139095040
        %v4745 = vshrl.u32 %v4744, 23
        %v4746 = vsub.s32 %v4745, 127
        %v4747 = vand.u32 2147483647, %v763
        %v4748 = vand.u32 %v4747, 8388607
        %v4749 = vor.u32 %v4748, 8388608
        %v4750 = vsub.s32 0, %v4749
        %v4751 = vadd.s32 %v4746, 1
        %vm4752 = vcmp.gt.s32.totalorder %v4751, 0
        %v4753 = vsel %vm4752, %v4751, 0
        %v4754 = vshrl.u32 %v4753, 5
        %v4755 = vand.u32 %v4753, 31
        %v4756 = vsub.s32 32, %v4755
        %v4757 = vshrl.u32 683565275, %v4756
        %v4758 = vshll.u32 683565275, %v4755
        %v4759 = vshrl.u32 2475754826, %v4756
        %v4760 = vor.u32 %v4758, %v4759
        %v4761 = vshll.u32 2475754826, %v4755
        %v4762 = vshrl.u32 2131351028, %v4756
        %v4763 = vor.u32 %v4761, %v4762
        %v4764 = vshll.u32 2131351028, %v4755
        %v4765 = vshrl.u32 2102212464, %v4756
        %v4766 = vor.u32 %v4764, %v4765
        %v4767 = vshll.u32 2102212464, %v4755
        %v4768 = vshrl.u32 920167782, %v4756
        %v4769 = vor.u32 %v4767, %v4768
        %v4770 = vshll.u32 920167782, %v4755
        %v4771 = vshrl.u32 1326507024, %v4756
        %v4772 = vor.u32 %v4770, %v4771
        %vm4773 = vcmp.lt.s32.totalorder %v4754, 1
        %vm4774 = vcmp.lt.s32.totalorder %v4754, 2
        %vm4775 = vcmp.lt.s32.totalorder %v4754, 3
        %vm4776 = vcmp.lt.s32.totalorder %v4754, 4
        %v4777 = vsel %vm4773, %v4757, %v4760
        %v4778 = vsel %vm4776, %v4766, 2102212464
        %v4779 = vsel %vm4775, %v4763, %v4778
        %v4780 = vsel %vm4774, %v4777, %v4779
        %v4781 = vsel %vm4773, %v4760, %v4763
        %v4782 = vsel %vm4776, %v4769, 920167782
        %v4783 = vsel %vm4775, %v4766, %v4782
        %v4784 = vsel %vm4774, %v4781, %v4783
        %v4785 = vsel %vm4773, %v4763, %v4766
        %v4786 = vsel %vm4776, %v4772, 1326507024
        %v4787 = vsel %vm4775, %v4769, %v4786
        %v4788 = vsel %vm4774, %v4785, %v4787
        %v4789 = vshll.u32 %v4749, 8
        %v4790 = vmul.u32.u64.compose %v4789, %v4788
        %v4791 = vextract.low.u32 %v4790
        %v4792 = vextract.high.u32 %v4790
        %v4793 = vmul.u32.u64.compose %v4789, %v4784
        %v4794 = vextract.low.u32 %v4793
        %v4795 = vextract.high.u32 %v4793
        %v4796 = vmul.u32 %v4789, %v4780
        %v4797 = vadd.s32 %v4792, %v4794
        %vm4798 = vc.u32 %v4792, %v4794
        %v4799 = vadd.s32 %v4795, 1
        %v4800 = vsel %vm4798, %v4799, %v4795
        %v4801 = vadd.s32 %v4796, %v4800
        %v4802 = vadd.s32 %v4801, 536870912
        %v4803 = vshrl.u32 %v4802, 30
        %v4804 = vshll.u32 %v4803, 30
        %v4805 = vsub.s32 %v4801, %v4804
        %vm4806 = vcmp.lt.s32.totalorder %v4805, 0
        %v4807 = vsub.s32 0, %v4805
        %v4808 = vsel %vm4806, %v4807, %v4805
        %v4809 = vclz %v4808
        %v4810 = vsub.s32 %v4809, 2
        %vm4811 = vcmp.gt.s32.totalorder 0, %v4810
        %v4812 = vsel %vm4811, 0, %v4810
        %v4813 = vsub.s32 32, %v4812
        %v4814 = vshll.u32 %v4805, %v4812
        %v4815 = vshrl.u32 %v4797, %v4813
        %v4816 = vor.u32 %v4814, %v4815
        %v4817 = vsub.s32 4294967266, %v4812
        %v4818 = vadd.s32 %v4817, 127
        %v4819 = vshll.u32 %v4818, 23
        %v4820 = vor.u32 4788187, %v4819
        %v4821 = vand.u32 2147483647, %v4820
        %v4823 = vcvt.s32.f32 %v4816
        %v4824 = vmul.f32 %v4823, %v4821
        %v4825 = vxor.u32 %v4824, 2147483648
        %v4826 = vsel %vm4743, %v4825, %v4824
        %v4827 = vsub.s32 4, %v4803
        %v4828 = vsel %vm4743, %v4827, %v4803
        %v4829 = vsel %vm4742, %v763, %v4826
        %v4830 = vsel %vm4742, 0, %v4828
        %v4831 = vcosq.f32.pop %v4829
        %v4832 = vsinq.f32.pop %v4829
        %vm4833 = vweird.f32 %v763
        %v4834 = vadd.s32 %v4830, 3
        %v4835 = vand.u32 %v4834, 3
        %vm4836 = vcmp.lt.s32.totalorder %v4835, 2
        %vm4837 = vcmp.eq.s32.totalorder %v4835, 0
        %v4838 = vxor.u32 %v4832, 2147483648
        %v4839 = vsel %vm4837, %v4831, %v4838
        %vm4840 = vcmp.eq.s32.totalorder %v4835, 2
        %v4841 = vxor.u32 %v4831, 2147483648
        %v4842 = vsel %vm4840, %v4841, %v4832
        %v4843 = vsel %vm4836, %v4839, %v4842
        %v4844 = vsel %vm4833, nan, %v4843
        %v4845 = vand.u32 2147483647, %v764
        %vm4846 = vcmp.le.f32.partialorder %v4845, 0.7853982
        %vm4847 = vcmp.lt.s32.totalorder %v764, 0
        %v4848 = vand.u32 %v764, 2139095040
        %v4849 = vshrl.u32 %v4848, 23
        %v4850 = vsub.s32 %v4849, 127
        %v4851 = vand.u32 2147483647, %v764
        %v4852 = vand.u32 %v4851, 8388607
        %v4853 = vor.u32 %v4852, 8388608
        %v4854 = vsub.s32 0, %v4853
        %v4855 = vadd.s32 %v4850, 1
        %vm4856 = vcmp.gt.s32.totalorder %v4855, 0
        %v4857 = vsel %vm4856, %v4855, 0
        %v4858 = vshrl.u32 %v4857, 5
        %v4859 = vand.u32 %v4857, 31
        %v4860 = vsub.s32 32, %v4859
        %v4861 = vshrl.u32 683565275, %v4860
        %v4862 = vshll.u32 683565275, %v4859
        %v4863 = vshrl.u32 2475754826, %v4860
        %v4864 = vor.u32 %v4862, %v4863
        %v4865 = vshll.u32 2475754826, %v4859
        %v4866 = vshrl.u32 2131351028, %v4860
        %v4867 = vor.u32 %v4865, %v4866
        %v4868 = vshll.u32 2131351028, %v4859
        %v4869 = vshrl.u32 2102212464, %v4860
        %v4870 = vor.u32 %v4868, %v4869
        %v4871 = vshll.u32 2102212464, %v4859
        %v4872 = vshrl.u32 920167782, %v4860
        %v4873 = vor.u32 %v4871, %v4872
        %v4874 = vshll.u32 920167782, %v4859
        %v4875 = vshrl.u32 1326507024, %v4860
        %v4876 = vor.u32 %v4874, %v4875
        %vm4877 = vcmp.lt.s32.totalorder %v4858, 1
        %vm4878 = vcmp.lt.s32.totalorder %v4858, 2
        %vm4879 = vcmp.lt.s32.totalorder %v4858, 3
        %vm4880 = vcmp.lt.s32.totalorder %v4858, 4
        %v4881 = vsel %vm4877, %v4861, %v4864
        %v4882 = vsel %vm4880, %v4870, 2102212464
        %v4883 = vsel %vm4879, %v4867, %v4882
        %v4884 = vsel %vm4878, %v4881, %v4883
        %v4885 = vsel %vm4877, %v4864, %v4867
        %v4886 = vsel %vm4880, %v4873, 920167782
        %v4887 = vsel %vm4879, %v4870, %v4886
        %v4888 = vsel %vm4878, %v4885, %v4887
        %v4889 = vsel %vm4877, %v4867, %v4870
        %v4890 = vsel %vm4880, %v4876, 1326507024
        %v4891 = vsel %vm4879, %v4873, %v4890
        %v4892 = vsel %vm4878, %v4889, %v4891
        %v4893 = vshll.u32 %v4853, 8
        %v4894 = vmul.u32.u64.compose %v4893, %v4892
        %v4895 = vextract.low.u32 %v4894
        %v4896 = vextract.high.u32 %v4894
        %v4897 = vmul.u32.u64.compose %v4893, %v4888
        %v4898 = vextract.low.u32 %v4897
        %v4899 = vextract.high.u32 %v4897
        %v4900 = vmul.u32 %v4893, %v4884
        %v4901 = vadd.s32 %v4896, %v4898
        %vm4902 = vc.u32 %v4896, %v4898
        %v4903 = vadd.s32 %v4899, 1
        %v4904 = vsel %vm4902, %v4903, %v4899
        %v4905 = vadd.s32 %v4900, %v4904
        %v4906 = vadd.s32 %v4905, 536870912
        %v4907 = vshrl.u32 %v4906, 30
        %v4908 = vshll.u32 %v4907, 30
        %v4909 = vsub.s32 %v4905, %v4908
        %vm4910 = vcmp.lt.s32.totalorder %v4909, 0
        %v4911 = vsub.s32 0, %v4909
        %v4912 = vsel %vm4910, %v4911, %v4909
        %v4913 = vclz %v4912
        %v4914 = vsub.s32 %v4913, 2
        %vm4915 = vcmp.gt.s32.totalorder 0, %v4914
        %v4916 = vsel %vm4915, 0, %v4914
        %v4917 = vsub.s32 32, %v4916
        %v4918 = vshll.u32 %v4909, %v4916
        %v4919 = vshrl.u32 %v4901, %v4917
        %v4920 = vor.u32 %v4918, %v4919
        %v4921 = vsub.s32 4294967266, %v4916
        %v4922 = vadd.s32 %v4921, 127
        %v4923 = vshll.u32 %v4922, 23
        %v4924 = vor.u32 4788187, %v4923
        %v4925 = vand.u32 2147483647, %v4924
        %v4927 = vcvt.s32.f32 %v4920
        %v4928 = vmul.f32 %v4927, %v4925
        %v4929 = vxor.u32 %v4928, 2147483648
        %v4930 = vsel %vm4847, %v4929, %v4928
        %v4931 = vsub.s32 4, %v4907
        %v4932 = vsel %vm4847, %v4931, %v4907
        %v4933 = vsel %vm4846, %v764, %v4930
        %v4934 = vsel %vm4846, 0, %v4932
        %v4935 = vcosq.f32.pop %v4933
        %v4936 = vsinq.f32.pop %v4933
        %vm4937 = vweird.f32 %v764
        %v4938 = vadd.s32 %v4934, 3
        %v4939 = vand.u32 %v4938, 3
        %vm4940 = vcmp.lt.s32.totalorder %v4939, 2
        %vm4941 = vcmp.eq.s32.totalorder %v4939, 0
        %v4942 = vxor.u32 %v4936, 2147483648
        %v4943 = vsel %vm4941, %v4935, %v4942
        %vm4944 = vcmp.eq.s32.totalorder %v4939, 2
        %v4945 = vxor.u32 %v4935, 2147483648
        %v4946 = vsel %vm4944, %v4945, %v4936
        %v4947 = vsel %vm4940, %v4943, %v4946
        %v4948 = vsel %vm4937, nan, %v4947
        %v4949 = vand.u32 2147483647, %v765
        %vm4950 = vcmp.le.f32.partialorder %v4949, 0.7853982
        %vm4951 = vcmp.lt.s32.totalorder %v765, 0
        %v4952 = vand.u32 %v765, 2139095040
        %v4953 = vshrl.u32 %v4952, 23
        %v4954 = vsub.s32 %v4953, 127
        %v4955 = vand.u32 2147483647, %v765
        %v4956 = vand.u32 %v4955, 8388607
        %v4957 = vor.u32 %v4956, 8388608
        %v4958 = vsub.s32 0, %v4957
        %v4959 = vadd.s32 %v4954, 1
        %vm4960 = vcmp.gt.s32.totalorder %v4959, 0
        %v4961 = vsel %vm4960, %v4959, 0
        %v4962 = vshrl.u32 %v4961, 5
        %v4963 = vand.u32 %v4961, 31
        %v4964 = vsub.s32 32, %v4963
        %v4965 = vshrl.u32 683565275, %v4964
        %v4966 = vshll.u32 683565275, %v4963
        %v4967 = vshrl.u32 2475754826, %v4964
        %v4968 = vor.u32 %v4966, %v4967
        %v4969 = vshll.u32 2475754826, %v4963
        %v4970 = vshrl.u32 2131351028, %v4964
        %v4971 = vor.u32 %v4969, %v4970
        %v4972 = vshll.u32 2131351028, %v4963
        %v4973 = vshrl.u32 2102212464, %v4964
        %v4974 = vor.u32 %v4972, %v4973
        %v4975 = vshll.u32 2102212464, %v4963
        %v4976 = vshrl.u32 920167782, %v4964
        %v4977 = vor.u32 %v4975, %v4976
        %v4978 = vshll.u32 920167782, %v4963
        %v4979 = vshrl.u32 1326507024, %v4964
        %v4980 = vor.u32 %v4978, %v4979
        %vm4981 = vcmp.lt.s32.totalorder %v4962, 1
        %vm4982 = vcmp.lt.s32.totalorder %v4962, 2
        %vm4983 = vcmp.lt.s32.totalorder %v4962, 3
        %vm4984 = vcmp.lt.s32.totalorder %v4962, 4
        %v4985 = vsel %vm4981, %v4965, %v4968
        %v4986 = vsel %vm4984, %v4974, 2102212464
        %v4987 = vsel %vm4983, %v4971, %v4986
        %v4988 = vsel %vm4982, %v4985, %v4987
        %v4989 = vsel %vm4981, %v4968, %v4971
        %v4990 = vsel %vm4984, %v4977, 920167782
        %v4991 = vsel %vm4983, %v4974, %v4990
        %v4992 = vsel %vm4982, %v4989, %v4991
        %v4993 = vsel %vm4981, %v4971, %v4974
        %v4994 = vsel %vm4984, %v4980, 1326507024
        %v4995 = vsel %vm4983, %v4977, %v4994
        %v4996 = vsel %vm4982, %v4993, %v4995
        %v4997 = vshll.u32 %v4957, 8
        %v4998 = vmul.u32.u64.compose %v4997, %v4996
        %v4999 = vextract.low.u32 %v4998
        %v5000 = vextract.high.u32 %v4998
        %v5001 = vmul.u32.u64.compose %v4997, %v4992
        %v5002 = vextract.low.u32 %v5001
        %v5003 = vextract.high.u32 %v5001
        %v5004 = vmul.u32 %v4997, %v4988
        %v5005 = vadd.s32 %v5000, %v5002
        %vm5006 = vc.u32 %v5000, %v5002
        %v5007 = vadd.s32 %v5003, 1
        %v5008 = vsel %vm5006, %v5007, %v5003
        %v5009 = vadd.s32 %v5004, %v5008
        %v5010 = vadd.s32 %v5009, 536870912
        %v5011 = vshrl.u32 %v5010, 30
        %v5012 = vshll.u32 %v5011, 30
        %v5013 = vsub.s32 %v5009, %v5012
        %vm5014 = vcmp.lt.s32.totalorder %v5013, 0
        %v5015 = vsub.s32 0, %v5013
        %v5016 = vsel %vm5014, %v5015, %v5013
        %v5017 = vclz %v5016
        %v5018 = vsub.s32 %v5017, 2
        %vm5019 = vcmp.gt.s32.totalorder 0, %v5018
        %v5020 = vsel %vm5019, 0, %v5018
        %v5021 = vsub.s32 32, %v5020
        %v5022 = vshll.u32 %v5013, %v5020
        %v5023 = vshrl.u32 %v5005, %v5021
        %v5024 = vor.u32 %v5022, %v5023
        %v5025 = vsub.s32 4294967266, %v5020
        %v5026 = vadd.s32 %v5025, 127
        %v5027 = vshll.u32 %v5026, 23
        %v5028 = vor.u32 4788187, %v5027
        %v5029 = vand.u32 2147483647, %v5028
        %v5031 = vcvt.s32.f32 %v5024
        %v5032 = vmul.f32 %v5031, %v5029
        %v5033 = vxor.u32 %v5032, 2147483648
        %v5034 = vsel %vm4951, %v5033, %v5032
        %v5035 = vsub.s32 4, %v5011
        %v5036 = vsel %vm4951, %v5035, %v5011
        %v5037 = vsel %vm4950, %v765, %v5034
        %v5038 = vsel %vm4950, 0, %v5036
        %v5039 = vcosq.f32.pop %v5037
        %v5040 = vsinq.f32.pop %v5037
        %vm5041 = vweird.f32 %v765
        %v5042 = vadd.s32 %v5038, 3
        %v5043 = vand.u32 %v5042, 3
        %vm5044 = vcmp.lt.s32.totalorder %v5043, 2
        %vm5045 = vcmp.eq.s32.totalorder %v5043, 0
        %v5046 = vxor.u32 %v5040, 2147483648
        %v5047 = vsel %vm5045, %v5039, %v5046
        %vm5048 = vcmp.eq.s32.totalorder %v5043, 2
        %v5049 = vxor.u32 %v5039, 2147483648
        %v5050 = vsel %vm5048, %v5049, %v5040
        %v5051 = vsel %vm5044, %v5047, %v5050
        %v5052 = vsel %vm5041, nan, %v5051
        %v5053 = vand.u32 2147483647, %v766
        %vm5054 = vcmp.le.f32.partialorder %v5053, 0.7853982
        %vm5055 = vcmp.lt.s32.totalorder %v766, 0
        %v5056 = vand.u32 %v766, 2139095040
        %v5057 = vshrl.u32 %v5056, 23
        %v5058 = vsub.s32 %v5057, 127
        %v5059 = vand.u32 2147483647, %v766
        %v5060 = vand.u32 %v5059, 8388607
        %v5061 = vor.u32 %v5060, 8388608
        %v5062 = vsub.s32 0, %v5061
        %v5063 = vadd.s32 %v5058, 1
        %vm5064 = vcmp.gt.s32.totalorder %v5063, 0
        %v5065 = vsel %vm5064, %v5063, 0
        %v5066 = vshrl.u32 %v5065, 5
        %v5067 = vand.u32 %v5065, 31
        %v5068 = vsub.s32 32, %v5067
        %v5069 = vshrl.u32 683565275, %v5068
        %v5070 = vshll.u32 683565275, %v5067
        %v5071 = vshrl.u32 2475754826, %v5068
        %v5072 = vor.u32 %v5070, %v5071
        %v5073 = vshll.u32 2475754826, %v5067
        %v5074 = vshrl.u32 2131351028, %v5068
        %v5075 = vor.u32 %v5073, %v5074
        %v5076 = vshll.u32 2131351028, %v5067
        %v5077 = vshrl.u32 2102212464, %v5068
        %v5078 = vor.u32 %v5076, %v5077
        %v5079 = vshll.u32 2102212464, %v5067
        %v5080 = vshrl.u32 920167782, %v5068
        %v5081 = vor.u32 %v5079, %v5080
        %v5082 = vshll.u32 920167782, %v5067
        %v5083 = vshrl.u32 1326507024, %v5068
        %v5084 = vor.u32 %v5082, %v5083
        %vm5085 = vcmp.lt.s32.totalorder %v5066, 1
        %vm5086 = vcmp.lt.s32.totalorder %v5066, 2
        %vm5087 = vcmp.lt.s32.totalorder %v5066, 3
        %vm5088 = vcmp.lt.s32.totalorder %v5066, 4
        %v5089 = vsel %vm5085, %v5069, %v5072
        %v5090 = vsel %vm5088, %v5078, 2102212464
        %v5091 = vsel %vm5087, %v5075, %v5090
        %v5092 = vsel %vm5086, %v5089, %v5091
        %v5093 = vsel %vm5085, %v5072, %v5075
        %v5094 = vsel %vm5088, %v5081, 920167782
        %v5095 = vsel %vm5087, %v5078, %v5094
        %v5096 = vsel %vm5086, %v5093, %v5095
        %v5097 = vsel %vm5085, %v5075, %v5078
        %v5098 = vsel %vm5088, %v5084, 1326507024
        %v5099 = vsel %vm5087, %v5081, %v5098
        %v5100 = vsel %vm5086, %v5097, %v5099
        %v5101 = vshll.u32 %v5061, 8
        %v5102 = vmul.u32.u64.compose %v5101, %v5100
        %v5103 = vextract.low.u32 %v5102
        %v5104 = vextract.high.u32 %v5102
        %v5105 = vmul.u32.u64.compose %v5101, %v5096
        %v5106 = vextract.low.u32 %v5105
        %v5107 = vextract.high.u32 %v5105
        %v5108 = vmul.u32 %v5101, %v5092
        %v5109 = vadd.s32 %v5104, %v5106
        %vm5110 = vc.u32 %v5104, %v5106
        %v5111 = vadd.s32 %v5107, 1
        %v5112 = vsel %vm5110, %v5111, %v5107
        %v5113 = vadd.s32 %v5108, %v5112
        %v5114 = vadd.s32 %v5113, 536870912
        %v5115 = vshrl.u32 %v5114, 30
        %v5116 = vshll.u32 %v5115, 30
        %v5117 = vsub.s32 %v5113, %v5116
        %vm5118 = vcmp.lt.s32.totalorder %v5117, 0
        %v5119 = vsub.s32 0, %v5117
        %v5120 = vsel %vm5118, %v5119, %v5117
        %v5121 = vclz %v5120
        %v5122 = vsub.s32 %v5121, 2
        %vm5123 = vcmp.gt.s32.totalorder 0, %v5122
        %v5124 = vsel %vm5123, 0, %v5122
        %v5125 = vsub.s32 32, %v5124
        %v5126 = vshll.u32 %v5117, %v5124
        %v5127 = vshrl.u32 %v5109, %v5125
        %v5128 = vor.u32 %v5126, %v5127
        %v5129 = vsub.s32 4294967266, %v5124
        %v5130 = vadd.s32 %v5129, 127
        %v5131 = vshll.u32 %v5130, 23
        %v5132 = vor.u32 4788187, %v5131
        %v5133 = vand.u32 2147483647, %v5132
        %v5135 = vcvt.s32.f32 %v5128
        %v5136 = vmul.f32 %v5135, %v5133
        %v5137 = vxor.u32 %v5136, 2147483648
        %v5138 = vsel %vm5055, %v5137, %v5136
        %v5139 = vsub.s32 4, %v5115
        %v5140 = vsel %vm5055, %v5139, %v5115
        %v5141 = vsel %vm5054, %v766, %v5138
        %v5142 = vsel %vm5054, 0, %v5140
        %v5143 = vcosq.f32.pop %v5141
        %v5144 = vsinq.f32.pop %v5141
        %vm5145 = vweird.f32 %v766
        %v5146 = vadd.s32 %v5142, 3
        %v5147 = vand.u32 %v5146, 3
        %vm5148 = vcmp.lt.s32.totalorder %v5147, 2
        %vm5149 = vcmp.eq.s32.totalorder %v5147, 0
        %v5150 = vxor.u32 %v5144, 2147483648
        %v5151 = vsel %vm5149, %v5143, %v5150
        %vm5152 = vcmp.eq.s32.totalorder %v5147, 2
        %v5153 = vxor.u32 %v5143, 2147483648
        %v5154 = vsel %vm5152, %v5153, %v5144
        %v5155 = vsel %vm5148, %v5151, %v5154
        %v5156 = vsel %vm5145, nan, %v5155
        %v5157 = vand.u32 2147483647, %v767
        %vm5158 = vcmp.le.f32.partialorder %v5157, 0.7853982
        %vm5159 = vcmp.lt.s32.totalorder %v767, 0
        %v5160 = vand.u32 %v767, 2139095040
        %v5161 = vshrl.u32 %v5160, 23
        %v5162 = vsub.s32 %v5161, 127
        %v5163 = vand.u32 2147483647, %v767
        %v5164 = vand.u32 %v5163, 8388607
        %v5165 = vor.u32 %v5164, 8388608
        %v5166 = vsub.s32 0, %v5165
        %v5167 = vadd.s32 %v5162, 1
        %vm5168 = vcmp.gt.s32.totalorder %v5167, 0
        %v5169 = vsel %vm5168, %v5167, 0
        %v5170 = vshrl.u32 %v5169, 5
        %v5171 = vand.u32 %v5169, 31
        %v5172 = vsub.s32 32, %v5171
        %v5173 = vshrl.u32 683565275, %v5172
        %v5174 = vshll.u32 683565275, %v5171
        %v5175 = vshrl.u32 2475754826, %v5172
        %v5176 = vor.u32 %v5174, %v5175
        %v5177 = vshll.u32 2475754826, %v5171
        %v5178 = vshrl.u32 2131351028, %v5172
        %v5179 = vor.u32 %v5177, %v5178
        %v5180 = vshll.u32 2131351028, %v5171
        %v5181 = vshrl.u32 2102212464, %v5172
        %v5182 = vor.u32 %v5180, %v5181
        %v5183 = vshll.u32 2102212464, %v5171
        %v5184 = vshrl.u32 920167782, %v5172
        %v5185 = vor.u32 %v5183, %v5184
        %v5186 = vshll.u32 920167782, %v5171
        %v5187 = vshrl.u32 1326507024, %v5172
        %v5188 = vor.u32 %v5186, %v5187
        %vm5189 = vcmp.lt.s32.totalorder %v5170, 1
        %vm5190 = vcmp.lt.s32.totalorder %v5170, 2
        %vm5191 = vcmp.lt.s32.totalorder %v5170, 3
        %vm5192 = vcmp.lt.s32.totalorder %v5170, 4
        %v5193 = vsel %vm5189, %v5173, %v5176
        %v5194 = vsel %vm5192, %v5182, 2102212464
        %v5195 = vsel %vm5191, %v5179, %v5194
        %v5196 = vsel %vm5190, %v5193, %v5195
        %v5197 = vsel %vm5189, %v5176, %v5179
        %v5198 = vsel %vm5192, %v5185, 920167782
        %v5199 = vsel %vm5191, %v5182, %v5198
        %v5200 = vsel %vm5190, %v5197, %v5199
        %v5201 = vsel %vm5189, %v5179, %v5182
        %v5202 = vsel %vm5192, %v5188, 1326507024
        %v5203 = vsel %vm5191, %v5185, %v5202
        %v5204 = vsel %vm5190, %v5201, %v5203
        %v5205 = vshll.u32 %v5165, 8
        %v5206 = vmul.u32.u64.compose %v5205, %v5204
        %v5207 = vextract.low.u32 %v5206
        %v5208 = vextract.high.u32 %v5206
        %v5209 = vmul.u32.u64.compose %v5205, %v5200
        %v5210 = vextract.low.u32 %v5209
        %v5211 = vextract.high.u32 %v5209
        %v5212 = vmul.u32 %v5205, %v5196
        %v5213 = vadd.s32 %v5208, %v5210
        %vm5214 = vc.u32 %v5208, %v5210
        %v5215 = vadd.s32 %v5211, 1
        %v5216 = vsel %vm5214, %v5215, %v5211
        %v5217 = vadd.s32 %v5212, %v5216
        %v5218 = vadd.s32 %v5217, 536870912
        %v5219 = vshrl.u32 %v5218, 30
        %v5220 = vshll.u32 %v5219, 30
        %v5221 = vsub.s32 %v5217, %v5220
        %vm5222 = vcmp.lt.s32.totalorder %v5221, 0
        %v5223 = vsub.s32 0, %v5221
        %v5224 = vsel %vm5222, %v5223, %v5221
        %v5225 = vclz %v5224
        %v5226 = vsub.s32 %v5225, 2
        %vm5227 = vcmp.gt.s32.totalorder 0, %v5226
        %v5228 = vsel %vm5227, 0, %v5226
        %v5229 = vsub.s32 32, %v5228
        %v5230 = vshll.u32 %v5221, %v5228
        %v5231 = vshrl.u32 %v5213, %v5229
        %v5232 = vor.u32 %v5230, %v5231
        %v5233 = vsub.s32 4294967266, %v5228
        %v5234 = vadd.s32 %v5233, 127
        %v5235 = vshll.u32 %v5234, 23
        %v5236 = vor.u32 4788187, %v5235
        %v5237 = vand.u32 2147483647, %v5236
        %v5239 = vcvt.s32.f32 %v5232
        %v5240 = vmul.f32 %v5239, %v5237
        %v5241 = vxor.u32 %v5240, 2147483648
        %v5242 = vsel %vm5159, %v5241, %v5240
        %v5243 = vsub.s32 4, %v5219
        %v5244 = vsel %vm5159, %v5243, %v5219
        %v5245 = vsel %vm5158, %v767, %v5242
        %v5246 = vsel %vm5158, 0, %v5244
        %v5247 = vcosq.f32.pop %v5245
        %v5248 = vsinq.f32.pop %v5245
        %vm5249 = vweird.f32 %v767
        %v5250 = vadd.s32 %v5246, 3
        %v5251 = vand.u32 %v5250, 3
        %vm5252 = vcmp.lt.s32.totalorder %v5251, 2
        %vm5253 = vcmp.eq.s32.totalorder %v5251, 0
        %v5254 = vxor.u32 %v5248, 2147483648
        %v5255 = vsel %vm5253, %v5247, %v5254
        %vm5256 = vcmp.eq.s32.totalorder %v5251, 2
        %v5257 = vxor.u32 %v5247, 2147483648
        %v5258 = vsel %vm5256, %v5257, %v5248
        %v5259 = vsel %vm5252, %v5255, %v5258
        %v5260 = vsel %vm5249, nan, %v5259
        %v5261 = vand.u32 2147483647, %v768
        %vm5262 = vcmp.le.f32.partialorder %v5261, 0.7853982
        %vm5263 = vcmp.lt.s32.totalorder %v768, 0
        %v5264 = vand.u32 %v768, 2139095040
        %v5265 = vshrl.u32 %v5264, 23
        %v5266 = vsub.s32 %v5265, 127
        %v5267 = vand.u32 2147483647, %v768
        %v5268 = vand.u32 %v5267, 8388607
        %v5269 = vor.u32 %v5268, 8388608
        %v5270 = vsub.s32 0, %v5269
        %v5271 = vadd.s32 %v5266, 1
        %vm5272 = vcmp.gt.s32.totalorder %v5271, 0
        %v5273 = vsel %vm5272, %v5271, 0
        %v5274 = vshrl.u32 %v5273, 5
        %v5275 = vand.u32 %v5273, 31
        %v5276 = vsub.s32 32, %v5275
        %v5277 = vshrl.u32 683565275, %v5276
        %v5278 = vshll.u32 683565275, %v5275
        %v5279 = vshrl.u32 2475754826, %v5276
        %v5280 = vor.u32 %v5278, %v5279
        %v5281 = vshll.u32 2475754826, %v5275
        %v5282 = vshrl.u32 2131351028, %v5276
        %v5283 = vor.u32 %v5281, %v5282
        %v5284 = vshll.u32 2131351028, %v5275
        %v5285 = vshrl.u32 2102212464, %v5276
        %v5286 = vor.u32 %v5284, %v5285
        %v5287 = vshll.u32 2102212464, %v5275
        %v5288 = vshrl.u32 920167782, %v5276
        %v5289 = vor.u32 %v5287, %v5288
        %v5290 = vshll.u32 920167782, %v5275
        %v5291 = vshrl.u32 1326507024, %v5276
        %v5292 = vor.u32 %v5290, %v5291
        %vm5293 = vcmp.lt.s32.totalorder %v5274, 1
        %vm5294 = vcmp.lt.s32.totalorder %v5274, 2
        %vm5295 = vcmp.lt.s32.totalorder %v5274, 3
        %vm5296 = vcmp.lt.s32.totalorder %v5274, 4
        %v5297 = vsel %vm5293, %v5277, %v5280
        %v5298 = vsel %vm5296, %v5286, 2102212464
        %v5299 = vsel %vm5295, %v5283, %v5298
        %v5300 = vsel %vm5294, %v5297, %v5299
        %v5301 = vsel %vm5293, %v5280, %v5283
        %v5302 = vsel %vm5296, %v5289, 920167782
        %v5303 = vsel %vm5295, %v5286, %v5302
        %v5304 = vsel %vm5294, %v5301, %v5303
        %v5305 = vsel %vm5293, %v5283, %v5286
        %v5306 = vsel %vm5296, %v5292, 1326507024
        %v5307 = vsel %vm5295, %v5289, %v5306
        %v5308 = vsel %vm5294, %v5305, %v5307
        %v5309 = vshll.u32 %v5269, 8
        %v5310 = vmul.u32.u64.compose %v5309, %v5308
        %v5311 = vextract.low.u32 %v5310
        %v5312 = vextract.high.u32 %v5310
        %v5313 = vmul.u32.u64.compose %v5309, %v5304
        %v5314 = vextract.low.u32 %v5313
        %v5315 = vextract.high.u32 %v5313
        %v5316 = vmul.u32 %v5309, %v5300
        %v5317 = vadd.s32 %v5312, %v5314
        %vm5318 = vc.u32 %v5312, %v5314
        %v5319 = vadd.s32 %v5315, 1
        %v5320 = vsel %vm5318, %v5319, %v5315
        %v5321 = vadd.s32 %v5316, %v5320
        %v5322 = vadd.s32 %v5321, 536870912
        %v5323 = vshrl.u32 %v5322, 30
        %v5324 = vshll.u32 %v5323, 30
        %v5325 = vsub.s32 %v5321, %v5324
        %vm5326 = vcmp.lt.s32.totalorder %v5325, 0
        %v5327 = vsub.s32 0, %v5325
        %v5328 = vsel %vm5326, %v5327, %v5325
        %v5329 = vclz %v5328
        %v5330 = vsub.s32 %v5329, 2
        %vm5331 = vcmp.gt.s32.totalorder 0, %v5330
        %v5332 = vsel %vm5331, 0, %v5330
        %v5333 = vsub.s32 32, %v5332
        %v5334 = vshll.u32 %v5325, %v5332
        %v5335 = vshrl.u32 %v5317, %v5333
        %v5336 = vor.u32 %v5334, %v5335
        %v5337 = vsub.s32 4294967266, %v5332
        %v5338 = vadd.s32 %v5337, 127
        %v5339 = vshll.u32 %v5338, 23
        %v5340 = vor.u32 4788187, %v5339
        %v5341 = vand.u32 2147483647, %v5340
        %v5343 = vcvt.s32.f32 %v5336
        %v5344 = vmul.f32 %v5343, %v5341
        %v5345 = vxor.u32 %v5344, 2147483648
        %v5346 = vsel %vm5263, %v5345, %v5344
        %v5347 = vsub.s32 4, %v5323
        %v5348 = vsel %vm5263, %v5347, %v5323
        %v5349 = vsel %vm5262, %v768, %v5346
        %v5350 = vsel %vm5262, 0, %v5348
        %v5351 = vcosq.f32.pop %v5349
        %v5352 = vsinq.f32.pop %v5349
        %vm5353 = vweird.f32 %v768
        %v5354 = vadd.s32 %v5350, 3
        %v5355 = vand.u32 %v5354, 3
        %vm5356 = vcmp.lt.s32.totalorder %v5355, 2
        %vm5357 = vcmp.eq.s32.totalorder %v5355, 0
        %v5358 = vxor.u32 %v5352, 2147483648
        %v5359 = vsel %vm5357, %v5351, %v5358
        %vm5360 = vcmp.eq.s32.totalorder %v5355, 2
        %v5361 = vxor.u32 %v5351, 2147483648
        %v5362 = vsel %vm5360, %v5361, %v5352
        %v5363 = vsel %vm5356, %v5359, %v5362
        %v5364 = vsel %vm5353, nan, %v5363
        %v5365 = vand.u32 2147483647, %v769
        %vm5366 = vcmp.le.f32.partialorder %v5365, 0.7853982
        %vm5367 = vcmp.lt.s32.totalorder %v769, 0
        %v5368 = vand.u32 %v769, 2139095040
        %v5369 = vshrl.u32 %v5368, 23
        %v5370 = vsub.s32 %v5369, 127
        %v5371 = vand.u32 2147483647, %v769
        %v5372 = vand.u32 %v5371, 8388607
        %v5373 = vor.u32 %v5372, 8388608
        %v5374 = vsub.s32 0, %v5373
        %v5375 = vadd.s32 %v5370, 1
        %vm5376 = vcmp.gt.s32.totalorder %v5375, 0
        %v5377 = vsel %vm5376, %v5375, 0
        %v5378 = vshrl.u32 %v5377, 5
        %v5379 = vand.u32 %v5377, 31
        %v5380 = vsub.s32 32, %v5379
        %v5381 = vshrl.u32 683565275, %v5380
        %v5382 = vshll.u32 683565275, %v5379
        %v5383 = vshrl.u32 2475754826, %v5380
        %v5384 = vor.u32 %v5382, %v5383
        %v5385 = vshll.u32 2475754826, %v5379
        %v5386 = vshrl.u32 2131351028, %v5380
        %v5387 = vor.u32 %v5385, %v5386
        %v5388 = vshll.u32 2131351028, %v5379
        %v5389 = vshrl.u32 2102212464, %v5380
        %v5390 = vor.u32 %v5388, %v5389
        %v5391 = vshll.u32 2102212464, %v5379
        %v5392 = vshrl.u32 920167782, %v5380
        %v5393 = vor.u32 %v5391, %v5392
        %v5394 = vshll.u32 920167782, %v5379
        %v5395 = vshrl.u32 1326507024, %v5380
        %v5396 = vor.u32 %v5394, %v5395
        %vm5397 = vcmp.lt.s32.totalorder %v5378, 1
        %vm5398 = vcmp.lt.s32.totalorder %v5378, 2
        %vm5399 = vcmp.lt.s32.totalorder %v5378, 3
        %vm5400 = vcmp.lt.s32.totalorder %v5378, 4
        %v5401 = vsel %vm5397, %v5381, %v5384
        %v5402 = vsel %vm5400, %v5390, 2102212464
        %v5403 = vsel %vm5399, %v5387, %v5402
        %v5404 = vsel %vm5398, %v5401, %v5403
        %v5405 = vsel %vm5397, %v5384, %v5387
        %v5406 = vsel %vm5400, %v5393, 920167782
        %v5407 = vsel %vm5399, %v5390, %v5406
        %v5408 = vsel %vm5398, %v5405, %v5407
        %v5409 = vsel %vm5397, %v5387, %v5390
        %v5410 = vsel %vm5400, %v5396, 1326507024
        %v5411 = vsel %vm5399, %v5393, %v5410
        %v5412 = vsel %vm5398, %v5409, %v5411
        %v5413 = vshll.u32 %v5373, 8
        %v5414 = vmul.u32.u64.compose %v5413, %v5412
        %v5415 = vextract.low.u32 %v5414
        %v5416 = vextract.high.u32 %v5414
        %v5417 = vmul.u32.u64.compose %v5413, %v5408
        %v5418 = vextract.low.u32 %v5417
        %v5419 = vextract.high.u32 %v5417
        %v5420 = vmul.u32 %v5413, %v5404
        %v5421 = vadd.s32 %v5416, %v5418
        %vm5422 = vc.u32 %v5416, %v5418
        %v5423 = vadd.s32 %v5419, 1
        %v5424 = vsel %vm5422, %v5423, %v5419
        %v5425 = vadd.s32 %v5420, %v5424
        %v5426 = vadd.s32 %v5425, 536870912
        %v5427 = vshrl.u32 %v5426, 30
        %v5428 = vshll.u32 %v5427, 30
        %v5429 = vsub.s32 %v5425, %v5428
        %vm5430 = vcmp.lt.s32.totalorder %v5429, 0
        %v5431 = vsub.s32 0, %v5429
        %v5432 = vsel %vm5430, %v5431, %v5429
        %v5433 = vclz %v5432
        %v5434 = vsub.s32 %v5433, 2
        %vm5435 = vcmp.gt.s32.totalorder 0, %v5434
        %v5436 = vsel %vm5435, 0, %v5434
        %v5437 = vsub.s32 32, %v5436
        %v5438 = vshll.u32 %v5429, %v5436
        %v5439 = vshrl.u32 %v5421, %v5437
        %v5440 = vor.u32 %v5438, %v5439
        %v5441 = vsub.s32 4294967266, %v5436
        %v5442 = vadd.s32 %v5441, 127
        %v5443 = vshll.u32 %v5442, 23
        %v5444 = vor.u32 4788187, %v5443
        %v5445 = vand.u32 2147483647, %v5444
        %v5447 = vcvt.s32.f32 %v5440
        %v5448 = vmul.f32 %v5447, %v5445
        %v5449 = vxor.u32 %v5448, 2147483648
        %v5450 = vsel %vm5367, %v5449, %v5448
        %v5451 = vsub.s32 4, %v5427
        %v5452 = vsel %vm5367, %v5451, %v5427
        %v5453 = vsel %vm5366, %v769, %v5450
        %v5454 = vsel %vm5366, 0, %v5452
        %v5455 = vcosq.f32.pop %v5453
        %v5456 = vsinq.f32.pop %v5453
        %vm5457 = vweird.f32 %v769
        %v5458 = vadd.s32 %v5454, 3
        %v5459 = vand.u32 %v5458, 3
        %vm5460 = vcmp.lt.s32.totalorder %v5459, 2
        %vm5461 = vcmp.eq.s32.totalorder %v5459, 0
        %v5462 = vxor.u32 %v5456, 2147483648
        %v5463 = vsel %vm5461, %v5455, %v5462
        %vm5464 = vcmp.eq.s32.totalorder %v5459, 2
        %v5465 = vxor.u32 %v5455, 2147483648
        %v5466 = vsel %vm5464, %v5465, %v5456
        %v5467 = vsel %vm5460, %v5463, %v5466
        %v5468 = vsel %vm5457, nan, %v5467
        %v5469 = vand.u32 2147483647, %v770
        %vm5470 = vcmp.le.f32.partialorder %v5469, 0.7853982
        %vm5471 = vcmp.lt.s32.totalorder %v770, 0
        %v5472 = vand.u32 %v770, 2139095040
        %v5473 = vshrl.u32 %v5472, 23
        %v5474 = vsub.s32 %v5473, 127
        %v5475 = vand.u32 2147483647, %v770
        %v5476 = vand.u32 %v5475, 8388607
        %v5477 = vor.u32 %v5476, 8388608
        %v5478 = vsub.s32 0, %v5477
        %v5479 = vadd.s32 %v5474, 1
        %vm5480 = vcmp.gt.s32.totalorder %v5479, 0
        %v5481 = vsel %vm5480, %v5479, 0
        %v5482 = vshrl.u32 %v5481, 5
        %v5483 = vand.u32 %v5481, 31
        %v5484 = vsub.s32 32, %v5483
        %v5485 = vshrl.u32 683565275, %v5484
        %v5486 = vshll.u32 683565275, %v5483
        %v5487 = vshrl.u32 2475754826, %v5484
        %v5488 = vor.u32 %v5486, %v5487
        %v5489 = vshll.u32 2475754826, %v5483
        %v5490 = vshrl.u32 2131351028, %v5484
        %v5491 = vor.u32 %v5489, %v5490
        %v5492 = vshll.u32 2131351028, %v5483
        %v5493 = vshrl.u32 2102212464, %v5484
        %v5494 = vor.u32 %v5492, %v5493
        %v5495 = vshll.u32 2102212464, %v5483
        %v5496 = vshrl.u32 920167782, %v5484
        %v5497 = vor.u32 %v5495, %v5496
        %v5498 = vshll.u32 920167782, %v5483
        %v5499 = vshrl.u32 1326507024, %v5484
        %v5500 = vor.u32 %v5498, %v5499
        %vm5501 = vcmp.lt.s32.totalorder %v5482, 1
        %vm5502 = vcmp.lt.s32.totalorder %v5482, 2
        %vm5503 = vcmp.lt.s32.totalorder %v5482, 3
        %vm5504 = vcmp.lt.s32.totalorder %v5482, 4
        %v5505 = vsel %vm5501, %v5485, %v5488
        %v5506 = vsel %vm5504, %v5494, 2102212464
        %v5507 = vsel %vm5503, %v5491, %v5506
        %v5508 = vsel %vm5502, %v5505, %v5507
        %v5509 = vsel %vm5501, %v5488, %v5491
        %v5510 = vsel %vm5504, %v5497, 920167782
        %v5511 = vsel %vm5503, %v5494, %v5510
        %v5512 = vsel %vm5502, %v5509, %v5511
        %v5513 = vsel %vm5501, %v5491, %v5494
        %v5514 = vsel %vm5504, %v5500, 1326507024
        %v5515 = vsel %vm5503, %v5497, %v5514
        %v5516 = vsel %vm5502, %v5513, %v5515
        %v5517 = vshll.u32 %v5477, 8
        %v5518 = vmul.u32.u64.compose %v5517, %v5516
        %v5519 = vextract.low.u32 %v5518
        %v5520 = vextract.high.u32 %v5518
        %v5521 = vmul.u32.u64.compose %v5517, %v5512
        %v5522 = vextract.low.u32 %v5521
        %v5523 = vextract.high.u32 %v5521
        %v5524 = vmul.u32 %v5517, %v5508
        %v5525 = vadd.s32 %v5520, %v5522
        %vm5526 = vc.u32 %v5520, %v5522
        %v5527 = vadd.s32 %v5523, 1
        %v5528 = vsel %vm5526, %v5527, %v5523
        %v5529 = vadd.s32 %v5524, %v5528
        %v5530 = vadd.s32 %v5529, 536870912
        %v5531 = vshrl.u32 %v5530, 30
        %v5532 = vshll.u32 %v5531, 30
        %v5533 = vsub.s32 %v5529, %v5532
        %vm5534 = vcmp.lt.s32.totalorder %v5533, 0
        %v5535 = vsub.s32 0, %v5533
        %v5536 = vsel %vm5534, %v5535, %v5533
        %v5537 = vclz %v5536
        %v5538 = vsub.s32 %v5537, 2
        %vm5539 = vcmp.gt.s32.totalorder 0, %v5538
        %v5540 = vsel %vm5539, 0, %v5538
        %v5541 = vsub.s32 32, %v5540
        %v5542 = vshll.u32 %v5533, %v5540
        %v5543 = vshrl.u32 %v5525, %v5541
        %v5544 = vor.u32 %v5542, %v5543
        %v5545 = vsub.s32 4294967266, %v5540
        %v5546 = vadd.s32 %v5545, 127
        %v5547 = vshll.u32 %v5546, 23
        %v5548 = vor.u32 4788187, %v5547
        %v5549 = vand.u32 2147483647, %v5548
        %v5551 = vcvt.s32.f32 %v5544
        %v5552 = vmul.f32 %v5551, %v5549
        %v5553 = vxor.u32 %v5552, 2147483648
        %v5554 = vsel %vm5471, %v5553, %v5552
        %v5555 = vsub.s32 4, %v5531
        %v5556 = vsel %vm5471, %v5555, %v5531
        %v5557 = vsel %vm5470, %v770, %v5554
        %v5558 = vsel %vm5470, 0, %v5556
        %v5559 = vcosq.f32.pop %v5557
        %v5560 = vsinq.f32.pop %v5557
        %vm5561 = vweird.f32 %v770
        %v5562 = vadd.s32 %v5558, 3
        %v5563 = vand.u32 %v5562, 3
        %vm5564 = vcmp.lt.s32.totalorder %v5563, 2
        %vm5565 = vcmp.eq.s32.totalorder %v5563, 0
        %v5566 = vxor.u32 %v5560, 2147483648
        %v5567 = vsel %vm5565, %v5559, %v5566
        %vm5568 = vcmp.eq.s32.totalorder %v5563, 2
        %v5569 = vxor.u32 %v5559, 2147483648
        %v5570 = vsel %vm5568, %v5569, %v5560
        %v5571 = vsel %vm5564, %v5567, %v5570
        %v5572 = vsel %vm5561, nan, %v5571
        %v5573 = vand.u32 2147483647, %v771
        %vm5574 = vcmp.le.f32.partialorder %v5573, 0.7853982
        %vm5575 = vcmp.lt.s32.totalorder %v771, 0
        %v5576 = vand.u32 %v771, 2139095040
        %v5577 = vshrl.u32 %v5576, 23
        %v5578 = vsub.s32 %v5577, 127
        %v5579 = vand.u32 2147483647, %v771
        %v5580 = vand.u32 %v5579, 8388607
        %v5581 = vor.u32 %v5580, 8388608
        %v5582 = vsub.s32 0, %v5581
        %v5583 = vadd.s32 %v5578, 1
        %vm5584 = vcmp.gt.s32.totalorder %v5583, 0
        %v5585 = vsel %vm5584, %v5583, 0
        %v5586 = vshrl.u32 %v5585, 5
        %v5587 = vand.u32 %v5585, 31
        %v5588 = vsub.s32 32, %v5587
        %v5589 = vshrl.u32 683565275, %v5588
        %v5590 = vshll.u32 683565275, %v5587
        %v5591 = vshrl.u32 2475754826, %v5588
        %v5592 = vor.u32 %v5590, %v5591
        %v5593 = vshll.u32 2475754826, %v5587
        %v5594 = vshrl.u32 2131351028, %v5588
        %v5595 = vor.u32 %v5593, %v5594
        %v5596 = vshll.u32 2131351028, %v5587
        %v5597 = vshrl.u32 2102212464, %v5588
        %v5598 = vor.u32 %v5596, %v5597
        %v5599 = vshll.u32 2102212464, %v5587
        %v5600 = vshrl.u32 920167782, %v5588
        %v5601 = vor.u32 %v5599, %v5600
        %v5602 = vshll.u32 920167782, %v5587
        %v5603 = vshrl.u32 1326507024, %v5588
        %v5604 = vor.u32 %v5602, %v5603
        %vm5605 = vcmp.lt.s32.totalorder %v5586, 1
        %vm5606 = vcmp.lt.s32.totalorder %v5586, 2
        %vm5607 = vcmp.lt.s32.totalorder %v5586, 3
        %vm5608 = vcmp.lt.s32.totalorder %v5586, 4
        %v5609 = vsel %vm5605, %v5589, %v5592
        %v5610 = vsel %vm5608, %v5598, 2102212464
        %v5611 = vsel %vm5607, %v5595, %v5610
        %v5612 = vsel %vm5606, %v5609, %v5611
        %v5613 = vsel %vm5605, %v5592, %v5595
        %v5614 = vsel %vm5608, %v5601, 920167782
        %v5615 = vsel %vm5607, %v5598, %v5614
        %v5616 = vsel %vm5606, %v5613, %v5615
        %v5617 = vsel %vm5605, %v5595, %v5598
        %v5618 = vsel %vm5608, %v5604, 1326507024
        %v5619 = vsel %vm5607, %v5601, %v5618
        %v5620 = vsel %vm5606, %v5617, %v5619
        %v5621 = vshll.u32 %v5581, 8
        %v5622 = vmul.u32.u64.compose %v5621, %v5620
        %v5623 = vextract.low.u32 %v5622
        %v5624 = vextract.high.u32 %v5622
        %v5625 = vmul.u32.u64.compose %v5621, %v5616
        %v5626 = vextract.low.u32 %v5625
        %v5627 = vextract.high.u32 %v5625
        %v5628 = vmul.u32 %v5621, %v5612
        %v5629 = vadd.s32 %v5624, %v5626
        %vm5630 = vc.u32 %v5624, %v5626
        %v5631 = vadd.s32 %v5627, 1
        %v5632 = vsel %vm5630, %v5631, %v5627
        %v5633 = vadd.s32 %v5628, %v5632
        %v5634 = vadd.s32 %v5633, 536870912
        %v5635 = vshrl.u32 %v5634, 30
        %v5636 = vshll.u32 %v5635, 30
        %v5637 = vsub.s32 %v5633, %v5636
        %vm5638 = vcmp.lt.s32.totalorder %v5637, 0
        %v5639 = vsub.s32 0, %v5637
        %v5640 = vsel %vm5638, %v5639, %v5637
        %v5641 = vclz %v5640
        %v5642 = vsub.s32 %v5641, 2
        %vm5643 = vcmp.gt.s32.totalorder 0, %v5642
        %v5644 = vsel %vm5643, 0, %v5642
        %v5645 = vsub.s32 32, %v5644
        %v5646 = vshll.u32 %v5637, %v5644
        %v5647 = vshrl.u32 %v5629, %v5645
        %v5648 = vor.u32 %v5646, %v5647
        %v5649 = vsub.s32 4294967266, %v5644
        %v5650 = vadd.s32 %v5649, 127
        %v5651 = vshll.u32 %v5650, 23
        %v5652 = vor.u32 4788187, %v5651
        %v5653 = vand.u32 2147483647, %v5652
        %v5655 = vcvt.s32.f32 %v5648
        %v5656 = vmul.f32 %v5655, %v5653
        %v5657 = vxor.u32 %v5656, 2147483648
        %v5658 = vsel %vm5575, %v5657, %v5656
        %v5659 = vsub.s32 4, %v5635
        %v5660 = vsel %vm5575, %v5659, %v5635
        %v5661 = vsel %vm5574, %v771, %v5658
        %v5662 = vsel %vm5574, 0, %v5660
        %v5663 = vcosq.f32.pop %v5661
        %v5664 = vsinq.f32.pop %v5661
        %vm5665 = vweird.f32 %v771
        %v5666 = vadd.s32 %v5662, 3
        %v5667 = vand.u32 %v5666, 3
        %vm5668 = vcmp.lt.s32.totalorder %v5667, 2
        %vm5669 = vcmp.eq.s32.totalorder %v5667, 0
        %v5670 = vxor.u32 %v5664, 2147483648
        %v5671 = vsel %vm5669, %v5663, %v5670
        %vm5672 = vcmp.eq.s32.totalorder %v5667, 2
        %v5673 = vxor.u32 %v5663, 2147483648
        %v5674 = vsel %vm5672, %v5673, %v5664
        %v5675 = vsel %vm5668, %v5671, %v5674
        %v5676 = vsel %vm5665, nan, %v5675
        %v5677 = vand.u32 2147483647, %v772
        %vm5678 = vcmp.le.f32.partialorder %v5677, 0.7853982
        %vm5679 = vcmp.lt.s32.totalorder %v772, 0
        %v5680 = vand.u32 %v772, 2139095040
        %v5681 = vshrl.u32 %v5680, 23
        %v5682 = vsub.s32 %v5681, 127
        %v5683 = vand.u32 2147483647, %v772
        %v5684 = vand.u32 %v5683, 8388607
        %v5685 = vor.u32 %v5684, 8388608
        %v5686 = vsub.s32 0, %v5685
        %v5687 = vadd.s32 %v5682, 1
        %vm5688 = vcmp.gt.s32.totalorder %v5687, 0
        %v5689 = vsel %vm5688, %v5687, 0
        %v5690 = vshrl.u32 %v5689, 5
        %v5691 = vand.u32 %v5689, 31
        %v5692 = vsub.s32 32, %v5691
        %v5693 = vshrl.u32 683565275, %v5692
        %v5694 = vshll.u32 683565275, %v5691
        %v5695 = vshrl.u32 2475754826, %v5692
        %v5696 = vor.u32 %v5694, %v5695
        %v5697 = vshll.u32 2475754826, %v5691
        %v5698 = vshrl.u32 2131351028, %v5692
        %v5699 = vor.u32 %v5697, %v5698
        %v5700 = vshll.u32 2131351028, %v5691
        %v5701 = vshrl.u32 2102212464, %v5692
        %v5702 = vor.u32 %v5700, %v5701
        %v5703 = vshll.u32 2102212464, %v5691
        %v5704 = vshrl.u32 920167782, %v5692
        %v5705 = vor.u32 %v5703, %v5704
        %v5706 = vshll.u32 920167782, %v5691
        %v5707 = vshrl.u32 1326507024, %v5692
        %v5708 = vor.u32 %v5706, %v5707
        %vm5709 = vcmp.lt.s32.totalorder %v5690, 1
        %vm5710 = vcmp.lt.s32.totalorder %v5690, 2
        %vm5711 = vcmp.lt.s32.totalorder %v5690, 3
        %vm5712 = vcmp.lt.s32.totalorder %v5690, 4
        %v5713 = vsel %vm5709, %v5693, %v5696
        %v5714 = vsel %vm5712, %v5702, 2102212464
        %v5715 = vsel %vm5711, %v5699, %v5714
        %v5716 = vsel %vm5710, %v5713, %v5715
        %v5717 = vsel %vm5709, %v5696, %v5699
        %v5718 = vsel %vm5712, %v5705, 920167782
        %v5719 = vsel %vm5711, %v5702, %v5718
        %v5720 = vsel %vm5710, %v5717, %v5719
        %v5721 = vsel %vm5709, %v5699, %v5702
        %v5722 = vsel %vm5712, %v5708, 1326507024
        %v5723 = vsel %vm5711, %v5705, %v5722
        %v5724 = vsel %vm5710, %v5721, %v5723
        %v5725 = vshll.u32 %v5685, 8
        %v5726 = vmul.u32.u64.compose %v5725, %v5724
        %v5727 = vextract.low.u32 %v5726
        %v5728 = vextract.high.u32 %v5726
        %v5729 = vmul.u32.u64.compose %v5725, %v5720
        %v5730 = vextract.low.u32 %v5729
        %v5731 = vextract.high.u32 %v5729
        %v5732 = vmul.u32 %v5725, %v5716
        %v5733 = vadd.s32 %v5728, %v5730
        %vm5734 = vc.u32 %v5728, %v5730
        %v5735 = vadd.s32 %v5731, 1
        %v5736 = vsel %vm5734, %v5735, %v5731
        %v5737 = vadd.s32 %v5732, %v5736
        %v5738 = vadd.s32 %v5737, 536870912
        %v5739 = vshrl.u32 %v5738, 30
        %v5740 = vshll.u32 %v5739, 30
        %v5741 = vsub.s32 %v5737, %v5740
        %vm5742 = vcmp.lt.s32.totalorder %v5741, 0
        %v5743 = vsub.s32 0, %v5741
        %v5744 = vsel %vm5742, %v5743, %v5741
        %v5745 = vclz %v5744
        %v5746 = vsub.s32 %v5745, 2
        %vm5747 = vcmp.gt.s32.totalorder 0, %v5746
        %v5748 = vsel %vm5747, 0, %v5746
        %v5749 = vsub.s32 32, %v5748
        %v5750 = vshll.u32 %v5741, %v5748
        %v5751 = vshrl.u32 %v5733, %v5749
        %v5752 = vor.u32 %v5750, %v5751
        %v5753 = vsub.s32 4294967266, %v5748
        %v5754 = vadd.s32 %v5753, 127
        %v5755 = vshll.u32 %v5754, 23
        %v5756 = vor.u32 4788187, %v5755
        %v5757 = vand.u32 2147483647, %v5756
        %v5759 = vcvt.s32.f32 %v5752
        %v5760 = vmul.f32 %v5759, %v5757
        %v5761 = vxor.u32 %v5760, 2147483648
        %v5762 = vsel %vm5679, %v5761, %v5760
        %v5763 = vsub.s32 4, %v5739
        %v5764 = vsel %vm5679, %v5763, %v5739
        %v5765 = vsel %vm5678, %v772, %v5762
        %v5766 = vsel %vm5678, 0, %v5764
        %v5767 = vcosq.f32.pop %v5765
        %v5768 = vsinq.f32.pop %v5765
        %vm5769 = vweird.f32 %v772
        %v5770 = vadd.s32 %v5766, 3
        %v5771 = vand.u32 %v5770, 3
        %vm5772 = vcmp.lt.s32.totalorder %v5771, 2
        %vm5773 = vcmp.eq.s32.totalorder %v5771, 0
        %v5774 = vxor.u32 %v5768, 2147483648
        %v5775 = vsel %vm5773, %v5767, %v5774
        %vm5776 = vcmp.eq.s32.totalorder %v5771, 2
        %v5777 = vxor.u32 %v5767, 2147483648
        %v5778 = vsel %vm5776, %v5777, %v5768
        %v5779 = vsel %vm5772, %v5775, %v5778
        %v5780 = vsel %vm5769, nan, %v5779
        %v5781 = vand.u32 2147483647, %v773
        %vm5782 = vcmp.le.f32.partialorder %v5781, 0.7853982
        %vm5783 = vcmp.lt.s32.totalorder %v773, 0
        %v5784 = vand.u32 %v773, 2139095040
        %v5785 = vshrl.u32 %v5784, 23
        %v5786 = vsub.s32 %v5785, 127
        %v5787 = vand.u32 2147483647, %v773
        %v5788 = vand.u32 %v5787, 8388607
        %v5789 = vor.u32 %v5788, 8388608
        %v5790 = vsub.s32 0, %v5789
        %v5791 = vadd.s32 %v5786, 1
        %vm5792 = vcmp.gt.s32.totalorder %v5791, 0
        %v5793 = vsel %vm5792, %v5791, 0
        %v5794 = vshrl.u32 %v5793, 5
        %v5795 = vand.u32 %v5793, 31
        %v5796 = vsub.s32 32, %v5795
        %v5797 = vshrl.u32 683565275, %v5796
        %v5798 = vshll.u32 683565275, %v5795
        %v5799 = vshrl.u32 2475754826, %v5796
        %v5800 = vor.u32 %v5798, %v5799
        %v5801 = vshll.u32 2475754826, %v5795
        %v5802 = vshrl.u32 2131351028, %v5796
        %v5803 = vor.u32 %v5801, %v5802
        %v5804 = vshll.u32 2131351028, %v5795
        %v5805 = vshrl.u32 2102212464, %v5796
        %v5806 = vor.u32 %v5804, %v5805
        %v5807 = vshll.u32 2102212464, %v5795
        %v5808 = vshrl.u32 920167782, %v5796
        %v5809 = vor.u32 %v5807, %v5808
        %v5810 = vshll.u32 920167782, %v5795
        %v5811 = vshrl.u32 1326507024, %v5796
        %v5812 = vor.u32 %v5810, %v5811
        %vm5813 = vcmp.lt.s32.totalorder %v5794, 1
        %vm5814 = vcmp.lt.s32.totalorder %v5794, 2
        %vm5815 = vcmp.lt.s32.totalorder %v5794, 3
        %vm5816 = vcmp.lt.s32.totalorder %v5794, 4
        %v5817 = vsel %vm5813, %v5797, %v5800
        %v5818 = vsel %vm5816, %v5806, 2102212464
        %v5819 = vsel %vm5815, %v5803, %v5818
        %v5820 = vsel %vm5814, %v5817, %v5819
        %v5821 = vsel %vm5813, %v5800, %v5803
        %v5822 = vsel %vm5816, %v5809, 920167782
        %v5823 = vsel %vm5815, %v5806, %v5822
        %v5824 = vsel %vm5814, %v5821, %v5823
        %v5825 = vsel %vm5813, %v5803, %v5806
        %v5826 = vsel %vm5816, %v5812, 1326507024
        %v5827 = vsel %vm5815, %v5809, %v5826
        %v5828 = vsel %vm5814, %v5825, %v5827
        %v5829 = vshll.u32 %v5789, 8
        %v5830 = vmul.u32.u64.compose %v5829, %v5828
        %v5831 = vextract.low.u32 %v5830
        %v5832 = vextract.high.u32 %v5830
        %v5833 = vmul.u32.u64.compose %v5829, %v5824
        %v5834 = vextract.low.u32 %v5833
        %v5835 = vextract.high.u32 %v5833
        %v5836 = vmul.u32 %v5829, %v5820
        %v5837 = vadd.s32 %v5832, %v5834
        %vm5838 = vc.u32 %v5832, %v5834
        %v5839 = vadd.s32 %v5835, 1
        %v5840 = vsel %vm5838, %v5839, %v5835
        %v5841 = vadd.s32 %v5836, %v5840
        %v5842 = vadd.s32 %v5841, 536870912
        %v5843 = vshrl.u32 %v5842, 30
        %v5844 = vshll.u32 %v5843, 30
        %v5845 = vsub.s32 %v5841, %v5844
        %vm5846 = vcmp.lt.s32.totalorder %v5845, 0
        %v5847 = vsub.s32 0, %v5845
        %v5848 = vsel %vm5846, %v5847, %v5845
        %v5849 = vclz %v5848
        %v5850 = vsub.s32 %v5849, 2
        %vm5851 = vcmp.gt.s32.totalorder 0, %v5850
        %v5852 = vsel %vm5851, 0, %v5850
        %v5853 = vsub.s32 32, %v5852
        %v5854 = vshll.u32 %v5845, %v5852
        %v5855 = vshrl.u32 %v5837, %v5853
        %v5856 = vor.u32 %v5854, %v5855
        %v5857 = vsub.s32 4294967266, %v5852
        %v5858 = vadd.s32 %v5857, 127
        %v5859 = vshll.u32 %v5858, 23
        %v5860 = vor.u32 4788187, %v5859
        %v5861 = vand.u32 2147483647, %v5860
        %v5863 = vcvt.s32.f32 %v5856
        %v5864 = vmul.f32 %v5863, %v5861
        %v5865 = vxor.u32 %v5864, 2147483648
        %v5866 = vsel %vm5783, %v5865, %v5864
        %v5867 = vsub.s32 4, %v5843
        %v5868 = vsel %vm5783, %v5867, %v5843
        %v5869 = vsel %vm5782, %v773, %v5866
        %v5870 = vsel %vm5782, 0, %v5868
        %v5871 = vcosq.f32.pop %v5869
        %v5872 = vsinq.f32.pop %v5869
        %vm5873 = vweird.f32 %v773
        %v5874 = vadd.s32 %v5870, 3
        %v5875 = vand.u32 %v5874, 3
        %vm5876 = vcmp.lt.s32.totalorder %v5875, 2
        %vm5877 = vcmp.eq.s32.totalorder %v5875, 0
        %v5878 = vxor.u32 %v5872, 2147483648
        %v5879 = vsel %vm5877, %v5871, %v5878
        %vm5880 = vcmp.eq.s32.totalorder %v5875, 2
        %v5881 = vxor.u32 %v5871, 2147483648
        %v5882 = vsel %vm5880, %v5881, %v5872
        %v5883 = vsel %vm5876, %v5879, %v5882
        %v5884 = vsel %vm5873, nan, %v5883
        %v5885 = vand.u32 2147483647, %v774
        %vm5886 = vcmp.le.f32.partialorder %v5885, 0.7853982
        %vm5887 = vcmp.lt.s32.totalorder %v774, 0
        %v5888 = vand.u32 %v774, 2139095040
        %v5889 = vshrl.u32 %v5888, 23
        %v5890 = vsub.s32 %v5889, 127
        %v5891 = vand.u32 2147483647, %v774
        %v5892 = vand.u32 %v5891, 8388607
        %v5893 = vor.u32 %v5892, 8388608
        %v5894 = vsub.s32 0, %v5893
        %v5895 = vadd.s32 %v5890, 1
        %vm5896 = vcmp.gt.s32.totalorder %v5895, 0
        %v5897 = vsel %vm5896, %v5895, 0
        %v5898 = vshrl.u32 %v5897, 5
        %v5899 = vand.u32 %v5897, 31
        %v5900 = vsub.s32 32, %v5899
        %v5901 = vshrl.u32 683565275, %v5900
        %v5902 = vshll.u32 683565275, %v5899
        %v5903 = vshrl.u32 2475754826, %v5900
        %v5904 = vor.u32 %v5902, %v5903
        %v5905 = vshll.u32 2475754826, %v5899
        %v5906 = vshrl.u32 2131351028, %v5900
        %v5907 = vor.u32 %v5905, %v5906
        %v5908 = vshll.u32 2131351028, %v5899
        %v5909 = vshrl.u32 2102212464, %v5900
        %v5910 = vor.u32 %v5908, %v5909
        %v5911 = vshll.u32 2102212464, %v5899
        %v5912 = vshrl.u32 920167782, %v5900
        %v5913 = vor.u32 %v5911, %v5912
        %v5914 = vshll.u32 920167782, %v5899
        %v5915 = vshrl.u32 1326507024, %v5900
        %v5916 = vor.u32 %v5914, %v5915
        %vm5917 = vcmp.lt.s32.totalorder %v5898, 1
        %vm5918 = vcmp.lt.s32.totalorder %v5898, 2
        %vm5919 = vcmp.lt.s32.totalorder %v5898, 3
        %vm5920 = vcmp.lt.s32.totalorder %v5898, 4
        %v5921 = vsel %vm5917, %v5901, %v5904
        %v5922 = vsel %vm5920, %v5910, 2102212464
        %v5923 = vsel %vm5919, %v5907, %v5922
        %v5924 = vsel %vm5918, %v5921, %v5923
        %v5925 = vsel %vm5917, %v5904, %v5907
        %v5926 = vsel %vm5920, %v5913, 920167782
        %v5927 = vsel %vm5919, %v5910, %v5926
        %v5928 = vsel %vm5918, %v5925, %v5927
        %v5929 = vsel %vm5917, %v5907, %v5910
        %v5930 = vsel %vm5920, %v5916, 1326507024
        %v5931 = vsel %vm5919, %v5913, %v5930
        %v5932 = vsel %vm5918, %v5929, %v5931
        %v5933 = vshll.u32 %v5893, 8
        %v5934 = vmul.u32.u64.compose %v5933, %v5932
        %v5935 = vextract.low.u32 %v5934
        %v5936 = vextract.high.u32 %v5934
        %v5937 = vmul.u32.u64.compose %v5933, %v5928
        %v5938 = vextract.low.u32 %v5937
        %v5939 = vextract.high.u32 %v5937
        %v5940 = vmul.u32 %v5933, %v5924
        %v5941 = vadd.s32 %v5936, %v5938
        %vm5942 = vc.u32 %v5936, %v5938
        %v5943 = vadd.s32 %v5939, 1
        %v5944 = vsel %vm5942, %v5943, %v5939
        %v5945 = vadd.s32 %v5940, %v5944
        %v5946 = vadd.s32 %v5945, 536870912
        %v5947 = vshrl.u32 %v5946, 30
        %v5948 = vshll.u32 %v5947, 30
        %v5949 = vsub.s32 %v5945, %v5948
        %vm5950 = vcmp.lt.s32.totalorder %v5949, 0
        %v5951 = vsub.s32 0, %v5949
        %v5952 = vsel %vm5950, %v5951, %v5949
        %v5953 = vclz %v5952
        %v5954 = vsub.s32 %v5953, 2
        %vm5955 = vcmp.gt.s32.totalorder 0, %v5954
        %v5956 = vsel %vm5955, 0, %v5954
        %v5957 = vsub.s32 32, %v5956
        %v5958 = vshll.u32 %v5949, %v5956
        %v5959 = vshrl.u32 %v5941, %v5957
        %v5960 = vor.u32 %v5958, %v5959
        %v5961 = vsub.s32 4294967266, %v5956
        %v5962 = vadd.s32 %v5961, 127
        %v5963 = vshll.u32 %v5962, 23
        %v5964 = vor.u32 4788187, %v5963
        %v5965 = vand.u32 2147483647, %v5964
        %v5967 = vcvt.s32.f32 %v5960
        %v5968 = vmul.f32 %v5967, %v5965
        %v5969 = vxor.u32 %v5968, 2147483648
        %v5970 = vsel %vm5887, %v5969, %v5968
        %v5971 = vsub.s32 4, %v5947
        %v5972 = vsel %vm5887, %v5971, %v5947
        %v5973 = vsel %vm5886, %v774, %v5970
        %v5974 = vsel %vm5886, 0, %v5972
        %v5975 = vcosq.f32.pop %v5973
        %v5976 = vsinq.f32.pop %v5973
        %vm5977 = vweird.f32 %v774
        %v5978 = vadd.s32 %v5974, 3
        %v5979 = vand.u32 %v5978, 3
        %vm5980 = vcmp.lt.s32.totalorder %v5979, 2
        %vm5981 = vcmp.eq.s32.totalorder %v5979, 0
        %v5982 = vxor.u32 %v5976, 2147483648
        %v5983 = vsel %vm5981, %v5975, %v5982
        %vm5984 = vcmp.eq.s32.totalorder %v5979, 2
        %v5985 = vxor.u32 %v5975, 2147483648
        %v5986 = vsel %vm5984, %v5985, %v5976
        %v5987 = vsel %vm5980, %v5983, %v5986
        %v5988 = vsel %vm5977, nan, %v5987
        %v5989 = vand.u32 2147483647, %v775
        %vm5990 = vcmp.le.f32.partialorder %v5989, 0.7853982
        %vm5991 = vcmp.lt.s32.totalorder %v775, 0
        %v5992 = vand.u32 %v775, 2139095040
        %v5993 = vshrl.u32 %v5992, 23
        %v5994 = vsub.s32 %v5993, 127
        %v5995 = vand.u32 2147483647, %v775
        %v5996 = vand.u32 %v5995, 8388607
        %v5997 = vor.u32 %v5996, 8388608
        %v5998 = vsub.s32 0, %v5997
        %v5999 = vadd.s32 %v5994, 1
        %vm6000 = vcmp.gt.s32.totalorder %v5999, 0
        %v6001 = vsel %vm6000, %v5999, 0
        %v6002 = vshrl.u32 %v6001, 5
        %v6003 = vand.u32 %v6001, 31
        %v6004 = vsub.s32 32, %v6003
        %v6005 = vshrl.u32 683565275, %v6004
        %v6006 = vshll.u32 683565275, %v6003
        %v6007 = vshrl.u32 2475754826, %v6004
        %v6008 = vor.u32 %v6006, %v6007
        %v6009 = vshll.u32 2475754826, %v6003
        %v6010 = vshrl.u32 2131351028, %v6004
        %v6011 = vor.u32 %v6009, %v6010
        %v6012 = vshll.u32 2131351028, %v6003
        %v6013 = vshrl.u32 2102212464, %v6004
        %v6014 = vor.u32 %v6012, %v6013
        %v6015 = vshll.u32 2102212464, %v6003
        %v6016 = vshrl.u32 920167782, %v6004
        %v6017 = vor.u32 %v6015, %v6016
        %v6018 = vshll.u32 920167782, %v6003
        %v6019 = vshrl.u32 1326507024, %v6004
        %v6020 = vor.u32 %v6018, %v6019
        %vm6021 = vcmp.lt.s32.totalorder %v6002, 1
        %vm6022 = vcmp.lt.s32.totalorder %v6002, 2
        %vm6023 = vcmp.lt.s32.totalorder %v6002, 3
        %vm6024 = vcmp.lt.s32.totalorder %v6002, 4
        %v6025 = vsel %vm6021, %v6005, %v6008
        %v6026 = vsel %vm6024, %v6014, 2102212464
        %v6027 = vsel %vm6023, %v6011, %v6026
        %v6028 = vsel %vm6022, %v6025, %v6027
        %v6029 = vsel %vm6021, %v6008, %v6011
        %v6030 = vsel %vm6024, %v6017, 920167782
        %v6031 = vsel %vm6023, %v6014, %v6030
        %v6032 = vsel %vm6022, %v6029, %v6031
        %v6033 = vsel %vm6021, %v6011, %v6014
        %v6034 = vsel %vm6024, %v6020, 1326507024
        %v6035 = vsel %vm6023, %v6017, %v6034
        %v6036 = vsel %vm6022, %v6033, %v6035
        %v6037 = vshll.u32 %v5997, 8
        %v6038 = vmul.u32.u64.compose %v6037, %v6036
        %v6039 = vextract.low.u32 %v6038
        %v6040 = vextract.high.u32 %v6038
        %v6041 = vmul.u32.u64.compose %v6037, %v6032
        %v6042 = vextract.low.u32 %v6041
        %v6043 = vextract.high.u32 %v6041
        %v6044 = vmul.u32 %v6037, %v6028
        %v6045 = vadd.s32 %v6040, %v6042
        %vm6046 = vc.u32 %v6040, %v6042
        %v6047 = vadd.s32 %v6043, 1
        %v6048 = vsel %vm6046, %v6047, %v6043
        %v6049 = vadd.s32 %v6044, %v6048
        %v6050 = vadd.s32 %v6049, 536870912
        %v6051 = vshrl.u32 %v6050, 30
        %v6052 = vshll.u32 %v6051, 30
        %v6053 = vsub.s32 %v6049, %v6052
        %vm6054 = vcmp.lt.s32.totalorder %v6053, 0
        %v6055 = vsub.s32 0, %v6053
        %v6056 = vsel %vm6054, %v6055, %v6053
        %v6057 = vclz %v6056
        %v6058 = vsub.s32 %v6057, 2
        %vm6059 = vcmp.gt.s32.totalorder 0, %v6058
        %v6060 = vsel %vm6059, 0, %v6058
        %v6061 = vsub.s32 32, %v6060
        %v6062 = vshll.u32 %v6053, %v6060
        %v6063 = vshrl.u32 %v6045, %v6061
        %v6064 = vor.u32 %v6062, %v6063
        %v6065 = vsub.s32 4294967266, %v6060
        %v6066 = vadd.s32 %v6065, 127
        %v6067 = vshll.u32 %v6066, 23
        %v6068 = vor.u32 4788187, %v6067
        %v6069 = vand.u32 2147483647, %v6068
        %v6071 = vcvt.s32.f32 %v6064
        %v6072 = vmul.f32 %v6071, %v6069
        %v6073 = vxor.u32 %v6072, 2147483648
        %v6074 = vsel %vm5991, %v6073, %v6072
        %v6075 = vsub.s32 4, %v6051
        %v6076 = vsel %vm5991, %v6075, %v6051
        %v6077 = vsel %vm5990, %v775, %v6074
        %v6078 = vsel %vm5990, 0, %v6076
        %v6079 = vcosq.f32.pop %v6077
        %v6080 = vsinq.f32.pop %v6077
        %vm6081 = vweird.f32 %v775
        %v6082 = vadd.s32 %v6078, 3
        %v6083 = vand.u32 %v6082, 3
        %vm6084 = vcmp.lt.s32.totalorder %v6083, 2
        %vm6085 = vcmp.eq.s32.totalorder %v6083, 0
        %v6086 = vxor.u32 %v6080, 2147483648
        %v6087 = vsel %vm6085, %v6079, %v6086
        %vm6088 = vcmp.eq.s32.totalorder %v6083, 2
        %v6089 = vxor.u32 %v6079, 2147483648
        %v6090 = vsel %vm6088, %v6089, %v6080
        %v6091 = vsel %vm6084, %v6087, %v6090
        %v6092 = vsel %vm6081, nan, %v6091
        %v6093 = vand.u32 2147483647, %v776
        %vm6094 = vcmp.le.f32.partialorder %v6093, 0.7853982
        %vm6095 = vcmp.lt.s32.totalorder %v776, 0
        %v6096 = vand.u32 %v776, 2139095040
        %v6097 = vshrl.u32 %v6096, 23
        %v6098 = vsub.s32 %v6097, 127
        %v6099 = vand.u32 2147483647, %v776
        %v6100 = vand.u32 %v6099, 8388607
        %v6101 = vor.u32 %v6100, 8388608
        %v6102 = vsub.s32 0, %v6101
        %v6103 = vadd.s32 %v6098, 1
        %vm6104 = vcmp.gt.s32.totalorder %v6103, 0
        %v6105 = vsel %vm6104, %v6103, 0
        %v6106 = vshrl.u32 %v6105, 5
        %v6107 = vand.u32 %v6105, 31
        %v6108 = vsub.s32 32, %v6107
        %v6109 = vshrl.u32 683565275, %v6108
        %v6110 = vshll.u32 683565275, %v6107
        %v6111 = vshrl.u32 2475754826, %v6108
        %v6112 = vor.u32 %v6110, %v6111
        %v6113 = vshll.u32 2475754826, %v6107
        %v6114 = vshrl.u32 2131351028, %v6108
        %v6115 = vor.u32 %v6113, %v6114
        %v6116 = vshll.u32 2131351028, %v6107
        %v6117 = vshrl.u32 2102212464, %v6108
        %v6118 = vor.u32 %v6116, %v6117
        %v6119 = vshll.u32 2102212464, %v6107
        %v6120 = vshrl.u32 920167782, %v6108
        %v6121 = vor.u32 %v6119, %v6120
        %v6122 = vshll.u32 920167782, %v6107
        %v6123 = vshrl.u32 1326507024, %v6108
        %v6124 = vor.u32 %v6122, %v6123
        %vm6125 = vcmp.lt.s32.totalorder %v6106, 1
        %vm6126 = vcmp.lt.s32.totalorder %v6106, 2
        %vm6127 = vcmp.lt.s32.totalorder %v6106, 3
        %vm6128 = vcmp.lt.s32.totalorder %v6106, 4
        %v6129 = vsel %vm6125, %v6109, %v6112
        %v6130 = vsel %vm6128, %v6118, 2102212464
        %v6131 = vsel %vm6127, %v6115, %v6130
        %v6132 = vsel %vm6126, %v6129, %v6131
        %v6133 = vsel %vm6125, %v6112, %v6115
        %v6134 = vsel %vm6128, %v6121, 920167782
        %v6135 = vsel %vm6127, %v6118, %v6134
        %v6136 = vsel %vm6126, %v6133, %v6135
        %v6137 = vsel %vm6125, %v6115, %v6118
        %v6138 = vsel %vm6128, %v6124, 1326507024
        %v6139 = vsel %vm6127, %v6121, %v6138
        %v6140 = vsel %vm6126, %v6137, %v6139
        %v6141 = vshll.u32 %v6101, 8
        %v6142 = vmul.u32.u64.compose %v6141, %v6140
        %v6143 = vextract.low.u32 %v6142
        %v6144 = vextract.high.u32 %v6142
        %v6145 = vmul.u32.u64.compose %v6141, %v6136
        %v6146 = vextract.low.u32 %v6145
        %v6147 = vextract.high.u32 %v6145
        %v6148 = vmul.u32 %v6141, %v6132
        %v6149 = vadd.s32 %v6144, %v6146
        %vm6150 = vc.u32 %v6144, %v6146
        %v6151 = vadd.s32 %v6147, 1
        %v6152 = vsel %vm6150, %v6151, %v6147
        %v6153 = vadd.s32 %v6148, %v6152
        %v6154 = vadd.s32 %v6153, 536870912
        %v6155 = vshrl.u32 %v6154, 30
        %v6156 = vshll.u32 %v6155, 30
        %v6157 = vsub.s32 %v6153, %v6156
        %vm6158 = vcmp.lt.s32.totalorder %v6157, 0
        %v6159 = vsub.s32 0, %v6157
        %v6160 = vsel %vm6158, %v6159, %v6157
        %v6161 = vclz %v6160
        %v6162 = vsub.s32 %v6161, 2
        %vm6163 = vcmp.gt.s32.totalorder 0, %v6162
        %v6164 = vsel %vm6163, 0, %v6162
        %v6165 = vsub.s32 32, %v6164
        %v6166 = vshll.u32 %v6157, %v6164
        %v6167 = vshrl.u32 %v6149, %v6165
        %v6168 = vor.u32 %v6166, %v6167
        %v6169 = vsub.s32 4294967266, %v6164
        %v6170 = vadd.s32 %v6169, 127
        %v6171 = vshll.u32 %v6170, 23
        %v6172 = vor.u32 4788187, %v6171
        %v6173 = vand.u32 2147483647, %v6172
        %v6175 = vcvt.s32.f32 %v6168
        %v6176 = vmul.f32 %v6175, %v6173
        %v6177 = vxor.u32 %v6176, 2147483648
        %v6178 = vsel %vm6095, %v6177, %v6176
        %v6179 = vsub.s32 4, %v6155
        %v6180 = vsel %vm6095, %v6179, %v6155
        %v6181 = vsel %vm6094, %v776, %v6178
        %v6182 = vsel %vm6094, 0, %v6180
        %v6183 = vcosq.f32.pop %v6181
        %v6184 = vsinq.f32.pop %v6181
        %vm6185 = vweird.f32 %v776
        %v6186 = vadd.s32 %v6182, 3
        %v6187 = vand.u32 %v6186, 3
        %vm6188 = vcmp.lt.s32.totalorder %v6187, 2
        %vm6189 = vcmp.eq.s32.totalorder %v6187, 0
        %v6190 = vxor.u32 %v6184, 2147483648
        %v6191 = vsel %vm6189, %v6183, %v6190
        %vm6192 = vcmp.eq.s32.totalorder %v6187, 2
        %v6193 = vxor.u32 %v6183, 2147483648
        %v6194 = vsel %vm6192, %v6193, %v6184
        %v6195 = vsel %vm6188, %v6191, %v6194
        %v6196 = vsel %vm6185, nan, %v6195
        %v6197 = vand.u32 2147483647, %v777
        %vm6198 = vcmp.le.f32.partialorder %v6197, 0.7853982
        %vm6199 = vcmp.lt.s32.totalorder %v777, 0
        %v6200 = vand.u32 %v777, 2139095040
        %v6201 = vshrl.u32 %v6200, 23
        %v6202 = vsub.s32 %v6201, 127
        %v6203 = vand.u32 2147483647, %v777
        %v6204 = vand.u32 %v6203, 8388607
        %v6205 = vor.u32 %v6204, 8388608
        %v6206 = vsub.s32 0, %v6205
        %v6207 = vadd.s32 %v6202, 1
        %vm6208 = vcmp.gt.s32.totalorder %v6207, 0
        %v6209 = vsel %vm6208, %v6207, 0
        %v6210 = vshrl.u32 %v6209, 5
        %v6211 = vand.u32 %v6209, 31
        %v6212 = vsub.s32 32, %v6211
        %v6213 = vshrl.u32 683565275, %v6212
        %v6214 = vshll.u32 683565275, %v6211
        %v6215 = vshrl.u32 2475754826, %v6212
        %v6216 = vor.u32 %v6214, %v6215
        %v6217 = vshll.u32 2475754826, %v6211
        %v6218 = vshrl.u32 2131351028, %v6212
        %v6219 = vor.u32 %v6217, %v6218
        %v6220 = vshll.u32 2131351028, %v6211
        %v6221 = vshrl.u32 2102212464, %v6212
        %v6222 = vor.u32 %v6220, %v6221
        %v6223 = vshll.u32 2102212464, %v6211
        %v6224 = vshrl.u32 920167782, %v6212
        %v6225 = vor.u32 %v6223, %v6224
        %v6226 = vshll.u32 920167782, %v6211
        %v6227 = vshrl.u32 1326507024, %v6212
        %v6228 = vor.u32 %v6226, %v6227
        %vm6229 = vcmp.lt.s32.totalorder %v6210, 1
        %vm6230 = vcmp.lt.s32.totalorder %v6210, 2
        %vm6231 = vcmp.lt.s32.totalorder %v6210, 3
        %vm6232 = vcmp.lt.s32.totalorder %v6210, 4
        %v6233 = vsel %vm6229, %v6213, %v6216
        %v6234 = vsel %vm6232, %v6222, 2102212464
        %v6235 = vsel %vm6231, %v6219, %v6234
        %v6236 = vsel %vm6230, %v6233, %v6235
        %v6237 = vsel %vm6229, %v6216, %v6219
        %v6238 = vsel %vm6232, %v6225, 920167782
        %v6239 = vsel %vm6231, %v6222, %v6238
        %v6240 = vsel %vm6230, %v6237, %v6239
        %v6241 = vsel %vm6229, %v6219, %v6222
        %v6242 = vsel %vm6232, %v6228, 1326507024
        %v6243 = vsel %vm6231, %v6225, %v6242
        %v6244 = vsel %vm6230, %v6241, %v6243
        %v6245 = vshll.u32 %v6205, 8
        %v6246 = vmul.u32.u64.compose %v6245, %v6244
        %v6247 = vextract.low.u32 %v6246
        %v6248 = vextract.high.u32 %v6246
        %v6249 = vmul.u32.u64.compose %v6245, %v6240
        %v6250 = vextract.low.u32 %v6249
        %v6251 = vextract.high.u32 %v6249
        %v6252 = vmul.u32 %v6245, %v6236
        %v6253 = vadd.s32 %v6248, %v6250
        %vm6254 = vc.u32 %v6248, %v6250
        %v6255 = vadd.s32 %v6251, 1
        %v6256 = vsel %vm6254, %v6255, %v6251
        %v6257 = vadd.s32 %v6252, %v6256
        %v6258 = vadd.s32 %v6257, 536870912
        %v6259 = vshrl.u32 %v6258, 30
        %v6260 = vshll.u32 %v6259, 30
        %v6261 = vsub.s32 %v6257, %v6260
        %vm6262 = vcmp.lt.s32.totalorder %v6261, 0
        %v6263 = vsub.s32 0, %v6261
        %v6264 = vsel %vm6262, %v6263, %v6261
        %v6265 = vclz %v6264
        %v6266 = vsub.s32 %v6265, 2
        %vm6267 = vcmp.gt.s32.totalorder 0, %v6266
        %v6268 = vsel %vm6267, 0, %v6266
        %v6269 = vsub.s32 32, %v6268
        %v6270 = vshll.u32 %v6261, %v6268
        %v6271 = vshrl.u32 %v6253, %v6269
        %v6272 = vor.u32 %v6270, %v6271
        %v6273 = vsub.s32 4294967266, %v6268
        %v6274 = vadd.s32 %v6273, 127
        %v6275 = vshll.u32 %v6274, 23
        %v6276 = vor.u32 4788187, %v6275
        %v6277 = vand.u32 2147483647, %v6276
        %v6279 = vcvt.s32.f32 %v6272
        %v6280 = vmul.f32 %v6279, %v6277
        %v6281 = vxor.u32 %v6280, 2147483648
        %v6282 = vsel %vm6199, %v6281, %v6280
        %v6283 = vsub.s32 4, %v6259
        %v6284 = vsel %vm6199, %v6283, %v6259
        %v6285 = vsel %vm6198, %v777, %v6282
        %v6286 = vsel %vm6198, 0, %v6284
        %v6287 = vcosq.f32.pop %v6285
        %v6288 = vsinq.f32.pop %v6285
        %vm6289 = vweird.f32 %v777
        %v6290 = vadd.s32 %v6286, 3
        %v6291 = vand.u32 %v6290, 3
        %vm6292 = vcmp.lt.s32.totalorder %v6291, 2
        %vm6293 = vcmp.eq.s32.totalorder %v6291, 0
        %v6294 = vxor.u32 %v6288, 2147483648
        %v6295 = vsel %vm6293, %v6287, %v6294
        %vm6296 = vcmp.eq.s32.totalorder %v6291, 2
        %v6297 = vxor.u32 %v6287, 2147483648
        %v6298 = vsel %vm6296, %v6297, %v6288
        %v6299 = vsel %vm6292, %v6295, %v6298
        %v6300 = vsel %vm6289, nan, %v6299
        %v6301 = vand.u32 2147483647, %v778
        %vm6302 = vcmp.le.f32.partialorder %v6301, 0.7853982
        %vm6303 = vcmp.lt.s32.totalorder %v778, 0
        %v6304 = vand.u32 %v778, 2139095040
        %v6305 = vshrl.u32 %v6304, 23
        %v6306 = vsub.s32 %v6305, 127
        %v6307 = vand.u32 2147483647, %v778
        %v6308 = vand.u32 %v6307, 8388607
        %v6309 = vor.u32 %v6308, 8388608
        %v6310 = vsub.s32 0, %v6309
        %v6311 = vadd.s32 %v6306, 1
        %vm6312 = vcmp.gt.s32.totalorder %v6311, 0
        %v6313 = vsel %vm6312, %v6311, 0
        %v6314 = vshrl.u32 %v6313, 5
        %v6315 = vand.u32 %v6313, 31
        %v6316 = vsub.s32 32, %v6315
        %v6317 = vshrl.u32 683565275, %v6316
        %v6318 = vshll.u32 683565275, %v6315
        %v6319 = vshrl.u32 2475754826, %v6316
        %v6320 = vor.u32 %v6318, %v6319
        %v6321 = vshll.u32 2475754826, %v6315
        %v6322 = vshrl.u32 2131351028, %v6316
        %v6323 = vor.u32 %v6321, %v6322
        %v6324 = vshll.u32 2131351028, %v6315
        %v6325 = vshrl.u32 2102212464, %v6316
        %v6326 = vor.u32 %v6324, %v6325
        %v6327 = vshll.u32 2102212464, %v6315
        %v6328 = vshrl.u32 920167782, %v6316
        %v6329 = vor.u32 %v6327, %v6328
        %v6330 = vshll.u32 920167782, %v6315
        %v6331 = vshrl.u32 1326507024, %v6316
        %v6332 = vor.u32 %v6330, %v6331
        %vm6333 = vcmp.lt.s32.totalorder %v6314, 1
        %vm6334 = vcmp.lt.s32.totalorder %v6314, 2
        %vm6335 = vcmp.lt.s32.totalorder %v6314, 3
        %vm6336 = vcmp.lt.s32.totalorder %v6314, 4
        %v6337 = vsel %vm6333, %v6317, %v6320
        %v6338 = vsel %vm6336, %v6326, 2102212464
        %v6339 = vsel %vm6335, %v6323, %v6338
        %v6340 = vsel %vm6334, %v6337, %v6339
        %v6341 = vsel %vm6333, %v6320, %v6323
        %v6342 = vsel %vm6336, %v6329, 920167782
        %v6343 = vsel %vm6335, %v6326, %v6342
        %v6344 = vsel %vm6334, %v6341, %v6343
        %v6345 = vsel %vm6333, %v6323, %v6326
        %v6346 = vsel %vm6336, %v6332, 1326507024
        %v6347 = vsel %vm6335, %v6329, %v6346
        %v6348 = vsel %vm6334, %v6345, %v6347
        %v6349 = vshll.u32 %v6309, 8
        %v6350 = vmul.u32.u64.compose %v6349, %v6348
        %v6351 = vextract.low.u32 %v6350
        %v6352 = vextract.high.u32 %v6350
        %v6353 = vmul.u32.u64.compose %v6349, %v6344
        %v6354 = vextract.low.u32 %v6353
        %v6355 = vextract.high.u32 %v6353
        %v6356 = vmul.u32 %v6349, %v6340
        %v6357 = vadd.s32 %v6352, %v6354
        %vm6358 = vc.u32 %v6352, %v6354
        %v6359 = vadd.s32 %v6355, 1
        %v6360 = vsel %vm6358, %v6359, %v6355
        %v6361 = vadd.s32 %v6356, %v6360
        %v6362 = vadd.s32 %v6361, 536870912
        %v6363 = vshrl.u32 %v6362, 30
        %v6364 = vshll.u32 %v6363, 30
        %v6365 = vsub.s32 %v6361, %v6364
        %vm6366 = vcmp.lt.s32.totalorder %v6365, 0
        %v6367 = vsub.s32 0, %v6365
        %v6368 = vsel %vm6366, %v6367, %v6365
        %v6369 = vclz %v6368
        %v6370 = vsub.s32 %v6369, 2
        %vm6371 = vcmp.gt.s32.totalorder 0, %v6370
        %v6372 = vsel %vm6371, 0, %v6370
        %v6373 = vsub.s32 32, %v6372
        %v6374 = vshll.u32 %v6365, %v6372
        %v6375 = vshrl.u32 %v6357, %v6373
        %v6376 = vor.u32 %v6374, %v6375
        %v6377 = vsub.s32 4294967266, %v6372
        %v6378 = vadd.s32 %v6377, 127
        %v6379 = vshll.u32 %v6378, 23
        %v6380 = vor.u32 4788187, %v6379
        %v6381 = vand.u32 2147483647, %v6380
        %v6383 = vcvt.s32.f32 %v6376
        %v6384 = vmul.f32 %v6383, %v6381
        %v6385 = vxor.u32 %v6384, 2147483648
        %v6386 = vsel %vm6303, %v6385, %v6384
        %v6387 = vsub.s32 4, %v6363
        %v6388 = vsel %vm6303, %v6387, %v6363
        %v6389 = vsel %vm6302, %v778, %v6386
        %v6390 = vsel %vm6302, 0, %v6388
        %v6391 = vcosq.f32.pop %v6389
        %v6392 = vsinq.f32.pop %v6389
        %vm6393 = vweird.f32 %v778
        %v6394 = vadd.s32 %v6390, 3
        %v6395 = vand.u32 %v6394, 3
        %vm6396 = vcmp.lt.s32.totalorder %v6395, 2
        %vm6397 = vcmp.eq.s32.totalorder %v6395, 0
        %v6398 = vxor.u32 %v6392, 2147483648
        %v6399 = vsel %vm6397, %v6391, %v6398
        %vm6400 = vcmp.eq.s32.totalorder %v6395, 2
        %v6401 = vxor.u32 %v6391, 2147483648
        %v6402 = vsel %vm6400, %v6401, %v6392
        %v6403 = vsel %vm6396, %v6399, %v6402
        %v6404 = vsel %vm6393, nan, %v6403
        %v6405 = vand.u32 2147483647, %v779
        %vm6406 = vcmp.le.f32.partialorder %v6405, 0.7853982
        %vm6407 = vcmp.lt.s32.totalorder %v779, 0
        %v6408 = vand.u32 %v779, 2139095040
        %v6409 = vshrl.u32 %v6408, 23
        %v6410 = vsub.s32 %v6409, 127
        %v6411 = vand.u32 2147483647, %v779
        %v6412 = vand.u32 %v6411, 8388607
        %v6413 = vor.u32 %v6412, 8388608
        %v6414 = vsub.s32 0, %v6413
        %v6415 = vadd.s32 %v6410, 1
        %vm6416 = vcmp.gt.s32.totalorder %v6415, 0
        %v6417 = vsel %vm6416, %v6415, 0
        %v6418 = vshrl.u32 %v6417, 5
        %v6419 = vand.u32 %v6417, 31
        %v6420 = vsub.s32 32, %v6419
        %v6421 = vshrl.u32 683565275, %v6420
        %v6422 = vshll.u32 683565275, %v6419
        %v6423 = vshrl.u32 2475754826, %v6420
        %v6424 = vor.u32 %v6422, %v6423
        %v6425 = vshll.u32 2475754826, %v6419
        %v6426 = vshrl.u32 2131351028, %v6420
        %v6427 = vor.u32 %v6425, %v6426
        %v6428 = vshll.u32 2131351028, %v6419
        %v6429 = vshrl.u32 2102212464, %v6420
        %v6430 = vor.u32 %v6428, %v6429
        %v6431 = vshll.u32 2102212464, %v6419
        %v6432 = vshrl.u32 920167782, %v6420
        %v6433 = vor.u32 %v6431, %v6432
        %v6434 = vshll.u32 920167782, %v6419
        %v6435 = vshrl.u32 1326507024, %v6420
        %v6436 = vor.u32 %v6434, %v6435
        %vm6437 = vcmp.lt.s32.totalorder %v6418, 1
        %vm6438 = vcmp.lt.s32.totalorder %v6418, 2
        %vm6439 = vcmp.lt.s32.totalorder %v6418, 3
        %vm6440 = vcmp.lt.s32.totalorder %v6418, 4
        %v6441 = vsel %vm6437, %v6421, %v6424
        %v6442 = vsel %vm6440, %v6430, 2102212464
        %v6443 = vsel %vm6439, %v6427, %v6442
        %v6444 = vsel %vm6438, %v6441, %v6443
        %v6445 = vsel %vm6437, %v6424, %v6427
        %v6446 = vsel %vm6440, %v6433, 920167782
        %v6447 = vsel %vm6439, %v6430, %v6446
        %v6448 = vsel %vm6438, %v6445, %v6447
        %v6449 = vsel %vm6437, %v6427, %v6430
        %v6450 = vsel %vm6440, %v6436, 1326507024
        %v6451 = vsel %vm6439, %v6433, %v6450
        %v6452 = vsel %vm6438, %v6449, %v6451
        %v6453 = vshll.u32 %v6413, 8
        %v6454 = vmul.u32.u64.compose %v6453, %v6452
        %v6455 = vextract.low.u32 %v6454
        %v6456 = vextract.high.u32 %v6454
        %v6457 = vmul.u32.u64.compose %v6453, %v6448
        %v6458 = vextract.low.u32 %v6457
        %v6459 = vextract.high.u32 %v6457
        %v6460 = vmul.u32 %v6453, %v6444
        %v6461 = vadd.s32 %v6456, %v6458
        %vm6462 = vc.u32 %v6456, %v6458
        %v6463 = vadd.s32 %v6459, 1
        %v6464 = vsel %vm6462, %v6463, %v6459
        %v6465 = vadd.s32 %v6460, %v6464
        %v6466 = vadd.s32 %v6465, 536870912
        %v6467 = vshrl.u32 %v6466, 30
        %v6468 = vshll.u32 %v6467, 30
        %v6469 = vsub.s32 %v6465, %v6468
        %vm6470 = vcmp.lt.s32.totalorder %v6469, 0
        %v6471 = vsub.s32 0, %v6469
        %v6472 = vsel %vm6470, %v6471, %v6469
        %v6473 = vclz %v6472
        %v6474 = vsub.s32 %v6473, 2
        %vm6475 = vcmp.gt.s32.totalorder 0, %v6474
        %v6476 = vsel %vm6475, 0, %v6474
        %v6477 = vsub.s32 32, %v6476
        %v6478 = vshll.u32 %v6469, %v6476
        %v6479 = vshrl.u32 %v6461, %v6477
        %v6480 = vor.u32 %v6478, %v6479
        %v6481 = vsub.s32 4294967266, %v6476
        %v6482 = vadd.s32 %v6481, 127
        %v6483 = vshll.u32 %v6482, 23
        %v6484 = vor.u32 4788187, %v6483
        %v6485 = vand.u32 2147483647, %v6484
        %v6487 = vcvt.s32.f32 %v6480
        %v6488 = vmul.f32 %v6487, %v6485
        %v6489 = vxor.u32 %v6488, 2147483648
        %v6490 = vsel %vm6407, %v6489, %v6488
        %v6491 = vsub.s32 4, %v6467
        %v6492 = vsel %vm6407, %v6491, %v6467
        %v6493 = vsel %vm6406, %v779, %v6490
        %v6494 = vsel %vm6406, 0, %v6492
        %v6495 = vcosq.f32.pop %v6493
        %v6496 = vsinq.f32.pop %v6493
        %vm6497 = vweird.f32 %v779
        %v6498 = vadd.s32 %v6494, 3
        %v6499 = vand.u32 %v6498, 3
        %vm6500 = vcmp.lt.s32.totalorder %v6499, 2
        %vm6501 = vcmp.eq.s32.totalorder %v6499, 0
        %v6502 = vxor.u32 %v6496, 2147483648
        %v6503 = vsel %vm6501, %v6495, %v6502
        %vm6504 = vcmp.eq.s32.totalorder %v6499, 2
        %v6505 = vxor.u32 %v6495, 2147483648
        %v6506 = vsel %vm6504, %v6505, %v6496
        %v6507 = vsel %vm6500, %v6503, %v6506
        %v6508 = vsel %vm6497, nan, %v6507
        %v6509 = vand.u32 2147483647, %v780
        %vm6510 = vcmp.le.f32.partialorder %v6509, 0.7853982
        %vm6511 = vcmp.lt.s32.totalorder %v780, 0
        %v6512 = vand.u32 %v780, 2139095040
        %v6513 = vshrl.u32 %v6512, 23
        %v6514 = vsub.s32 %v6513, 127
        %v6515 = vand.u32 2147483647, %v780
        %v6516 = vand.u32 %v6515, 8388607
        %v6517 = vor.u32 %v6516, 8388608
        %v6518 = vsub.s32 0, %v6517
        %v6519 = vadd.s32 %v6514, 1
        %vm6520 = vcmp.gt.s32.totalorder %v6519, 0
        %v6521 = vsel %vm6520, %v6519, 0
        %v6522 = vshrl.u32 %v6521, 5
        %v6523 = vand.u32 %v6521, 31
        %v6524 = vsub.s32 32, %v6523
        %v6525 = vshrl.u32 683565275, %v6524
        %v6526 = vshll.u32 683565275, %v6523
        %v6527 = vshrl.u32 2475754826, %v6524
        %v6528 = vor.u32 %v6526, %v6527
        %v6529 = vshll.u32 2475754826, %v6523
        %v6530 = vshrl.u32 2131351028, %v6524
        %v6531 = vor.u32 %v6529, %v6530
        %v6532 = vshll.u32 2131351028, %v6523
        %v6533 = vshrl.u32 2102212464, %v6524
        %v6534 = vor.u32 %v6532, %v6533
        %v6535 = vshll.u32 2102212464, %v6523
        %v6536 = vshrl.u32 920167782, %v6524
        %v6537 = vor.u32 %v6535, %v6536
        %v6538 = vshll.u32 920167782, %v6523
        %v6539 = vshrl.u32 1326507024, %v6524
        %v6540 = vor.u32 %v6538, %v6539
        %vm6541 = vcmp.lt.s32.totalorder %v6522, 1
        %vm6542 = vcmp.lt.s32.totalorder %v6522, 2
        %vm6543 = vcmp.lt.s32.totalorder %v6522, 3
        %vm6544 = vcmp.lt.s32.totalorder %v6522, 4
        %v6545 = vsel %vm6541, %v6525, %v6528
        %v6546 = vsel %vm6544, %v6534, 2102212464
        %v6547 = vsel %vm6543, %v6531, %v6546
        %v6548 = vsel %vm6542, %v6545, %v6547
        %v6549 = vsel %vm6541, %v6528, %v6531
        %v6550 = vsel %vm6544, %v6537, 920167782
        %v6551 = vsel %vm6543, %v6534, %v6550
        %v6552 = vsel %vm6542, %v6549, %v6551
        %v6553 = vsel %vm6541, %v6531, %v6534
        %v6554 = vsel %vm6544, %v6540, 1326507024
        %v6555 = vsel %vm6543, %v6537, %v6554
        %v6556 = vsel %vm6542, %v6553, %v6555
        %v6557 = vshll.u32 %v6517, 8
        %v6558 = vmul.u32.u64.compose %v6557, %v6556
        %v6559 = vextract.low.u32 %v6558
        %v6560 = vextract.high.u32 %v6558
        %v6561 = vmul.u32.u64.compose %v6557, %v6552
        %v6562 = vextract.low.u32 %v6561
        %v6563 = vextract.high.u32 %v6561
        %v6564 = vmul.u32 %v6557, %v6548
        %v6565 = vadd.s32 %v6560, %v6562
        %vm6566 = vc.u32 %v6560, %v6562
        %v6567 = vadd.s32 %v6563, 1
        %v6568 = vsel %vm6566, %v6567, %v6563
        %v6569 = vadd.s32 %v6564, %v6568
        %v6570 = vadd.s32 %v6569, 536870912
        %v6571 = vshrl.u32 %v6570, 30
        %v6572 = vshll.u32 %v6571, 30
        %v6573 = vsub.s32 %v6569, %v6572
        %vm6574 = vcmp.lt.s32.totalorder %v6573, 0
        %v6575 = vsub.s32 0, %v6573
        %v6576 = vsel %vm6574, %v6575, %v6573
        %v6577 = vclz %v6576
        %v6578 = vsub.s32 %v6577, 2
        %vm6579 = vcmp.gt.s32.totalorder 0, %v6578
        %v6580 = vsel %vm6579, 0, %v6578
        %v6581 = vsub.s32 32, %v6580
        %v6582 = vshll.u32 %v6573, %v6580
        %v6583 = vshrl.u32 %v6565, %v6581
        %v6584 = vor.u32 %v6582, %v6583
        %v6585 = vsub.s32 4294967266, %v6580
        %v6586 = vadd.s32 %v6585, 127
        %v6587 = vshll.u32 %v6586, 23
        %v6588 = vor.u32 4788187, %v6587
        %v6589 = vand.u32 2147483647, %v6588
        %v6591 = vcvt.s32.f32 %v6584
        %v6592 = vmul.f32 %v6591, %v6589
        %v6593 = vxor.u32 %v6592, 2147483648
        %v6594 = vsel %vm6511, %v6593, %v6592
        %v6595 = vsub.s32 4, %v6571
        %v6596 = vsel %vm6511, %v6595, %v6571
        %v6597 = vsel %vm6510, %v780, %v6594
        %v6598 = vsel %vm6510, 0, %v6596
        %v6599 = vcosq.f32.pop %v6597
        %v6600 = vsinq.f32.pop %v6597
        %vm6601 = vweird.f32 %v780
        %v6602 = vadd.s32 %v6598, 3
        %v6603 = vand.u32 %v6602, 3
        %vm6604 = vcmp.lt.s32.totalorder %v6603, 2
        %vm6605 = vcmp.eq.s32.totalorder %v6603, 0
        %v6606 = vxor.u32 %v6600, 2147483648
        %v6607 = vsel %vm6605, %v6599, %v6606
        %vm6608 = vcmp.eq.s32.totalorder %v6603, 2
        %v6609 = vxor.u32 %v6599, 2147483648
        %v6610 = vsel %vm6608, %v6609, %v6600
        %v6611 = vsel %vm6604, %v6607, %v6610
        %v6612 = vsel %vm6601, nan, %v6611
        %v6613 = vand.u32 2147483647, %v781
        %vm6614 = vcmp.le.f32.partialorder %v6613, 0.7853982
        %vm6615 = vcmp.lt.s32.totalorder %v781, 0
        %v6616 = vand.u32 %v781, 2139095040
        %v6617 = vshrl.u32 %v6616, 23
        %v6618 = vsub.s32 %v6617, 127
        %v6619 = vand.u32 2147483647, %v781
        %v6620 = vand.u32 %v6619, 8388607
        %v6621 = vor.u32 %v6620, 8388608
        %v6622 = vsub.s32 0, %v6621
        %v6623 = vadd.s32 %v6618, 1
        %vm6624 = vcmp.gt.s32.totalorder %v6623, 0
        %v6625 = vsel %vm6624, %v6623, 0
        %v6626 = vshrl.u32 %v6625, 5
        %v6627 = vand.u32 %v6625, 31
        %v6628 = vsub.s32 32, %v6627
        %v6629 = vshrl.u32 683565275, %v6628
        %v6630 = vshll.u32 683565275, %v6627
        %v6631 = vshrl.u32 2475754826, %v6628
        %v6632 = vor.u32 %v6630, %v6631
        %v6633 = vshll.u32 2475754826, %v6627
        %v6634 = vshrl.u32 2131351028, %v6628
        %v6635 = vor.u32 %v6633, %v6634
        %v6636 = vshll.u32 2131351028, %v6627
        %v6637 = vshrl.u32 2102212464, %v6628
        %v6638 = vor.u32 %v6636, %v6637
        %v6639 = vshll.u32 2102212464, %v6627
        %v6640 = vshrl.u32 920167782, %v6628
        %v6641 = vor.u32 %v6639, %v6640
        %v6642 = vshll.u32 920167782, %v6627
        %v6643 = vshrl.u32 1326507024, %v6628
        %v6644 = vor.u32 %v6642, %v6643
        %vm6645 = vcmp.lt.s32.totalorder %v6626, 1
        %vm6646 = vcmp.lt.s32.totalorder %v6626, 2
        %vm6647 = vcmp.lt.s32.totalorder %v6626, 3
        %vm6648 = vcmp.lt.s32.totalorder %v6626, 4
        %v6649 = vsel %vm6645, %v6629, %v6632
        %v6650 = vsel %vm6648, %v6638, 2102212464
        %v6651 = vsel %vm6647, %v6635, %v6650
        %v6652 = vsel %vm6646, %v6649, %v6651
        %v6653 = vsel %vm6645, %v6632, %v6635
        %v6654 = vsel %vm6648, %v6641, 920167782
        %v6655 = vsel %vm6647, %v6638, %v6654
        %v6656 = vsel %vm6646, %v6653, %v6655
        %v6657 = vsel %vm6645, %v6635, %v6638
        %v6658 = vsel %vm6648, %v6644, 1326507024
        %v6659 = vsel %vm6647, %v6641, %v6658
        %v6660 = vsel %vm6646, %v6657, %v6659
        %v6661 = vshll.u32 %v6621, 8
        %v6662 = vmul.u32.u64.compose %v6661, %v6660
        %v6663 = vextract.low.u32 %v6662
        %v6664 = vextract.high.u32 %v6662
        %v6665 = vmul.u32.u64.compose %v6661, %v6656
        %v6666 = vextract.low.u32 %v6665
        %v6667 = vextract.high.u32 %v6665
        %v6668 = vmul.u32 %v6661, %v6652
        %v6669 = vadd.s32 %v6664, %v6666
        %vm6670 = vc.u32 %v6664, %v6666
        %v6671 = vadd.s32 %v6667, 1
        %v6672 = vsel %vm6670, %v6671, %v6667
        %v6673 = vadd.s32 %v6668, %v6672
        %v6674 = vadd.s32 %v6673, 536870912
        %v6675 = vshrl.u32 %v6674, 30
        %v6676 = vshll.u32 %v6675, 30
        %v6677 = vsub.s32 %v6673, %v6676
        %vm6678 = vcmp.lt.s32.totalorder %v6677, 0
        %v6679 = vsub.s32 0, %v6677
        %v6680 = vsel %vm6678, %v6679, %v6677
        %v6681 = vclz %v6680
        %v6682 = vsub.s32 %v6681, 2
        %vm6683 = vcmp.gt.s32.totalorder 0, %v6682
        %v6684 = vsel %vm6683, 0, %v6682
        %v6685 = vsub.s32 32, %v6684
        %v6686 = vshll.u32 %v6677, %v6684
        %v6687 = vshrl.u32 %v6669, %v6685
        %v6688 = vor.u32 %v6686, %v6687
        %v6689 = vsub.s32 4294967266, %v6684
        %v6690 = vadd.s32 %v6689, 127
        %v6691 = vshll.u32 %v6690, 23
        %v6692 = vor.u32 4788187, %v6691
        %v6693 = vand.u32 2147483647, %v6692
        %v6695 = vcvt.s32.f32 %v6688
        %v6696 = vmul.f32 %v6695, %v6693
        %v6697 = vxor.u32 %v6696, 2147483648
        %v6698 = vsel %vm6615, %v6697, %v6696
        %v6699 = vsub.s32 4, %v6675
        %v6700 = vsel %vm6615, %v6699, %v6675
        %v6701 = vsel %vm6614, %v781, %v6698
        %v6702 = vsel %vm6614, 0, %v6700
        %v6703 = vcosq.f32.pop %v6701
        %v6704 = vsinq.f32.pop %v6701
        %vm6705 = vweird.f32 %v781
        %v6706 = vadd.s32 %v6702, 3
        %v6707 = vand.u32 %v6706, 3
        %vm6708 = vcmp.lt.s32.totalorder %v6707, 2
        %vm6709 = vcmp.eq.s32.totalorder %v6707, 0
        %v6710 = vxor.u32 %v6704, 2147483648
        %v6711 = vsel %vm6709, %v6703, %v6710
        %vm6712 = vcmp.eq.s32.totalorder %v6707, 2
        %v6713 = vxor.u32 %v6703, 2147483648
        %v6714 = vsel %vm6712, %v6713, %v6704
        %v6715 = vsel %vm6708, %v6711, %v6714
        %v6716 = vsel %vm6705, nan, %v6715
        %v6717 = vand.u32 2147483647, %v782
        %vm6718 = vcmp.le.f32.partialorder %v6717, 0.7853982
        %vm6719 = vcmp.lt.s32.totalorder %v782, 0
        %v6720 = vand.u32 %v782, 2139095040
        %v6721 = vshrl.u32 %v6720, 23
        %v6722 = vsub.s32 %v6721, 127
        %v6723 = vand.u32 2147483647, %v782
        %v6724 = vand.u32 %v6723, 8388607
        %v6725 = vor.u32 %v6724, 8388608
        %v6726 = vsub.s32 0, %v6725
        %v6727 = vadd.s32 %v6722, 1
        %vm6728 = vcmp.gt.s32.totalorder %v6727, 0
        %v6729 = vsel %vm6728, %v6727, 0
        %v6730 = vshrl.u32 %v6729, 5
        %v6731 = vand.u32 %v6729, 31
        %v6732 = vsub.s32 32, %v6731
        %v6733 = vshrl.u32 683565275, %v6732
        %v6734 = vshll.u32 683565275, %v6731
        %v6735 = vshrl.u32 2475754826, %v6732
        %v6736 = vor.u32 %v6734, %v6735
        %v6737 = vshll.u32 2475754826, %v6731
        %v6738 = vshrl.u32 2131351028, %v6732
        %v6739 = vor.u32 %v6737, %v6738
        %v6740 = vshll.u32 2131351028, %v6731
        %v6741 = vshrl.u32 2102212464, %v6732
        %v6742 = vor.u32 %v6740, %v6741
        %v6743 = vshll.u32 2102212464, %v6731
        %v6744 = vshrl.u32 920167782, %v6732
        %v6745 = vor.u32 %v6743, %v6744
        %v6746 = vshll.u32 920167782, %v6731
        %v6747 = vshrl.u32 1326507024, %v6732
        %v6748 = vor.u32 %v6746, %v6747
        %vm6749 = vcmp.lt.s32.totalorder %v6730, 1
        %vm6750 = vcmp.lt.s32.totalorder %v6730, 2
        %vm6751 = vcmp.lt.s32.totalorder %v6730, 3
        %vm6752 = vcmp.lt.s32.totalorder %v6730, 4
        %v6753 = vsel %vm6749, %v6733, %v6736
        %v6754 = vsel %vm6752, %v6742, 2102212464
        %v6755 = vsel %vm6751, %v6739, %v6754
        %v6756 = vsel %vm6750, %v6753, %v6755
        %v6757 = vsel %vm6749, %v6736, %v6739
        %v6758 = vsel %vm6752, %v6745, 920167782
        %v6759 = vsel %vm6751, %v6742, %v6758
        %v6760 = vsel %vm6750, %v6757, %v6759
        %v6761 = vsel %vm6749, %v6739, %v6742
        %v6762 = vsel %vm6752, %v6748, 1326507024
        %v6763 = vsel %vm6751, %v6745, %v6762
        %v6764 = vsel %vm6750, %v6761, %v6763
        %v6765 = vshll.u32 %v6725, 8
        %v6766 = vmul.u32.u64.compose %v6765, %v6764
        %v6767 = vextract.low.u32 %v6766
        %v6768 = vextract.high.u32 %v6766
        %v6769 = vmul.u32.u64.compose %v6765, %v6760
        %v6770 = vextract.low.u32 %v6769
        %v6771 = vextract.high.u32 %v6769
        %v6772 = vmul.u32 %v6765, %v6756
        %v6773 = vadd.s32 %v6768, %v6770
        %vm6774 = vc.u32 %v6768, %v6770
        %v6775 = vadd.s32 %v6771, 1
        %v6776 = vsel %vm6774, %v6775, %v6771
        %v6777 = vadd.s32 %v6772, %v6776
        %v6778 = vadd.s32 %v6777, 536870912
        %v6779 = vshrl.u32 %v6778, 30
        %v6780 = vshll.u32 %v6779, 30
        %v6781 = vsub.s32 %v6777, %v6780
        %vm6782 = vcmp.lt.s32.totalorder %v6781, 0
        %v6783 = vsub.s32 0, %v6781
        %v6784 = vsel %vm6782, %v6783, %v6781
        %v6785 = vclz %v6784
        %v6786 = vsub.s32 %v6785, 2
        %vm6787 = vcmp.gt.s32.totalorder 0, %v6786
        %v6788 = vsel %vm6787, 0, %v6786
        %v6789 = vsub.s32 32, %v6788
        %v6790 = vshll.u32 %v6781, %v6788
        %v6791 = vshrl.u32 %v6773, %v6789
        %v6792 = vor.u32 %v6790, %v6791
        %v6793 = vsub.s32 4294967266, %v6788
        %v6794 = vadd.s32 %v6793, 127
        %v6795 = vshll.u32 %v6794, 23
        %v6796 = vor.u32 4788187, %v6795
        %v6797 = vand.u32 2147483647, %v6796
        %v6799 = vcvt.s32.f32 %v6792
        %v6800 = vmul.f32 %v6799, %v6797
        %v6801 = vxor.u32 %v6800, 2147483648
        %v6802 = vsel %vm6719, %v6801, %v6800
        %v6803 = vsub.s32 4, %v6779
        %v6804 = vsel %vm6719, %v6803, %v6779
        %v6805 = vsel %vm6718, %v782, %v6802
        %v6806 = vsel %vm6718, 0, %v6804
        %v6807 = vcosq.f32.pop %v6805
        %v6808 = vsinq.f32.pop %v6805
        %vm6809 = vweird.f32 %v782
        %v6810 = vadd.s32 %v6806, 3
        %v6811 = vand.u32 %v6810, 3
        %vm6812 = vcmp.lt.s32.totalorder %v6811, 2
        %vm6813 = vcmp.eq.s32.totalorder %v6811, 0
        %v6814 = vxor.u32 %v6808, 2147483648
        %v6815 = vsel %vm6813, %v6807, %v6814
        %vm6816 = vcmp.eq.s32.totalorder %v6811, 2
        %v6817 = vxor.u32 %v6807, 2147483648
        %v6818 = vsel %vm6816, %v6817, %v6808
        %v6819 = vsel %vm6812, %v6815, %v6818
        %v6820 = vsel %vm6809, nan, %v6819
        %v6821 = vand.u32 2147483647, %v783
        %vm6822 = vcmp.le.f32.partialorder %v6821, 0.7853982
        %vm6823 = vcmp.lt.s32.totalorder %v783, 0
        %v6824 = vand.u32 %v783, 2139095040
        %v6825 = vshrl.u32 %v6824, 23
        %v6826 = vsub.s32 %v6825, 127
        %v6827 = vand.u32 2147483647, %v783
        %v6828 = vand.u32 %v6827, 8388607
        %v6829 = vor.u32 %v6828, 8388608
        %v6830 = vsub.s32 0, %v6829
        %v6831 = vadd.s32 %v6826, 1
        %vm6832 = vcmp.gt.s32.totalorder %v6831, 0
        %v6833 = vsel %vm6832, %v6831, 0
        %v6834 = vshrl.u32 %v6833, 5
        %v6835 = vand.u32 %v6833, 31
        %v6836 = vsub.s32 32, %v6835
        %v6837 = vshrl.u32 683565275, %v6836
        %v6838 = vshll.u32 683565275, %v6835
        %v6839 = vshrl.u32 2475754826, %v6836
        %v6840 = vor.u32 %v6838, %v6839
        %v6841 = vshll.u32 2475754826, %v6835
        %v6842 = vshrl.u32 2131351028, %v6836
        %v6843 = vor.u32 %v6841, %v6842
        %v6844 = vshll.u32 2131351028, %v6835
        %v6845 = vshrl.u32 2102212464, %v6836
        %v6846 = vor.u32 %v6844, %v6845
        %v6847 = vshll.u32 2102212464, %v6835
        %v6848 = vshrl.u32 920167782, %v6836
        %v6849 = vor.u32 %v6847, %v6848
        %v6850 = vshll.u32 920167782, %v6835
        %v6851 = vshrl.u32 1326507024, %v6836
        %v6852 = vor.u32 %v6850, %v6851
        %vm6853 = vcmp.lt.s32.totalorder %v6834, 1
        %vm6854 = vcmp.lt.s32.totalorder %v6834, 2
        %vm6855 = vcmp.lt.s32.totalorder %v6834, 3
        %vm6856 = vcmp.lt.s32.totalorder %v6834, 4
        %v6857 = vsel %vm6853, %v6837, %v6840
        %v6858 = vsel %vm6856, %v6846, 2102212464
        %v6859 = vsel %vm6855, %v6843, %v6858
        %v6860 = vsel %vm6854, %v6857, %v6859
        %v6861 = vsel %vm6853, %v6840, %v6843
        %v6862 = vsel %vm6856, %v6849, 920167782
        %v6863 = vsel %vm6855, %v6846, %v6862
        %v6864 = vsel %vm6854, %v6861, %v6863
        %v6865 = vsel %vm6853, %v6843, %v6846
        %v6866 = vsel %vm6856, %v6852, 1326507024
        %v6867 = vsel %vm6855, %v6849, %v6866
        %v6868 = vsel %vm6854, %v6865, %v6867
        %v6869 = vshll.u32 %v6829, 8
        %v6870 = vmul.u32.u64.compose %v6869, %v6868
        %v6871 = vextract.low.u32 %v6870
        %v6872 = vextract.high.u32 %v6870
        %v6873 = vmul.u32.u64.compose %v6869, %v6864
        %v6874 = vextract.low.u32 %v6873
        %v6875 = vextract.high.u32 %v6873
        %v6876 = vmul.u32 %v6869, %v6860
        %v6877 = vadd.s32 %v6872, %v6874
        %vm6878 = vc.u32 %v6872, %v6874
        %v6879 = vadd.s32 %v6875, 1
        %v6880 = vsel %vm6878, %v6879, %v6875
        %v6881 = vadd.s32 %v6876, %v6880
        %v6882 = vadd.s32 %v6881, 536870912
        %v6883 = vshrl.u32 %v6882, 30
        %v6884 = vshll.u32 %v6883, 30
        %v6885 = vsub.s32 %v6881, %v6884
        %vm6886 = vcmp.lt.s32.totalorder %v6885, 0
        %v6887 = vsub.s32 0, %v6885
        %v6888 = vsel %vm6886, %v6887, %v6885
        %v6889 = vclz %v6888
        %v6890 = vsub.s32 %v6889, 2
        %vm6891 = vcmp.gt.s32.totalorder 0, %v6890
        %v6892 = vsel %vm6891, 0, %v6890
        %v6893 = vsub.s32 32, %v6892
        %v6894 = vshll.u32 %v6885, %v6892
        %v6895 = vshrl.u32 %v6877, %v6893
        %v6896 = vor.u32 %v6894, %v6895
        %v6897 = vsub.s32 4294967266, %v6892
        %v6898 = vadd.s32 %v6897, 127
        %v6899 = vshll.u32 %v6898, 23
        %v6900 = vor.u32 4788187, %v6899
        %v6901 = vand.u32 2147483647, %v6900
        %v6903 = vcvt.s32.f32 %v6896
        %v6904 = vmul.f32 %v6903, %v6901
        %v6905 = vxor.u32 %v6904, 2147483648
        %v6906 = vsel %vm6823, %v6905, %v6904
        %v6907 = vsub.s32 4, %v6883
        %v6908 = vsel %vm6823, %v6907, %v6883
        %v6909 = vsel %vm6822, %v783, %v6906
        %v6910 = vsel %vm6822, 0, %v6908
        %v6911 = vcosq.f32.pop %v6909
        %v6912 = vsinq.f32.pop %v6909
        %vm6913 = vweird.f32 %v783
        %v6914 = vadd.s32 %v6910, 3
        %v6915 = vand.u32 %v6914, 3
        %vm6916 = vcmp.lt.s32.totalorder %v6915, 2
        %vm6917 = vcmp.eq.s32.totalorder %v6915, 0
        %v6918 = vxor.u32 %v6912, 2147483648
        %v6919 = vsel %vm6917, %v6911, %v6918
        %vm6920 = vcmp.eq.s32.totalorder %v6915, 2
        %v6921 = vxor.u32 %v6911, 2147483648
        %v6922 = vsel %vm6920, %v6921, %v6912
        %v6923 = vsel %vm6916, %v6919, %v6922
        %v6924 = vsel %vm6913, nan, %v6923
        %v6925 = vand.u32 2147483647, %v784
        %vm6926 = vcmp.le.f32.partialorder %v6925, 0.7853982
        %vm6927 = vcmp.lt.s32.totalorder %v784, 0
        %v6928 = vand.u32 %v784, 2139095040
        %v6929 = vshrl.u32 %v6928, 23
        %v6930 = vsub.s32 %v6929, 127
        %v6931 = vand.u32 2147483647, %v784
        %v6932 = vand.u32 %v6931, 8388607
        %v6933 = vor.u32 %v6932, 8388608
        %v6934 = vsub.s32 0, %v6933
        %v6935 = vadd.s32 %v6930, 1
        %vm6936 = vcmp.gt.s32.totalorder %v6935, 0
        %v6937 = vsel %vm6936, %v6935, 0
        %v6938 = vshrl.u32 %v6937, 5
        %v6939 = vand.u32 %v6937, 31
        %v6940 = vsub.s32 32, %v6939
        %v6941 = vshrl.u32 683565275, %v6940
        %v6942 = vshll.u32 683565275, %v6939
        %v6943 = vshrl.u32 2475754826, %v6940
        %v6944 = vor.u32 %v6942, %v6943
        %v6945 = vshll.u32 2475754826, %v6939
        %v6946 = vshrl.u32 2131351028, %v6940
        %v6947 = vor.u32 %v6945, %v6946
        %v6948 = vshll.u32 2131351028, %v6939
        %v6949 = vshrl.u32 2102212464, %v6940
        %v6950 = vor.u32 %v6948, %v6949
        %v6951 = vshll.u32 2102212464, %v6939
        %v6952 = vshrl.u32 920167782, %v6940
        %v6953 = vor.u32 %v6951, %v6952
        %v6954 = vshll.u32 920167782, %v6939
        %v6955 = vshrl.u32 1326507024, %v6940
        %v6956 = vor.u32 %v6954, %v6955
        %vm6957 = vcmp.lt.s32.totalorder %v6938, 1
        %vm6958 = vcmp.lt.s32.totalorder %v6938, 2
        %vm6959 = vcmp.lt.s32.totalorder %v6938, 3
        %vm6960 = vcmp.lt.s32.totalorder %v6938, 4
        %v6961 = vsel %vm6957, %v6941, %v6944
        %v6962 = vsel %vm6960, %v6950, 2102212464
        %v6963 = vsel %vm6959, %v6947, %v6962
        %v6964 = vsel %vm6958, %v6961, %v6963
        %v6965 = vsel %vm6957, %v6944, %v6947
        %v6966 = vsel %vm6960, %v6953, 920167782
        %v6967 = vsel %vm6959, %v6950, %v6966
        %v6968 = vsel %vm6958, %v6965, %v6967
        %v6969 = vsel %vm6957, %v6947, %v6950
        %v6970 = vsel %vm6960, %v6956, 1326507024
        %v6971 = vsel %vm6959, %v6953, %v6970
        %v6972 = vsel %vm6958, %v6969, %v6971
        %v6973 = vshll.u32 %v6933, 8
        %v6974 = vmul.u32.u64.compose %v6973, %v6972
        %v6975 = vextract.low.u32 %v6974
        %v6976 = vextract.high.u32 %v6974
        %v6977 = vmul.u32.u64.compose %v6973, %v6968
        %v6978 = vextract.low.u32 %v6977
        %v6979 = vextract.high.u32 %v6977
        %v6980 = vmul.u32 %v6973, %v6964
        %v6981 = vadd.s32 %v6976, %v6978
        %vm6982 = vc.u32 %v6976, %v6978
        %v6983 = vadd.s32 %v6979, 1
        %v6984 = vsel %vm6982, %v6983, %v6979
        %v6985 = vadd.s32 %v6980, %v6984
        %v6986 = vadd.s32 %v6985, 536870912
        %v6987 = vshrl.u32 %v6986, 30
        %v6988 = vshll.u32 %v6987, 30
        %v6989 = vsub.s32 %v6985, %v6988
        %vm6990 = vcmp.lt.s32.totalorder %v6989, 0
        %v6991 = vsub.s32 0, %v6989
        %v6992 = vsel %vm6990, %v6991, %v6989
        %v6993 = vclz %v6992
        %v6994 = vsub.s32 %v6993, 2
        %vm6995 = vcmp.gt.s32.totalorder 0, %v6994
        %v6996 = vsel %vm6995, 0, %v6994
        %v6997 = vsub.s32 32, %v6996
        %v6998 = vshll.u32 %v6989, %v6996
        %v6999 = vshrl.u32 %v6981, %v6997
        %v7000 = vor.u32 %v6998, %v6999
        %v7001 = vsub.s32 4294967266, %v6996
        %v7002 = vadd.s32 %v7001, 127
        %v7003 = vshll.u32 %v7002, 23
        %v7004 = vor.u32 4788187, %v7003
        %v7005 = vand.u32 2147483647, %v7004
        %v7007 = vcvt.s32.f32 %v7000
        %v7008 = vmul.f32 %v7007, %v7005
        %v7009 = vxor.u32 %v7008, 2147483648
        %v7010 = vsel %vm6927, %v7009, %v7008
        %v7011 = vsub.s32 4, %v6987
        %v7012 = vsel %vm6927, %v7011, %v6987
        %v7013 = vsel %vm6926, %v784, %v7010
        %v7014 = vsel %vm6926, 0, %v7012
        %v7015 = vcosq.f32.pop %v7013
        %v7016 = vsinq.f32.pop %v7013
        %vm7017 = vweird.f32 %v784
        %v7018 = vadd.s32 %v7014, 3
        %v7019 = vand.u32 %v7018, 3
        %vm7020 = vcmp.lt.s32.totalorder %v7019, 2
        %vm7021 = vcmp.eq.s32.totalorder %v7019, 0
        %v7022 = vxor.u32 %v7016, 2147483648
        %v7023 = vsel %vm7021, %v7015, %v7022
        %vm7024 = vcmp.eq.s32.totalorder %v7019, 2
        %v7025 = vxor.u32 %v7015, 2147483648
        %v7026 = vsel %vm7024, %v7025, %v7016
        %v7027 = vsel %vm7020, %v7023, %v7026
        %v7028 = vsel %vm7017, nan, %v7027
        %v7029 = vand.u32 2147483647, %v785
        %vm7030 = vcmp.le.f32.partialorder %v7029, 0.7853982
        %vm7031 = vcmp.lt.s32.totalorder %v785, 0
        %v7032 = vand.u32 %v785, 2139095040
        %v7033 = vshrl.u32 %v7032, 23
        %v7034 = vsub.s32 %v7033, 127
        %v7035 = vand.u32 2147483647, %v785
        %v7036 = vand.u32 %v7035, 8388607
        %v7037 = vor.u32 %v7036, 8388608
        %v7038 = vsub.s32 0, %v7037
        %v7039 = vadd.s32 %v7034, 1
        %vm7040 = vcmp.gt.s32.totalorder %v7039, 0
        %v7041 = vsel %vm7040, %v7039, 0
        %v7042 = vshrl.u32 %v7041, 5
        %v7043 = vand.u32 %v7041, 31
        %v7044 = vsub.s32 32, %v7043
        %v7045 = vshrl.u32 683565275, %v7044
        %v7046 = vshll.u32 683565275, %v7043
        %v7047 = vshrl.u32 2475754826, %v7044
        %v7048 = vor.u32 %v7046, %v7047
        %v7049 = vshll.u32 2475754826, %v7043
        %v7050 = vshrl.u32 2131351028, %v7044
        %v7051 = vor.u32 %v7049, %v7050
        %v7052 = vshll.u32 2131351028, %v7043
        %v7053 = vshrl.u32 2102212464, %v7044
        %v7054 = vor.u32 %v7052, %v7053
        %v7055 = vshll.u32 2102212464, %v7043
        %v7056 = vshrl.u32 920167782, %v7044
        %v7057 = vor.u32 %v7055, %v7056
        %v7058 = vshll.u32 920167782, %v7043
        %v7059 = vshrl.u32 1326507024, %v7044
        %v7060 = vor.u32 %v7058, %v7059
        %vm7061 = vcmp.lt.s32.totalorder %v7042, 1
        %vm7062 = vcmp.lt.s32.totalorder %v7042, 2
        %vm7063 = vcmp.lt.s32.totalorder %v7042, 3
        %vm7064 = vcmp.lt.s32.totalorder %v7042, 4
        %v7065 = vsel %vm7061, %v7045, %v7048
        %v7066 = vsel %vm7064, %v7054, 2102212464
        %v7067 = vsel %vm7063, %v7051, %v7066
        %v7068 = vsel %vm7062, %v7065, %v7067
        %v7069 = vsel %vm7061, %v7048, %v7051
        %v7070 = vsel %vm7064, %v7057, 920167782
        %v7071 = vsel %vm7063, %v7054, %v7070
        %v7072 = vsel %vm7062, %v7069, %v7071
        %v7073 = vsel %vm7061, %v7051, %v7054
        %v7074 = vsel %vm7064, %v7060, 1326507024
        %v7075 = vsel %vm7063, %v7057, %v7074
        %v7076 = vsel %vm7062, %v7073, %v7075
        %v7077 = vshll.u32 %v7037, 8
        %v7078 = vmul.u32.u64.compose %v7077, %v7076
        %v7079 = vextract.low.u32 %v7078
        %v7080 = vextract.high.u32 %v7078
        %v7081 = vmul.u32.u64.compose %v7077, %v7072
        %v7082 = vextract.low.u32 %v7081
        %v7083 = vextract.high.u32 %v7081
        %v7084 = vmul.u32 %v7077, %v7068
        %v7085 = vadd.s32 %v7080, %v7082
        %vm7086 = vc.u32 %v7080, %v7082
        %v7087 = vadd.s32 %v7083, 1
        %v7088 = vsel %vm7086, %v7087, %v7083
        %v7089 = vadd.s32 %v7084, %v7088
        %v7090 = vadd.s32 %v7089, 536870912
        %v7091 = vshrl.u32 %v7090, 30
        %v7092 = vshll.u32 %v7091, 30
        %v7093 = vsub.s32 %v7089, %v7092
        %vm7094 = vcmp.lt.s32.totalorder %v7093, 0
        %v7095 = vsub.s32 0, %v7093
        %v7096 = vsel %vm7094, %v7095, %v7093
        %v7097 = vclz %v7096
        %v7098 = vsub.s32 %v7097, 2
        %vm7099 = vcmp.gt.s32.totalorder 0, %v7098
        %v7100 = vsel %vm7099, 0, %v7098
        %v7101 = vsub.s32 32, %v7100
        %v7102 = vshll.u32 %v7093, %v7100
        %v7103 = vshrl.u32 %v7085, %v7101
        %v7104 = vor.u32 %v7102, %v7103
        %v7105 = vsub.s32 4294967266, %v7100
        %v7106 = vadd.s32 %v7105, 127
        %v7107 = vshll.u32 %v7106, 23
        %v7108 = vor.u32 4788187, %v7107
        %v7109 = vand.u32 2147483647, %v7108
        %v7111 = vcvt.s32.f32 %v7104
        %v7112 = vmul.f32 %v7111, %v7109
        %v7113 = vxor.u32 %v7112, 2147483648
        %v7114 = vsel %vm7031, %v7113, %v7112
        %v7115 = vsub.s32 4, %v7091
        %v7116 = vsel %vm7031, %v7115, %v7091
        %v7117 = vsel %vm7030, %v785, %v7114
        %v7118 = vsel %vm7030, 0, %v7116
        %v7119 = vcosq.f32.pop %v7117
        %v7120 = vsinq.f32.pop %v7117
        %vm7121 = vweird.f32 %v785
        %v7122 = vadd.s32 %v7118, 3
        %v7123 = vand.u32 %v7122, 3
        %vm7124 = vcmp.lt.s32.totalorder %v7123, 2
        %vm7125 = vcmp.eq.s32.totalorder %v7123, 0
        %v7126 = vxor.u32 %v7120, 2147483648
        %v7127 = vsel %vm7125, %v7119, %v7126
        %vm7128 = vcmp.eq.s32.totalorder %v7123, 2
        %v7129 = vxor.u32 %v7119, 2147483648
        %v7130 = vsel %vm7128, %v7129, %v7120
        %v7131 = vsel %vm7124, %v7127, %v7130
        %v7132 = vsel %vm7121, nan, %v7131
        %v7133 = vand.u32 2147483647, %v786
        %vm7134 = vcmp.le.f32.partialorder %v7133, 0.7853982
        %vm7135 = vcmp.lt.s32.totalorder %v786, 0
        %v7136 = vand.u32 %v786, 2139095040
        %v7137 = vshrl.u32 %v7136, 23
        %v7138 = vsub.s32 %v7137, 127
        %v7139 = vand.u32 2147483647, %v786
        %v7140 = vand.u32 %v7139, 8388607
        %v7141 = vor.u32 %v7140, 8388608
        %v7142 = vsub.s32 0, %v7141
        %v7143 = vadd.s32 %v7138, 1
        %vm7144 = vcmp.gt.s32.totalorder %v7143, 0
        %v7145 = vsel %vm7144, %v7143, 0
        %v7146 = vshrl.u32 %v7145, 5
        %v7147 = vand.u32 %v7145, 31
        %v7148 = vsub.s32 32, %v7147
        %v7149 = vshrl.u32 683565275, %v7148
        %v7150 = vshll.u32 683565275, %v7147
        %v7151 = vshrl.u32 2475754826, %v7148
        %v7152 = vor.u32 %v7150, %v7151
        %v7153 = vshll.u32 2475754826, %v7147
        %v7154 = vshrl.u32 2131351028, %v7148
        %v7155 = vor.u32 %v7153, %v7154
        %v7156 = vshll.u32 2131351028, %v7147
        %v7157 = vshrl.u32 2102212464, %v7148
        %v7158 = vor.u32 %v7156, %v7157
        %v7159 = vshll.u32 2102212464, %v7147
        %v7160 = vshrl.u32 920167782, %v7148
        %v7161 = vor.u32 %v7159, %v7160
        %v7162 = vshll.u32 920167782, %v7147
        %v7163 = vshrl.u32 1326507024, %v7148
        %v7164 = vor.u32 %v7162, %v7163
        %vm7165 = vcmp.lt.s32.totalorder %v7146, 1
        %vm7166 = vcmp.lt.s32.totalorder %v7146, 2
        %vm7167 = vcmp.lt.s32.totalorder %v7146, 3
        %vm7168 = vcmp.lt.s32.totalorder %v7146, 4
        %v7169 = vsel %vm7165, %v7149, %v7152
        %v7170 = vsel %vm7168, %v7158, 2102212464
        %v7171 = vsel %vm7167, %v7155, %v7170
        %v7172 = vsel %vm7166, %v7169, %v7171
        %v7173 = vsel %vm7165, %v7152, %v7155
        %v7174 = vsel %vm7168, %v7161, 920167782
        %v7175 = vsel %vm7167, %v7158, %v7174
        %v7176 = vsel %vm7166, %v7173, %v7175
        %v7177 = vsel %vm7165, %v7155, %v7158
        %v7178 = vsel %vm7168, %v7164, 1326507024
        %v7179 = vsel %vm7167, %v7161, %v7178
        %v7180 = vsel %vm7166, %v7177, %v7179
        %v7181 = vshll.u32 %v7141, 8
        %v7182 = vmul.u32.u64.compose %v7181, %v7180
        %v7183 = vextract.low.u32 %v7182
        %v7184 = vextract.high.u32 %v7182
        %v7185 = vmul.u32.u64.compose %v7181, %v7176
        %v7186 = vextract.low.u32 %v7185
        %v7187 = vextract.high.u32 %v7185
        %v7188 = vmul.u32 %v7181, %v7172
        %v7189 = vadd.s32 %v7184, %v7186
        %vm7190 = vc.u32 %v7184, %v7186
        %v7191 = vadd.s32 %v7187, 1
        %v7192 = vsel %vm7190, %v7191, %v7187
        %v7193 = vadd.s32 %v7188, %v7192
        %v7194 = vadd.s32 %v7193, 536870912
        %v7195 = vshrl.u32 %v7194, 30
        %v7196 = vshll.u32 %v7195, 30
        %v7197 = vsub.s32 %v7193, %v7196
        %vm7198 = vcmp.lt.s32.totalorder %v7197, 0
        %v7199 = vsub.s32 0, %v7197
        %v7200 = vsel %vm7198, %v7199, %v7197
        %v7201 = vclz %v7200
        %v7202 = vsub.s32 %v7201, 2
        %vm7203 = vcmp.gt.s32.totalorder 0, %v7202
        %v7204 = vsel %vm7203, 0, %v7202
        %v7205 = vsub.s32 32, %v7204
        %v7206 = vshll.u32 %v7197, %v7204
        %v7207 = vshrl.u32 %v7189, %v7205
        %v7208 = vor.u32 %v7206, %v7207
        %v7209 = vsub.s32 4294967266, %v7204
        %v7210 = vadd.s32 %v7209, 127
        %v7211 = vshll.u32 %v7210, 23
        %v7212 = vor.u32 4788187, %v7211
        %v7213 = vand.u32 2147483647, %v7212
        %v7215 = vcvt.s32.f32 %v7208
        %v7216 = vmul.f32 %v7215, %v7213
        %v7217 = vxor.u32 %v7216, 2147483648
        %v7218 = vsel %vm7135, %v7217, %v7216
        %v7219 = vsub.s32 4, %v7195
        %v7220 = vsel %vm7135, %v7219, %v7195
        %v7221 = vsel %vm7134, %v786, %v7218
        %v7222 = vsel %vm7134, 0, %v7220
        %v7223 = vcosq.f32.pop %v7221
        %v7224 = vsinq.f32.pop %v7221
        %vm7225 = vweird.f32 %v786
        %v7226 = vadd.s32 %v7222, 3
        %v7227 = vand.u32 %v7226, 3
        %vm7228 = vcmp.lt.s32.totalorder %v7227, 2
        %vm7229 = vcmp.eq.s32.totalorder %v7227, 0
        %v7230 = vxor.u32 %v7224, 2147483648
        %v7231 = vsel %vm7229, %v7223, %v7230
        %vm7232 = vcmp.eq.s32.totalorder %v7227, 2
        %v7233 = vxor.u32 %v7223, 2147483648
        %v7234 = vsel %vm7232, %v7233, %v7224
        %v7235 = vsel %vm7228, %v7231, %v7234
        %v7236 = vsel %vm7225, nan, %v7235
        %v7237 = vand.u32 2147483647, %v787
        %vm7238 = vcmp.le.f32.partialorder %v7237, 0.7853982
        %vm7239 = vcmp.lt.s32.totalorder %v787, 0
        %v7240 = vand.u32 %v787, 2139095040
        %v7241 = vshrl.u32 %v7240, 23
        %v7242 = vsub.s32 %v7241, 127
        %v7243 = vand.u32 2147483647, %v787
        %v7244 = vand.u32 %v7243, 8388607
        %v7245 = vor.u32 %v7244, 8388608
        %v7246 = vsub.s32 0, %v7245
        %v7247 = vadd.s32 %v7242, 1
        %vm7248 = vcmp.gt.s32.totalorder %v7247, 0
        %v7249 = vsel %vm7248, %v7247, 0
        %v7250 = vshrl.u32 %v7249, 5
        %v7251 = vand.u32 %v7249, 31
        %v7252 = vsub.s32 32, %v7251
        %v7253 = vshrl.u32 683565275, %v7252
        %v7254 = vshll.u32 683565275, %v7251
        %v7255 = vshrl.u32 2475754826, %v7252
        %v7256 = vor.u32 %v7254, %v7255
        %v7257 = vshll.u32 2475754826, %v7251
        %v7258 = vshrl.u32 2131351028, %v7252
        %v7259 = vor.u32 %v7257, %v7258
        %v7260 = vshll.u32 2131351028, %v7251
        %v7261 = vshrl.u32 2102212464, %v7252
        %v7262 = vor.u32 %v7260, %v7261
        %v7263 = vshll.u32 2102212464, %v7251
        %v7264 = vshrl.u32 920167782, %v7252
        %v7265 = vor.u32 %v7263, %v7264
        %v7266 = vshll.u32 920167782, %v7251
        %v7267 = vshrl.u32 1326507024, %v7252
        %v7268 = vor.u32 %v7266, %v7267
        %vm7269 = vcmp.lt.s32.totalorder %v7250, 1
        %vm7270 = vcmp.lt.s32.totalorder %v7250, 2
        %vm7271 = vcmp.lt.s32.totalorder %v7250, 3
        %vm7272 = vcmp.lt.s32.totalorder %v7250, 4
        %v7273 = vsel %vm7269, %v7253, %v7256
        %v7274 = vsel %vm7272, %v7262, 2102212464
        %v7275 = vsel %vm7271, %v7259, %v7274
        %v7276 = vsel %vm7270, %v7273, %v7275
        %v7277 = vsel %vm7269, %v7256, %v7259
        %v7278 = vsel %vm7272, %v7265, 920167782
        %v7279 = vsel %vm7271, %v7262, %v7278
        %v7280 = vsel %vm7270, %v7277, %v7279
        %v7281 = vsel %vm7269, %v7259, %v7262
        %v7282 = vsel %vm7272, %v7268, 1326507024
        %v7283 = vsel %vm7271, %v7265, %v7282
        %v7284 = vsel %vm7270, %v7281, %v7283
        %v7285 = vshll.u32 %v7245, 8
        %v7286 = vmul.u32.u64.compose %v7285, %v7284
        %v7287 = vextract.low.u32 %v7286
        %v7288 = vextract.high.u32 %v7286
        %v7289 = vmul.u32.u64.compose %v7285, %v7280
        %v7290 = vextract.low.u32 %v7289
        %v7291 = vextract.high.u32 %v7289
        %v7292 = vmul.u32 %v7285, %v7276
        %v7293 = vadd.s32 %v7288, %v7290
        %vm7294 = vc.u32 %v7288, %v7290
        %v7295 = vadd.s32 %v7291, 1
        %v7296 = vsel %vm7294, %v7295, %v7291
        %v7297 = vadd.s32 %v7292, %v7296
        %v7298 = vadd.s32 %v7297, 536870912
        %v7299 = vshrl.u32 %v7298, 30
        %v7300 = vshll.u32 %v7299, 30
        %v7301 = vsub.s32 %v7297, %v7300
        %vm7302 = vcmp.lt.s32.totalorder %v7301, 0
        %v7303 = vsub.s32 0, %v7301
        %v7304 = vsel %vm7302, %v7303, %v7301
        %v7305 = vclz %v7304
        %v7306 = vsub.s32 %v7305, 2
        %vm7307 = vcmp.gt.s32.totalorder 0, %v7306
        %v7308 = vsel %vm7307, 0, %v7306
        %v7309 = vsub.s32 32, %v7308
        %v7310 = vshll.u32 %v7301, %v7308
        %v7311 = vshrl.u32 %v7293, %v7309
        %v7312 = vor.u32 %v7310, %v7311
        %v7313 = vsub.s32 4294967266, %v7308
        %v7314 = vadd.s32 %v7313, 127
        %v7315 = vshll.u32 %v7314, 23
        %v7316 = vor.u32 4788187, %v7315
        %v7317 = vand.u32 2147483647, %v7316
        %v7319 = vcvt.s32.f32 %v7312
        %v7320 = vmul.f32 %v7319, %v7317
        %v7321 = vxor.u32 %v7320, 2147483648
        %v7322 = vsel %vm7239, %v7321, %v7320
        %v7323 = vsub.s32 4, %v7299
        %v7324 = vsel %vm7239, %v7323, %v7299
        %v7325 = vsel %vm7238, %v787, %v7322
        %v7326 = vsel %vm7238, 0, %v7324
        %v7327 = vcosq.f32.pop %v7325
        %v7328 = vsinq.f32.pop %v7325
        %vm7329 = vweird.f32 %v787
        %v7330 = vadd.s32 %v7326, 3
        %v7331 = vand.u32 %v7330, 3
        %vm7332 = vcmp.lt.s32.totalorder %v7331, 2
        %vm7333 = vcmp.eq.s32.totalorder %v7331, 0
        %v7334 = vxor.u32 %v7328, 2147483648
        %v7335 = vsel %vm7333, %v7327, %v7334
        %vm7336 = vcmp.eq.s32.totalorder %v7331, 2
        %v7337 = vxor.u32 %v7327, 2147483648
        %v7338 = vsel %vm7336, %v7337, %v7328
        %v7339 = vsel %vm7332, %v7335, %v7338
        %v7340 = vsel %vm7329, nan, %v7339
        %v7341 = vand.u32 2147483647, %v788
        %vm7342 = vcmp.le.f32.partialorder %v7341, 0.7853982
        %vm7343 = vcmp.lt.s32.totalorder %v788, 0
        %v7344 = vand.u32 %v788, 2139095040
        %v7345 = vshrl.u32 %v7344, 23
        %v7346 = vsub.s32 %v7345, 127
        %v7347 = vand.u32 2147483647, %v788
        %v7348 = vand.u32 %v7347, 8388607
        %v7349 = vor.u32 %v7348, 8388608
        %v7350 = vsub.s32 0, %v7349
        %v7351 = vadd.s32 %v7346, 1
        %vm7352 = vcmp.gt.s32.totalorder %v7351, 0
        %v7353 = vsel %vm7352, %v7351, 0
        %v7354 = vshrl.u32 %v7353, 5
        %v7355 = vand.u32 %v7353, 31
        %v7356 = vsub.s32 32, %v7355
        %v7357 = vshrl.u32 683565275, %v7356
        %v7358 = vshll.u32 683565275, %v7355
        %v7359 = vshrl.u32 2475754826, %v7356
        %v7360 = vor.u32 %v7358, %v7359
        %v7361 = vshll.u32 2475754826, %v7355
        %v7362 = vshrl.u32 2131351028, %v7356
        %v7363 = vor.u32 %v7361, %v7362
        %v7364 = vshll.u32 2131351028, %v7355
        %v7365 = vshrl.u32 2102212464, %v7356
        %v7366 = vor.u32 %v7364, %v7365
        %v7367 = vshll.u32 2102212464, %v7355
        %v7368 = vshrl.u32 920167782, %v7356
        %v7369 = vor.u32 %v7367, %v7368
        %v7370 = vshll.u32 920167782, %v7355
        %v7371 = vshrl.u32 1326507024, %v7356
        %v7372 = vor.u32 %v7370, %v7371
        %vm7373 = vcmp.lt.s32.totalorder %v7354, 1
        %vm7374 = vcmp.lt.s32.totalorder %v7354, 2
        %vm7375 = vcmp.lt.s32.totalorder %v7354, 3
        %vm7376 = vcmp.lt.s32.totalorder %v7354, 4
        %v7377 = vsel %vm7373, %v7357, %v7360
        %v7378 = vsel %vm7376, %v7366, 2102212464
        %v7379 = vsel %vm7375, %v7363, %v7378
        %v7380 = vsel %vm7374, %v7377, %v7379
        %v7381 = vsel %vm7373, %v7360, %v7363
        %v7382 = vsel %vm7376, %v7369, 920167782
        %v7383 = vsel %vm7375, %v7366, %v7382
        %v7384 = vsel %vm7374, %v7381, %v7383
        %v7385 = vsel %vm7373, %v7363, %v7366
        %v7386 = vsel %vm7376, %v7372, 1326507024
        %v7387 = vsel %vm7375, %v7369, %v7386
        %v7388 = vsel %vm7374, %v7385, %v7387
        %v7389 = vshll.u32 %v7349, 8
        %v7390 = vmul.u32.u64.compose %v7389, %v7388
        %v7391 = vextract.low.u32 %v7390
        %v7392 = vextract.high.u32 %v7390
        %v7393 = vmul.u32.u64.compose %v7389, %v7384
        %v7394 = vextract.low.u32 %v7393
        %v7395 = vextract.high.u32 %v7393
        %v7396 = vmul.u32 %v7389, %v7380
        %v7397 = vadd.s32 %v7392, %v7394
        %vm7398 = vc.u32 %v7392, %v7394
        %v7399 = vadd.s32 %v7395, 1
        %v7400 = vsel %vm7398, %v7399, %v7395
        %v7401 = vadd.s32 %v7396, %v7400
        %v7402 = vadd.s32 %v7401, 536870912
        %v7403 = vshrl.u32 %v7402, 30
        %v7404 = vshll.u32 %v7403, 30
        %v7405 = vsub.s32 %v7401, %v7404
        %vm7406 = vcmp.lt.s32.totalorder %v7405, 0
        %v7407 = vsub.s32 0, %v7405
        %v7408 = vsel %vm7406, %v7407, %v7405
        %v7409 = vclz %v7408
        %v7410 = vsub.s32 %v7409, 2
        %vm7411 = vcmp.gt.s32.totalorder 0, %v7410
        %v7412 = vsel %vm7411, 0, %v7410
        %v7413 = vsub.s32 32, %v7412
        %v7414 = vshll.u32 %v7405, %v7412
        %v7415 = vshrl.u32 %v7397, %v7413
        %v7416 = vor.u32 %v7414, %v7415
        %v7417 = vsub.s32 4294967266, %v7412
        %v7418 = vadd.s32 %v7417, 127
        %v7419 = vshll.u32 %v7418, 23
        %v7420 = vor.u32 4788187, %v7419
        %v7421 = vand.u32 2147483647, %v7420
        %v7423 = vcvt.s32.f32 %v7416
        %v7424 = vmul.f32 %v7423, %v7421
        %v7425 = vxor.u32 %v7424, 2147483648
        %v7426 = vsel %vm7343, %v7425, %v7424
        %v7427 = vsub.s32 4, %v7403
        %v7428 = vsel %vm7343, %v7427, %v7403
        %v7429 = vsel %vm7342, %v788, %v7426
        %v7430 = vsel %vm7342, 0, %v7428
        %v7431 = vcosq.f32.pop %v7429
        %v7432 = vsinq.f32.pop %v7429
        %vm7433 = vweird.f32 %v788
        %v7434 = vadd.s32 %v7430, 3
        %v7435 = vand.u32 %v7434, 3
        %vm7436 = vcmp.lt.s32.totalorder %v7435, 2
        %vm7437 = vcmp.eq.s32.totalorder %v7435, 0
        %v7438 = vxor.u32 %v7432, 2147483648
        %v7439 = vsel %vm7437, %v7431, %v7438
        %vm7440 = vcmp.eq.s32.totalorder %v7435, 2
        %v7441 = vxor.u32 %v7431, 2147483648
        %v7442 = vsel %vm7440, %v7441, %v7432
        %v7443 = vsel %vm7436, %v7439, %v7442
        %v7444 = vsel %vm7433, nan, %v7443
        %v7445 = vld [vmem:[%s260] sm:$0xff]
        %v7446 = vld [vmem:[%s260 + $0x8] sm:$0xff]
        %v7447 = vld [vmem:[%s260 + $0x10] sm:$0xff]
        %v7448 = vld [vmem:[%s260 + $0x18] sm:$0xff]
        %v7449 = vld [vmem:[%s260 + $0x20] sm:$0xff]
        %v7450 = vld [vmem:[%s260 + $0x28] sm:$0xff]
        %v7451 = vld [vmem:[%s260 + $0x30] sm:$0xff]
        %v7452 = vld [vmem:[%s260 + $0x38] sm:$0xff]
        %v7453 = vld [vmem:[%s260 + $0x40] sm:$0xff]
        %v7454 = vld [vmem:[%s260 + $0x48] sm:$0xff]
        %v7455 = vld [vmem:[%s260 + $0x50] sm:$0xff]
        %v7456 = vld [vmem:[%s260 + $0x58] sm:$0xff]
        %v7457 = vld [vmem:[%s260 + $0x60] sm:$0xff]
        %v7458 = vld [vmem:[%s260 + $0x68] sm:$0xff]
        %v7459 = vld [vmem:[%s260 + $0x70] sm:$0xff]
        %v7460 = vld [vmem:[%s260 + $0x78] sm:$0xff]
        %v7461 = vld [vmem:[%s260 + $0x80] sm:$0xff]
        %v7462 = vld [vmem:[%s260 + $0x88] sm:$0xff]
        %v7463 = vld [vmem:[%s260 + $0x90] sm:$0xff]
        %v7464 = vld [vmem:[%s260 + $0x98] sm:$0xff]
        %v7465 = vld [vmem:[%s260 + $0xa0] sm:$0xff]
        %v7466 = vld [vmem:[%s260 + $0xa8] sm:$0xff]
        %v7467 = vld [vmem:[%s260 + $0xb0] sm:$0xff]
        %v7468 = vld [vmem:[%s260 + $0xb8] sm:$0xff]
        %v7469 = vld [vmem:[%s260 + $0xc0] sm:$0xff]
        %v7470 = vld [vmem:[%s260 + $0xc8] sm:$0xff]
        %v7471 = vld [vmem:[%s260 + $0xd0] sm:$0xff]
        %v7472 = vld [vmem:[%s260 + $0xd8] sm:$0xff]
        %v7473 = vld [vmem:[%s260 + $0xe0] sm:$0xff]
        %v7474 = vld [vmem:[%s260 + $0xe8] sm:$0xff]
        %v7475 = vld [vmem:[%s260 + $0xf0] sm:$0xff]
        %v7476 = vld [vmem:[%s260 + $0xf8] sm:$0xff]
        %v7477 = vld [vmem:[%s260 + $0x100] sm:$0xff]
        %v7478 = vld [vmem:[%s260 + $0x108] sm:$0xff]
        %v7479 = vld [vmem:[%s260 + $0x110] sm:$0xff]
        %v7480 = vld [vmem:[%s260 + $0x118] sm:$0xff]
        %v7481 = vld [vmem:[%s260 + $0x120] sm:$0xff]
        %v7482 = vld [vmem:[%s260 + $0x128] sm:$0xff]
        %v7483 = vld [vmem:[%s260 + $0x130] sm:$0xff]
        %v7484 = vld [vmem:[%s260 + $0x138] sm:$0xff]
        %v7485 = vld [vmem:[%s260 + $0x140] sm:$0xff]
        %v7486 = vld [vmem:[%s260 + $0x148] sm:$0xff]
        %v7487 = vld [vmem:[%s260 + $0x150] sm:$0xff]
        %v7488 = vld [vmem:[%s260 + $0x158] sm:$0xff]
        %v7489 = vld [vmem:[%s260 + $0x160] sm:$0xff]
        %v7490 = vld [vmem:[%s260 + $0x168] sm:$0xff]
        %v7491 = vld [vmem:[%s260 + $0x170] sm:$0xff]
        %v7492 = vld [vmem:[%s260 + $0x178] sm:$0xff]
        %v7493 = vld [vmem:[%s260 + $0x180] sm:$0xff]
        %v7494 = vld [vmem:[%s260 + $0x188] sm:$0xff]
        %v7495 = vld [vmem:[%s260 + $0x190] sm:$0xff]
        %v7496 = vld [vmem:[%s260 + $0x198] sm:$0xff]
        %v7497 = vld [vmem:[%s260 + $0x1a0] sm:$0xff]
        %v7498 = vld [vmem:[%s260 + $0x1a8] sm:$0xff]
        %v7499 = vld [vmem:[%s260 + $0x1b0] sm:$0xff]
        %v7500 = vld [vmem:[%s260 + $0x1b8] sm:$0xff]
        %v7501 = vld [vmem:[%s260 + $0x1c0] sm:$0xff]
        %v7502 = vld [vmem:[%s260 + $0x1c8] sm:$0xff]
        %v7503 = vld [vmem:[%s260 + $0x1d0] sm:$0xff]
        %v7504 = vld [vmem:[%s260 + $0x1d8] sm:$0xff]
        %v7505 = vld [vmem:[%s260 + $0x1e0] sm:$0xff]
        %v7506 = vld [vmem:[%s260 + $0x1e8] sm:$0xff]
        %v7507 = vld [vmem:[%s260 + $0x1f0] sm:$0xff]
        %v7508 = vld [vmem:[%s260 + $0x1f8] sm:$0xff]
        %v7509 = vmul.f32 %v892, 11.313708
        %v7510 = vmul.f32 %v996, 11.313708
        %v7511 = vmul.f32 %v1100, 11.313708
        %v7512 = vmul.f32 %v1204, 11.313708
        %v7513 = vmul.f32 %v1308, 11.313708
        %v7514 = vmul.f32 %v1412, 11.313708
        %v7515 = vmul.f32 %v1516, 11.313708
        %v7516 = vmul.f32 %v1620, 11.313708
        %v7517 = vmul.f32 %v1724, 11.313708
        %v7518 = vmul.f32 %v1828, 11.313708
        %v7519 = vmul.f32 %v1932, 11.313708
        %v7520 = vmul.f32 %v2036, 11.313708
        %v7521 = vmul.f32 %v2140, 11.313708
        %v7522 = vmul.f32 %v2244, 11.313708
        %v7523 = vmul.f32 %v2348, 11.313708
        %v7524 = vmul.f32 %v2452, 11.313708
        %v7525 = vmul.f32 %v2556, 11.313708
        %v7526 = vmul.f32 %v2660, 11.313708
        %v7527 = vmul.f32 %v2764, 11.313708
        %v7528 = vmul.f32 %v2868, 11.313708
        %v7529 = vmul.f32 %v2972, 11.313708
        %v7530 = vmul.f32 %v3076, 11.313708
        %v7531 = vmul.f32 %v3180, 11.313708
        %v7532 = vmul.f32 %v3284, 11.313708
        %v7533 = vmul.f32 %v3388, 11.313708
        %v7534 = vmul.f32 %v3492, 11.313708
        %v7535 = vmul.f32 %v3596, 11.313708
        %v7536 = vmul.f32 %v3700, 11.313708
        %v7537 = vmul.f32 %v3804, 11.313708
        %v7538 = vmul.f32 %v3908, 11.313708
        %v7539 = vmul.f32 %v4012, 11.313708
        %v7540 = vmul.f32 %v4116, 11.313708
        %v7541 = vmul.f32 %v4220, 11.313708
        %v7542 = vmul.f32 %v4324, 11.313708
        %v7543 = vmul.f32 %v4428, 11.313708
        %v7544 = vmul.f32 %v4532, 11.313708
        %v7545 = vmul.f32 %v4636, 11.313708
        %v7546 = vmul.f32 %v4740, 11.313708
        %v7547 = vmul.f32 %v4844, 11.313708
        %v7548 = vmul.f32 %v4948, 11.313708
        %v7549 = vmul.f32 %v5052, 11.313708
        %v7550 = vmul.f32 %v5156, 11.313708
        %v7551 = vmul.f32 %v5260, 11.313708
        %v7552 = vmul.f32 %v5364, 11.313708
        %v7553 = vmul.f32 %v5468, 11.313708
        %v7554 = vmul.f32 %v5572, 11.313708
        %v7555 = vmul.f32 %v5676, 11.313708
        %v7556 = vmul.f32 %v5780, 11.313708
        %v7557 = vmul.f32 %v5884, 11.313708
        %v7558 = vmul.f32 %v5988, 11.313708
        %v7559 = vmul.f32 %v6092, 11.313708
        %v7560 = vmul.f32 %v6196, 11.313708
        %v7561 = vmul.f32 %v6300, 11.313708
        %v7562 = vmul.f32 %v6404, 11.313708
        %v7563 = vmul.f32 %v6508, 11.313708
        %v7564 = vmul.f32 %v6612, 11.313708
        %v7565 = vmul.f32 %v6716, 11.313708
        %v7566 = vmul.f32 %v6820, 11.313708
        %v7567 = vmul.f32 %v6924, 11.313708
        %v7568 = vmul.f32 %v7028, 11.313708
        %v7569 = vmul.f32 %v7132, 11.313708
        %v7570 = vmul.f32 %v7236, 11.313708
        %v7571 = vmul.f32 %v7340, 11.313708
        %v7572 = vmul.f32 %v7444, 11.313708
        %v7573 = vadd.f32 %v7445, %v7509
        %v7574 = vadd.f32 %v7446, %v7510
        %v7575 = vadd.f32 %v7447, %v7511
        %v7576 = vadd.f32 %v7448, %v7512
        %v7577 = vadd.f32 %v7449, %v7513
        %v7578 = vadd.f32 %v7450, %v7514
        %v7579 = vadd.f32 %v7451, %v7515
        %v7580 = vadd.f32 %v7452, %v7516
        %v7581 = vadd.f32 %v7453, %v7517
        %v7582 = vadd.f32 %v7454, %v7518
        %v7583 = vadd.f32 %v7455, %v7519
        %v7584 = vadd.f32 %v7456, %v7520
        %v7585 = vadd.f32 %v7457, %v7521
        %v7586 = vadd.f32 %v7458, %v7522
        %v7587 = vadd.f32 %v7459, %v7523
        %v7588 = vadd.f32 %v7460, %v7524
        %v7589 = vadd.f32 %v7461, %v7525
        %v7590 = vadd.f32 %v7462, %v7526
        %v7591 = vadd.f32 %v7463, %v7527
        %v7592 = vadd.f32 %v7464, %v7528
        %v7593 = vadd.f32 %v7465, %v7529
        %v7594 = vadd.f32 %v7466, %v7530
        %v7595 = vadd.f32 %v7467, %v7531
        %v7596 = vadd.f32 %v7468, %v7532
        %v7597 = vadd.f32 %v7469, %v7533
        %v7598 = vadd.f32 %v7470, %v7534
        %v7599 = vadd.f32 %v7471, %v7535
        %v7600 = vadd.f32 %v7472, %v7536
        %v7601 = vadd.f32 %v7473, %v7537
        %v7602 = vadd.f32 %v7474, %v7538
        %v7603 = vadd.f32 %v7475, %v7539
        %v7604 = vadd.f32 %v7476, %v7540
        %v7605 = vadd.f32 %v7477, %v7541
        %v7606 = vadd.f32 %v7478, %v7542
        %v7607 = vadd.f32 %v7479, %v7543
        %v7608 = vadd.f32 %v7480, %v7544
        %v7609 = vadd.f32 %v7481, %v7545
        %v7610 = vadd.f32 %v7482, %v7546
        %v7611 = vadd.f32 %v7483, %v7547
        %v7612 = vadd.f32 %v7484, %v7548
        %v7613 = vadd.f32 %v7485, %v7549
        %v7614 = vadd.f32 %v7486, %v7550
        %v7615 = vadd.f32 %v7487, %v7551
        %v7616 = vadd.f32 %v7488, %v7552
        %v7617 = vadd.f32 %v7489, %v7553
        %v7618 = vadd.f32 %v7490, %v7554
        %v7619 = vadd.f32 %v7491, %v7555
        %v7620 = vadd.f32 %v7492, %v7556
        %v7621 = vadd.f32 %v7493, %v7557
        %v7622 = vadd.f32 %v7494, %v7558
        %v7623 = vadd.f32 %v7495, %v7559
        %v7624 = vadd.f32 %v7496, %v7560
        %v7625 = vadd.f32 %v7497, %v7561
        %v7626 = vadd.f32 %v7498, %v7562
        %v7627 = vadd.f32 %v7499, %v7563
        %v7628 = vadd.f32 %v7500, %v7564
        %v7629 = vadd.f32 %v7501, %v7565
        %v7630 = vadd.f32 %v7502, %v7566
        %v7631 = vadd.f32 %v7503, %v7567
        %v7632 = vadd.f32 %v7504, %v7568
        %v7633 = vadd.f32 %v7505, %v7569
        %v7634 = vadd.f32 %v7506, %v7570
        %v7635 = vadd.f32 %v7507, %v7571
        %v7636 = vadd.f32 %v7508, %v7572
        %7637 = vst [vmem:[%s241] sm:$0xff] %v7573
        %7638 = vst [vmem:[%s241 + $0x8] sm:$0xff] %v7574
        %7639 = vst [vmem:[%s241 + $0x10] sm:$0xff] %v7575
        %7640 = vst [vmem:[%s241 + $0x18] sm:$0xff] %v7576
        %7641 = vst [vmem:[%s241 + $0x20] sm:$0xff] %v7577
        %7642 = vst [vmem:[%s241 + $0x28] sm:$0xff] %v7578
        %7643 = vst [vmem:[%s241 + $0x30] sm:$0xff] %v7579
        %7644 = vst [vmem:[%s241 + $0x38] sm:$0xff] %v7580
        %7645 = vst [vmem:[%s241 + $0x40] sm:$0xff] %v7581
        %7646 = vst [vmem:[%s241 + $0x48] sm:$0xff] %v7582
        %7647 = vst [vmem:[%s241 + $0x50] sm:$0xff] %v7583
        %7648 = vst [vmem:[%s241 + $0x58] sm:$0xff] %v7584
        %7649 = vst [vmem:[%s241 + $0x60] sm:$0xff] %v7585
        %7650 = vst [vmem:[%s241 + $0x68] sm:$0xff] %v7586
        %7651 = vst [vmem:[%s241 + $0x70] sm:$0xff] %v7587
        %7652 = vst [vmem:[%s241 + $0x78] sm:$0xff] %v7588
        %7653 = vst [vmem:[%s241 + $0x80] sm:$0xff] %v7589
        %7654 = vst [vmem:[%s241 + $0x88] sm:$0xff] %v7590
        %7655 = vst [vmem:[%s241 + $0x90] sm:$0xff] %v7591
        %7656 = vst [vmem:[%s241 + $0x98] sm:$0xff] %v7592
        %7657 = vst [vmem:[%s241 + $0xa0] sm:$0xff] %v7593
        %7658 = vst [vmem:[%s241 + $0xa8] sm:$0xff] %v7594
        %7659 = vst [vmem:[%s241 + $0xb0] sm:$0xff] %v7595
        %7660 = vst [vmem:[%s241 + $0xb8] sm:$0xff] %v7596
        %7661 = vst [vmem:[%s241 + $0xc0] sm:$0xff] %v7597
        %7662 = vst [vmem:[%s241 + $0xc8] sm:$0xff] %v7598
        %7663 = vst [vmem:[%s241 + $0xd0] sm:$0xff] %v7599
        %7664 = vst [vmem:[%s241 + $0xd8] sm:$0xff] %v7600
        %7665 = vst [vmem:[%s241 + $0xe0] sm:$0xff] %v7601
        %7666 = vst [vmem:[%s241 + $0xe8] sm:$0xff] %v7602
        %7667 = vst [vmem:[%s241 + $0xf0] sm:$0xff] %v7603
        %7668 = vst [vmem:[%s241 + $0xf8] sm:$0xff] %v7604
        %7669 = vst [vmem:[%s241 + $0x100] sm:$0xff] %v7605
        %7670 = vst [vmem:[%s241 + $0x108] sm:$0xff] %v7606
        %7671 = vst [vmem:[%s241 + $0x110] sm:$0xff] %v7607
        %7672 = vst [vmem:[%s241 + $0x118] sm:$0xff] %v7608
        %7673 = vst [vmem:[%s241 + $0x120] sm:$0xff] %v7609
        %7674 = vst [vmem:[%s241 + $0x128] sm:$0xff] %v7610
        %7675 = vst [vmem:[%s241 + $0x130] sm:$0xff] %v7611
        %7676 = vst [vmem:[%s241 + $0x138] sm:$0xff] %v7612
        %7677 = vst [vmem:[%s241 + $0x140] sm:$0xff] %v7613
        %7678 = vst [vmem:[%s241 + $0x148] sm:$0xff] %v7614
        %7679 = vst [vmem:[%s241 + $0x150] sm:$0xff] %v7615
        %7680 = vst [vmem:[%s241 + $0x158] sm:$0xff] %v7616
        %7681 = vst [vmem:[%s241 + $0x160] sm:$0xff] %v7617
        %7682 = vst [vmem:[%s241 + $0x168] sm:$0xff] %v7618
        %7683 = vst [vmem:[%s241 + $0x170] sm:$0xff] %v7619
        %7684 = vst [vmem:[%s241 + $0x178] sm:$0xff] %v7620
        %7685 = vst [vmem:[%s241 + $0x180] sm:$0xff] %v7621
        %7686 = vst [vmem:[%s241 + $0x188] sm:$0xff] %v7622
        %7687 = vst [vmem:[%s241 + $0x190] sm:$0xff] %v7623
        %7688 = vst [vmem:[%s241 + $0x198] sm:$0xff] %v7624
        %7689 = vst [vmem:[%s241 + $0x1a0] sm:$0xff] %v7625
        %7690 = vst [vmem:[%s241 + $0x1a8] sm:$0xff] %v7626
        %7691 = vst [vmem:[%s241 + $0x1b0] sm:$0xff] %v7627
        %7692 = vst [vmem:[%s241 + $0x1b8] sm:$0xff] %v7628
        %7693 = vst [vmem:[%s241 + $0x1c0] sm:$0xff] %v7629
        %7694 = vst [vmem:[%s241 + $0x1c8] sm:$0xff] %v7630
        %7695 = vst [vmem:[%s241 + $0x1d0] sm:$0xff] %v7631
        %7696 = vst [vmem:[%s241 + $0x1d8] sm:$0xff] %v7632
        %7697 = vst [vmem:[%s241 + $0x1e0] sm:$0xff] %v7633
        %7698 = vst [vmem:[%s241 + $0x1e8] sm:$0xff] %v7634
        %7699 = vst [vmem:[%s241 + $0x1f0] sm:$0xff] %v7635
        %7700 = vst [vmem:[%s241 + $0x1f8] sm:$0xff] %v7636
        %s7701 = sand.u32 %s138, 1
        %s7702 = scalar_lea.sflag [#allocation3], %s7701
        %s7703 = sand.u32 %s138, 1
        %s7704 = smul.addr %s7703, 512
        %s7705 = scalar_lea.vmem [#allocation2], %s7704
        // Predicated region
        $region37: #{tpu_custom_call.1} parent=35 // pred_check
          %p7706 = pneg %p148
        $region38: #{tpu_custom_call.1} parent=35 // pred_check_branch
          %7708 = sbr.rel (%p7706) target = $region40
        $region39: #{tpu_custom_call.1} parent=35 // pred_region
          %s7709 = smul.u32 64, %s23
          %s7711 = ssub.s32 8192, 8192
          %7712 = vsyncadd %s7702, %s7711
          %s7713 = smul.addr %s22, 64
          %s7714 = sadd.s32 %s7709, %s7713
          %s7715 = smul.addr %s7714, 128
          %s7716 = scalar_lea.hbm %s4, %s7715
          %s7717 = sshll.u32 %s7705, 4
          %s7718 = int_to_ptr.vmem [resolvable:$true] %s7717
          %7723 = dma.vmem_to_hbm [thread:$0]  %s7718, 8192, %s7716, %s7702, 128, 128, 8
        $region40: #{tpu_custom_call.1} parent=35 // pred_fallthru
          _
      $region36: #{tpu_custom_call.1} parent=5 // pred_fallthru
        _
      %p7724 = scmp.le.s32.totalorder 2, %s13
      // Predicated region
      $region41: #{tpu_custom_call.1} parent=5 // pred_check
        %p7725 = pneg %p7724
      $region42: #{tpu_custom_call.1} parent=5 // pred_check_branch
        %7727 = sbr.rel (%p7725) target = $region44
      $region43: #{tpu_custom_call.1} parent=5 // pred_region
        %s7728 = ssub.s32 %s13, 2
        // Predicated region
        $region45: #{tpu_custom_call.1} parent=43 // pred_check
          %p7729 = pneg %p154
        $region46: #{tpu_custom_call.1} parent=43 // pred_check_branch
          %7731 = sbr.rel (%p7729) target = $region48
        $region47: #{tpu_custom_call.1} parent=43 // pred_region
          %s7732 = sand.u32 %s139, 1
          %s7733 = scalar_lea.sflag [#allocation3], %s7732
          %s7734 = sand.u32 %s139, 1
          %s7735 = smul.addr %s7734, 512
          %s7736 = scalar_lea.vmem [#allocation2], %s7735
          %7737 = dma.done %s7733, 8192
        $region48: #{tpu_custom_call.1} parent=43 // pred_fallthru
          _
      $region44: #{tpu_custom_call.1} parent=5 // pred_fallthru
        _
    $region6: #{tpu_custom_call.1} parent=1 // loop_footer
      %s17 = sadd.s32 1, %s13
    $region7: #{tpu_custom_call.1} parent=1 // loop_footer_branch
      %12 = sbr.rel target = $region3
    $region8: #{tpu_custom_call.1} parent=1 // loop_exit
      _
    %7738 = vsyncpa [#allocation3], 1
    %s7739 = scalar_lea.sflag [#allocation3], 1
    %7740 = vsyncpa %s7739, 1

</llo_original>
